<compile_context>
chip_gen: v7x
topology: tpu7x:2x2x1
jax: 0.10.0
libtpu: 0.0.40
codegen_flags: <defaults>
</compile_context>

<pallas_src>
import jax
import jax.numpy as jnp
from jax.experimental import pallas as pl
from jax.experimental.pallas import tpu as pltpu

LANE = 128


def _mlp_kernel(x_ref, w1_ref, b1_ref, w2_ref, b2_ref,
                w3_ref, b3_ref, w4_ref, b4_ref, o_ref):
    # Fused 4-layer MLP on one batch tile.  All weights are VMEM-resident (~1.1 MB bf16).
    # bf16 matmul operands, f32 accumulation, f32 bias-add/ReLU.
    x = x_ref[...].astype(jnp.bfloat16)          # no-op when the producer emits bf16
    h = jnp.dot(x, w1_ref[...], preferred_element_type=jnp.float32) + b1_ref[...]
    h = jnp.maximum(h, 0.0)
    h = jnp.dot(h.astype(jnp.bfloat16), w2_ref[...],
                preferred_element_type=jnp.float32) + b2_ref[...]
    h = jnp.maximum(h, 0.0)
    h = jnp.dot(h.astype(jnp.bfloat16), w3_ref[...],
                preferred_element_type=jnp.float32) + b3_ref[...]
    h = jnp.maximum(h, 0.0)
    out = jnp.dot(h.astype(jnp.bfloat16), w4_ref[...],
                  preferred_element_type=jnp.float32) + b4_ref[...]
    o_ref[...] = out.astype(o_ref.dtype)


def semantic_encoder_forward(x, params, *, latent_dim=32, batch_tile=512):
    """x: (B, input_dim), f32 or (preferred) bf16.
    params: dict from init_params(); w4/b4 already lane-padded to a multiple of 128.
    batch_tile: sweep 256/512/1024; pick it so cdiv(B, batch_tile) gives ~4-8 grid steps
    (and >= 2 so v7x's second TensorCore gets work)."""
    B, D_in = x.shape
    out_pad = params["w4"].shape[1]              # lane-padded final width (>= latent_dim)

    # Ragged grid: no batch padding of x.  Last block reads junk rows past B; its store is
    # masked to the real output extent by the pipeline, and rows are independent.
    tile_m = batch_tile if B > batch_tile else B
    grid_m = pl.cdiv(B, tile_m)

    weight_args = (params["w1"], params["b1"], params["w2"], params["b2"],
                   params["w3"], params["b3"], params["w4"], params["b4"])

    # Advisory cost estimate for XLA's scheduler around this small custom call.
    dims = [D_in, params["w1"].shape[1], params["w2"].shape[1],
            params["w3"].shape[1], out_pad]
    flops = 2 * grid_m * tile_m * sum(dims[i] * dims[i + 1] for i in range(4))
    param_bytes = sum(int(a.size) * a.dtype.itemsize for a in weight_args)
    io_bytes = B * D_in * x.dtype.itemsize + B * out_pad * 4
    cost = pl.CostEstimate(flops=flops, transcendentals=0,
                           bytes_accessed=param_bytes + io_bytes)

    def call(single_buffer_weights):
        if single_buffer_weights:
            def const_spec(shape):
                # constant index_map -> loaded once; single buffer reclaims the dead copy
                return pl.BlockSpec(shape, lambda i: (0, 0),
                                    pipeline_mode=pl.Buffered(1))
        else:
            def const_spec(shape):
                return pl.BlockSpec(shape, lambda i: (0, 0))

        in_specs = [pl.BlockSpec((tile_m, D_in), lambda i: (i, 0))]   # x tile
        in_specs += [const_spec(a.shape) for a in weight_args]
        out_spec = pl.BlockSpec((tile_m, out_pad), lambda i: (i, 0))

        return pl.pallas_call(
            _mlp_kernel,
            out_shape=jax.ShapeDtypeStruct((B, out_pad), jnp.float32),
            grid_spec=pltpu.PrefetchScalarGridSpec(
                num_scalar_prefetch=0,
                grid=(grid_m,),
                in_specs=in_specs,
                out_specs=out_spec,
            ),
            compiler_params=pltpu.CompilerParams(
                dimension_semantics=("parallel",),   # batch axis shards across v7x's 2 TCs
            ),
            cost_estimate=cost,
        )(x, *weight_args)

    try:
        out_full = call(True)
    except Exception:
        # pl.Buffered(1) unavailable/rejected on this jax version: default double-buffering.
        out_full = call(False)

    return out_full[:, :latent_dim]


def init_params(key, input_dim=768, latent_dim=32):
    """Deterministic init mimicking PyTorch nn.Linear (uniform +/- 1/sqrt(fan_in)).
    Weights stored bf16 (native MXU rate, halved HBM/VMEM); biases stay f32.
    The final layer is lane-padded (zero columns) to a multiple of 128 here, once."""
    dims = [input_dim, 512, 256, 128, latent_dim]
    params = {}
    keys = jax.random.split(key, 2 * (len(dims) - 1))
    for li in range(len(dims) - 1):
        fan_in, fan_out = dims[li], dims[li + 1]
        bound = 1.0 / (fan_in ** 0.5)
        w = jax.random.uniform(keys[2 * li], (fan_in, fan_out),
                               minval=-bound, maxval=bound, dtype=jnp.float32)
        b = jax.random.uniform(keys[2 * li + 1], (1, fan_out),
                               minval=-bound, maxval=bound, dtype=jnp.float32)
        if li == len(dims) - 2:                      # final layer: pad out-dim to 128 lanes
            out_pad = max(LANE, ((fan_out + LANE - 1) // LANE) * LANE)
            if out_pad != fan_out:
                w = jnp.pad(w, ((0, 0), (0, out_pad - fan_out)))
                b = jnp.pad(b, ((0, 0), (0, out_pad - fan_out)))
        params[f"w{li + 1}"] = w.astype(jnp.bfloat16)
        params[f"b{li + 1}"] = b
    return params


def reference_forward(x, params, latent_dim=32):
    # Pure-JAX reference with the same numerics: bf16 matmul operands, f32 accumulation.
    h = x
    for li in range(1, 5):
        h = jnp.dot(h.astype(jnp.bfloat16), params[f"w{li}"],
                    preferred_element_type=jnp.float32) + params[f"b{li}"]
        if li < 4:
            h = jnp.maximum(h, 0.0)
    return h[:, :latent_dim]


if __name__ == "__main__":
    key = jax.random.PRNGKey(0)
    k_param, k_x = jax.random.split(key)

    input_dim, latent_dim = 768, 32
    batch = 200        # NOT a multiple of batch_tile -> exercises the ragged last block
    batch_tile = 128   # kept small for this test; production default is 512

    params = init_params(k_param, input_dim=input_dim, latent_dim=latent_dim)
    # Producer emits bf16 activations (caller contract); f32 x also works.
    x = jax.random.normal(k_x, (batch, input_dim), dtype=jnp.bfloat16)

    out = semantic_encoder_forward(x, params, latent_dim=latent_dim, batch_tile=batch_tile)
    out = jax.block_until_ready(out)

    ref = reference_forward(x, params, latent_dim=latent_dim)
    assert out.shape == (batch, latent_dim)
    assert jnp.allclose(out, ref, atol=2e-2, rtol=2e-2), "mismatch vs pure-JAX reference"

    print("KERNEL_OK")
</pallas_src>

<mosaic_0001>
module attributes {stable_mosaic.version = 11 : i64} {
  func.func @_mlp_kernel(%arg0: i32, %arg1: memref<128x768xbf16, #tpu.memory_space<vmem>>, %arg2: memref<768x512xbf16, #tpu.memory_space<vmem>>, %arg3: memref<1x512xf32, #tpu.memory_space<vmem>>, %arg4: memref<512x256xbf16, #tpu.memory_space<vmem>>, %arg5: memref<1x256xf32, #tpu.memory_space<vmem>>, %arg6: memref<256x128xbf16, #tpu.memory_space<vmem>>, %arg7: memref<1x128xf32, #tpu.memory_space<vmem>>, %arg8: memref<128x128xbf16, #tpu.memory_space<vmem>>, %arg9: memref<1x128xf32, #tpu.memory_space<vmem>>, %arg10: memref<128x128xf32, #tpu.memory_space<vmem>>) attributes {dimension_semantics = [#tpu.dimension_semantics<parallel>], iteration_bounds = array<i64: 2>, scalar_prefetch = 0 : i64, scratch_operands = 0 : i64, tpu.core_type = #tpu.core_type<tc>, window_params = [{transform_indices = @transform_0, window_bounds = array<i64: 128, 768>}, {pipeline_mode = #tpu.pipeline_mode<synchronous>, transform_indices = @transform_1, window_bounds = array<i64: 768, 512>}, {pipeline_mode = #tpu.pipeline_mode<synchronous>, transform_indices = @transform_2, window_bounds = array<i64: 1, 512>}, {pipeline_mode = #tpu.pipeline_mode<synchronous>, transform_indices = @transform_3, window_bounds = array<i64: 512, 256>}, {pipeline_mode = #tpu.pipeline_mode<synchronous>, transform_indices = @transform_4, window_bounds = array<i64: 1, 256>}, {pipeline_mode = #tpu.pipeline_mode<synchronous>, transform_indices = @transform_5, window_bounds = array<i64: 256, 128>}, {pipeline_mode = #tpu.pipeline_mode<synchronous>, transform_indices = @transform_6, window_bounds = array<i64: 1, 128>}, {pipeline_mode = #tpu.pipeline_mode<synchronous>, transform_indices = @transform_7, window_bounds = array<i64: 128, 128>}, {pipeline_mode = #tpu.pipeline_mode<synchronous>, transform_indices = @transform_8, window_bounds = array<i64: 1, 128>}, {transform_indices = @transform_9, window_bounds = array<i64: 128, 128>}]} {
    %c0 = arith.constant 0 : index
    %c0_0 = arith.constant 0 : index
    %0 = vector.load %arg1[%c0, %c0_0] : memref<128x768xbf16, #tpu.memory_space<vmem>>, vector<128x768xbf16>
    %c0_1 = arith.constant 0 : index
    %c0_2 = arith.constant 0 : index
    %1 = vector.load %arg2[%c0_1, %c0_2] : memref<768x512xbf16, #tpu.memory_space<vmem>>, vector<768x512xbf16>
    %cst = arith.constant dense<0.000000e+00> : vector<128x512xf32>
    %2 = tpu.matmul %0, %1, %cst {dimension_numbers = #tpu.dot_dimension_numbers<[1], [0], [0], [1], [0, 0, 1, 1], [], []>} : vector<128x768xbf16>, vector<768x512xbf16>, vector<128x512xf32> -> vector<128x512xf32>
    %c0_3 = arith.constant 0 : index
    %c0_4 = arith.constant 0 : index
    %3 = vector.load %arg3[%c0_3, %c0_4] : memref<1x512xf32, #tpu.memory_space<vmem>>, vector<1x512xf32>
    %4 = vector.broadcast %3 : vector<1x512xf32> to vector<128x512xf32>
    %5 = arith.addf %2, %4 : vector<128x512xf32>
    %cst_5 = arith.constant 0.000000e+00 : f32
    %6 = vector.broadcast %cst_5 : f32 to vector<128x512xf32>
    %7 = arith.maximumf %5, %6 : vector<128x512xf32>
    %8 = arith.truncf %7 : vector<128x512xf32> to vector<128x512xbf16>
    %c0_6 = arith.constant 0 : index
    %c0_7 = arith.constant 0 : index
    %9 = vector.load %arg4[%c0_6, %c0_7] : memref<512x256xbf16, #tpu.memory_space<vmem>>, vector<512x256xbf16>
    %cst_8 = arith.constant dense<0.000000e+00> : vector<128x256xf32>
    %10 = tpu.matmul %8, %9, %cst_8 {dimension_numbers = #tpu.dot_dimension_numbers<[1], [0], [0], [1], [0, 0, 1, 1], [], []>} : vector<128x512xbf16>, vector<512x256xbf16>, vector<128x256xf32> -> vector<128x256xf32>
    %c0_9 = arith.constant 0 : index
    %c0_10 = arith.constant 0 : index
    %11 = vector.load %arg5[%c0_9, %c0_10] : memref<1x256xf32, #tpu.memory_space<vmem>>, vector<1x256xf32>
    %12 = vector.broadcast %11 : vector<1x256xf32> to vector<128x256xf32>
    %13 = arith.addf %10, %12 : vector<128x256xf32>
    %cst_11 = arith.constant 0.000000e+00 : f32
    %14 = vector.broadcast %cst_11 : f32 to vector<128x256xf32>
    %15 = arith.maximumf %13, %14 : vector<128x256xf32>
    %16 = arith.truncf %15 : vector<128x256xf32> to vector<128x256xbf16>
    %c0_12 = arith.constant 0 : index
    %c0_13 = arith.constant 0 : index
    %17 = vector.load %arg6[%c0_12, %c0_13] : memref<256x128xbf16, #tpu.memory_space<vmem>>, vector<256x128xbf16>
    %cst_14 = arith.constant dense<0.000000e+00> : vector<128x128xf32>
    %18 = tpu.matmul %16, %17, %cst_14 {dimension_numbers = #tpu.dot_dimension_numbers<[1], [0], [0], [1], [0, 0, 1, 1], [], []>} : vector<128x256xbf16>, vector<256x128xbf16>, vector<128x128xf32> -> vector<128x128xf32>
    %c0_15 = arith.constant 0 : index
    %c0_16 = arith.constant 0 : index
    %19 = vector.load %arg7[%c0_15, %c0_16] : memref<1x128xf32, #tpu.memory_space<vmem>>, vector<1x128xf32>
    %20 = vector.broadcast %19 : vector<1x128xf32> to vector<128x128xf32>
    %21 = arith.addf %18, %20 : vector<128x128xf32>
    %cst_17 = arith.constant 0.000000e+00 : f32
    %22 = vector.broadcast %cst_17 : f32 to vector<128x128xf32>
    %23 = arith.maximumf %21, %22 : vector<128x128xf32>
    %24 = arith.truncf %23 : vector<128x128xf32> to vector<128x128xbf16>
    %c0_18 = arith.constant 0 : index
    %c0_19 = arith.constant 0 : index
    %25 = vector.load %arg8[%c0_18, %c0_19] : memref<128x128xbf16, #tpu.memory_space<vmem>>, vector<128x128xbf16>
    %cst_20 = arith.constant dense<0.000000e+00> : vector<128x128xf32>
    %26 = tpu.matmul %24, %25, %cst_20 {dimension_numbers = #tpu.dot_dimension_numbers<[1], [0], [0], [1], [0, 0, 1, 1], [], []>} : vector<128x128xbf16>, vector<128x128xbf16>, vector<128x128xf32> -> vector<128x128xf32>
    %c0_21 = arith.constant 0 : index
    %c0_22 = arith.constant 0 : index
    %27 = vector.load %arg9[%c0_21, %c0_22] : memref<1x128xf32, #tpu.memory_space<vmem>>, vector<1x128xf32>
    %28 = vector.broadcast %27 : vector<1x128xf32> to vector<128x128xf32>
    %29 = arith.addf %26, %28 : vector<128x128xf32>
    %c0_23 = arith.constant 0 : index
    %c0_24 = arith.constant 0 : index
    %30 = vector.load %arg10[%c0_23, %c0_24] : memref<128x128xf32, #tpu.memory_space<vmem>>, vector<128x128xf32>
    tpu.vector_store %arg10[%c0_23, %c0_24], %29 {strides = array<i32>} : memref<128x128xf32, #tpu.memory_space<vmem>>, vector<128x128xf32>,
    return
  }
  func.func @transform_0(%arg0: i32) -> (i32, i32) {
    %c0_i32 = arith.constant 0 : i32
    %c0_i32_0 = arith.constant 0 : i32
    return %arg0, %c0_i32 : i32, i32
  }
  func.func @transform_1(%arg0: i32) -> (i32, i32) {
    %c0_i32 = arith.constant 0 : i32
    %c0_i32_0 = arith.constant 0 : i32
    %c0_i32_1 = arith.constant 0 : i32
    return %c0_i32, %c0_i32_0 : i32, i32
  }
  func.func @transform_2(%arg0: i32) -> (i32, i32) {
    %c0_i32 = arith.constant 0 : i32
    %c0_i32_0 = arith.constant 0 : i32
    %c0_i32_1 = arith.constant 0 : i32
    return %c0_i32, %c0_i32_0 : i32, i32
  }
  func.func @transform_3(%arg0: i32) -> (i32, i32) {
    %c0_i32 = arith.constant 0 : i32
    %c0_i32_0 = arith.constant 0 : i32
    %c0_i32_1 = arith.constant 0 : i32
    return %c0_i32, %c0_i32_0 : i32, i32
  }
  func.func @transform_4(%arg0: i32) -> (i32, i32) {
    %c0_i32 = arith.constant 0 : i32
    %c0_i32_0 = arith.constant 0 : i32
    %c0_i32_1 = arith.constant 0 : i32
    return %c0_i32, %c0_i32_0 : i32, i32
  }
  func.func @transform_5(%arg0: i32) -> (i32, i32) {
    %c0_i32 = arith.constant 0 : i32
    %c0_i32_0 = arith.constant 0 : i32
    %c0_i32_1 = arith.constant 0 : i32
    return %c0_i32, %c0_i32_0 : i32, i32
  }
  func.func @transform_6(%arg0: i32) -> (i32, i32) {
    %c0_i32 = arith.constant 0 : i32
    %c0_i32_0 = arith.constant 0 : i32
    %c0_i32_1 = arith.constant 0 : i32
    return %c0_i32, %c0_i32_0 : i32, i32
  }
  func.func @transform_7(%arg0: i32) -> (i32, i32) {
    %c0_i32 = arith.constant 0 : i32
    %c0_i32_0 = arith.constant 0 : i32
    %c0_i32_1 = arith.constant 0 : i32
    return %c0_i32, %c0_i32_0 : i32, i32
  }
  func.func @transform_8(%arg0: i32) -> (i32, i32) {
    %c0_i32 = arith.constant 0 : i32
    %c0_i32_0 = arith.constant 0 : i32
    %c0_i32_1 = arith.constant 0 : i32
    return %c0_i32, %c0_i32_0 : i32, i32
  }
  func.func @transform_9(%arg0: i32) -> (i32, i32) {
    %c0_i32 = arith.constant 0 : i32
    %c0_i32_0 = arith.constant 0 : i32
    return %arg0, %c0_i32 : i32, i32
  }
}

module attributes {stable_mosaic.version = 11 : i64} {
  func.func @_mlp_kernel(%arg0: i32, %arg1: memref<128x768xbf16, #tpu.memory_space<vmem>>, %arg2: memref<768x512xbf16, #tpu.memory_space<vmem>>, %arg3: memref<1x512xf32, #tpu.memory_space<vmem>>, %arg4: memref<512x256xbf16, #tpu.memory_space<vmem>>, %arg5: memref<1x256xf32, #tpu.memory_space<vmem>>, %arg6: memref<256x128xbf16, #tpu.memory_space<vmem>>, %arg7: memref<1x128xf32, #tpu.memory_space<vmem>>, %arg8: memref<128x128xbf16, #tpu.memory_space<vmem>>, %arg9: memref<1x128xf32, #tpu.memory_space<vmem>>, %arg10: memref<128x128xf32, #tpu.memory_space<vmem>>) attributes {dimension_semantics = [#tpu.dimension_semantics<parallel>], iteration_bounds = array<i64: 2>, scalar_prefetch = 0 : i64, scratch_operands = 0 : i64, tpu.core_type = #tpu.core_type<tc>, window_params = [{transform_indices = @transform_0, window_bounds = array<i64: 128, 768>}, {pipeline_mode = #tpu.pipeline_mode<synchronous>, transform_indices = @transform_1, window_bounds = array<i64: 768, 512>}, {pipeline_mode = #tpu.pipeline_mode<synchronous>, transform_indices = @transform_2, window_bounds = array<i64: 1, 512>}, {pipeline_mode = #tpu.pipeline_mode<synchronous>, transform_indices = @transform_3, window_bounds = array<i64: 512, 256>}, {pipeline_mode = #tpu.pipeline_mode<synchronous>, transform_indices = @transform_4, window_bounds = array<i64: 1, 256>}, {pipeline_mode = #tpu.pipeline_mode<synchronous>, transform_indices = @transform_5, window_bounds = array<i64: 256, 128>}, {pipeline_mode = #tpu.pipeline_mode<synchronous>, transform_indices = @transform_6, window_bounds = array<i64: 1, 128>}, {pipeline_mode = #tpu.pipeline_mode<synchronous>, transform_indices = @transform_7, window_bounds = array<i64: 128, 128>}, {pipeline_mode = #tpu.pipeline_mode<synchronous>, transform_indices = @transform_8, window_bounds = array<i64: 1, 128>}, {transform_indices = @transform_9, window_bounds = array<i64: 128, 128>}]} {
    %c0 = arith.constant 0 : index
    %c0_0 = arith.constant 0 : index
    %0 = vector.load %arg1[%c0, %c0_0] : memref<128x768xbf16, #tpu.memory_space<vmem>>, vector<128x768xbf16>
    %c0_1 = arith.constant 0 : index
    %c0_2 = arith.constant 0 : index
    %1 = vector.load %arg2[%c0_1, %c0_2] : memref<768x512xbf16, #tpu.memory_space<vmem>>, vector<768x512xbf16>
    %cst = arith.constant dense<0.000000e+00> : vector<128x512xf32>
    %2 = tpu.matmul %0, %1, %cst {dimension_numbers = #tpu.dot_dimension_numbers<[1], [0], [0], [1], [0, 0, 1, 1], [], []>} : vector<128x768xbf16>, vector<768x512xbf16>, vector<128x512xf32> -> vector<128x512xf32>
    %c0_3 = arith.constant 0 : index
    %c0_4 = arith.constant 0 : index
    %3 = vector.load %arg3[%c0_3, %c0_4] : memref<1x512xf32, #tpu.memory_space<vmem>>, vector<1x512xf32>
    %4 = vector.broadcast %3 : vector<1x512xf32> to vector<128x512xf32>
    %5 = arith.addf %2, %4 : vector<128x512xf32>
    %cst_5 = arith.constant 0.000000e+00 : f32
    %6 = vector.broadcast %cst_5 : f32 to vector<128x512xf32>
    %7 = arith.maximumf %5, %6 : vector<128x512xf32>
    %8 = arith.truncf %7 : vector<128x512xf32> to vector<128x512xbf16>
    %c0_6 = arith.constant 0 : index
    %c0_7 = arith.constant 0 : index
    %9 = vector.load %arg4[%c0_6, %c0_7] : memref<512x256xbf16, #tpu.memory_space<vmem>>, vector<512x256xbf16>
    %cst_8 = arith.constant dense<0.000000e+00> : vector<128x256xf32>
    %10 = tpu.matmul %8, %9, %cst_8 {dimension_numbers = #tpu.dot_dimension_numbers<[1], [0], [0], [1], [0, 0, 1, 1], [], []>} : vector<128x512xbf16>, vector<512x256xbf16>, vector<128x256xf32> -> vector<128x256xf32>
    %c0_9 = arith.constant 0 : index
    %c0_10 = arith.constant 0 : index
    %11 = vector.load %arg5[%c0_9, %c0_10] : memref<1x256xf32, #tpu.memory_space<vmem>>, vector<1x256xf32>
    %12 = vector.broadcast %11 : vector<1x256xf32> to vector<128x256xf32>
    %13 = arith.addf %10, %12 : vector<128x256xf32>
    %cst_11 = arith.constant 0.000000e+00 : f32
    %14 = vector.broadcast %cst_11 : f32 to vector<128x256xf32>
    %15 = arith.maximumf %13, %14 : vector<128x256xf32>
    %16 = arith.truncf %15 : vector<128x256xf32> to vector<128x256xbf16>
    %c0_12 = arith.constant 0 : index
    %c0_13 = arith.constant 0 : index
    %17 = vector.load %arg6[%c0_12, %c0_13] : memref<256x128xbf16, #tpu.memory_space<vmem>>, vector<256x128xbf16>
    %cst_14 = arith.constant dense<0.000000e+00> : vector<128x128xf32>
    %18 = tpu.matmul %16, %17, %cst_14 {dimension_numbers = #tpu.dot_dimension_numbers<[1], [0], [0], [1], [0, 0, 1, 1], [], []>} : vector<128x256xbf16>, vector<256x128xbf16>, vector<128x128xf32> -> vector<128x128xf32>
    %c0_15 = arith.constant 0 : index
    %c0_16 = arith.constant 0 : index
    %19 = vector.load %arg7[%c0_15, %c0_16] : memref<1x128xf32, #tpu.memory_space<vmem>>, vector<1x128xf32>
    %20 = vector.broadcast %19 : vector<1x128xf32> to vector<128x128xf32>
    %21 = arith.addf %18, %20 : vector<128x128xf32>
    %cst_17 = arith.constant 0.000000e+00 : f32
    %22 = vector.broadcast %cst_17 : f32 to vector<128x128xf32>
    %23 = arith.maximumf %21, %22 : vector<128x128xf32>
    %24 = arith.truncf %23 : vector<128x128xf32> to vector<128x128xbf16>
    %c0_18 = arith.constant 0 : index
    %c0_19 = arith.constant 0 : index
    %25 = vector.load %arg8[%c0_18, %c0_19] : memref<128x128xbf16, #tpu.memory_space<vmem>>, vector<128x128xbf16>
    %cst_20 = arith.constant dense<0.000000e+00> : vector<128x128xf32>
    %26 = tpu.matmul %24, %25, %cst_20 {dimension_numbers = #tpu.dot_dimension_numbers<[1], [0], [0], [1], [0, 0, 1, 1], [], []>} : vector<128x128xbf16>, vector<128x128xbf16>, vector<128x128xf32> -> vector<128x128xf32>
    %c0_21 = arith.constant 0 : index
    %c0_22 = arith.constant 0 : index
    %27 = vector.load %arg9[%c0_21, %c0_22] : memref<1x128xf32, #tpu.memory_space<vmem>>, vector<1x128xf32>
    %28 = vector.broadcast %27 : vector<1x128xf32> to vector<128x128xf32>
    %29 = arith.addf %26, %28 : vector<128x128xf32>
    %c0_23 = arith.constant 0 : index
    %c0_24 = arith.constant 0 : index
    %30 = vector.load %arg10[%c0_23, %c0_24] : memref<128x128xf32, #tpu.memory_space<vmem>>, vector<128x128xf32>
    tpu.vector_store %arg10[%c0_23, %c0_24], %29 {strides = array<i32>} : memref<128x128xf32, #tpu.memory_space<vmem>>, vector<128x128xf32>,
    return
  }
  func.func @transform_0(%arg0: i32) -> (i32, i32) {
    %c0_i32 = arith.constant 0 : i32
    %c0_i32_0 = arith.constant 0 : i32
    return %arg0, %c0_i32 : i32, i32
  }
  func.func @transform_1(%arg0: i32) -> (i32, i32) {
    %c0_i32 = arith.constant 0 : i32
    %c0_i32_0 = arith.constant 0 : i32
    %c0_i32_1 = arith.constant 0 : i32
    return %c0_i32, %c0_i32_0 : i32, i32
  }
  func.func @transform_2(%arg0: i32) -> (i32, i32) {
    %c0_i32 = arith.constant 0 : i32
    %c0_i32_0 = arith.constant 0 : i32
    %c0_i32_1 = arith.constant 0 : i32
    return %c0_i32, %c0_i32_0 : i32, i32
  }
  func.func @transform_3(%arg0: i32) -> (i32, i32) {
    %c0_i32 = arith.constant 0 : i32
    %c0_i32_0 = arith.constant 0 : i32
    %c0_i32_1 = arith.constant 0 : i32
    return %c0_i32, %c0_i32_0 : i32, i32
  }
  func.func @transform_4(%arg0: i32) -> (i32, i32) {
    %c0_i32 = arith.constant 0 : i32
    %c0_i32_0 = arith.constant 0 : i32
    %c0_i32_1 = arith.constant 0 : i32
    return %c0_i32, %c0_i32_0 : i32, i32
  }
  func.func @transform_5(%arg0: i32) -> (i32, i32) {
    %c0_i32 = arith.constant 0 : i32
    %c0_i32_0 = arith.constant 0 : i32
    %c0_i32_1 = arith.constant 0 : i32
    return %c0_i32, %c0_i32_0 : i32, i32
  }
  func.func @transform_6(%arg0: i32) -> (i32, i32) {
    %c0_i32 = arith.constant 0 : i32
    %c0_i32_0 = arith.constant 0 : i32
    %c0_i32_1 = arith.constant 0 : i32
    return %c0_i32, %c0_i32_0 : i32, i32
  }
  func.func @transform_7(%arg0: i32) -> (i32, i32) {
    %c0_i32 = arith.constant 0 : i32
    %c0_i32_0 = arith.constant 0 : i32
    %c0_i32_1 = arith.constant 0 : i32
    return %c0_i32, %c0_i32_0 : i32, i32
  }
  func.func @transform_8(%arg0: i32) -> (i32, i32) {
    %c0_i32 = arith.constant 0 : i32
    %c0_i32_0 = arith.constant 0 : i32
    %c0_i32_1 = arith.constant 0 : i32
    return %c0_i32, %c0_i32_0 : i32, i32
  }
  func.func @transform_9(%arg0: i32) -> (i32, i32) {
    %c0_i32 = arith.constant 0 : i32
    %c0_i32_0 = arith.constant 0 : i32
    return %arg0, %c0_i32 : i32, i32
  }
}

</mosaic_0001>

<llo_original>
// kernel: tpu_custom_call.1
$region0: #{tpu_custom_call.1}
  #allocation0 [shape = 'u32[]', space=smem, size = 0x4, offset = 0x4, fixed_abs, tag = 'smem constant byte address 0x4 - core index']
  #allocation1 [shape = 'u32[144,128]{1,0:T(1,128)}', space=vmem, size = 0x12000, scoped, tag = 'internal scratch']
  %s0 = inlined_call_operand.hbm [shape: bf16[200,768], index: 0, kind: input, shape index: {}]
  %s1 = inlined_call_operand.hbm [shape: bf16[768,512], index: 1, kind: input, shape index: {}]
  %s2 = inlined_call_operand.vmem [shape: f32[1,512], index: 2, kind: input, shape index: {}]
  %s3 = inlined_call_operand.hbm [shape: bf16[512,256], index: 3, kind: input, shape index: {}]
  %s4 = inlined_call_operand.vmem [shape: f32[1,256], index: 4, kind: input, shape index: {}]
  %s5 = inlined_call_operand.hbm [shape: bf16[256,128], index: 5, kind: input, shape index: {}]
  %s6 = inlined_call_operand.vmem [shape: f32[1,128], index: 6, kind: input, shape index: {}]
  %s7 = inlined_call_operand.hbm [shape: bf16[128,128], index: 7, kind: input, shape index: {}]
  %s8 = inlined_call_operand.vmem [shape: f32[1,128], index: 8, kind: input, shape index: {}]
  %s9 = inlined_call_operand.hbm [shape: f32[200,128], index: 9, kind: output, shape index: {}]
  %s10 = sld [smem:[#allocation0]]
  $region89: #{tpu_custom_call.1} parent=0
    _
  %s12 = ssub.s32 1, %s10
  %s13 = scalar_select 0, %s12, %s10
  $region1: #{tpu_custom_call.1} parent=0
    #allocation2 [shape = 'u8[393216]{0}', space=vmem, size = 0x60000, scoped, tag = 'input window, operand 0']
    #allocation3 [shape = 's32[2]{0}', space=sflag, size = 0x8, scoped, tag = 'scoped memory for tpu_custom_call.1']
    #allocation4 [shape = 's32[2]{0}', space=sflag, size = 0x8, scoped, tag = 'scoped memory for tpu_custom_call.1']
    #allocation5 [shape = 'u8[786432]{0}', space=vmem, size = 0xc0000, scoped, tag = 'input window, operand 1, single buffered']
    #allocation6 [shape = 's32[1]{0}', space=sflag, size = 0x4, scoped, tag = 'scoped memory for tpu_custom_call.1']
    #allocation7 [shape = 'u8[262144]{0}', space=vmem, size = 0x40000, scoped, tag = 'input window, operand 3, single buffered']
    #allocation8 [shape = 'u8[65536]{0}', space=vmem, size = 0x10000, scoped, tag = 'input window, operand 5, single buffered']
    #allocation9 [shape = 's32[1]{0}', space=sflag, size = 0x4, scoped, tag = 'scoped memory for tpu_custom_call.1']
    #allocation10 [shape = 'u8[32768]{0}', space=vmem, size = 0x8000, scoped, tag = 'input window, operand 7, single buffered']
    #allocation11 [shape = 'u8[131072]{0}', space=vmem, size = 0x20000, scoped, tag = 'output window, operand 0']
    %14 = vsyncpa [#allocation3], 0
    %s15 = scalar_lea.sflag [#allocation3], 1
    %16 = vsyncpa %s15, 0
    %17 = vsyncpa [#allocation6], 0
    %18 = vsyncpa [#allocation9], 0
    %19 = vsyncpa [#allocation4], 0
    %s20 = scalar_lea.sflag [#allocation4], 1
    %21 = vsyncpa %s20, 0
    loop: start=0, step=1, limit=4
    $region2: #{tpu_custom_call.1} parent=1 // loop_pre_header
      _
    $region3: #{tpu_custom_call.1} parent=1 // loop_header
      %s23 = sphi 0, %s27
      %p24 = scmp.ge.s32.totalorder %s23, 4
      %s33 = sphi 0, %s35
      %s36 = sphi 0, %s33
      %s37 = sphi 0, %s36
      %s53 = sphi 0, %s37
      %s57 = sphi 0, %s57
      %s59 = sphi 0, %s57
      %s60 = sphi 0, %s59
      %s74 = sphi 0, %s60
      %s78 = sphi 0, %s78
      %s80 = sphi 0, %s78
      %s81 = sphi 0, %s80
      %s95 = sphi 0, %s81
      %s99 = sphi 0, %s99
      %s101 = sphi 0, %s99
      %s102 = sphi 0, %s101
      %s116 = sphi 0, %s102
      %s120 = sphi 0, %s120
      %s122 = sphi 0, %s120
      %s123 = sphi 0, %s122
      %s137 = sphi 0, %s123
      %s141 = sphi 0, %s141
      %s143 = sphi 0, %s141
      %s144 = sphi 0, %s143
      %s158 = sphi 0, %s144
      %s162 = sphi 0, %s162
      %s164 = sphi 0, %s162
      %s165 = sphi 0, %s164
      %s179 = sphi 0, %s165
      %s183 = sphi 0, %s183
      %s185 = sphi 0, %s183
      %s186 = sphi 0, %s185
      %s200 = sphi 0, %s186
      %s204 = sphi 0, %s204
      %s206 = sphi 0, %s204
      %s207 = sphi 0, %s206
      %s221 = sphi 0, %s207
      %s227 = sphi 0, %s229
      %s230 = sphi 0, %s227
      %s231 = sphi 0, %s230
      %s247 = sphi 0, %s231
    $region4: #{tpu_custom_call.1} parent=1 // loop_header_branch
      %26 = sbr.rel (%p24) target = $region8
    $region5: #{tpu_custom_call.1} parent=1 // loop_body
      %s28 = ssub.s32 %s23, 1
      %s29 = ssub.s32 %s23, 2
      %s30 = sadd.s32 %s23, 1
      %s31 = ssub.s32 %s23, %s30
      %p32 = scmp.eq.s32.totalorder %s31, 0
      %s34 = sadd.s32 %s33, 1
      %s35 = scalar_select %p32, %s33, %s34
      %p38 = pneg %p32
      %p39 = scmp.eq.s32.totalorder %s23, 1
      %p40 = por %p38, %p39
      %p41 = scmp.ne.s32.totalorder %s33, %s36
      %p42 = scmp.eq.s32.totalorder %s23, 0
      %p43 = por %p41, %p42
      %p44 = scmp.ne.s32.totalorder %s33, %s36
      %p45 = scmp.eq.s32.totalorder %s28, 1
      %p46 = por %p44, %p45
      %p47 = scmp.ne.s32.totalorder %s36, %s37
      %p48 = scmp.eq.s32.totalorder %s28, 0
      %p49 = por %p47, %p48
      %p50 = scmp.ne.s32.totalorder %s36, %s37
      %p51 = scmp.eq.s32.totalorder %s29, 1
      %p52 = por %p50, %p51
      %p54 = scmp.ne.s32.totalorder %s37, %s53
      %p55 = scmp.eq.s32.totalorder %s29, 0
      %p56 = por %p54, %p55
      %s58 = sadd.s32 %s57, 1
      %p61 = scmp.eq.s32.totalorder %s23, 1
      %p62 = scmp.ne.s32.totalorder %s57, %s59
      %p63 = scmp.eq.s32.totalorder %s23, 0
      %p64 = por %p62, %p63
      %p65 = scmp.ne.s32.totalorder %s57, %s59
      %p66 = scmp.eq.s32.totalorder %s28, 1
      %p67 = por %p65, %p66
      %p68 = scmp.ne.s32.totalorder %s59, %s60
      %p69 = scmp.eq.s32.totalorder %s28, 0
      %p70 = por %p68, %p69
      %p71 = scmp.ne.s32.totalorder %s59, %s60
      %p72 = scmp.eq.s32.totalorder %s29, 1
      %p73 = por %p71, %p72
      %p75 = scmp.ne.s32.totalorder %s60, %s74
      %p76 = scmp.eq.s32.totalorder %s29, 0
      %p77 = por %p75, %p76
      %s79 = sadd.s32 %s78, 1
      %p82 = scmp.eq.s32.totalorder %s23, 1
      %p83 = scmp.ne.s32.totalorder %s78, %s80
      %p84 = scmp.eq.s32.totalorder %s23, 0
      %p85 = por %p83, %p84
      %p86 = scmp.ne.s32.totalorder %s78, %s80
      %p87 = scmp.eq.s32.totalorder %s28, 1
      %p88 = por %p86, %p87
      %p89 = scmp.ne.s32.totalorder %s80, %s81
      %p90 = scmp.eq.s32.totalorder %s28, 0
      %p91 = por %p89, %p90
      %p92 = scmp.ne.s32.totalorder %s80, %s81
      %p93 = scmp.eq.s32.totalorder %s29, 1
      %p94 = por %p92, %p93
      %p96 = scmp.ne.s32.totalorder %s81, %s95
      %p97 = scmp.eq.s32.totalorder %s29, 0
      %p98 = por %p96, %p97
      %s100 = sadd.s32 %s99, 1
      %p103 = scmp.eq.s32.totalorder %s23, 1
      %p104 = scmp.ne.s32.totalorder %s99, %s101
      %p105 = scmp.eq.s32.totalorder %s23, 0
      %p106 = por %p104, %p105
      %p107 = scmp.ne.s32.totalorder %s99, %s101
      %p108 = scmp.eq.s32.totalorder %s28, 1
      %p109 = por %p107, %p108
      %p110 = scmp.ne.s32.totalorder %s101, %s102
      %p111 = scmp.eq.s32.totalorder %s28, 0
      %p112 = por %p110, %p111
      %p113 = scmp.ne.s32.totalorder %s101, %s102
      %p114 = scmp.eq.s32.totalorder %s29, 1
      %p115 = por %p113, %p114
      %p117 = scmp.ne.s32.totalorder %s102, %s116
      %p118 = scmp.eq.s32.totalorder %s29, 0
      %p119 = por %p117, %p118
      %s121 = sadd.s32 %s120, 1
      %p124 = scmp.eq.s32.totalorder %s23, 1
      %p125 = scmp.ne.s32.totalorder %s120, %s122
      %p126 = scmp.eq.s32.totalorder %s23, 0
      %p127 = por %p125, %p126
      %p128 = scmp.ne.s32.totalorder %s120, %s122
      %p129 = scmp.eq.s32.totalorder %s28, 1
      %p130 = por %p128, %p129
      %p131 = scmp.ne.s32.totalorder %s122, %s123
      %p132 = scmp.eq.s32.totalorder %s28, 0
      %p133 = por %p131, %p132
      %p134 = scmp.ne.s32.totalorder %s122, %s123
      %p135 = scmp.eq.s32.totalorder %s29, 1
      %p136 = por %p134, %p135
      %p138 = scmp.ne.s32.totalorder %s123, %s137
      %p139 = scmp.eq.s32.totalorder %s29, 0
      %p140 = por %p138, %p139
      %s142 = sadd.s32 %s141, 1
      %p145 = scmp.eq.s32.totalorder %s23, 1
      %p146 = scmp.ne.s32.totalorder %s141, %s143
      %p147 = scmp.eq.s32.totalorder %s23, 0
      %p148 = por %p146, %p147
      %p149 = scmp.ne.s32.totalorder %s141, %s143
      %p150 = scmp.eq.s32.totalorder %s28, 1
      %p151 = por %p149, %p150
      %p152 = scmp.ne.s32.totalorder %s143, %s144
      %p153 = scmp.eq.s32.totalorder %s28, 0
      %p154 = por %p152, %p153
      %p155 = scmp.ne.s32.totalorder %s143, %s144
      %p156 = scmp.eq.s32.totalorder %s29, 1
      %p157 = por %p155, %p156
      %p159 = scmp.ne.s32.totalorder %s144, %s158
      %p160 = scmp.eq.s32.totalorder %s29, 0
      %p161 = por %p159, %p160
      %s163 = sadd.s32 %s162, 1
      %p166 = scmp.eq.s32.totalorder %s23, 1
      %p167 = scmp.ne.s32.totalorder %s162, %s164
      %p168 = scmp.eq.s32.totalorder %s23, 0
      %p169 = por %p167, %p168
      %p170 = scmp.ne.s32.totalorder %s162, %s164
      %p171 = scmp.eq.s32.totalorder %s28, 1
      %p172 = por %p170, %p171
      %p173 = scmp.ne.s32.totalorder %s164, %s165
      %p174 = scmp.eq.s32.totalorder %s28, 0
      %p175 = por %p173, %p174
      %p176 = scmp.ne.s32.totalorder %s164, %s165
      %p177 = scmp.eq.s32.totalorder %s29, 1
      %p178 = por %p176, %p177
      %p180 = scmp.ne.s32.totalorder %s165, %s179
      %p181 = scmp.eq.s32.totalorder %s29, 0
      %p182 = por %p180, %p181
      %s184 = sadd.s32 %s183, 1
      %p187 = scmp.eq.s32.totalorder %s23, 1
      %p188 = scmp.ne.s32.totalorder %s183, %s185
      %p189 = scmp.eq.s32.totalorder %s23, 0
      %p190 = por %p188, %p189
      %p191 = scmp.ne.s32.totalorder %s183, %s185
      %p192 = scmp.eq.s32.totalorder %s28, 1
      %p193 = por %p191, %p192
      %p194 = scmp.ne.s32.totalorder %s185, %s186
      %p195 = scmp.eq.s32.totalorder %s28, 0
      %p196 = por %p194, %p195
      %p197 = scmp.ne.s32.totalorder %s185, %s186
      %p198 = scmp.eq.s32.totalorder %s29, 1
      %p199 = por %p197, %p198
      %p201 = scmp.ne.s32.totalorder %s186, %s200
      %p202 = scmp.eq.s32.totalorder %s29, 0
      %p203 = por %p201, %p202
      %s205 = sadd.s32 %s204, 1
      %p208 = scmp.eq.s32.totalorder %s23, 1
      %p209 = scmp.ne.s32.totalorder %s204, %s206
      %p210 = scmp.eq.s32.totalorder %s23, 0
      %p211 = por %p209, %p210
      %p212 = scmp.ne.s32.totalorder %s204, %s206
      %p213 = scmp.eq.s32.totalorder %s28, 1
      %p214 = por %p212, %p213
      %p215 = scmp.ne.s32.totalorder %s206, %s207
      %p216 = scmp.eq.s32.totalorder %s28, 0
      %p217 = por %p215, %p216
      %p218 = scmp.ne.s32.totalorder %s206, %s207
      %p219 = scmp.eq.s32.totalorder %s29, 1
      %p220 = por %p218, %p219
      %p222 = scmp.ne.s32.totalorder %s207, %s221
      %p223 = scmp.eq.s32.totalorder %s29, 0
      %p224 = por %p222, %p223
      %s225 = ssub.s32 %s23, %s30
      %p226 = scmp.eq.s32.totalorder %s225, 0
      %s228 = sadd.s32 %s227, 1
      %s229 = scalar_select %p226, %s227, %s228
      %p232 = pneg %p226
      %p233 = scmp.eq.s32.totalorder %s23, 1
      %p234 = por %p232, %p233
      %p235 = scmp.ne.s32.totalorder %s227, %s230
      %p236 = scmp.eq.s32.totalorder %s23, 0
      %p237 = por %p235, %p236
      %p238 = scmp.ne.s32.totalorder %s227, %s230
      %p239 = scmp.eq.s32.totalorder %s28, 1
      %p240 = por %p238, %p239
      %p241 = scmp.ne.s32.totalorder %s230, %s231
      %p242 = scmp.eq.s32.totalorder %s28, 0
      %p243 = por %p241, %p242
      %p244 = scmp.ne.s32.totalorder %s230, %s231
      %p245 = scmp.eq.s32.totalorder %s29, 1
      %p246 = por %p244, %p245
      %p248 = scmp.ne.s32.totalorder %s231, %s247
      %p249 = scmp.eq.s32.totalorder %s29, 0
      %p250 = por %p248, %p249
      %p251 = scmp.le.s32.totalorder 1, %s23
      %p252 = scmp.lt.s32.totalorder %s23, 3
      %p253 = pnand %p251, %p252
      %p254 = pneg %p253
      // Predicated region
      $region9: #{tpu_custom_call.1} parent=5 // pred_check
        _
      $region10: #{tpu_custom_call.1} parent=5 // pred_check_branch
        %256 = sbr.rel (%p253) target = $region12
      $region11: #{tpu_custom_call.1} parent=5 // pred_region
        %s257 = ssub.s32 %s23, 1
        // Predicated region
        $region13: #{tpu_custom_call.1} parent=11 // pred_check
          %p258 = pneg %p70
        $region14: #{tpu_custom_call.1} parent=11 // pred_check_branch
          %260 = sbr.rel (%p258) target = $region16
        $region15: #{tpu_custom_call.1} parent=11 // pred_region
          %s262 = ssub.s32 24576, 24576
          %263 = vsyncadd [#allocation6], %s262
          %s264 = sshll.u32 [#allocation5], 4
          %s265 = int_to_ptr.vmem [resolvable:$true] %s264
          %270 = dma.hbm_to_vmem [thread:$0]  %s1, 24576, %s265, [#allocation6], 256, 256, 16
        $region16: #{tpu_custom_call.1} parent=11 // pred_fallthru
          _
        // Predicated region
        $region17: #{tpu_custom_call.1} parent=11 // pred_check
          %p271 = pneg %p91
        $region18: #{tpu_custom_call.1} parent=11 // pred_check_branch
          %273 = sbr.rel (%p271) target = $region20
        $region19: #{tpu_custom_call.1} parent=11 // pred_region
          _
        $region20: #{tpu_custom_call.1} parent=11 // pred_fallthru
          _
        // Predicated region
        $region21: #{tpu_custom_call.1} parent=11 // pred_check
          %p274 = pneg %p112
        $region22: #{tpu_custom_call.1} parent=11 // pred_check_branch
          %276 = sbr.rel (%p274) target = $region24
        $region23: #{tpu_custom_call.1} parent=11 // pred_region
          %s278 = ssub.s32 8192, 8192
          %279 = vsyncadd [#allocation6], %s278
          %s280 = sshll.u32 [#allocation7], 4
          %s281 = int_to_ptr.vmem [resolvable:$true] %s280
          %286 = dma.hbm_to_vmem [thread:$0]  %s3, 8192, %s281, [#allocation6], 128, 128, 8
        $region24: #{tpu_custom_call.1} parent=11 // pred_fallthru
          _
        // Predicated region
        $region25: #{tpu_custom_call.1} parent=11 // pred_check
          %p287 = pneg %p133
        $region26: #{tpu_custom_call.1} parent=11 // pred_check_branch
          %289 = sbr.rel (%p287) target = $region28
        $region27: #{tpu_custom_call.1} parent=11 // pred_region
          _
        $region28: #{tpu_custom_call.1} parent=11 // pred_fallthru
          _
        // Predicated region
        $region29: #{tpu_custom_call.1} parent=11 // pred_check
          %p290 = pneg %p154
        $region30: #{tpu_custom_call.1} parent=11 // pred_check_branch
          %292 = sbr.rel (%p290) target = $region32
        $region31: #{tpu_custom_call.1} parent=11 // pred_region
          %s294 = ssub.s32 2048, 2048
          %295 = vsyncadd [#allocation9], %s294
          %s296 = sshll.u32 [#allocation8], 4
          %s297 = int_to_ptr.vmem [resolvable:$true] %s296
          %302 = dma.hbm_to_vmem [thread:$0]  %s5, 2048, %s297, [#allocation9], 64, 64, 4
        $region32: #{tpu_custom_call.1} parent=11 // pred_fallthru
          _
        // Predicated region
        $region33: #{tpu_custom_call.1} parent=11 // pred_check
          %p303 = pneg %p175
        $region34: #{tpu_custom_call.1} parent=11 // pred_check_branch
          %305 = sbr.rel (%p303) target = $region36
        $region35: #{tpu_custom_call.1} parent=11 // pred_region
          _
        $region36: #{tpu_custom_call.1} parent=11 // pred_fallthru
          _
        // Predicated region
        $region37: #{tpu_custom_call.1} parent=11 // pred_check
          %p306 = pneg %p196
        $region38: #{tpu_custom_call.1} parent=11 // pred_check_branch
          %308 = sbr.rel (%p306) target = $region40
        $region39: #{tpu_custom_call.1} parent=11 // pred_region
          %s310 = ssub.s32 1024, 1024
          %311 = vsyncadd [#allocation9], %s310
          %s312 = sshll.u32 [#allocation10], 4
          %s313 = int_to_ptr.vmem [resolvable:$true] %s312
          %318 = dma.hbm_to_vmem [thread:$0]  %s7, 1024, %s313, [#allocation9], 64, 64, 4
        $region40: #{tpu_custom_call.1} parent=11 // pred_fallthru
          _
        // Predicated region
        $region41: #{tpu_custom_call.1} parent=11 // pred_check
          %p319 = pneg %p217
        $region42: #{tpu_custom_call.1} parent=11 // pred_check_branch
          %321 = sbr.rel (%p319) target = $region44
        $region43: #{tpu_custom_call.1} parent=11 // pred_region
          _
        $region44: #{tpu_custom_call.1} parent=11 // pred_fallthru
          _
      $region12: #{tpu_custom_call.1} parent=5 // pred_fallthru
        _
      %p322 = scmp.lt.s32.totalorder %s23, 2
      // Predicated region
      $region45: #{tpu_custom_call.1} parent=5 // pred_check
        %p323 = pneg %p322
      $region46: #{tpu_custom_call.1} parent=5 // pred_check_branch
        %325 = sbr.rel (%p323) target = $region48
      $region47: #{tpu_custom_call.1} parent=5 // pred_region
        // Predicated region
        $region49: #{tpu_custom_call.1} parent=47 // pred_check
          %p326 = pneg %p43
        $region50: #{tpu_custom_call.1} parent=47 // pred_check_branch
          %328 = sbr.rel (%p326) target = $region52
        $region51: #{tpu_custom_call.1} parent=47 // pred_region
          %s329 = sand.u32 %s33, 1
          %s330 = scalar_lea.sflag [#allocation3], %s329
          %s331 = sand.u32 %s33, 1
          %s332 = smul.addr %s331, 384
          %s333 = scalar_lea.vmem [#allocation2], %s332
          %s334 = smul.u32 16, %s23
          %s335 = ssub.s32 25, %s334
          %p336 = scmp.lt.s32.totalorder %s335, 16
          %s337 = scalar_select %p336, %s335, 16
          %s338 = smul.u32 64, %s337
          %s339 = smul.u32 %s338, 6
          %s341 = ssub.s32 6144, %s339
          %342 = vsyncadd %s330, %s341
          %p343 = scmp.ne.s32.totalorder 0, %s339
          %s344 = smul.addr %s334, 6
          %s345 = smul.addr %s344, 64
          %s346 = scalar_lea.hbm %s0, %s345
          %s347 = smul.u32 24, %s337
          %s348 = sshll.u32 %s333, 4
          %s349 = int_to_ptr.vmem [resolvable:$true] %s348
          %s350 = sshll.u32 %s347, 4
          %354 = dma.hbm_to_vmem [thread:$0]  (%p343), %s346, %s350, %s349, %s330, 384, 384, 24
        $region52: #{tpu_custom_call.1} parent=47 // pred_fallthru
          _
      $region48: #{tpu_custom_call.1} parent=5 // pred_fallthru
        _
      %p355 = scmp.le.s32.totalorder 1, %s23
      %p356 = scmp.lt.s32.totalorder %s23, 3
      %p357 = pnand %p355, %p356
      %p358 = pneg %p357
      // Predicated region
      $region53: #{tpu_custom_call.1} parent=5 // pred_check
        _
      $region54: #{tpu_custom_call.1} parent=5 // pred_check_branch
        %360 = sbr.rel (%p357) target = $region56
      $region55: #{tpu_custom_call.1} parent=5 // pred_region
        %s361 = ssub.s32 %s23, 1
        %s362 = sand.u32 %s36, 1
        %s363 = scalar_lea.sflag [#allocation3], %s362
        %s364 = sand.u32 %s36, 1
        %s365 = smul.addr %s364, 384
        %s366 = scalar_lea.vmem [#allocation2], %s365
        // Predicated region
        $region57: #{tpu_custom_call.1} parent=55 // pred_check
          %p367 = pneg %p49
        $region58: #{tpu_custom_call.1} parent=55 // pred_check_branch
          %369 = sbr.rel (%p367) target = $region60
        $region59: #{tpu_custom_call.1} parent=55 // pred_region
          %370 = dma.done %s363, 6144
        $region60: #{tpu_custom_call.1} parent=55 // pred_fallthru
          _
        // Predicated region
        $region61: #{tpu_custom_call.1} parent=55 // pred_check
          %p371 = pneg %p70
        $region62: #{tpu_custom_call.1} parent=55 // pred_check_branch
          %373 = sbr.rel (%p371) target = $region64
        $region63: #{tpu_custom_call.1} parent=55 // pred_region
          %374 = dma.done [#allocation6], 24576
        $region64: #{tpu_custom_call.1} parent=55 // pred_fallthru
          _
        // Predicated region
        $region65: #{tpu_custom_call.1} parent=55 // pred_check
          %p375 = pneg %p112
        $region66: #{tpu_custom_call.1} parent=55 // pred_check_branch
          %377 = sbr.rel (%p375) target = $region68
        $region67: #{tpu_custom_call.1} parent=55 // pred_region
          %378 = dma.done [#allocation6], 8192
        $region68: #{tpu_custom_call.1} parent=55 // pred_fallthru
          _
        // Predicated region
        $region69: #{tpu_custom_call.1} parent=55 // pred_check
          %p379 = pneg %p154
        $region70: #{tpu_custom_call.1} parent=55 // pred_check_branch
          %381 = sbr.rel (%p379) target = $region72
        $region71: #{tpu_custom_call.1} parent=55 // pred_region
          %382 = dma.done [#allocation9], 2048
        $region72: #{tpu_custom_call.1} parent=55 // pred_fallthru
          _
        // Predicated region
        $region73: #{tpu_custom_call.1} parent=55 // pred_check
          %p383 = pneg %p196
        $region74: #{tpu_custom_call.1} parent=55 // pred_check_branch
          %385 = sbr.rel (%p383) target = $region76
        $region75: #{tpu_custom_call.1} parent=55 // pred_region
          %386 = dma.done [#allocation9], 1024
        $region76: #{tpu_custom_call.1} parent=55 // pred_fallthru
          _
        %s387 = sand.u32 %s36, 1
        %s388 = scalar_lea.sflag [#allocation3], %s387
        %s389 = sand.u32 %s36, 1
        %s390 = smul.addr %s389, 384
        %s391 = scalar_lea.vmem [#allocation2], %s390
        %p392 = pneg %p49
        %p393 = pneg %p46
        %p394 = pneg %p70
        %p395 = pneg %p67
        %p396 = pneg %p91
        %p397 = pneg %p88
        %p398 = pneg %p112
        %p399 = pneg %p109
        %p400 = pneg %p133
        %p401 = pneg %p130
        %p402 = pneg %p154
        %p403 = pneg %p151
        %p404 = pneg %p175
        %p405 = pneg %p172
        %p406 = pneg %p196
        %p407 = pneg %p193
        %p408 = pneg %p217
        %p409 = pneg %p214
        %p410 = pneg %p243
        %p411 = pneg %p240
        %s412 = sand.u32 %s230, 1
        %s413 = scalar_lea.sflag [#allocation4], %s412
        %s414 = sand.u32 %s230, 1
        %s415 = smul.addr %s414, 128
        %s416 = scalar_lea.vmem [#allocation11], %s415
        %s417 = smul.u32 16, %s28
        %s418 = ssub.s32 25, %s417
        %p419 = scmp.lt.s32.totalorder %s418, 16
        %s420 = scalar_select %p419, %s418, 16
        %s421 = smul.u32 64, %s420
        %s422 = smul.u32 %s421, 6
        %s423 = smul.u32 16, %s28
        %s424 = ssub.s32 25, %s423
        %p425 = scmp.lt.s32.totalorder %s424, 16
        %s426 = scalar_select %p425, %s424, 16
        %s427 = smul.u32 128, %s426
        %v429 = vld [vmem:[%s366] sm:$0xff]
        %v430 = vld [vmem:[%s366 + $0x8] sm:$0xff]
        %v431 = vld [vmem:[%s366 + $0x10] sm:$0xff]
        %v432 = vld [vmem:[%s366 + $0x18] sm:$0xff]
        %v433 = vld [vmem:[%s366 + $0x20] sm:$0xff]
        %v434 = vld [vmem:[%s366 + $0x28] sm:$0xff]
        %v435 = vld [vmem:[%s366 + $0x30] sm:$0xff]
        %v436 = vld [vmem:[%s366 + $0x38] sm:$0xff]
        %v437 = vld [vmem:[%s366 + $0x40] sm:$0xff]
        %v438 = vld [vmem:[%s366 + $0x48] sm:$0xff]
        %v439 = vld [vmem:[%s366 + $0x50] sm:$0xff]
        %v440 = vld [vmem:[%s366 + $0x58] sm:$0xff]
        %v441 = vld [vmem:[%s366 + $0x60] sm:$0xff]
        %v442 = vld [vmem:[%s366 + $0x68] sm:$0xff]
        %v443 = vld [vmem:[%s366 + $0x70] sm:$0xff]
        %v444 = vld [vmem:[%s366 + $0x78] sm:$0xff]
        %v445 = vld [vmem:[%s366 + $0x80] sm:$0xff]
        %v446 = vld [vmem:[%s366 + $0x88] sm:$0xff]
        %v447 = vld [vmem:[%s366 + $0x90] sm:$0xff]
        %v448 = vld [vmem:[%s366 + $0x98] sm:$0xff]
        %v449 = vld [vmem:[%s366 + $0xa0] sm:$0xff]
        %v450 = vld [vmem:[%s366 + $0xa8] sm:$0xff]
        %v451 = vld [vmem:[%s366 + $0xb0] sm:$0xff]
        %v452 = vld [vmem:[%s366 + $0xb8] sm:$0xff]
        %v453 = vld [vmem:[%s366 + $0xc0] sm:$0xff]
        %v454 = vld [vmem:[%s366 + $0xc8] sm:$0xff]
        %v455 = vld [vmem:[%s366 + $0xd0] sm:$0xff]
        %v456 = vld [vmem:[%s366 + $0xd8] sm:$0xff]
        %v457 = vld [vmem:[%s366 + $0xe0] sm:$0xff]
        %v458 = vld [vmem:[%s366 + $0xe8] sm:$0xff]
        %v459 = vld [vmem:[%s366 + $0xf0] sm:$0xff]
        %v460 = vld [vmem:[%s366 + $0xf8] sm:$0xff]
        %v461 = vld [vmem:[%s366 + $0x100] sm:$0xff]
        %v462 = vld [vmem:[%s366 + $0x108] sm:$0xff]
        %v463 = vld [vmem:[%s366 + $0x110] sm:$0xff]
        %v464 = vld [vmem:[%s366 + $0x118] sm:$0xff]
        %v465 = vld [vmem:[%s366 + $0x120] sm:$0xff]
        %v466 = vld [vmem:[%s366 + $0x128] sm:$0xff]
        %v467 = vld [vmem:[%s366 + $0x130] sm:$0xff]
        %v468 = vld [vmem:[%s366 + $0x138] sm:$0xff]
        %v469 = vld [vmem:[%s366 + $0x140] sm:$0xff]
        %v470 = vld [vmem:[%s366 + $0x148] sm:$0xff]
        %v471 = vld [vmem:[%s366 + $0x150] sm:$0xff]
        %v472 = vld [vmem:[%s366 + $0x158] sm:$0xff]
        %v473 = vld [vmem:[%s366 + $0x160] sm:$0xff]
        %v474 = vld [vmem:[%s366 + $0x168] sm:$0xff]
        %v475 = vld [vmem:[%s366 + $0x170] sm:$0xff]
        %v476 = vld [vmem:[%s366 + $0x178] sm:$0xff]
        %v477 = vld [vmem:[#allocation5] sm:$0xff]
        %v478 = vld [vmem:[#allocation5 + $0x8] sm:$0xff]
        %v479 = vld [vmem:[#allocation5 + $0x10] sm:$0xff]
        %v480 = vld [vmem:[#allocation5 + $0x18] sm:$0xff]
        %v481 = vld [vmem:[#allocation5 + $0x20] sm:$0xff]
        %v482 = vld [vmem:[#allocation5 + $0x28] sm:$0xff]
        %v483 = vld [vmem:[#allocation5 + $0x30] sm:$0xff]
        %v484 = vld [vmem:[#allocation5 + $0x38] sm:$0xff]
        %v485 = vld [vmem:[#allocation5 + $0x40] sm:$0xff]
        %v486 = vld [vmem:[#allocation5 + $0x48] sm:$0xff]
        %v487 = vld [vmem:[#allocation5 + $0x50] sm:$0xff]
        %v488 = vld [vmem:[#allocation5 + $0x58] sm:$0xff]
        %v489 = vld [vmem:[#allocation5 + $0x60] sm:$0xff]
        %v490 = vld [vmem:[#allocation5 + $0x68] sm:$0xff]
        %v491 = vld [vmem:[#allocation5 + $0x70] sm:$0xff]
        %v492 = vld [vmem:[#allocation5 + $0x78] sm:$0xff]
        %v493 = vld [vmem:[#allocation5 + $0x80] sm:$0xff]
        %v494 = vld [vmem:[#allocation5 + $0x88] sm:$0xff]
        %v495 = vld [vmem:[#allocation5 + $0x90] sm:$0xff]
        %v496 = vld [vmem:[#allocation5 + $0x98] sm:$0xff]
        %v497 = vld [vmem:[#allocation5 + $0xa0] sm:$0xff]
        %v498 = vld [vmem:[#allocation5 + $0xa8] sm:$0xff]
        %v499 = vld [vmem:[#allocation5 + $0xb0] sm:$0xff]
        %v500 = vld [vmem:[#allocation5 + $0xb8] sm:$0xff]
        %v501 = vld [vmem:[#allocation5 + $0xc0] sm:$0xff]
        %v502 = vld [vmem:[#allocation5 + $0xc8] sm:$0xff]
        %v503 = vld [vmem:[#allocation5 + $0xd0] sm:$0xff]
        %v504 = vld [vmem:[#allocation5 + $0xd8] sm:$0xff]
        %v505 = vld [vmem:[#allocation5 + $0xe0] sm:$0xff]
        %v506 = vld [vmem:[#allocation5 + $0xe8] sm:$0xff]
        %v507 = vld [vmem:[#allocation5 + $0xf0] sm:$0xff]
        %v508 = vld [vmem:[#allocation5 + $0xf8] sm:$0xff]
        %v509 = vld [vmem:[#allocation5 + $0x100] sm:$0xff]
        %v510 = vld [vmem:[#allocation5 + $0x108] sm:$0xff]
        %v511 = vld [vmem:[#allocation5 + $0x110] sm:$0xff]
        %v512 = vld [vmem:[#allocation5 + $0x118] sm:$0xff]
        %v513 = vld [vmem:[#allocation5 + $0x120] sm:$0xff]
        %v514 = vld [vmem:[#allocation5 + $0x128] sm:$0xff]
        %v515 = vld [vmem:[#allocation5 + $0x130] sm:$0xff]
        %v516 = vld [vmem:[#allocation5 + $0x138] sm:$0xff]
        %v517 = vld [vmem:[#allocation5 + $0x140] sm:$0xff]
        %v518 = vld [vmem:[#allocation5 + $0x148] sm:$0xff]
        %v519 = vld [vmem:[#allocation5 + $0x150] sm:$0xff]
        %v520 = vld [vmem:[#allocation5 + $0x158] sm:$0xff]
        %v521 = vld [vmem:[#allocation5 + $0x160] sm:$0xff]
        %v522 = vld [vmem:[#allocation5 + $0x168] sm:$0xff]
        %v523 = vld [vmem:[#allocation5 + $0x170] sm:$0xff]
        %v524 = vld [vmem:[#allocation5 + $0x178] sm:$0xff]
        %v525 = vld [vmem:[#allocation5 + $0x180] sm:$0xff]
        %v526 = vld [vmem:[#allocation5 + $0x188] sm:$0xff]
        %v527 = vld [vmem:[#allocation5 + $0x190] sm:$0xff]
        %v528 = vld [vmem:[#allocation5 + $0x198] sm:$0xff]
        %v529 = vld [vmem:[#allocation5 + $0x1a0] sm:$0xff]
        %v530 = vld [vmem:[#allocation5 + $0x1a8] sm:$0xff]
        %v531 = vld [vmem:[#allocation5 + $0x1b0] sm:$0xff]
        %v532 = vld [vmem:[#allocation5 + $0x1b8] sm:$0xff]
        %v533 = vld [vmem:[#allocation5 + $0x1c0] sm:$0xff]
        %v534 = vld [vmem:[#allocation5 + $0x1c8] sm:$0xff]
        %v535 = vld [vmem:[#allocation5 + $0x1d0] sm:$0xff]
        %v536 = vld [vmem:[#allocation5 + $0x1d8] sm:$0xff]
        %v537 = vld [vmem:[#allocation5 + $0x1e0] sm:$0xff]
        %v538 = vld [vmem:[#allocation5 + $0x1e8] sm:$0xff]
        %v539 = vld [vmem:[#allocation5 + $0x1f0] sm:$0xff]
        %v540 = vld [vmem:[#allocation5 + $0x1f8] sm:$0xff]
        %v541 = vld [vmem:[#allocation5 + $0x200] sm:$0xff]
        %v542 = vld [vmem:[#allocation5 + $0x208] sm:$0xff]
        %v543 = vld [vmem:[#allocation5 + $0x210] sm:$0xff]
        %v544 = vld [vmem:[#allocation5 + $0x218] sm:$0xff]
        %v545 = vld [vmem:[#allocation5 + $0x220] sm:$0xff]
        %v546 = vld [vmem:[#allocation5 + $0x228] sm:$0xff]
        %v547 = vld [vmem:[#allocation5 + $0x230] sm:$0xff]
        %v548 = vld [vmem:[#allocation5 + $0x238] sm:$0xff]
        %v549 = vld [vmem:[#allocation5 + $0x240] sm:$0xff]
        %v550 = vld [vmem:[#allocation5 + $0x248] sm:$0xff]
        %v551 = vld [vmem:[#allocation5 + $0x250] sm:$0xff]
        %v552 = vld [vmem:[#allocation5 + $0x258] sm:$0xff]
        %v553 = vld [vmem:[#allocation5 + $0x260] sm:$0xff]
        %v554 = vld [vmem:[#allocation5 + $0x268] sm:$0xff]
        %v555 = vld [vmem:[#allocation5 + $0x270] sm:$0xff]
        %v556 = vld [vmem:[#allocation5 + $0x278] sm:$0xff]
        %v557 = vld [vmem:[#allocation5 + $0x280] sm:$0xff]
        %v558 = vld [vmem:[#allocation5 + $0x288] sm:$0xff]
        %v559 = vld [vmem:[#allocation5 + $0x290] sm:$0xff]
        %v560 = vld [vmem:[#allocation5 + $0x298] sm:$0xff]
        %v561 = vld [vmem:[#allocation5 + $0x2a0] sm:$0xff]
        %v562 = vld [vmem:[#allocation5 + $0x2a8] sm:$0xff]
        %v563 = vld [vmem:[#allocation5 + $0x2b0] sm:$0xff]
        %v564 = vld [vmem:[#allocation5 + $0x2b8] sm:$0xff]
        %v565 = vld [vmem:[#allocation5 + $0x2c0] sm:$0xff]
        %v566 = vld [vmem:[#allocation5 + $0x2c8] sm:$0xff]
        %v567 = vld [vmem:[#allocation5 + $0x2d0] sm:$0xff]
        %v568 = vld [vmem:[#allocation5 + $0x2d8] sm:$0xff]
        %v569 = vld [vmem:[#allocation5 + $0x2e0] sm:$0xff]
        %v570 = vld [vmem:[#allocation5 + $0x2e8] sm:$0xff]
        %v571 = vld [vmem:[#allocation5 + $0x2f0] sm:$0xff]
        %v572 = vld [vmem:[#allocation5 + $0x2f8] sm:$0xff]
        %v573 = vld [vmem:[#allocation5 + $0x300] sm:$0xff]
        %v574 = vld [vmem:[#allocation5 + $0x308] sm:$0xff]
        %v575 = vld [vmem:[#allocation5 + $0x310] sm:$0xff]
        %v576 = vld [vmem:[#allocation5 + $0x318] sm:$0xff]
        %v577 = vld [vmem:[#allocation5 + $0x320] sm:$0xff]
        %v578 = vld [vmem:[#allocation5 + $0x328] sm:$0xff]
        %v579 = vld [vmem:[#allocation5 + $0x330] sm:$0xff]
        %v580 = vld [vmem:[#allocation5 + $0x338] sm:$0xff]
        %v581 = vld [vmem:[#allocation5 + $0x340] sm:$0xff]
        %v582 = vld [vmem:[#allocation5 + $0x348] sm:$0xff]
        %v583 = vld [vmem:[#allocation5 + $0x350] sm:$0xff]
        %v584 = vld [vmem:[#allocation5 + $0x358] sm:$0xff]
        %v585 = vld [vmem:[#allocation5 + $0x360] sm:$0xff]
        %v586 = vld [vmem:[#allocation5 + $0x368] sm:$0xff]
        %v587 = vld [vmem:[#allocation5 + $0x370] sm:$0xff]
        %v588 = vld [vmem:[#allocation5 + $0x378] sm:$0xff]
        %v589 = vld [vmem:[#allocation5 + $0x380] sm:$0xff]
        %v590 = vld [vmem:[#allocation5 + $0x388] sm:$0xff]
        %v591 = vld [vmem:[#allocation5 + $0x390] sm:$0xff]
        %v592 = vld [vmem:[#allocation5 + $0x398] sm:$0xff]
        %v593 = vld [vmem:[#allocation5 + $0x3a0] sm:$0xff]
        %v594 = vld [vmem:[#allocation5 + $0x3a8] sm:$0xff]
        %v595 = vld [vmem:[#allocation5 + $0x3b0] sm:$0xff]
        %v596 = vld [vmem:[#allocation5 + $0x3b8] sm:$0xff]
        %v597 = vld [vmem:[#allocation5 + $0x3c0] sm:$0xff]
        %v598 = vld [vmem:[#allocation5 + $0x3c8] sm:$0xff]
        %v599 = vld [vmem:[#allocation5 + $0x3d0] sm:$0xff]
        %v600 = vld [vmem:[#allocation5 + $0x3d8] sm:$0xff]
        %v601 = vld [vmem:[#allocation5 + $0x3e0] sm:$0xff]
        %v602 = vld [vmem:[#allocation5 + $0x3e8] sm:$0xff]
        %v603 = vld [vmem:[#allocation5 + $0x3f0] sm:$0xff]
        %v604 = vld [vmem:[#allocation5 + $0x3f8] sm:$0xff]
        %v605 = vld [vmem:[#allocation5 + $0x400] sm:$0xff]
        %v606 = vld [vmem:[#allocation5 + $0x408] sm:$0xff]
        %v607 = vld [vmem:[#allocation5 + $0x410] sm:$0xff]
        %v608 = vld [vmem:[#allocation5 + $0x418] sm:$0xff]
        %v609 = vld [vmem:[#allocation5 + $0x420] sm:$0xff]
        %v610 = vld [vmem:[#allocation5 + $0x428] sm:$0xff]
        %v611 = vld [vmem:[#allocation5 + $0x430] sm:$0xff]
        %v612 = vld [vmem:[#allocation5 + $0x438] sm:$0xff]
        %v613 = vld [vmem:[#allocation5 + $0x440] sm:$0xff]
        %v614 = vld [vmem:[#allocation5 + $0x448] sm:$0xff]
        %v615 = vld [vmem:[#allocation5 + $0x450] sm:$0xff]
        %v616 = vld [vmem:[#allocation5 + $0x458] sm:$0xff]
        %v617 = vld [vmem:[#allocation5 + $0x460] sm:$0xff]
        %v618 = vld [vmem:[#allocation5 + $0x468] sm:$0xff]
        %v619 = vld [vmem:[#allocation5 + $0x470] sm:$0xff]
        %v620 = vld [vmem:[#allocation5 + $0x478] sm:$0xff]
        %v621 = vld [vmem:[#allocation5 + $0x480] sm:$0xff]
        %v622 = vld [vmem:[#allocation5 + $0x488] sm:$0xff]
        %v623 = vld [vmem:[#allocation5 + $0x490] sm:$0xff]
        %v624 = vld [vmem:[#allocation5 + $0x498] sm:$0xff]
        %v625 = vld [vmem:[#allocation5 + $0x4a0] sm:$0xff]
        %v626 = vld [vmem:[#allocation5 + $0x4a8] sm:$0xff]
        %v627 = vld [vmem:[#allocation5 + $0x4b0] sm:$0xff]
        %v628 = vld [vmem:[#allocation5 + $0x4b8] sm:$0xff]
        %v629 = vld [vmem:[#allocation5 + $0x4c0] sm:$0xff]
        %v630 = vld [vmem:[#allocation5 + $0x4c8] sm:$0xff]
        %v631 = vld [vmem:[#allocation5 + $0x4d0] sm:$0xff]
        %v632 = vld [vmem:[#allocation5 + $0x4d8] sm:$0xff]
        %v633 = vld [vmem:[#allocation5 + $0x4e0] sm:$0xff]
        %v634 = vld [vmem:[#allocation5 + $0x4e8] sm:$0xff]
        %v635 = vld [vmem:[#allocation5 + $0x4f0] sm:$0xff]
        %v636 = vld [vmem:[#allocation5 + $0x4f8] sm:$0xff]
        %v637 = vld [vmem:[#allocation5 + $0x500] sm:$0xff]
        %v638 = vld [vmem:[#allocation5 + $0x508] sm:$0xff]
        %v639 = vld [vmem:[#allocation5 + $0x510] sm:$0xff]
        %v640 = vld [vmem:[#allocation5 + $0x518] sm:$0xff]
        %v641 = vld [vmem:[#allocation5 + $0x520] sm:$0xff]
        %v642 = vld [vmem:[#allocation5 + $0x528] sm:$0xff]
        %v643 = vld [vmem:[#allocation5 + $0x530] sm:$0xff]
        %v644 = vld [vmem:[#allocation5 + $0x538] sm:$0xff]
        %v645 = vld [vmem:[#allocation5 + $0x540] sm:$0xff]
        %v646 = vld [vmem:[#allocation5 + $0x548] sm:$0xff]
        %v647 = vld [vmem:[#allocation5 + $0x550] sm:$0xff]
        %v648 = vld [vmem:[#allocation5 + $0x558] sm:$0xff]
        %v649 = vld [vmem:[#allocation5 + $0x560] sm:$0xff]
        %v650 = vld [vmem:[#allocation5 + $0x568] sm:$0xff]
        %v651 = vld [vmem:[#allocation5 + $0x570] sm:$0xff]
        %v652 = vld [vmem:[#allocation5 + $0x578] sm:$0xff]
        %v653 = vld [vmem:[#allocation5 + $0x580] sm:$0xff]
        %v654 = vld [vmem:[#allocation5 + $0x588] sm:$0xff]
        %v655 = vld [vmem:[#allocation5 + $0x590] sm:$0xff]
        %v656 = vld [vmem:[#allocation5 + $0x598] sm:$0xff]
        %v657 = vld [vmem:[#allocation5 + $0x5a0] sm:$0xff]
        %v658 = vld [vmem:[#allocation5 + $0x5a8] sm:$0xff]
        %v659 = vld [vmem:[#allocation5 + $0x5b0] sm:$0xff]
        %v660 = vld [vmem:[#allocation5 + $0x5b8] sm:$0xff]
        %v661 = vld [vmem:[#allocation5 + $0x5c0] sm:$0xff]
        %v662 = vld [vmem:[#allocation5 + $0x5c8] sm:$0xff]
        %v663 = vld [vmem:[#allocation5 + $0x5d0] sm:$0xff]
        %v664 = vld [vmem:[#allocation5 + $0x5d8] sm:$0xff]
        %v665 = vld [vmem:[#allocation5 + $0x5e0] sm:$0xff]
        %v666 = vld [vmem:[#allocation5 + $0x5e8] sm:$0xff]
        %v667 = vld [vmem:[#allocation5 + $0x5f0] sm:$0xff]
        %v668 = vld [vmem:[#allocation5 + $0x5f8] sm:$0xff]
        %v669 = vld [vmem:[%s2] sm:$0xf]
        %v671 = vlaneseq
        %v672 = vshrl.u32 %v671, 7
        %v673 = vsub.s32 0, %v672
        %v674 = vrot.slane %v669, %v673
        %v675 = vlaneseq
        %v676 = vshrl.u32 %v675, 7
        %v677 = vsub.s32 1, %v676
        %v678 = vrot.slane %v669, %v677
        %v679 = vlaneseq
        %v680 = vshrl.u32 %v679, 7
        %v681 = vsub.s32 2, %v680
        %v682 = vrot.slane %v669, %v681
        %v683 = vlaneseq
        %v684 = vshrl.u32 %v683, 7
        %v685 = vsub.s32 3, %v684
        %v686 = vrot.slane %v669, %v685
        %v739 = vunpack.c.l.b16 %v429
        %v740 = vunpack.c.h.b16 %v429
        %v741 = vunpack.c.l.b16 %v430
        %v742 = vunpack.c.h.b16 %v430
        %v743 = vunpack.c.l.b16 %v431
        %v744 = vunpack.c.h.b16 %v431
        %v745 = vunpack.c.l.b16 %v432
        %v746 = vunpack.c.h.b16 %v432
        %v747 = vunpack.c.l.b16 %v433
        %v748 = vunpack.c.h.b16 %v433
        %v749 = vunpack.c.l.b16 %v434
        %v750 = vunpack.c.h.b16 %v434
        %v751 = vunpack.c.l.b16 %v435
        %v752 = vunpack.c.h.b16 %v435
        %v753 = vunpack.c.l.b16 %v436
        %v754 = vunpack.c.h.b16 %v436
        %v755 = vunpack.c.l.b16 %v437
        %v756 = vunpack.c.h.b16 %v437
        %v757 = vunpack.c.l.b16 %v438
        %v758 = vunpack.c.h.b16 %v438
        %v759 = vunpack.c.l.b16 %v439
        %v760 = vunpack.c.h.b16 %v439
        %v761 = vunpack.c.l.b16 %v440
        %v762 = vunpack.c.h.b16 %v440
        %v763 = vunpack.c.l.b16 %v441
        %v764 = vunpack.c.h.b16 %v441
        %v765 = vunpack.c.l.b16 %v442
        %v766 = vunpack.c.h.b16 %v442
        %v767 = vunpack.c.l.b16 %v443
        %v768 = vunpack.c.h.b16 %v443
        %v769 = vunpack.c.l.b16 %v444
        %v770 = vunpack.c.h.b16 %v444
        %v771 = vunpack.c.l.b16 %v445
        %v772 = vunpack.c.h.b16 %v445
        %v773 = vunpack.c.l.b16 %v446
        %v774 = vunpack.c.h.b16 %v446
        %v775 = vunpack.c.l.b16 %v447
        %v776 = vunpack.c.h.b16 %v447
        %v777 = vunpack.c.l.b16 %v448
        %v778 = vunpack.c.h.b16 %v448
        %v779 = vunpack.c.l.b16 %v449
        %v780 = vunpack.c.h.b16 %v449
        %v781 = vunpack.c.l.b16 %v450
        %v782 = vunpack.c.h.b16 %v450
        %v783 = vunpack.c.l.b16 %v451
        %v784 = vunpack.c.h.b16 %v451
        %v785 = vunpack.c.l.b16 %v452
        %v786 = vunpack.c.h.b16 %v452
        %v787 = vunpack.c.l.b16 %v453
        %v788 = vunpack.c.h.b16 %v453
        %v789 = vunpack.c.l.b16 %v454
        %v790 = vunpack.c.h.b16 %v454
        %v791 = vunpack.c.l.b16 %v455
        %v792 = vunpack.c.h.b16 %v455
        %v793 = vunpack.c.l.b16 %v456
        %v794 = vunpack.c.h.b16 %v456
        %v795 = vunpack.c.l.b16 %v457
        %v796 = vunpack.c.h.b16 %v457
        %v797 = vunpack.c.l.b16 %v458
        %v798 = vunpack.c.h.b16 %v458
        %v799 = vunpack.c.l.b16 %v459
        %v800 = vunpack.c.h.b16 %v459
        %v801 = vunpack.c.l.b16 %v460
        %v802 = vunpack.c.h.b16 %v460
        %v803 = vunpack.c.l.b16 %v461
        %v804 = vunpack.c.h.b16 %v461
        %v805 = vunpack.c.l.b16 %v462
        %v806 = vunpack.c.h.b16 %v462
        %v807 = vunpack.c.l.b16 %v463
        %v808 = vunpack.c.h.b16 %v463
        %v809 = vunpack.c.l.b16 %v464
        %v810 = vunpack.c.h.b16 %v464
        %v811 = vunpack.c.l.b16 %v465
        %v812 = vunpack.c.h.b16 %v465
        %v813 = vunpack.c.l.b16 %v466
        %v814 = vunpack.c.h.b16 %v466
        %v815 = vunpack.c.l.b16 %v467
        %v816 = vunpack.c.h.b16 %v467
        %v817 = vunpack.c.l.b16 %v468
        %v818 = vunpack.c.h.b16 %v468
        %v819 = vunpack.c.l.b16 %v469
        %v820 = vunpack.c.h.b16 %v469
        %v821 = vunpack.c.l.b16 %v470
        %v822 = vunpack.c.h.b16 %v470
        %v823 = vunpack.c.l.b16 %v471
        %v824 = vunpack.c.h.b16 %v471
        %v825 = vunpack.c.l.b16 %v472
        %v826 = vunpack.c.h.b16 %v472
        %v827 = vunpack.c.l.b16 %v473
        %v828 = vunpack.c.h.b16 %v473
        %v829 = vunpack.c.l.b16 %v474
        %v830 = vunpack.c.h.b16 %v474
        %v831 = vunpack.c.l.b16 %v475
        %v832 = vunpack.c.h.b16 %v475
        %v833 = vunpack.c.l.b16 %v476
        %v834 = vunpack.c.h.b16 %v476
        %v835 = vpack.c.b16 %v745, %v739
        %v836 = vpack.c.b16 %v746, %v740
        %v837 = vpack.c.b16 %v747, %v741
        %v838 = vpack.c.b16 %v748, %v742
        %v839 = vpack.c.b16 %v749, %v743
        %v840 = vpack.c.b16 %v750, %v744
        %v841 = vpack.c.b16 %v757, %v751
        %v842 = vpack.c.b16 %v758, %v752
        %v843 = vpack.c.b16 %v759, %v753
        %v844 = vpack.c.b16 %v760, %v754
        %v845 = vpack.c.b16 %v761, %v755
        %v846 = vpack.c.b16 %v762, %v756
        %v847 = vpack.c.b16 %v769, %v763
        %v848 = vpack.c.b16 %v770, %v764
        %v849 = vpack.c.b16 %v771, %v765
        %v850 = vpack.c.b16 %v772, %v766
        %v851 = vpack.c.b16 %v773, %v767
        %v852 = vpack.c.b16 %v774, %v768
        %v853 = vpack.c.b16 %v781, %v775
        %v854 = vpack.c.b16 %v782, %v776
        %v855 = vpack.c.b16 %v783, %v777
        %v856 = vpack.c.b16 %v784, %v778
        %v857 = vpack.c.b16 %v785, %v779
        %v858 = vpack.c.b16 %v786, %v780
        %v859 = vpack.c.b16 %v793, %v787
        %v860 = vpack.c.b16 %v794, %v788
        %v861 = vpack.c.b16 %v795, %v789
        %v862 = vpack.c.b16 %v796, %v790
        %v863 = vpack.c.b16 %v797, %v791
        %v864 = vpack.c.b16 %v798, %v792
        %v865 = vpack.c.b16 %v805, %v799
        %v866 = vpack.c.b16 %v806, %v800
        %v867 = vpack.c.b16 %v807, %v801
        %v868 = vpack.c.b16 %v808, %v802
        %v869 = vpack.c.b16 %v809, %v803
        %v870 = vpack.c.b16 %v810, %v804
        %v871 = vpack.c.b16 %v817, %v811
        %v872 = vpack.c.b16 %v818, %v812
        %v873 = vpack.c.b16 %v819, %v813
        %v874 = vpack.c.b16 %v820, %v814
        %v875 = vpack.c.b16 %v821, %v815
        %v876 = vpack.c.b16 %v822, %v816
        %v877 = vpack.c.b16 %v829, %v823
        %v878 = vpack.c.b16 %v830, %v824
        %v879 = vpack.c.b16 %v831, %v825
        %v880 = vpack.c.b16 %v832, %v826
        %v881 = vpack.c.b16 %v833, %v827
        %v882 = vpack.c.b16 %v834, %v828
        %v1123 = vunpack.c.l.b16 %v477
        %v1124 = vunpack.c.h.b16 %v477
        %v1125 = vunpack.c.l.b16 %v478
        %v1126 = vunpack.c.h.b16 %v478
        %v1127 = vunpack.c.l.b16 %v479
        %v1128 = vunpack.c.h.b16 %v479
        %v1129 = vunpack.c.l.b16 %v480
        %v1130 = vunpack.c.h.b16 %v480
        %v1131 = vunpack.c.l.b16 %v481
        %v1132 = vunpack.c.h.b16 %v481
        %v1133 = vunpack.c.l.b16 %v482
        %v1134 = vunpack.c.h.b16 %v482
        %v1135 = vunpack.c.l.b16 %v483
        %v1136 = vunpack.c.h.b16 %v483
        %v1137 = vunpack.c.l.b16 %v484
        %v1138 = vunpack.c.h.b16 %v484
        %v1139 = vunpack.c.l.b16 %v485
        %v1140 = vunpack.c.h.b16 %v485
        %v1141 = vunpack.c.l.b16 %v486
        %v1142 = vunpack.c.h.b16 %v486
        %v1143 = vunpack.c.l.b16 %v487
        %v1144 = vunpack.c.h.b16 %v487
        %v1145 = vunpack.c.l.b16 %v488
        %v1146 = vunpack.c.h.b16 %v488
        %v1147 = vunpack.c.l.b16 %v489
        %v1148 = vunpack.c.h.b16 %v489
        %v1149 = vunpack.c.l.b16 %v490
        %v1150 = vunpack.c.h.b16 %v490
        %v1151 = vunpack.c.l.b16 %v491
        %v1152 = vunpack.c.h.b16 %v491
        %v1153 = vunpack.c.l.b16 %v492
        %v1154 = vunpack.c.h.b16 %v492
        %v1155 = vunpack.c.l.b16 %v493
        %v1156 = vunpack.c.h.b16 %v493
        %v1157 = vunpack.c.l.b16 %v494
        %v1158 = vunpack.c.h.b16 %v494
        %v1159 = vunpack.c.l.b16 %v495
        %v1160 = vunpack.c.h.b16 %v495
        %v1161 = vunpack.c.l.b16 %v496
        %v1162 = vunpack.c.h.b16 %v496
        %v1163 = vunpack.c.l.b16 %v497
        %v1164 = vunpack.c.h.b16 %v497
        %v1165 = vunpack.c.l.b16 %v498
        %v1166 = vunpack.c.h.b16 %v498
        %v1167 = vunpack.c.l.b16 %v499
        %v1168 = vunpack.c.h.b16 %v499
        %v1169 = vunpack.c.l.b16 %v500
        %v1170 = vunpack.c.h.b16 %v500
        %v1171 = vunpack.c.l.b16 %v501
        %v1172 = vunpack.c.h.b16 %v501
        %v1173 = vunpack.c.l.b16 %v502
        %v1174 = vunpack.c.h.b16 %v502
        %v1175 = vunpack.c.l.b16 %v503
        %v1176 = vunpack.c.h.b16 %v503
        %v1177 = vunpack.c.l.b16 %v504
        %v1178 = vunpack.c.h.b16 %v504
        %v1179 = vunpack.c.l.b16 %v505
        %v1180 = vunpack.c.h.b16 %v505
        %v1181 = vunpack.c.l.b16 %v506
        %v1182 = vunpack.c.h.b16 %v506
        %v1183 = vunpack.c.l.b16 %v507
        %v1184 = vunpack.c.h.b16 %v507
        %v1185 = vunpack.c.l.b16 %v508
        %v1186 = vunpack.c.h.b16 %v508
        %v1187 = vunpack.c.l.b16 %v509
        %v1188 = vunpack.c.h.b16 %v509
        %v1189 = vunpack.c.l.b16 %v510
        %v1190 = vunpack.c.h.b16 %v510
        %v1191 = vunpack.c.l.b16 %v511
        %v1192 = vunpack.c.h.b16 %v511
        %v1193 = vunpack.c.l.b16 %v512
        %v1194 = vunpack.c.h.b16 %v512
        %v1195 = vunpack.c.l.b16 %v513
        %v1196 = vunpack.c.h.b16 %v513
        %v1197 = vunpack.c.l.b16 %v514
        %v1198 = vunpack.c.h.b16 %v514
        %v1199 = vunpack.c.l.b16 %v515
        %v1200 = vunpack.c.h.b16 %v515
        %v1201 = vunpack.c.l.b16 %v516
        %v1202 = vunpack.c.h.b16 %v516
        %v1203 = vunpack.c.l.b16 %v517
        %v1204 = vunpack.c.h.b16 %v517
        %v1205 = vunpack.c.l.b16 %v518
        %v1206 = vunpack.c.h.b16 %v518
        %v1207 = vunpack.c.l.b16 %v519
        %v1208 = vunpack.c.h.b16 %v519
        %v1209 = vunpack.c.l.b16 %v520
        %v1210 = vunpack.c.h.b16 %v520
        %v1211 = vunpack.c.l.b16 %v521
        %v1212 = vunpack.c.h.b16 %v521
        %v1213 = vunpack.c.l.b16 %v522
        %v1214 = vunpack.c.h.b16 %v522
        %v1215 = vunpack.c.l.b16 %v523
        %v1216 = vunpack.c.h.b16 %v523
        %v1217 = vunpack.c.l.b16 %v524
        %v1218 = vunpack.c.h.b16 %v524
        %v1219 = vunpack.c.l.b16 %v525
        %v1220 = vunpack.c.h.b16 %v525
        %v1221 = vunpack.c.l.b16 %v526
        %v1222 = vunpack.c.h.b16 %v526
        %v1223 = vunpack.c.l.b16 %v527
        %v1224 = vunpack.c.h.b16 %v527
        %v1225 = vunpack.c.l.b16 %v528
        %v1226 = vunpack.c.h.b16 %v528
        %v1227 = vunpack.c.l.b16 %v529
        %v1228 = vunpack.c.h.b16 %v529
        %v1229 = vunpack.c.l.b16 %v530
        %v1230 = vunpack.c.h.b16 %v530
        %v1231 = vunpack.c.l.b16 %v531
        %v1232 = vunpack.c.h.b16 %v531
        %v1233 = vunpack.c.l.b16 %v532
        %v1234 = vunpack.c.h.b16 %v532
        %v1235 = vunpack.c.l.b16 %v533
        %v1236 = vunpack.c.h.b16 %v533
        %v1237 = vunpack.c.l.b16 %v534
        %v1238 = vunpack.c.h.b16 %v534
        %v1239 = vunpack.c.l.b16 %v535
        %v1240 = vunpack.c.h.b16 %v535
        %v1241 = vunpack.c.l.b16 %v536
        %v1242 = vunpack.c.h.b16 %v536
        %v1243 = vunpack.c.l.b16 %v537
        %v1244 = vunpack.c.h.b16 %v537
        %v1245 = vunpack.c.l.b16 %v538
        %v1246 = vunpack.c.h.b16 %v538
        %v1247 = vunpack.c.l.b16 %v539
        %v1248 = vunpack.c.h.b16 %v539
        %v1249 = vunpack.c.l.b16 %v540
        %v1250 = vunpack.c.h.b16 %v540
        %v1251 = vunpack.c.l.b16 %v541
        %v1252 = vunpack.c.h.b16 %v541
        %v1253 = vunpack.c.l.b16 %v542
        %v1254 = vunpack.c.h.b16 %v542
        %v1255 = vunpack.c.l.b16 %v543
        %v1256 = vunpack.c.h.b16 %v543
        %v1257 = vunpack.c.l.b16 %v544
        %v1258 = vunpack.c.h.b16 %v544
        %v1259 = vunpack.c.l.b16 %v545
        %v1260 = vunpack.c.h.b16 %v545
        %v1261 = vunpack.c.l.b16 %v546
        %v1262 = vunpack.c.h.b16 %v546
        %v1263 = vunpack.c.l.b16 %v547
        %v1264 = vunpack.c.h.b16 %v547
        %v1265 = vunpack.c.l.b16 %v548
        %v1266 = vunpack.c.h.b16 %v548
        %v1267 = vunpack.c.l.b16 %v549
        %v1268 = vunpack.c.h.b16 %v549
        %v1269 = vunpack.c.l.b16 %v550
        %v1270 = vunpack.c.h.b16 %v550
        %v1271 = vunpack.c.l.b16 %v551
        %v1272 = vunpack.c.h.b16 %v551
        %v1273 = vunpack.c.l.b16 %v552
        %v1274 = vunpack.c.h.b16 %v552
        %v1275 = vunpack.c.l.b16 %v553
        %v1276 = vunpack.c.h.b16 %v553
        %v1277 = vunpack.c.l.b16 %v554
        %v1278 = vunpack.c.h.b16 %v554
        %v1279 = vunpack.c.l.b16 %v555
        %v1280 = vunpack.c.h.b16 %v555
        %v1281 = vunpack.c.l.b16 %v556
        %v1282 = vunpack.c.h.b16 %v556
        %v1283 = vunpack.c.l.b16 %v557
        %v1284 = vunpack.c.h.b16 %v557
        %v1285 = vunpack.c.l.b16 %v558
        %v1286 = vunpack.c.h.b16 %v558
        %v1287 = vunpack.c.l.b16 %v559
        %v1288 = vunpack.c.h.b16 %v559
        %v1289 = vunpack.c.l.b16 %v560
        %v1290 = vunpack.c.h.b16 %v560
        %v1291 = vunpack.c.l.b16 %v561
        %v1292 = vunpack.c.h.b16 %v561
        %v1293 = vunpack.c.l.b16 %v562
        %v1294 = vunpack.c.h.b16 %v562
        %v1295 = vunpack.c.l.b16 %v563
        %v1296 = vunpack.c.h.b16 %v563
        %v1297 = vunpack.c.l.b16 %v564
        %v1298 = vunpack.c.h.b16 %v564
        %v1299 = vunpack.c.l.b16 %v565
        %v1300 = vunpack.c.h.b16 %v565
        %v1301 = vunpack.c.l.b16 %v566
        %v1302 = vunpack.c.h.b16 %v566
        %v1303 = vunpack.c.l.b16 %v567
        %v1304 = vunpack.c.h.b16 %v567
        %v1305 = vunpack.c.l.b16 %v568
        %v1306 = vunpack.c.h.b16 %v568
        %v1307 = vunpack.c.l.b16 %v569
        %v1308 = vunpack.c.h.b16 %v569
        %v1309 = vunpack.c.l.b16 %v570
        %v1310 = vunpack.c.h.b16 %v570
        %v1311 = vunpack.c.l.b16 %v571
        %v1312 = vunpack.c.h.b16 %v571
        %v1313 = vunpack.c.l.b16 %v572
        %v1314 = vunpack.c.h.b16 %v572
        %v1315 = vunpack.c.l.b16 %v573
        %v1316 = vunpack.c.h.b16 %v573
        %v1317 = vunpack.c.l.b16 %v574
        %v1318 = vunpack.c.h.b16 %v574
        %v1319 = vunpack.c.l.b16 %v575
        %v1320 = vunpack.c.h.b16 %v575
        %v1321 = vunpack.c.l.b16 %v576
        %v1322 = vunpack.c.h.b16 %v576
        %v1323 = vunpack.c.l.b16 %v577
        %v1324 = vunpack.c.h.b16 %v577
        %v1325 = vunpack.c.l.b16 %v578
        %v1326 = vunpack.c.h.b16 %v578
        %v1327 = vunpack.c.l.b16 %v579
        %v1328 = vunpack.c.h.b16 %v579
        %v1329 = vunpack.c.l.b16 %v580
        %v1330 = vunpack.c.h.b16 %v580
        %v1331 = vunpack.c.l.b16 %v581
        %v1332 = vunpack.c.h.b16 %v581
        %v1333 = vunpack.c.l.b16 %v582
        %v1334 = vunpack.c.h.b16 %v582
        %v1335 = vunpack.c.l.b16 %v583
        %v1336 = vunpack.c.h.b16 %v583
        %v1337 = vunpack.c.l.b16 %v584
        %v1338 = vunpack.c.h.b16 %v584
        %v1339 = vunpack.c.l.b16 %v585
        %v1340 = vunpack.c.h.b16 %v585
        %v1341 = vunpack.c.l.b16 %v586
        %v1342 = vunpack.c.h.b16 %v586
        %v1343 = vunpack.c.l.b16 %v587
        %v1344 = vunpack.c.h.b16 %v587
        %v1345 = vunpack.c.l.b16 %v588
        %v1346 = vunpack.c.h.b16 %v588
        %v1347 = vunpack.c.l.b16 %v589
        %v1348 = vunpack.c.h.b16 %v589
        %v1349 = vunpack.c.l.b16 %v590
        %v1350 = vunpack.c.h.b16 %v590
        %v1351 = vunpack.c.l.b16 %v591
        %v1352 = vunpack.c.h.b16 %v591
        %v1353 = vunpack.c.l.b16 %v592
        %v1354 = vunpack.c.h.b16 %v592
        %v1355 = vunpack.c.l.b16 %v593
        %v1356 = vunpack.c.h.b16 %v593
        %v1357 = vunpack.c.l.b16 %v594
        %v1358 = vunpack.c.h.b16 %v594
        %v1359 = vunpack.c.l.b16 %v595
        %v1360 = vunpack.c.h.b16 %v595
        %v1361 = vunpack.c.l.b16 %v596
        %v1362 = vunpack.c.h.b16 %v596
        %v1363 = vunpack.c.l.b16 %v597
        %v1364 = vunpack.c.h.b16 %v597
        %v1365 = vunpack.c.l.b16 %v598
        %v1366 = vunpack.c.h.b16 %v598
        %v1367 = vunpack.c.l.b16 %v599
        %v1368 = vunpack.c.h.b16 %v599
        %v1369 = vunpack.c.l.b16 %v600
        %v1370 = vunpack.c.h.b16 %v600
        %v1371 = vunpack.c.l.b16 %v601
        %v1372 = vunpack.c.h.b16 %v601
        %v1373 = vunpack.c.l.b16 %v602
        %v1374 = vunpack.c.h.b16 %v602
        %v1375 = vunpack.c.l.b16 %v603
        %v1376 = vunpack.c.h.b16 %v603
        %v1377 = vunpack.c.l.b16 %v604
        %v1378 = vunpack.c.h.b16 %v604
        %v1379 = vunpack.c.l.b16 %v605
        %v1380 = vunpack.c.h.b16 %v605
        %v1381 = vunpack.c.l.b16 %v606
        %v1382 = vunpack.c.h.b16 %v606
        %v1383 = vunpack.c.l.b16 %v607
        %v1384 = vunpack.c.h.b16 %v607
        %v1385 = vunpack.c.l.b16 %v608
        %v1386 = vunpack.c.h.b16 %v608
        %v1387 = vunpack.c.l.b16 %v609
        %v1388 = vunpack.c.h.b16 %v609
        %v1389 = vunpack.c.l.b16 %v610
        %v1390 = vunpack.c.h.b16 %v610
        %v1391 = vunpack.c.l.b16 %v611
        %v1392 = vunpack.c.h.b16 %v611
        %v1393 = vunpack.c.l.b16 %v612
        %v1394 = vunpack.c.h.b16 %v612
        %v1395 = vunpack.c.l.b16 %v613
        %v1396 = vunpack.c.h.b16 %v613
        %v1397 = vunpack.c.l.b16 %v614
        %v1398 = vunpack.c.h.b16 %v614
        %v1399 = vunpack.c.l.b16 %v615
        %v1400 = vunpack.c.h.b16 %v615
        %v1401 = vunpack.c.l.b16 %v616
        %v1402 = vunpack.c.h.b16 %v616
        %v1403 = vunpack.c.l.b16 %v617
        %v1404 = vunpack.c.h.b16 %v617
        %v1405 = vunpack.c.l.b16 %v618
        %v1406 = vunpack.c.h.b16 %v618
        %v1407 = vunpack.c.l.b16 %v619
        %v1408 = vunpack.c.h.b16 %v619
        %v1409 = vunpack.c.l.b16 %v620
        %v1410 = vunpack.c.h.b16 %v620
        %v1411 = vunpack.c.l.b16 %v621
        %v1412 = vunpack.c.h.b16 %v621
        %v1413 = vunpack.c.l.b16 %v622
        %v1414 = vunpack.c.h.b16 %v622
        %v1415 = vunpack.c.l.b16 %v623
        %v1416 = vunpack.c.h.b16 %v623
        %v1417 = vunpack.c.l.b16 %v624
        %v1418 = vunpack.c.h.b16 %v624
        %v1419 = vunpack.c.l.b16 %v625
        %v1420 = vunpack.c.h.b16 %v625
        %v1421 = vunpack.c.l.b16 %v626
        %v1422 = vunpack.c.h.b16 %v626
        %v1423 = vunpack.c.l.b16 %v627
        %v1424 = vunpack.c.h.b16 %v627
        %v1425 = vunpack.c.l.b16 %v628
        %v1426 = vunpack.c.h.b16 %v628
        %v1427 = vunpack.c.l.b16 %v629
        %v1428 = vunpack.c.h.b16 %v629
        %v1429 = vunpack.c.l.b16 %v630
        %v1430 = vunpack.c.h.b16 %v630
        %v1431 = vunpack.c.l.b16 %v631
        %v1432 = vunpack.c.h.b16 %v631
        %v1433 = vunpack.c.l.b16 %v632
        %v1434 = vunpack.c.h.b16 %v632
        %v1435 = vunpack.c.l.b16 %v633
        %v1436 = vunpack.c.h.b16 %v633
        %v1437 = vunpack.c.l.b16 %v634
        %v1438 = vunpack.c.h.b16 %v634
        %v1439 = vunpack.c.l.b16 %v635
        %v1440 = vunpack.c.h.b16 %v635
        %v1441 = vunpack.c.l.b16 %v636
        %v1442 = vunpack.c.h.b16 %v636
        %v1443 = vunpack.c.l.b16 %v637
        %v1444 = vunpack.c.h.b16 %v637
        %v1445 = vunpack.c.l.b16 %v638
        %v1446 = vunpack.c.h.b16 %v638
        %v1447 = vunpack.c.l.b16 %v639
        %v1448 = vunpack.c.h.b16 %v639
        %v1449 = vunpack.c.l.b16 %v640
        %v1450 = vunpack.c.h.b16 %v640
        %v1451 = vunpack.c.l.b16 %v641
        %v1452 = vunpack.c.h.b16 %v641
        %v1453 = vunpack.c.l.b16 %v642
        %v1454 = vunpack.c.h.b16 %v642
        %v1455 = vunpack.c.l.b16 %v643
        %v1456 = vunpack.c.h.b16 %v643
        %v1457 = vunpack.c.l.b16 %v644
        %v1458 = vunpack.c.h.b16 %v644
        %v1459 = vunpack.c.l.b16 %v645
        %v1460 = vunpack.c.h.b16 %v645
        %v1461 = vunpack.c.l.b16 %v646
        %v1462 = vunpack.c.h.b16 %v646
        %v1463 = vunpack.c.l.b16 %v647
        %v1464 = vunpack.c.h.b16 %v647
        %v1465 = vunpack.c.l.b16 %v648
        %v1466 = vunpack.c.h.b16 %v648
        %v1467 = vunpack.c.l.b16 %v649
        %v1468 = vunpack.c.h.b16 %v649
        %v1469 = vunpack.c.l.b16 %v650
        %v1470 = vunpack.c.h.b16 %v650
        %v1471 = vunpack.c.l.b16 %v651
        %v1472 = vunpack.c.h.b16 %v651
        %v1473 = vunpack.c.l.b16 %v652
        %v1474 = vunpack.c.h.b16 %v652
        %v1475 = vunpack.c.l.b16 %v653
        %v1476 = vunpack.c.h.b16 %v653
        %v1477 = vunpack.c.l.b16 %v654
        %v1478 = vunpack.c.h.b16 %v654
        %v1479 = vunpack.c.l.b16 %v655
        %v1480 = vunpack.c.h.b16 %v655
        %v1481 = vunpack.c.l.b16 %v656
        %v1482 = vunpack.c.h.b16 %v656
        %v1483 = vunpack.c.l.b16 %v657
        %v1484 = vunpack.c.h.b16 %v657
        %v1485 = vunpack.c.l.b16 %v658
        %v1486 = vunpack.c.h.b16 %v658
        %v1487 = vunpack.c.l.b16 %v659
        %v1488 = vunpack.c.h.b16 %v659
        %v1489 = vunpack.c.l.b16 %v660
        %v1490 = vunpack.c.h.b16 %v660
        %v1491 = vunpack.c.l.b16 %v661
        %v1492 = vunpack.c.h.b16 %v661
        %v1493 = vunpack.c.l.b16 %v662
        %v1494 = vunpack.c.h.b16 %v662
        %v1495 = vunpack.c.l.b16 %v663
        %v1496 = vunpack.c.h.b16 %v663
        %v1497 = vunpack.c.l.b16 %v664
        %v1498 = vunpack.c.h.b16 %v664
        %v1499 = vunpack.c.l.b16 %v665
        %v1500 = vunpack.c.h.b16 %v665
        %v1501 = vunpack.c.l.b16 %v666
        %v1502 = vunpack.c.h.b16 %v666
        %v1503 = vunpack.c.l.b16 %v667
        %v1504 = vunpack.c.h.b16 %v667
        %v1505 = vunpack.c.l.b16 %v668
        %v1506 = vunpack.c.h.b16 %v668
        %v1507 = vpack.c.b16 %v1127, %v1123
        %v1508 = vpack.c.b16 %v1128, %v1124
        %v1509 = vpack.c.b16 %v1129, %v1125
        %v1510 = vpack.c.b16 %v1130, %v1126
        %v1511 = vpack.c.b16 %v1135, %v1131
        %v1512 = vpack.c.b16 %v1136, %v1132
        %v1513 = vpack.c.b16 %v1137, %v1133
        %v1514 = vpack.c.b16 %v1138, %v1134
        %v1515 = vpack.c.b16 %v1143, %v1139
        %v1516 = vpack.c.b16 %v1144, %v1140
        %v1517 = vpack.c.b16 %v1145, %v1141
        %v1518 = vpack.c.b16 %v1146, %v1142
        %v1519 = vpack.c.b16 %v1151, %v1147
        %v1520 = vpack.c.b16 %v1152, %v1148
        %v1521 = vpack.c.b16 %v1153, %v1149
        %v1522 = vpack.c.b16 %v1154, %v1150
        %v1523 = vpack.c.b16 %v1159, %v1155
        %v1524 = vpack.c.b16 %v1160, %v1156
        %v1525 = vpack.c.b16 %v1161, %v1157
        %v1526 = vpack.c.b16 %v1162, %v1158
        %v1527 = vpack.c.b16 %v1167, %v1163
        %v1528 = vpack.c.b16 %v1168, %v1164
        %v1529 = vpack.c.b16 %v1169, %v1165
        %v1530 = vpack.c.b16 %v1170, %v1166
        %v1531 = vpack.c.b16 %v1175, %v1171
        %v1532 = vpack.c.b16 %v1176, %v1172
        %v1533 = vpack.c.b16 %v1177, %v1173
        %v1534 = vpack.c.b16 %v1178, %v1174
        %v1535 = vpack.c.b16 %v1183, %v1179
        %v1536 = vpack.c.b16 %v1184, %v1180
        %v1537 = vpack.c.b16 %v1185, %v1181
        %v1538 = vpack.c.b16 %v1186, %v1182
        %v1539 = vpack.c.b16 %v1191, %v1187
        %v1540 = vpack.c.b16 %v1192, %v1188
        %v1541 = vpack.c.b16 %v1193, %v1189
        %v1542 = vpack.c.b16 %v1194, %v1190
        %v1543 = vpack.c.b16 %v1199, %v1195
        %v1544 = vpack.c.b16 %v1200, %v1196
        %v1545 = vpack.c.b16 %v1201, %v1197
        %v1546 = vpack.c.b16 %v1202, %v1198
        %v1547 = vpack.c.b16 %v1207, %v1203
        %v1548 = vpack.c.b16 %v1208, %v1204
        %v1549 = vpack.c.b16 %v1209, %v1205
        %v1550 = vpack.c.b16 %v1210, %v1206
        %v1551 = vpack.c.b16 %v1215, %v1211
        %v1552 = vpack.c.b16 %v1216, %v1212
        %v1553 = vpack.c.b16 %v1217, %v1213
        %v1554 = vpack.c.b16 %v1218, %v1214
        %v1555 = vpack.c.b16 %v1223, %v1219
        %v1556 = vpack.c.b16 %v1224, %v1220
        %v1557 = vpack.c.b16 %v1225, %v1221
        %v1558 = vpack.c.b16 %v1226, %v1222
        %v1559 = vpack.c.b16 %v1231, %v1227
        %v1560 = vpack.c.b16 %v1232, %v1228
        %v1561 = vpack.c.b16 %v1233, %v1229
        %v1562 = vpack.c.b16 %v1234, %v1230
        %v1563 = vpack.c.b16 %v1239, %v1235
        %v1564 = vpack.c.b16 %v1240, %v1236
        %v1565 = vpack.c.b16 %v1241, %v1237
        %v1566 = vpack.c.b16 %v1242, %v1238
        %v1567 = vpack.c.b16 %v1247, %v1243
        %v1568 = vpack.c.b16 %v1248, %v1244
        %v1569 = vpack.c.b16 %v1249, %v1245
        %v1570 = vpack.c.b16 %v1250, %v1246
        %v1571 = vpack.c.b16 %v1255, %v1251
        %v1572 = vpack.c.b16 %v1256, %v1252
        %v1573 = vpack.c.b16 %v1257, %v1253
        %v1574 = vpack.c.b16 %v1258, %v1254
        %v1575 = vpack.c.b16 %v1263, %v1259
        %v1576 = vpack.c.b16 %v1264, %v1260
        %v1577 = vpack.c.b16 %v1265, %v1261
        %v1578 = vpack.c.b16 %v1266, %v1262
        %v1579 = vpack.c.b16 %v1271, %v1267
        %v1580 = vpack.c.b16 %v1272, %v1268
        %v1581 = vpack.c.b16 %v1273, %v1269
        %v1582 = vpack.c.b16 %v1274, %v1270
        %v1583 = vpack.c.b16 %v1279, %v1275
        %v1584 = vpack.c.b16 %v1280, %v1276
        %v1585 = vpack.c.b16 %v1281, %v1277
        %v1586 = vpack.c.b16 %v1282, %v1278
        %v1587 = vpack.c.b16 %v1287, %v1283
        %v1588 = vpack.c.b16 %v1288, %v1284
        %v1589 = vpack.c.b16 %v1289, %v1285
        %v1590 = vpack.c.b16 %v1290, %v1286
        %v1591 = vpack.c.b16 %v1295, %v1291
        %v1592 = vpack.c.b16 %v1296, %v1292
        %v1593 = vpack.c.b16 %v1297, %v1293
        %v1594 = vpack.c.b16 %v1298, %v1294
        %v1595 = vpack.c.b16 %v1303, %v1299
        %v1596 = vpack.c.b16 %v1304, %v1300
        %v1597 = vpack.c.b16 %v1305, %v1301
        %v1598 = vpack.c.b16 %v1306, %v1302
        %v1599 = vpack.c.b16 %v1311, %v1307
        %v1600 = vpack.c.b16 %v1312, %v1308
        %v1601 = vpack.c.b16 %v1313, %v1309
        %v1602 = vpack.c.b16 %v1314, %v1310
        %v1603 = vpack.c.b16 %v1319, %v1315
        %v1604 = vpack.c.b16 %v1320, %v1316
        %v1605 = vpack.c.b16 %v1321, %v1317
        %v1606 = vpack.c.b16 %v1322, %v1318
        %v1607 = vpack.c.b16 %v1327, %v1323
        %v1608 = vpack.c.b16 %v1328, %v1324
        %v1609 = vpack.c.b16 %v1329, %v1325
        %v1610 = vpack.c.b16 %v1330, %v1326
        %v1611 = vpack.c.b16 %v1335, %v1331
        %v1612 = vpack.c.b16 %v1336, %v1332
        %v1613 = vpack.c.b16 %v1337, %v1333
        %v1614 = vpack.c.b16 %v1338, %v1334
        %v1615 = vpack.c.b16 %v1343, %v1339
        %v1616 = vpack.c.b16 %v1344, %v1340
        %v1617 = vpack.c.b16 %v1345, %v1341
        %v1618 = vpack.c.b16 %v1346, %v1342
        %v1619 = vpack.c.b16 %v1351, %v1347
        %v1620 = vpack.c.b16 %v1352, %v1348
        %v1621 = vpack.c.b16 %v1353, %v1349
        %v1622 = vpack.c.b16 %v1354, %v1350
        %v1623 = vpack.c.b16 %v1359, %v1355
        %v1624 = vpack.c.b16 %v1360, %v1356
        %v1625 = vpack.c.b16 %v1361, %v1357
        %v1626 = vpack.c.b16 %v1362, %v1358
        %v1627 = vpack.c.b16 %v1367, %v1363
        %v1628 = vpack.c.b16 %v1368, %v1364
        %v1629 = vpack.c.b16 %v1369, %v1365
        %v1630 = vpack.c.b16 %v1370, %v1366
        %v1631 = vpack.c.b16 %v1375, %v1371
        %v1632 = vpack.c.b16 %v1376, %v1372
        %v1633 = vpack.c.b16 %v1377, %v1373
        %v1634 = vpack.c.b16 %v1378, %v1374
        %v1635 = vpack.c.b16 %v1383, %v1379
        %v1636 = vpack.c.b16 %v1384, %v1380
        %v1637 = vpack.c.b16 %v1385, %v1381
        %v1638 = vpack.c.b16 %v1386, %v1382
        %v1639 = vpack.c.b16 %v1391, %v1387
        %v1640 = vpack.c.b16 %v1392, %v1388
        %v1641 = vpack.c.b16 %v1393, %v1389
        %v1642 = vpack.c.b16 %v1394, %v1390
        %v1643 = vpack.c.b16 %v1399, %v1395
        %v1644 = vpack.c.b16 %v1400, %v1396
        %v1645 = vpack.c.b16 %v1401, %v1397
        %v1646 = vpack.c.b16 %v1402, %v1398
        %v1647 = vpack.c.b16 %v1407, %v1403
        %v1648 = vpack.c.b16 %v1408, %v1404
        %v1649 = vpack.c.b16 %v1409, %v1405
        %v1650 = vpack.c.b16 %v1410, %v1406
        %v1651 = vpack.c.b16 %v1415, %v1411
        %v1652 = vpack.c.b16 %v1416, %v1412
        %v1653 = vpack.c.b16 %v1417, %v1413
        %v1654 = vpack.c.b16 %v1418, %v1414
        %v1655 = vpack.c.b16 %v1423, %v1419
        %v1656 = vpack.c.b16 %v1424, %v1420
        %v1657 = vpack.c.b16 %v1425, %v1421
        %v1658 = vpack.c.b16 %v1426, %v1422
        %v1659 = vpack.c.b16 %v1431, %v1427
        %v1660 = vpack.c.b16 %v1432, %v1428
        %v1661 = vpack.c.b16 %v1433, %v1429
        %v1662 = vpack.c.b16 %v1434, %v1430
        %v1663 = vpack.c.b16 %v1439, %v1435
        %v1664 = vpack.c.b16 %v1440, %v1436
        %v1665 = vpack.c.b16 %v1441, %v1437
        %v1666 = vpack.c.b16 %v1442, %v1438
        %v1667 = vpack.c.b16 %v1447, %v1443
        %v1668 = vpack.c.b16 %v1448, %v1444
        %v1669 = vpack.c.b16 %v1449, %v1445
        %v1670 = vpack.c.b16 %v1450, %v1446
        %v1671 = vpack.c.b16 %v1455, %v1451
        %v1672 = vpack.c.b16 %v1456, %v1452
        %v1673 = vpack.c.b16 %v1457, %v1453
        %v1674 = vpack.c.b16 %v1458, %v1454
        %v1675 = vpack.c.b16 %v1463, %v1459
        %v1676 = vpack.c.b16 %v1464, %v1460
        %v1677 = vpack.c.b16 %v1465, %v1461
        %v1678 = vpack.c.b16 %v1466, %v1462
        %v1679 = vpack.c.b16 %v1471, %v1467
        %v1680 = vpack.c.b16 %v1472, %v1468
        %v1681 = vpack.c.b16 %v1473, %v1469
        %v1682 = vpack.c.b16 %v1474, %v1470
        %v1683 = vpack.c.b16 %v1479, %v1475
        %v1684 = vpack.c.b16 %v1480, %v1476
        %v1685 = vpack.c.b16 %v1481, %v1477
        %v1686 = vpack.c.b16 %v1482, %v1478
        %v1687 = vpack.c.b16 %v1487, %v1483
        %v1688 = vpack.c.b16 %v1488, %v1484
        %v1689 = vpack.c.b16 %v1489, %v1485
        %v1690 = vpack.c.b16 %v1490, %v1486
        %v1691 = vpack.c.b16 %v1495, %v1491
        %v1692 = vpack.c.b16 %v1496, %v1492
        %v1693 = vpack.c.b16 %v1497, %v1493
        %v1694 = vpack.c.b16 %v1498, %v1494
        %v1695 = vpack.c.b16 %v1503, %v1499
        %v1696 = vpack.c.b16 %v1504, %v1500
        %v1697 = vpack.c.b16 %v1505, %v1501
        %v1698 = vpack.c.b16 %v1506, %v1502
        %1891 = vmatprep.subr.bf16.mxu0 %v1508
        %1892 = vmatpush1.bf16.msra.mxu0 %v1507
        %1893 = vmatprep.subr.bf16.mxu0 %v1512
        %1894 = vmatpush1.bf16.msra.mxu0 %v1511
        %1895 = vmatprep.subr.bf16.mxu0 %v1516
        %1896 = vmatpush1.bf16.msra.mxu0 %v1515
        %1897 = vmatprep.subr.bf16.mxu0 %v1520
        %1898 = vmatpush1.bf16.msra.mxu0 %v1519
        %1899 = vmatprep.subr.bf16.mxu0 %v1524
        %1900 = vmatpush1.bf16.msra.mxu0 %v1523
        %1901 = vmatprep.subr.bf16.mxu0 %v1528
        %1902 = vmatpush1.bf16.msra.mxu0 %v1527
        %1903 = vmatprep.subr.bf16.mxu0 %v1532
        %1904 = vmatpush1.bf16.msra.mxu0 %v1531
        %1905 = vmatprep.subr.bf16.mxu0 %v1536
        %1906 = vmatpush1.bf16.msra.mxu0 %v1535
        %1907 = vmatprep.subr.bf16.mxu0 %v1540
        %1908 = vmatpush1.bf16.msra.mxu0 %v1539
        %1909 = vmatprep.subr.bf16.mxu0 %v1544
        %1910 = vmatpush1.bf16.msra.mxu0 %v1543
        %1911 = vmatprep.subr.bf16.mxu0 %v1548
        %1912 = vmatpush1.bf16.msra.mxu0 %v1547
        %1913 = vmatprep.subr.bf16.mxu0 %v1552
        %1914 = vmatpush1.bf16.msra.mxu0 %v1551
        %1915 = vmatprep.subr.bf16.mxu0 %v1556
        %1916 = vmatpush1.bf16.msra.mxu0 %v1555
        %1917 = vmatprep.subr.bf16.mxu0 %v1560
        %1918 = vmatpush1.bf16.msra.mxu0 %v1559
        %1919 = vmatprep.subr.bf16.mxu0 %v1564
        %1920 = vmatpush1.bf16.msra.mxu0 %v1563
        %1921 = vmatprep.subr.bf16.mxu0 %v1568
        %1922 = vmatpush1.bf16.msra.mxu0 %v1567
        %1923 = vmatprep.mubr.bf16.mxu0 %v836
        %1924 = vmatmul.mubr.bf16.gmra.mrb[0].mxu0 %v835
        %v1925 = vpop.f32.mrb[0].mxu0
        %v1926 = vadd.f32 %v674, %v1925
        %v1927 = vpop.f32.mrb[0].mxu0
        %v1928 = vadd.f32 %v678, %v1927
        %v1929 = vpop.f32.mrb[0].mxu0
        %v1930 = vadd.f32 %v674, %v1929
        %v1931 = vpop.f32.mrb[0].mxu0
        %v1932 = vadd.f32 %v678, %v1931
        %1933 = vmatprep.mubr.bf16.mxu0 %v842
        %1934 = vmatmul.mubr.bf16.gmra.mrb[0].mxu0 %v841
        %v1935 = vpop.f32.mrb[0].mxu0
        %v1936 = vadd.f32 %v674, %v1935
        %v1937 = vpop.f32.mrb[0].mxu0
        %v1938 = vadd.f32 %v678, %v1937
        %v1939 = vpop.f32.mrb[0].mxu0
        %v1940 = vadd.f32 %v674, %v1939
        %v1941 = vpop.f32.mrb[0].mxu0
        %v1942 = vadd.f32 %v678, %v1941
        %1943 = vmatprep.mubr.bf16.mxu0 %v848
        %1944 = vmatmul.mubr.bf16.gmra.mrb[0].mxu0 %v847
        %v1945 = vpop.f32.mrb[0].mxu0
        %v1946 = vadd.f32 %v674, %v1945
        %v1947 = vpop.f32.mrb[0].mxu0
        %v1948 = vadd.f32 %v678, %v1947
        %v1949 = vpop.f32.mrb[0].mxu0
        %v1950 = vadd.f32 %v674, %v1949
        %v1951 = vpop.f32.mrb[0].mxu0
        %v1952 = vadd.f32 %v678, %v1951
        %1953 = vmatprep.mubr.bf16.mxu0 %v854
        %1954 = vmatmul.mubr.bf16.gmra.mrb[0].mxu0 %v853
        %v1955 = vpop.f32.mrb[0].mxu0
        %v1956 = vadd.f32 %v674, %v1955
        %v1957 = vpop.f32.mrb[0].mxu0
        %v1958 = vadd.f32 %v678, %v1957
        %v1959 = vpop.f32.mrb[0].mxu0
        %v1960 = vadd.f32 %v674, %v1959
        %v1961 = vpop.f32.mrb[0].mxu0
        %v1962 = vadd.f32 %v678, %v1961
        %1963 = vmatprep.mubr.bf16.mxu0 %v860
        %1964 = vmatmul.mubr.bf16.gmra.mrb[0].mxu0 %v859
        %v1965 = vpop.f32.mrb[0].mxu0
        %v1966 = vadd.f32 %v674, %v1965
        %v1967 = vpop.f32.mrb[0].mxu0
        %v1968 = vadd.f32 %v678, %v1967
        %v1969 = vpop.f32.mrb[0].mxu0
        %v1970 = vadd.f32 %v674, %v1969
        %v1971 = vpop.f32.mrb[0].mxu0
        %v1972 = vadd.f32 %v678, %v1971
        %1973 = vmatprep.mubr.bf16.mxu0 %v866
        %1974 = vmatmul.mubr.bf16.gmra.mrb[0].mxu0 %v865
        %v1975 = vpop.f32.mrb[0].mxu0
        %v1976 = vadd.f32 %v674, %v1975
        %v1977 = vpop.f32.mrb[0].mxu0
        %v1978 = vadd.f32 %v678, %v1977
        %v1979 = vpop.f32.mrb[0].mxu0
        %v1980 = vadd.f32 %v674, %v1979
        %v1981 = vpop.f32.mrb[0].mxu0
        %v1982 = vadd.f32 %v678, %v1981
        %1983 = vmatprep.mubr.bf16.mxu0 %v872
        %1984 = vmatmul.mubr.bf16.gmra.mrb[0].mxu0 %v871
        %v1985 = vpop.f32.mrb[0].mxu0
        %v1986 = vadd.f32 %v674, %v1985
        %v1987 = vpop.f32.mrb[0].mxu0
        %v1988 = vadd.f32 %v678, %v1987
        %v1989 = vpop.f32.mrb[0].mxu0
        %v1990 = vadd.f32 %v674, %v1989
        %v1991 = vpop.f32.mrb[0].mxu0
        %v1992 = vadd.f32 %v678, %v1991
        %1993 = vmatprep.mubr.bf16.mxu0 %v878
        %1994 = vmatmul.mubr.bf16.gmra.mrb[0].mxu0 %v877
        %v1995 = vpop.f32.mrb[0].mxu0
        %v1996 = vadd.f32 %v674, %v1995
        %v1997 = vpop.f32.mrb[0].mxu0
        %v1998 = vadd.f32 %v678, %v1997
        %v1999 = vpop.f32.mrb[0].mxu0
        %v2000 = vadd.f32 %v674, %v1999
        %v2001 = vpop.f32.mrb[0].mxu0
        %v2002 = vadd.f32 %v678, %v2001
        %2003 = vdwg.mxu0
        %2004 = vmatprep.subr.bf16.mxu0 %v1572
        %2005 = vmatpush1.bf16.msra.mxu0 %v1571
        %2006 = vmatprep.subr.bf16.mxu0 %v1576
        %2007 = vmatpush1.bf16.msra.mxu0 %v1575
        %2008 = vmatprep.subr.bf16.mxu0 %v1580
        %2009 = vmatpush1.bf16.msra.mxu0 %v1579
        %2010 = vmatprep.subr.bf16.mxu0 %v1584
        %2011 = vmatpush1.bf16.msra.mxu0 %v1583
        %2012 = vmatprep.subr.bf16.mxu0 %v1588
        %2013 = vmatpush1.bf16.msra.mxu0 %v1587
        %2014 = vmatprep.subr.bf16.mxu0 %v1592
        %2015 = vmatpush1.bf16.msra.mxu0 %v1591
        %2016 = vmatprep.subr.bf16.mxu0 %v1596
        %2017 = vmatpush1.bf16.msra.mxu0 %v1595
        %2018 = vmatprep.subr.bf16.mxu0 %v1600
        %2019 = vmatpush1.bf16.msra.mxu0 %v1599
        %2020 = vmatprep.subr.bf16.mxu0 %v1604
        %2021 = vmatpush1.bf16.msra.mxu0 %v1603
        %2022 = vmatprep.subr.bf16.mxu0 %v1608
        %2023 = vmatpush1.bf16.msra.mxu0 %v1607
        %2024 = vmatprep.subr.bf16.mxu0 %v1612
        %2025 = vmatpush1.bf16.msra.mxu0 %v1611
        %2026 = vmatprep.subr.bf16.mxu0 %v1616
        %2027 = vmatpush1.bf16.msra.mxu0 %v1615
        %2028 = vmatprep.subr.bf16.mxu0 %v1620
        %2029 = vmatpush1.bf16.msra.mxu0 %v1619
        %2030 = vmatprep.subr.bf16.mxu0 %v1624
        %2031 = vmatpush1.bf16.msra.mxu0 %v1623
        %2032 = vmatprep.subr.bf16.mxu0 %v1628
        %2033 = vmatpush1.bf16.msra.mxu0 %v1627
        %2034 = vmatprep.subr.bf16.mxu0 %v1632
        %2035 = vmatpush1.bf16.msra.mxu0 %v1631
        %2036 = vmatprep.mubr.bf16.mxu0 %v838
        %2037 = vmatmul.mubr.bf16.gmra.mrb[0].mxu0 %v837
        %v2038 = vpop.f32.mrb[0].mxu0
        %v2039 = vadd.f32 %v1926, %v2038
        %v2040 = vpop.f32.mrb[0].mxu0
        %v2041 = vadd.f32 %v1928, %v2040
        %v2042 = vpop.f32.mrb[0].mxu0
        %v2043 = vadd.f32 %v1930, %v2042
        %v2044 = vpop.f32.mrb[0].mxu0
        %v2045 = vadd.f32 %v1932, %v2044
        %2046 = vmatprep.mubr.bf16.mxu0 %v844
        %2047 = vmatmul.mubr.bf16.gmra.mrb[0].mxu0 %v843
        %v2048 = vpop.f32.mrb[0].mxu0
        %v2049 = vadd.f32 %v1936, %v2048
        %v2050 = vpop.f32.mrb[0].mxu0
        %v2051 = vadd.f32 %v1938, %v2050
        %v2052 = vpop.f32.mrb[0].mxu0
        %v2053 = vadd.f32 %v1940, %v2052
        %v2054 = vpop.f32.mrb[0].mxu0
        %v2055 = vadd.f32 %v1942, %v2054
        %2056 = vmatprep.mubr.bf16.mxu0 %v850
        %2057 = vmatmul.mubr.bf16.gmra.mrb[0].mxu0 %v849
        %v2058 = vpop.f32.mrb[0].mxu0
        %v2059 = vadd.f32 %v1946, %v2058
        %v2060 = vpop.f32.mrb[0].mxu0
        %v2061 = vadd.f32 %v1948, %v2060
        %v2062 = vpop.f32.mrb[0].mxu0
        %v2063 = vadd.f32 %v1950, %v2062
        %v2064 = vpop.f32.mrb[0].mxu0
        %v2065 = vadd.f32 %v1952, %v2064
        %2066 = vmatprep.mubr.bf16.mxu0 %v856
        %2067 = vmatmul.mubr.bf16.gmra.mrb[0].mxu0 %v855
        %v2068 = vpop.f32.mrb[0].mxu0
        %v2069 = vadd.f32 %v1956, %v2068
        %v2070 = vpop.f32.mrb[0].mxu0
        %v2071 = vadd.f32 %v1958, %v2070
        %v2072 = vpop.f32.mrb[0].mxu0
        %v2073 = vadd.f32 %v1960, %v2072
        %v2074 = vpop.f32.mrb[0].mxu0
        %v2075 = vadd.f32 %v1962, %v2074
        %2076 = vmatprep.mubr.bf16.mxu0 %v862
        %2077 = vmatmul.mubr.bf16.gmra.mrb[0].mxu0 %v861
        %v2078 = vpop.f32.mrb[0].mxu0
        %v2079 = vadd.f32 %v1966, %v2078
        %v2080 = vpop.f32.mrb[0].mxu0
        %v2081 = vadd.f32 %v1968, %v2080
        %v2082 = vpop.f32.mrb[0].mxu0
        %v2083 = vadd.f32 %v1970, %v2082
        %v2084 = vpop.f32.mrb[0].mxu0
        %v2085 = vadd.f32 %v1972, %v2084
        %2086 = vmatprep.mubr.bf16.mxu0 %v868
        %2087 = vmatmul.mubr.bf16.gmra.mrb[0].mxu0 %v867
        %v2088 = vpop.f32.mrb[0].mxu0
        %v2089 = vadd.f32 %v1976, %v2088
        %v2090 = vpop.f32.mrb[0].mxu0
        %v2091 = vadd.f32 %v1978, %v2090
        %v2092 = vpop.f32.mrb[0].mxu0
        %v2093 = vadd.f32 %v1980, %v2092
        %v2094 = vpop.f32.mrb[0].mxu0
        %v2095 = vadd.f32 %v1982, %v2094
        %2096 = vmatprep.mubr.bf16.mxu0 %v874
        %2097 = vmatmul.mubr.bf16.gmra.mrb[0].mxu0 %v873
        %v2098 = vpop.f32.mrb[0].mxu0
        %v2099 = vadd.f32 %v1986, %v2098
        %v2100 = vpop.f32.mrb[0].mxu0
        %v2101 = vadd.f32 %v1988, %v2100
        %v2102 = vpop.f32.mrb[0].mxu0
        %v2103 = vadd.f32 %v1990, %v2102
        %v2104 = vpop.f32.mrb[0].mxu0
        %v2105 = vadd.f32 %v1992, %v2104
        %2106 = vmatprep.mubr.bf16.mxu0 %v880
        %2107 = vmatmul.mubr.bf16.gmra.mrb[0].mxu0 %v879
        %v2108 = vpop.f32.mrb[0].mxu0
        %v2109 = vadd.f32 %v1996, %v2108
        %v2110 = vpop.f32.mrb[0].mxu0
        %v2111 = vadd.f32 %v1998, %v2110
        %v2112 = vpop.f32.mrb[0].mxu0
        %v2113 = vadd.f32 %v2000, %v2112
        %v2114 = vpop.f32.mrb[0].mxu0
        %v2115 = vadd.f32 %v2002, %v2114
        %2116 = vdwg.mxu0
        %2117 = vmatprep.subr.bf16.mxu0 %v1636
        %2118 = vmatpush1.bf16.msra.mxu0 %v1635
        %2119 = vmatprep.subr.bf16.mxu0 %v1640
        %2120 = vmatpush1.bf16.msra.mxu0 %v1639
        %2121 = vmatprep.subr.bf16.mxu0 %v1644
        %2122 = vmatpush1.bf16.msra.mxu0 %v1643
        %2123 = vmatprep.subr.bf16.mxu0 %v1648
        %2124 = vmatpush1.bf16.msra.mxu0 %v1647
        %2125 = vmatprep.subr.bf16.mxu0 %v1652
        %2126 = vmatpush1.bf16.msra.mxu0 %v1651
        %2127 = vmatprep.subr.bf16.mxu0 %v1656
        %2128 = vmatpush1.bf16.msra.mxu0 %v1655
        %2129 = vmatprep.subr.bf16.mxu0 %v1660
        %2130 = vmatpush1.bf16.msra.mxu0 %v1659
        %2131 = vmatprep.subr.bf16.mxu0 %v1664
        %2132 = vmatpush1.bf16.msra.mxu0 %v1663
        %2133 = vmatprep.subr.bf16.mxu0 %v1668
        %2134 = vmatpush1.bf16.msra.mxu0 %v1667
        %2135 = vmatprep.subr.bf16.mxu0 %v1672
        %2136 = vmatpush1.bf16.msra.mxu0 %v1671
        %2137 = vmatprep.subr.bf16.mxu0 %v1676
        %2138 = vmatpush1.bf16.msra.mxu0 %v1675
        %2139 = vmatprep.subr.bf16.mxu0 %v1680
        %2140 = vmatpush1.bf16.msra.mxu0 %v1679
        %2141 = vmatprep.subr.bf16.mxu0 %v1684
        %2142 = vmatpush1.bf16.msra.mxu0 %v1683
        %2143 = vmatprep.subr.bf16.mxu0 %v1688
        %2144 = vmatpush1.bf16.msra.mxu0 %v1687
        %2145 = vmatprep.subr.bf16.mxu0 %v1692
        %2146 = vmatpush1.bf16.msra.mxu0 %v1691
        %2147 = vmatprep.subr.bf16.mxu0 %v1696
        %2148 = vmatpush1.bf16.msra.mxu0 %v1695
        %2149 = vmatprep.mubr.bf16.mxu0 %v840
        %2150 = vmatmul.mubr.bf16.gmra.mrb[0].mxu0 %v839
        %v2151 = vpop.f32.mrb[0].mxu0
        %v2152 = vadd.f32 %v2039, %v2151
        %v2153 = vpop.f32.mrb[0].mxu0
        %v2154 = vadd.f32 %v2041, %v2153
        %v2155 = vpop.f32.mrb[0].mxu0
        %v2156 = vadd.f32 %v2043, %v2155
        %v2157 = vpop.f32.mrb[0].mxu0
        %v2158 = vadd.f32 %v2045, %v2157
        %2159 = vmatprep.mubr.bf16.mxu0 %v846
        %2160 = vmatmul.mubr.bf16.gmra.mrb[0].mxu0 %v845
        %v2161 = vpop.f32.mrb[0].mxu0
        %v2162 = vadd.f32 %v2049, %v2161
        %v2163 = vpop.f32.mrb[0].mxu0
        %v2164 = vadd.f32 %v2051, %v2163
        %v2165 = vpop.f32.mrb[0].mxu0
        %v2166 = vadd.f32 %v2053, %v2165
        %v2167 = vpop.f32.mrb[0].mxu0
        %v2168 = vadd.f32 %v2055, %v2167
        %2169 = vmatprep.mubr.bf16.mxu0 %v852
        %2170 = vmatmul.mubr.bf16.gmra.mrb[0].mxu0 %v851
        %v2171 = vpop.f32.mrb[0].mxu0
        %v2172 = vadd.f32 %v2059, %v2171
        %v2173 = vpop.f32.mrb[0].mxu0
        %v2174 = vadd.f32 %v2061, %v2173
        %v2175 = vpop.f32.mrb[0].mxu0
        %v2176 = vadd.f32 %v2063, %v2175
        %v2177 = vpop.f32.mrb[0].mxu0
        %v2178 = vadd.f32 %v2065, %v2177
        %2179 = vmatprep.mubr.bf16.mxu0 %v858
        %2180 = vmatmul.mubr.bf16.gmra.mrb[0].mxu0 %v857
        %v2181 = vpop.f32.mrb[0].mxu0
        %v2182 = vadd.f32 %v2069, %v2181
        %v2183 = vpop.f32.mrb[0].mxu0
        %v2184 = vadd.f32 %v2071, %v2183
        %v2185 = vpop.f32.mrb[0].mxu0
        %v2186 = vadd.f32 %v2073, %v2185
        %v2187 = vpop.f32.mrb[0].mxu0
        %v2188 = vadd.f32 %v2075, %v2187
        %2189 = vmatprep.mubr.bf16.mxu0 %v864
        %2190 = vmatmul.mubr.bf16.gmra.mrb[0].mxu0 %v863
        %v2191 = vpop.f32.mrb[0].mxu0
        %v2192 = vadd.f32 %v2079, %v2191
        %v2193 = vpop.f32.mrb[0].mxu0
        %v2194 = vadd.f32 %v2081, %v2193
        %v2195 = vpop.f32.mrb[0].mxu0
        %v2196 = vadd.f32 %v2083, %v2195
        %v2197 = vpop.f32.mrb[0].mxu0
        %v2198 = vadd.f32 %v2085, %v2197
        %2199 = vmatprep.mubr.bf16.mxu0 %v870
        %2200 = vmatmul.mubr.bf16.gmra.mrb[0].mxu0 %v869
        %v2201 = vpop.f32.mrb[0].mxu0
        %v2202 = vadd.f32 %v2089, %v2201
        %v2203 = vpop.f32.mrb[0].mxu0
        %v2204 = vadd.f32 %v2091, %v2203
        %v2205 = vpop.f32.mrb[0].mxu0
        %v2206 = vadd.f32 %v2093, %v2205
        %v2207 = vpop.f32.mrb[0].mxu0
        %v2208 = vadd.f32 %v2095, %v2207
        %2209 = vmatprep.mubr.bf16.mxu0 %v876
        %2210 = vmatmul.mubr.bf16.gmra.mrb[0].mxu0 %v875
        %v2211 = vpop.f32.mrb[0].mxu0
        %v2212 = vadd.f32 %v2099, %v2211
        %v2213 = vpop.f32.mrb[0].mxu0
        %v2214 = vadd.f32 %v2101, %v2213
        %v2215 = vpop.f32.mrb[0].mxu0
        %v2216 = vadd.f32 %v2103, %v2215
        %v2217 = vpop.f32.mrb[0].mxu0
        %v2218 = vadd.f32 %v2105, %v2217
        %2219 = vmatprep.mubr.bf16.mxu0 %v882
        %2220 = vmatmul.mubr.bf16.gmra.mrb[0].mxu0 %v881
        %v2221 = vpop.f32.mrb[0].mxu0
        %v2222 = vadd.f32 %v2109, %v2221
        %v2223 = vpop.f32.mrb[0].mxu0
        %v2224 = vadd.f32 %v2111, %v2223
        %v2225 = vpop.f32.mrb[0].mxu0
        %v2226 = vadd.f32 %v2113, %v2225
        %v2227 = vpop.f32.mrb[0].mxu0
        %v2228 = vadd.f32 %v2115, %v2227
        %2229 = vdwg.mxu0
        %2230 = vmatprep.subr.bf16.mxu0 %v1510
        %2231 = vmatpush1.bf16.msra.mxu0 %v1509
        %2232 = vmatprep.subr.bf16.mxu0 %v1514
        %2233 = vmatpush1.bf16.msra.mxu0 %v1513
        %2234 = vmatprep.subr.bf16.mxu0 %v1518
        %2235 = vmatpush1.bf16.msra.mxu0 %v1517
        %2236 = vmatprep.subr.bf16.mxu0 %v1522
        %2237 = vmatpush1.bf16.msra.mxu0 %v1521
        %2238 = vmatprep.subr.bf16.mxu0 %v1526
        %2239 = vmatpush1.bf16.msra.mxu0 %v1525
        %2240 = vmatprep.subr.bf16.mxu0 %v1530
        %2241 = vmatpush1.bf16.msra.mxu0 %v1529
        %2242 = vmatprep.subr.bf16.mxu0 %v1534
        %2243 = vmatpush1.bf16.msra.mxu0 %v1533
        %2244 = vmatprep.subr.bf16.mxu0 %v1538
        %2245 = vmatpush1.bf16.msra.mxu0 %v1537
        %2246 = vmatprep.subr.bf16.mxu0 %v1542
        %2247 = vmatpush1.bf16.msra.mxu0 %v1541
        %2248 = vmatprep.subr.bf16.mxu0 %v1546
        %2249 = vmatpush1.bf16.msra.mxu0 %v1545
        %2250 = vmatprep.subr.bf16.mxu0 %v1550
        %2251 = vmatpush1.bf16.msra.mxu0 %v1549
        %2252 = vmatprep.subr.bf16.mxu0 %v1554
        %2253 = vmatpush1.bf16.msra.mxu0 %v1553
        %2254 = vmatprep.subr.bf16.mxu0 %v1558
        %2255 = vmatpush1.bf16.msra.mxu0 %v1557
        %2256 = vmatprep.subr.bf16.mxu0 %v1562
        %2257 = vmatpush1.bf16.msra.mxu0 %v1561
        %2258 = vmatprep.subr.bf16.mxu0 %v1566
        %2259 = vmatpush1.bf16.msra.mxu0 %v1565
        %2260 = vmatprep.subr.bf16.mxu0 %v1570
        %2261 = vmatpush1.bf16.msra.mxu0 %v1569
        %2262 = vmatprep.mubr.bf16.mxu0 %v836
        %2263 = vmatmul.mubr.bf16.gmra.mrb[0].mxu0 %v835
        %v2264 = vpop.f32.mrb[0].mxu0
        %v2265 = vadd.f32 %v682, %v2264
        %v2266 = vpop.f32.mrb[0].mxu0
        %v2267 = vadd.f32 %v686, %v2266
        %v2268 = vpop.f32.mrb[0].mxu0
        %v2269 = vadd.f32 %v682, %v2268
        %v2270 = vpop.f32.mrb[0].mxu0
        %v2271 = vadd.f32 %v686, %v2270
        %2272 = vmatprep.mubr.bf16.mxu0 %v842
        %2273 = vmatmul.mubr.bf16.gmra.mrb[0].mxu0 %v841
        %v2274 = vpop.f32.mrb[0].mxu0
        %v2275 = vadd.f32 %v682, %v2274
        %v2276 = vpop.f32.mrb[0].mxu0
        %v2277 = vadd.f32 %v686, %v2276
        %v2278 = vpop.f32.mrb[0].mxu0
        %v2279 = vadd.f32 %v682, %v2278
        %v2280 = vpop.f32.mrb[0].mxu0
        %v2281 = vadd.f32 %v686, %v2280
        %2282 = vmatprep.mubr.bf16.mxu0 %v848
        %2283 = vmatmul.mubr.bf16.gmra.mrb[0].mxu0 %v847
        %v2284 = vpop.f32.mrb[0].mxu0
        %v2285 = vadd.f32 %v682, %v2284
        %v2286 = vpop.f32.mrb[0].mxu0
        %v2287 = vadd.f32 %v686, %v2286
        %v2288 = vpop.f32.mrb[0].mxu0
        %v2289 = vadd.f32 %v682, %v2288
        %v2290 = vpop.f32.mrb[0].mxu0
        %v2291 = vadd.f32 %v686, %v2290
        %2292 = vmatprep.mubr.bf16.mxu0 %v854
        %2293 = vmatmul.mubr.bf16.gmra.mrb[0].mxu0 %v853
        %v2294 = vpop.f32.mrb[0].mxu0
        %v2295 = vadd.f32 %v682, %v2294
        %v2296 = vpop.f32.mrb[0].mxu0
        %v2297 = vadd.f32 %v686, %v2296
        %v2298 = vpop.f32.mrb[0].mxu0
        %v2299 = vadd.f32 %v682, %v2298
        %v2300 = vpop.f32.mrb[0].mxu0
        %v2301 = vadd.f32 %v686, %v2300
        %2302 = vmatprep.mubr.bf16.mxu0 %v860
        %2303 = vmatmul.mubr.bf16.gmra.mrb[0].mxu0 %v859
        %v2304 = vpop.f32.mrb[0].mxu0
        %v2305 = vadd.f32 %v682, %v2304
        %v2306 = vpop.f32.mrb[0].mxu0
        %v2307 = vadd.f32 %v686, %v2306
        %v2308 = vpop.f32.mrb[0].mxu0
        %v2309 = vadd.f32 %v682, %v2308
        %v2310 = vpop.f32.mrb[0].mxu0
        %v2311 = vadd.f32 %v686, %v2310
        %2312 = vmatprep.mubr.bf16.mxu0 %v866
        %2313 = vmatmul.mubr.bf16.gmra.mrb[0].mxu0 %v865
        %v2314 = vpop.f32.mrb[0].mxu0
        %v2315 = vadd.f32 %v682, %v2314
        %v2316 = vpop.f32.mrb[0].mxu0
        %v2317 = vadd.f32 %v686, %v2316
        %v2318 = vpop.f32.mrb[0].mxu0
        %v2319 = vadd.f32 %v682, %v2318
        %v2320 = vpop.f32.mrb[0].mxu0
        %v2321 = vadd.f32 %v686, %v2320
        %2322 = vmatprep.mubr.bf16.mxu0 %v872
        %2323 = vmatmul.mubr.bf16.gmra.mrb[0].mxu0 %v871
        %v2324 = vpop.f32.mrb[0].mxu0
        %v2325 = vadd.f32 %v682, %v2324
        %v2326 = vpop.f32.mrb[0].mxu0
        %v2327 = vadd.f32 %v686, %v2326
        %v2328 = vpop.f32.mrb[0].mxu0
        %v2329 = vadd.f32 %v682, %v2328
        %v2330 = vpop.f32.mrb[0].mxu0
        %v2331 = vadd.f32 %v686, %v2330
        %2332 = vmatprep.mubr.bf16.mxu0 %v878
        %2333 = vmatmul.mubr.bf16.gmra.mrb[0].mxu0 %v877
        %v2334 = vpop.f32.mrb[0].mxu0
        %v2335 = vadd.f32 %v682, %v2334
        %v2336 = vpop.f32.mrb[0].mxu0
        %v2337 = vadd.f32 %v686, %v2336
        %v2338 = vpop.f32.mrb[0].mxu0
        %v2339 = vadd.f32 %v682, %v2338
        %v2340 = vpop.f32.mrb[0].mxu0
        %v2341 = vadd.f32 %v686, %v2340
        %2342 = vdwg.mxu0
        %2343 = vmatprep.subr.bf16.mxu0 %v1574
        %2344 = vmatpush1.bf16.msra.mxu0 %v1573
        %2345 = vmatprep.subr.bf16.mxu0 %v1578
        %2346 = vmatpush1.bf16.msra.mxu0 %v1577
        %2347 = vmatprep.subr.bf16.mxu0 %v1582
        %2348 = vmatpush1.bf16.msra.mxu0 %v1581
        %2349 = vmatprep.subr.bf16.mxu0 %v1586
        %2350 = vmatpush1.bf16.msra.mxu0 %v1585
        %2351 = vmatprep.subr.bf16.mxu0 %v1590
        %2352 = vmatpush1.bf16.msra.mxu0 %v1589
        %2353 = vmatprep.subr.bf16.mxu0 %v1594
        %2354 = vmatpush1.bf16.msra.mxu0 %v1593
        %2355 = vmatprep.subr.bf16.mxu0 %v1598
        %2356 = vmatpush1.bf16.msra.mxu0 %v1597
        %2357 = vmatprep.subr.bf16.mxu0 %v1602
        %2358 = vmatpush1.bf16.msra.mxu0 %v1601
        %2359 = vmatprep.subr.bf16.mxu0 %v1606
        %2360 = vmatpush1.bf16.msra.mxu0 %v1605
        %2361 = vmatprep.subr.bf16.mxu0 %v1610
        %2362 = vmatpush1.bf16.msra.mxu0 %v1609
        %2363 = vmatprep.subr.bf16.mxu0 %v1614
        %2364 = vmatpush1.bf16.msra.mxu0 %v1613
        %2365 = vmatprep.subr.bf16.mxu0 %v1618
        %2366 = vmatpush1.bf16.msra.mxu0 %v1617
        %2367 = vmatprep.subr.bf16.mxu0 %v1622
        %2368 = vmatpush1.bf16.msra.mxu0 %v1621
        %2369 = vmatprep.subr.bf16.mxu0 %v1626
        %2370 = vmatpush1.bf16.msra.mxu0 %v1625
        %2371 = vmatprep.subr.bf16.mxu0 %v1630
        %2372 = vmatpush1.bf16.msra.mxu0 %v1629
        %2373 = vmatprep.subr.bf16.mxu0 %v1634
        %2374 = vmatpush1.bf16.msra.mxu0 %v1633
        %2375 = vmatprep.mubr.bf16.mxu0 %v838
        %2376 = vmatmul.mubr.bf16.gmra.mrb[0].mxu0 %v837
        %v2377 = vpop.f32.mrb[0].mxu0
        %v2378 = vadd.f32 %v2265, %v2377
        %v2379 = vpop.f32.mrb[0].mxu0
        %v2380 = vadd.f32 %v2267, %v2379
        %v2381 = vpop.f32.mrb[0].mxu0
        %v2382 = vadd.f32 %v2269, %v2381
        %v2383 = vpop.f32.mrb[0].mxu0
        %v2384 = vadd.f32 %v2271, %v2383
        %2385 = vmatprep.mubr.bf16.mxu0 %v844
        %2386 = vmatmul.mubr.bf16.gmra.mrb[0].mxu0 %v843
        %v2387 = vpop.f32.mrb[0].mxu0
        %v2388 = vadd.f32 %v2275, %v2387
        %v2389 = vpop.f32.mrb[0].mxu0
        %v2390 = vadd.f32 %v2277, %v2389
        %v2391 = vpop.f32.mrb[0].mxu0
        %v2392 = vadd.f32 %v2279, %v2391
        %v2393 = vpop.f32.mrb[0].mxu0
        %v2394 = vadd.f32 %v2281, %v2393
        %2395 = vmatprep.mubr.bf16.mxu0 %v850
        %2396 = vmatmul.mubr.bf16.gmra.mrb[0].mxu0 %v849
        %v2397 = vpop.f32.mrb[0].mxu0
        %v2398 = vadd.f32 %v2285, %v2397
        %v2399 = vpop.f32.mrb[0].mxu0
        %v2400 = vadd.f32 %v2287, %v2399
        %v2401 = vpop.f32.mrb[0].mxu0
        %v2402 = vadd.f32 %v2289, %v2401
        %v2403 = vpop.f32.mrb[0].mxu0
        %v2404 = vadd.f32 %v2291, %v2403
        %2405 = vmatprep.mubr.bf16.mxu0 %v856
        %2406 = vmatmul.mubr.bf16.gmra.mrb[0].mxu0 %v855
        %v2407 = vpop.f32.mrb[0].mxu0
        %v2408 = vadd.f32 %v2295, %v2407
        %v2409 = vpop.f32.mrb[0].mxu0
        %v2410 = vadd.f32 %v2297, %v2409
        %v2411 = vpop.f32.mrb[0].mxu0
        %v2412 = vadd.f32 %v2299, %v2411
        %v2413 = vpop.f32.mrb[0].mxu0
        %v2414 = vadd.f32 %v2301, %v2413
        %2415 = vmatprep.mubr.bf16.mxu0 %v862
        %2416 = vmatmul.mubr.bf16.gmra.mrb[0].mxu0 %v861
        %v2417 = vpop.f32.mrb[0].mxu0
        %v2418 = vadd.f32 %v2305, %v2417
        %v2419 = vpop.f32.mrb[0].mxu0
        %v2420 = vadd.f32 %v2307, %v2419
        %v2421 = vpop.f32.mrb[0].mxu0
        %v2422 = vadd.f32 %v2309, %v2421
        %v2423 = vpop.f32.mrb[0].mxu0
        %v2424 = vadd.f32 %v2311, %v2423
        %2425 = vmatprep.mubr.bf16.mxu0 %v868
        %2426 = vmatmul.mubr.bf16.gmra.mrb[0].mxu0 %v867
        %v2427 = vpop.f32.mrb[0].mxu0
        %v2428 = vadd.f32 %v2315, %v2427
        %v2429 = vpop.f32.mrb[0].mxu0
        %v2430 = vadd.f32 %v2317, %v2429
        %v2431 = vpop.f32.mrb[0].mxu0
        %v2432 = vadd.f32 %v2319, %v2431
        %v2433 = vpop.f32.mrb[0].mxu0
        %v2434 = vadd.f32 %v2321, %v2433
        %2435 = vmatprep.mubr.bf16.mxu0 %v874
        %2436 = vmatmul.mubr.bf16.gmra.mrb[0].mxu0 %v873
        %v2437 = vpop.f32.mrb[0].mxu0
        %v2438 = vadd.f32 %v2325, %v2437
        %v2439 = vpop.f32.mrb[0].mxu0
        %v2440 = vadd.f32 %v2327, %v2439
        %v2441 = vpop.f32.mrb[0].mxu0
        %v2442 = vadd.f32 %v2329, %v2441
        %v2443 = vpop.f32.mrb[0].mxu0
        %v2444 = vadd.f32 %v2331, %v2443
        %2445 = vmatprep.mubr.bf16.mxu0 %v880
        %2446 = vmatmul.mubr.bf16.gmra.mrb[0].mxu0 %v879
        %v2447 = vpop.f32.mrb[0].mxu0
        %v2448 = vadd.f32 %v2335, %v2447
        %v2449 = vpop.f32.mrb[0].mxu0
        %v2450 = vadd.f32 %v2337, %v2449
        %v2451 = vpop.f32.mrb[0].mxu0
        %v2452 = vadd.f32 %v2339, %v2451
        %v2453 = vpop.f32.mrb[0].mxu0
        %v2454 = vadd.f32 %v2341, %v2453
        %2455 = vdwg.mxu0
        %2456 = vmatprep.subr.bf16.mxu0 %v1638
        %2457 = vmatpush1.bf16.msra.mxu0 %v1637
        %2458 = vmatprep.subr.bf16.mxu0 %v1642
        %2459 = vmatpush1.bf16.msra.mxu0 %v1641
        %2460 = vmatprep.subr.bf16.mxu0 %v1646
        %2461 = vmatpush1.bf16.msra.mxu0 %v1645
        %2462 = vmatprep.subr.bf16.mxu0 %v1650
        %2463 = vmatpush1.bf16.msra.mxu0 %v1649
        %2464 = vmatprep.subr.bf16.mxu0 %v1654
        %2465 = vmatpush1.bf16.msra.mxu0 %v1653
        %2466 = vmatprep.subr.bf16.mxu0 %v1658
        %2467 = vmatpush1.bf16.msra.mxu0 %v1657
        %2468 = vmatprep.subr.bf16.mxu0 %v1662
        %2469 = vmatpush1.bf16.msra.mxu0 %v1661
        %2470 = vmatprep.subr.bf16.mxu0 %v1666
        %2471 = vmatpush1.bf16.msra.mxu0 %v1665
        %2472 = vmatprep.subr.bf16.mxu0 %v1670
        %2473 = vmatpush1.bf16.msra.mxu0 %v1669
        %2474 = vmatprep.subr.bf16.mxu0 %v1674
        %2475 = vmatpush1.bf16.msra.mxu0 %v1673
        %2476 = vmatprep.subr.bf16.mxu0 %v1678
        %2477 = vmatpush1.bf16.msra.mxu0 %v1677
        %2478 = vmatprep.subr.bf16.mxu0 %v1682
        %2479 = vmatpush1.bf16.msra.mxu0 %v1681
        %2480 = vmatprep.subr.bf16.mxu0 %v1686
        %2481 = vmatpush1.bf16.msra.mxu0 %v1685
        %2482 = vmatprep.subr.bf16.mxu0 %v1690
        %2483 = vmatpush1.bf16.msra.mxu0 %v1689
        %2484 = vmatprep.subr.bf16.mxu0 %v1694
        %2485 = vmatpush1.bf16.msra.mxu0 %v1693
        %2486 = vmatprep.subr.bf16.mxu0 %v1698
        %2487 = vmatpush1.bf16.msra.mxu0 %v1697
        %2488 = vmatprep.mubr.bf16.mxu0 %v840
        %2489 = vmatmul.mubr.bf16.gmra.mrb[0].mxu0 %v839
        %v2490 = vpop.f32.mrb[0].mxu0
        %v2491 = vadd.f32 %v2378, %v2490
        %v2492 = vpop.f32.mrb[0].mxu0
        %v2493 = vadd.f32 %v2380, %v2492
        %v2494 = vpop.f32.mrb[0].mxu0
        %v2495 = vadd.f32 %v2382, %v2494
        %v2496 = vpop.f32.mrb[0].mxu0
        %v2497 = vadd.f32 %v2384, %v2496
        %2498 = vmatprep.mubr.bf16.mxu0 %v846
        %2499 = vmatmul.mubr.bf16.gmra.mrb[0].mxu0 %v845
        %v2500 = vpop.f32.mrb[0].mxu0
        %v2501 = vadd.f32 %v2388, %v2500
        %v2502 = vpop.f32.mrb[0].mxu0
        %v2503 = vadd.f32 %v2390, %v2502
        %v2504 = vpop.f32.mrb[0].mxu0
        %v2505 = vadd.f32 %v2392, %v2504
        %v2506 = vpop.f32.mrb[0].mxu0
        %v2507 = vadd.f32 %v2394, %v2506
        %2508 = vmatprep.mubr.bf16.mxu0 %v852
        %2509 = vmatmul.mubr.bf16.gmra.mrb[0].mxu0 %v851
        %v2510 = vpop.f32.mrb[0].mxu0
        %v2511 = vadd.f32 %v2398, %v2510
        %v2512 = vpop.f32.mrb[0].mxu0
        %v2513 = vadd.f32 %v2400, %v2512
        %v2514 = vpop.f32.mrb[0].mxu0
        %v2515 = vadd.f32 %v2402, %v2514
        %v2516 = vpop.f32.mrb[0].mxu0
        %v2517 = vadd.f32 %v2404, %v2516
        %2518 = vmatprep.mubr.bf16.mxu0 %v858
        %2519 = vmatmul.mubr.bf16.gmra.mrb[0].mxu0 %v857
        %v2520 = vpop.f32.mrb[0].mxu0
        %v2521 = vadd.f32 %v2408, %v2520
        %v2522 = vpop.f32.mrb[0].mxu0
        %v2523 = vadd.f32 %v2410, %v2522
        %v2524 = vpop.f32.mrb[0].mxu0
        %v2525 = vadd.f32 %v2412, %v2524
        %v2526 = vpop.f32.mrb[0].mxu0
        %v2527 = vadd.f32 %v2414, %v2526
        %2528 = vmatprep.mubr.bf16.mxu0 %v864
        %2529 = vmatmul.mubr.bf16.gmra.mrb[0].mxu0 %v863
        %v2530 = vpop.f32.mrb[0].mxu0
        %v2531 = vadd.f32 %v2418, %v2530
        %v2532 = vpop.f32.mrb[0].mxu0
        %v2533 = vadd.f32 %v2420, %v2532
        %v2534 = vpop.f32.mrb[0].mxu0
        %v2535 = vadd.f32 %v2422, %v2534
        %v2536 = vpop.f32.mrb[0].mxu0
        %v2537 = vadd.f32 %v2424, %v2536
        %2538 = vmatprep.mubr.bf16.mxu0 %v870
        %2539 = vmatmul.mubr.bf16.gmra.mrb[0].mxu0 %v869
        %v2540 = vpop.f32.mrb[0].mxu0
        %v2541 = vadd.f32 %v2428, %v2540
        %v2542 = vpop.f32.mrb[0].mxu0
        %v2543 = vadd.f32 %v2430, %v2542
        %v2544 = vpop.f32.mrb[0].mxu0
        %v2545 = vadd.f32 %v2432, %v2544
        %v2546 = vpop.f32.mrb[0].mxu0
        %v2547 = vadd.f32 %v2434, %v2546
        %2548 = vmatprep.mubr.bf16.mxu0 %v876
        %2549 = vmatmul.mubr.bf16.gmra.mrb[0].mxu0 %v875
        %v2550 = vpop.f32.mrb[0].mxu0
        %v2551 = vadd.f32 %v2438, %v2550
        %v2552 = vpop.f32.mrb[0].mxu0
        %v2553 = vadd.f32 %v2440, %v2552
        %v2554 = vpop.f32.mrb[0].mxu0
        %v2555 = vadd.f32 %v2442, %v2554
        %v2556 = vpop.f32.mrb[0].mxu0
        %v2557 = vadd.f32 %v2444, %v2556
        %2558 = vmatprep.mubr.bf16.mxu0 %v882
        %2559 = vmatmul.mubr.bf16.gmra.mrb[0].mxu0 %v881
        %v2560 = vpop.f32.mrb[0].mxu0
        %v2561 = vadd.f32 %v2448, %v2560
        %v2562 = vpop.f32.mrb[0].mxu0
        %v2563 = vadd.f32 %v2450, %v2562
        %v2564 = vpop.f32.mrb[0].mxu0
        %v2565 = vadd.f32 %v2452, %v2564
        %v2566 = vpop.f32.mrb[0].mxu0
        %v2567 = vadd.f32 %v2454, %v2566
        %2568 = vdwg.mxu0
        %v2569 = vmax.f32 %v2152, 0.0
        %v2570 = vmax.f32 %v2154, 0.0
        %v2571 = vmax.f32 %v2491, 0.0
        %v2572 = vmax.f32 %v2493, 0.0
        %v2573 = vmax.f32 %v2156, 0.0
        %v2574 = vmax.f32 %v2158, 0.0
        %v2575 = vmax.f32 %v2495, 0.0
        %v2576 = vmax.f32 %v2497, 0.0
        %v2577 = vmax.f32 %v2162, 0.0
        %v2578 = vmax.f32 %v2164, 0.0
        %v2579 = vmax.f32 %v2501, 0.0
        %v2580 = vmax.f32 %v2503, 0.0
        %v2581 = vmax.f32 %v2166, 0.0
        %v2582 = vmax.f32 %v2168, 0.0
        %v2583 = vmax.f32 %v2505, 0.0
        %v2584 = vmax.f32 %v2507, 0.0
        %v2585 = vmax.f32 %v2172, 0.0
        %v2586 = vmax.f32 %v2174, 0.0
        %v2587 = vmax.f32 %v2511, 0.0
        %v2588 = vmax.f32 %v2513, 0.0
        %v2589 = vmax.f32 %v2176, 0.0
        %v2590 = vmax.f32 %v2178, 0.0
        %v2591 = vmax.f32 %v2515, 0.0
        %v2592 = vmax.f32 %v2517, 0.0
        %v2593 = vmax.f32 %v2182, 0.0
        %v2594 = vmax.f32 %v2184, 0.0
        %v2595 = vmax.f32 %v2521, 0.0
        %v2596 = vmax.f32 %v2523, 0.0
        %v2597 = vmax.f32 %v2186, 0.0
        %v2598 = vmax.f32 %v2188, 0.0
        %v2599 = vmax.f32 %v2525, 0.0
        %v2600 = vmax.f32 %v2527, 0.0
        %v2601 = vmax.f32 %v2192, 0.0
        %v2602 = vmax.f32 %v2194, 0.0
        %v2603 = vmax.f32 %v2531, 0.0
        %v2604 = vmax.f32 %v2533, 0.0
        %v2605 = vmax.f32 %v2196, 0.0
        %v2606 = vmax.f32 %v2198, 0.0
        %v2607 = vmax.f32 %v2535, 0.0
        %v2608 = vmax.f32 %v2537, 0.0
        %v2609 = vmax.f32 %v2202, 0.0
        %v2610 = vmax.f32 %v2204, 0.0
        %v2611 = vmax.f32 %v2541, 0.0
        %v2612 = vmax.f32 %v2543, 0.0
        %v2613 = vmax.f32 %v2206, 0.0
        %v2614 = vmax.f32 %v2208, 0.0
        %v2615 = vmax.f32 %v2545, 0.0
        %v2616 = vmax.f32 %v2547, 0.0
        %v2617 = vmax.f32 %v2212, 0.0
        %v2618 = vmax.f32 %v2214, 0.0
        %v2619 = vmax.f32 %v2551, 0.0
        %v2620 = vmax.f32 %v2553, 0.0
        %v2621 = vmax.f32 %v2216, 0.0
        %v2622 = vmax.f32 %v2218, 0.0
        %v2623 = vmax.f32 %v2555, 0.0
        %v2624 = vmax.f32 %v2557, 0.0
        %v2625 = vmax.f32 %v2222, 0.0
        %v2626 = vmax.f32 %v2224, 0.0
        %v2627 = vmax.f32 %v2561, 0.0
        %v2628 = vmax.f32 %v2563, 0.0
        %v2629 = vmax.f32 %v2226, 0.0
        %v2630 = vmax.f32 %v2228, 0.0
        %v2631 = vmax.f32 %v2565, 0.0
        %v2632 = vmax.f32 %v2567, 0.0
        %v2633 = vpack.c.bf16 %v2573, %v2569
        %v2634 = vpack.c.bf16 %v2574, %v2570
        %v2635 = vpack.c.bf16 %v2575, %v2571
        %v2636 = vpack.c.bf16 %v2576, %v2572
        %v2637 = vpack.c.bf16 %v2581, %v2577
        %v2638 = vpack.c.bf16 %v2582, %v2578
        %v2639 = vpack.c.bf16 %v2583, %v2579
        %v2640 = vpack.c.bf16 %v2584, %v2580
        %v2641 = vpack.c.bf16 %v2589, %v2585
        %v2642 = vpack.c.bf16 %v2590, %v2586
        %v2643 = vpack.c.bf16 %v2591, %v2587
        %v2644 = vpack.c.bf16 %v2592, %v2588
        %v2645 = vpack.c.bf16 %v2597, %v2593
        %v2646 = vpack.c.bf16 %v2598, %v2594
        %v2647 = vpack.c.bf16 %v2599, %v2595
        %v2648 = vpack.c.bf16 %v2600, %v2596
        %v2649 = vpack.c.bf16 %v2605, %v2601
        %v2650 = vpack.c.bf16 %v2606, %v2602
        %v2651 = vpack.c.bf16 %v2607, %v2603
        %v2652 = vpack.c.bf16 %v2608, %v2604
        %v2653 = vpack.c.bf16 %v2613, %v2609
        %v2654 = vpack.c.bf16 %v2614, %v2610
        %v2655 = vpack.c.bf16 %v2615, %v2611
        %v2656 = vpack.c.bf16 %v2616, %v2612
        %v2657 = vpack.c.bf16 %v2621, %v2617
        %v2658 = vpack.c.bf16 %v2622, %v2618
        %v2659 = vpack.c.bf16 %v2623, %v2619
        %v2660 = vpack.c.bf16 %v2624, %v2620
        %v2661 = vpack.c.bf16 %v2629, %v2625
        %v2662 = vpack.c.bf16 %v2630, %v2626
        %v2663 = vpack.c.bf16 %v2631, %v2627
        %v2664 = vpack.c.bf16 %v2632, %v2628
        %v2665 = vld [vmem:[#allocation7] sm:$0xff]
        %v2666 = vld [vmem:[#allocation7 + $0x8] sm:$0xff]
        %v2667 = vld [vmem:[#allocation7 + $0x10] sm:$0xff]
        %v2668 = vld [vmem:[#allocation7 + $0x18] sm:$0xff]
        %v2669 = vld [vmem:[#allocation7 + $0x20] sm:$0xff]
        %v2670 = vld [vmem:[#allocation7 + $0x28] sm:$0xff]
        %v2671 = vld [vmem:[#allocation7 + $0x30] sm:$0xff]
        %v2672 = vld [vmem:[#allocation7 + $0x38] sm:$0xff]
        %v2673 = vld [vmem:[#allocation7 + $0x40] sm:$0xff]
        %v2674 = vld [vmem:[#allocation7 + $0x48] sm:$0xff]
        %v2675 = vld [vmem:[#allocation7 + $0x50] sm:$0xff]
        %v2676 = vld [vmem:[#allocation7 + $0x58] sm:$0xff]
        %v2677 = vld [vmem:[#allocation7 + $0x60] sm:$0xff]
        %v2678 = vld [vmem:[#allocation7 + $0x68] sm:$0xff]
        %v2679 = vld [vmem:[#allocation7 + $0x70] sm:$0xff]
        %v2680 = vld [vmem:[#allocation7 + $0x78] sm:$0xff]
        %v2681 = vld [vmem:[#allocation7 + $0x80] sm:$0xff]
        %v2682 = vld [vmem:[#allocation7 + $0x88] sm:$0xff]
        %v2683 = vld [vmem:[#allocation7 + $0x90] sm:$0xff]
        %v2684 = vld [vmem:[#allocation7 + $0x98] sm:$0xff]
        %v2685 = vld [vmem:[#allocation7 + $0xa0] sm:$0xff]
        %v2686 = vld [vmem:[#allocation7 + $0xa8] sm:$0xff]
        %v2687 = vld [vmem:[#allocation7 + $0xb0] sm:$0xff]
        %v2688 = vld [vmem:[#allocation7 + $0xb8] sm:$0xff]
        %v2689 = vld [vmem:[#allocation7 + $0xc0] sm:$0xff]
        %v2690 = vld [vmem:[#allocation7 + $0xc8] sm:$0xff]
        %v2691 = vld [vmem:[#allocation7 + $0xd0] sm:$0xff]
        %v2692 = vld [vmem:[#allocation7 + $0xd8] sm:$0xff]
        %v2693 = vld [vmem:[#allocation7 + $0xe0] sm:$0xff]
        %v2694 = vld [vmem:[#allocation7 + $0xe8] sm:$0xff]
        %v2695 = vld [vmem:[#allocation7 + $0xf0] sm:$0xff]
        %v2696 = vld [vmem:[#allocation7 + $0xf8] sm:$0xff]
        %v2697 = vld [vmem:[#allocation7 + $0x100] sm:$0xff]
        %v2698 = vld [vmem:[#allocation7 + $0x108] sm:$0xff]
        %v2699 = vld [vmem:[#allocation7 + $0x110] sm:$0xff]
        %v2700 = vld [vmem:[#allocation7 + $0x118] sm:$0xff]
        %v2701 = vld [vmem:[#allocation7 + $0x120] sm:$0xff]
        %v2702 = vld [vmem:[#allocation7 + $0x128] sm:$0xff]
        %v2703 = vld [vmem:[#allocation7 + $0x130] sm:$0xff]
        %v2704 = vld [vmem:[#allocation7 + $0x138] sm:$0xff]
        %v2705 = vld [vmem:[#allocation7 + $0x140] sm:$0xff]
        %v2706 = vld [vmem:[#allocation7 + $0x148] sm:$0xff]
        %v2707 = vld [vmem:[#allocation7 + $0x150] sm:$0xff]
        %v2708 = vld [vmem:[#allocation7 + $0x158] sm:$0xff]
        %v2709 = vld [vmem:[#allocation7 + $0x160] sm:$0xff]
        %v2710 = vld [vmem:[#allocation7 + $0x168] sm:$0xff]
        %v2711 = vld [vmem:[#allocation7 + $0x170] sm:$0xff]
        %v2712 = vld [vmem:[#allocation7 + $0x178] sm:$0xff]
        %v2713 = vld [vmem:[#allocation7 + $0x180] sm:$0xff]
        %v2714 = vld [vmem:[#allocation7 + $0x188] sm:$0xff]
        %v2715 = vld [vmem:[#allocation7 + $0x190] sm:$0xff]
        %v2716 = vld [vmem:[#allocation7 + $0x198] sm:$0xff]
        %v2717 = vld [vmem:[#allocation7 + $0x1a0] sm:$0xff]
        %v2718 = vld [vmem:[#allocation7 + $0x1a8] sm:$0xff]
        %v2719 = vld [vmem:[#allocation7 + $0x1b0] sm:$0xff]
        %v2720 = vld [vmem:[#allocation7 + $0x1b8] sm:$0xff]
        %v2721 = vld [vmem:[#allocation7 + $0x1c0] sm:$0xff]
        %v2722 = vld [vmem:[#allocation7 + $0x1c8] sm:$0xff]
        %v2723 = vld [vmem:[#allocation7 + $0x1d0] sm:$0xff]
        %v2724 = vld [vmem:[#allocation7 + $0x1d8] sm:$0xff]
        %v2725 = vld [vmem:[#allocation7 + $0x1e0] sm:$0xff]
        %v2726 = vld [vmem:[#allocation7 + $0x1e8] sm:$0xff]
        %v2727 = vld [vmem:[#allocation7 + $0x1f0] sm:$0xff]
        %v2728 = vld [vmem:[#allocation7 + $0x1f8] sm:$0xff]
        %v2729 = vld [vmem:[%s4] sm:$0x3]
        %v2731 = vlaneseq
        %v2732 = vshrl.u32 %v2731, 7
        %v2733 = vsub.s32 0, %v2732
        %v2734 = vrot.slane %v2729, %v2733
        %v2735 = vlaneseq
        %v2736 = vshrl.u32 %v2735, 7
        %v2737 = vsub.s32 1, %v2736
        %v2738 = vrot.slane %v2729, %v2737
        %v2805 = vunpack.c.l.b16 %v2665
        %v2806 = vunpack.c.h.b16 %v2665
        %v2807 = vunpack.c.l.b16 %v2666
        %v2808 = vunpack.c.h.b16 %v2666
        %v2809 = vunpack.c.l.b16 %v2667
        %v2810 = vunpack.c.h.b16 %v2667
        %v2811 = vunpack.c.l.b16 %v2668
        %v2812 = vunpack.c.h.b16 %v2668
        %v2813 = vunpack.c.l.b16 %v2669
        %v2814 = vunpack.c.h.b16 %v2669
        %v2815 = vunpack.c.l.b16 %v2670
        %v2816 = vunpack.c.h.b16 %v2670
        %v2817 = vunpack.c.l.b16 %v2671
        %v2818 = vunpack.c.h.b16 %v2671
        %v2819 = vunpack.c.l.b16 %v2672
        %v2820 = vunpack.c.h.b16 %v2672
        %v2821 = vunpack.c.l.b16 %v2673
        %v2822 = vunpack.c.h.b16 %v2673
        %v2823 = vunpack.c.l.b16 %v2674
        %v2824 = vunpack.c.h.b16 %v2674
        %v2825 = vunpack.c.l.b16 %v2675
        %v2826 = vunpack.c.h.b16 %v2675
        %v2827 = vunpack.c.l.b16 %v2676
        %v2828 = vunpack.c.h.b16 %v2676
        %v2829 = vunpack.c.l.b16 %v2677
        %v2830 = vunpack.c.h.b16 %v2677
        %v2831 = vunpack.c.l.b16 %v2678
        %v2832 = vunpack.c.h.b16 %v2678
        %v2833 = vunpack.c.l.b16 %v2679
        %v2834 = vunpack.c.h.b16 %v2679
        %v2835 = vunpack.c.l.b16 %v2680
        %v2836 = vunpack.c.h.b16 %v2680
        %v2837 = vunpack.c.l.b16 %v2681
        %v2838 = vunpack.c.h.b16 %v2681
        %v2839 = vunpack.c.l.b16 %v2682
        %v2840 = vunpack.c.h.b16 %v2682
        %v2841 = vunpack.c.l.b16 %v2683
        %v2842 = vunpack.c.h.b16 %v2683
        %v2843 = vunpack.c.l.b16 %v2684
        %v2844 = vunpack.c.h.b16 %v2684
        %v2845 = vunpack.c.l.b16 %v2685
        %v2846 = vunpack.c.h.b16 %v2685
        %v2847 = vunpack.c.l.b16 %v2686
        %v2848 = vunpack.c.h.b16 %v2686
        %v2849 = vunpack.c.l.b16 %v2687
        %v2850 = vunpack.c.h.b16 %v2687
        %v2851 = vunpack.c.l.b16 %v2688
        %v2852 = vunpack.c.h.b16 %v2688
        %v2853 = vunpack.c.l.b16 %v2689
        %v2854 = vunpack.c.h.b16 %v2689
        %v2855 = vunpack.c.l.b16 %v2690
        %v2856 = vunpack.c.h.b16 %v2690
        %v2857 = vunpack.c.l.b16 %v2691
        %v2858 = vunpack.c.h.b16 %v2691
        %v2859 = vunpack.c.l.b16 %v2692
        %v2860 = vunpack.c.h.b16 %v2692
        %v2861 = vunpack.c.l.b16 %v2693
        %v2862 = vunpack.c.h.b16 %v2693
        %v2863 = vunpack.c.l.b16 %v2694
        %v2864 = vunpack.c.h.b16 %v2694
        %v2865 = vunpack.c.l.b16 %v2695
        %v2866 = vunpack.c.h.b16 %v2695
        %v2867 = vunpack.c.l.b16 %v2696
        %v2868 = vunpack.c.h.b16 %v2696
        %v2869 = vunpack.c.l.b16 %v2697
        %v2870 = vunpack.c.h.b16 %v2697
        %v2871 = vunpack.c.l.b16 %v2698
        %v2872 = vunpack.c.h.b16 %v2698
        %v2873 = vunpack.c.l.b16 %v2699
        %v2874 = vunpack.c.h.b16 %v2699
        %v2875 = vunpack.c.l.b16 %v2700
        %v2876 = vunpack.c.h.b16 %v2700
        %v2877 = vunpack.c.l.b16 %v2701
        %v2878 = vunpack.c.h.b16 %v2701
        %v2879 = vunpack.c.l.b16 %v2702
        %v2880 = vunpack.c.h.b16 %v2702
        %v2881 = vunpack.c.l.b16 %v2703
        %v2882 = vunpack.c.h.b16 %v2703
        %v2883 = vunpack.c.l.b16 %v2704
        %v2884 = vunpack.c.h.b16 %v2704
        %v2885 = vunpack.c.l.b16 %v2705
        %v2886 = vunpack.c.h.b16 %v2705
        %v2887 = vunpack.c.l.b16 %v2706
        %v2888 = vunpack.c.h.b16 %v2706
        %v2889 = vunpack.c.l.b16 %v2707
        %v2890 = vunpack.c.h.b16 %v2707
        %v2891 = vunpack.c.l.b16 %v2708
        %v2892 = vunpack.c.h.b16 %v2708
        %v2893 = vunpack.c.l.b16 %v2709
        %v2894 = vunpack.c.h.b16 %v2709
        %v2895 = vunpack.c.l.b16 %v2710
        %v2896 = vunpack.c.h.b16 %v2710
        %v2897 = vunpack.c.l.b16 %v2711
        %v2898 = vunpack.c.h.b16 %v2711
        %v2899 = vunpack.c.l.b16 %v2712
        %v2900 = vunpack.c.h.b16 %v2712
        %v2901 = vunpack.c.l.b16 %v2713
        %v2902 = vunpack.c.h.b16 %v2713
        %v2903 = vunpack.c.l.b16 %v2714
        %v2904 = vunpack.c.h.b16 %v2714
        %v2905 = vunpack.c.l.b16 %v2715
        %v2906 = vunpack.c.h.b16 %v2715
        %v2907 = vunpack.c.l.b16 %v2716
        %v2908 = vunpack.c.h.b16 %v2716
        %v2909 = vunpack.c.l.b16 %v2717
        %v2910 = vunpack.c.h.b16 %v2717
        %v2911 = vunpack.c.l.b16 %v2718
        %v2912 = vunpack.c.h.b16 %v2718
        %v2913 = vunpack.c.l.b16 %v2719
        %v2914 = vunpack.c.h.b16 %v2719
        %v2915 = vunpack.c.l.b16 %v2720
        %v2916 = vunpack.c.h.b16 %v2720
        %v2917 = vunpack.c.l.b16 %v2721
        %v2918 = vunpack.c.h.b16 %v2721
        %v2919 = vunpack.c.l.b16 %v2722
        %v2920 = vunpack.c.h.b16 %v2722
        %v2921 = vunpack.c.l.b16 %v2723
        %v2922 = vunpack.c.h.b16 %v2723
        %v2923 = vunpack.c.l.b16 %v2724
        %v2924 = vunpack.c.h.b16 %v2724
        %v2925 = vunpack.c.l.b16 %v2725
        %v2926 = vunpack.c.h.b16 %v2725
        %v2927 = vunpack.c.l.b16 %v2726
        %v2928 = vunpack.c.h.b16 %v2726
        %v2929 = vunpack.c.l.b16 %v2727
        %v2930 = vunpack.c.h.b16 %v2727
        %v2931 = vunpack.c.l.b16 %v2728
        %v2932 = vunpack.c.h.b16 %v2728
        %v2933 = vpack.c.b16 %v2807, %v2805
        %v2934 = vpack.c.b16 %v2808, %v2806
        %v2935 = vpack.c.b16 %v2811, %v2809
        %v2936 = vpack.c.b16 %v2812, %v2810
        %v2937 = vpack.c.b16 %v2815, %v2813
        %v2938 = vpack.c.b16 %v2816, %v2814
        %v2939 = vpack.c.b16 %v2819, %v2817
        %v2940 = vpack.c.b16 %v2820, %v2818
        %v2941 = vpack.c.b16 %v2823, %v2821
        %v2942 = vpack.c.b16 %v2824, %v2822
        %v2943 = vpack.c.b16 %v2827, %v2825
        %v2944 = vpack.c.b16 %v2828, %v2826
        %v2945 = vpack.c.b16 %v2831, %v2829
        %v2946 = vpack.c.b16 %v2832, %v2830
        %v2947 = vpack.c.b16 %v2835, %v2833
        %v2948 = vpack.c.b16 %v2836, %v2834
        %v2949 = vpack.c.b16 %v2839, %v2837
        %v2950 = vpack.c.b16 %v2840, %v2838
        %v2951 = vpack.c.b16 %v2843, %v2841
        %v2952 = vpack.c.b16 %v2844, %v2842
        %v2953 = vpack.c.b16 %v2847, %v2845
        %v2954 = vpack.c.b16 %v2848, %v2846
        %v2955 = vpack.c.b16 %v2851, %v2849
        %v2956 = vpack.c.b16 %v2852, %v2850
        %v2957 = vpack.c.b16 %v2855, %v2853
        %v2958 = vpack.c.b16 %v2856, %v2854
        %v2959 = vpack.c.b16 %v2859, %v2857
        %v2960 = vpack.c.b16 %v2860, %v2858
        %v2961 = vpack.c.b16 %v2863, %v2861
        %v2962 = vpack.c.b16 %v2864, %v2862
        %v2963 = vpack.c.b16 %v2867, %v2865
        %v2964 = vpack.c.b16 %v2868, %v2866
        %v2965 = vpack.c.b16 %v2871, %v2869
        %v2966 = vpack.c.b16 %v2872, %v2870
        %v2967 = vpack.c.b16 %v2875, %v2873
        %v2968 = vpack.c.b16 %v2876, %v2874
        %v2969 = vpack.c.b16 %v2879, %v2877
        %v2970 = vpack.c.b16 %v2880, %v2878
        %v2971 = vpack.c.b16 %v2883, %v2881
        %v2972 = vpack.c.b16 %v2884, %v2882
        %v2973 = vpack.c.b16 %v2887, %v2885
        %v2974 = vpack.c.b16 %v2888, %v2886
        %v2975 = vpack.c.b16 %v2891, %v2889
        %v2976 = vpack.c.b16 %v2892, %v2890
        %v2977 = vpack.c.b16 %v2895, %v2893
        %v2978 = vpack.c.b16 %v2896, %v2894
        %v2979 = vpack.c.b16 %v2899, %v2897
        %v2980 = vpack.c.b16 %v2900, %v2898
        %v2981 = vpack.c.b16 %v2903, %v2901
        %v2982 = vpack.c.b16 %v2904, %v2902
        %v2983 = vpack.c.b16 %v2907, %v2905
        %v2984 = vpack.c.b16 %v2908, %v2906
        %v2985 = vpack.c.b16 %v2911, %v2909
        %v2986 = vpack.c.b16 %v2912, %v2910
        %v2987 = vpack.c.b16 %v2915, %v2913
        %v2988 = vpack.c.b16 %v2916, %v2914
        %v2989 = vpack.c.b16 %v2919, %v2917
        %v2990 = vpack.c.b16 %v2920, %v2918
        %v2991 = vpack.c.b16 %v2923, %v2921
        %v2992 = vpack.c.b16 %v2924, %v2922
        %v2993 = vpack.c.b16 %v2927, %v2925
        %v2994 = vpack.c.b16 %v2928, %v2926
        %v2995 = vpack.c.b16 %v2931, %v2929
        %v2996 = vpack.c.b16 %v2932, %v2930
        %3061 = vmatprep.subr.bf16.mxu0 %v2934
        %3062 = vmatpush1.bf16.msra.mxu0 %v2933
        %3063 = vmatprep.subr.bf16.mxu0 %v2936
        %3064 = vmatpush1.bf16.msra.mxu0 %v2935
        %3065 = vmatprep.subr.bf16.mxu0 %v2938
        %3066 = vmatpush1.bf16.msra.mxu0 %v2937
        %3067 = vmatprep.subr.bf16.mxu0 %v2940
        %3068 = vmatpush1.bf16.msra.mxu0 %v2939
        %3069 = vmatprep.subr.bf16.mxu0 %v2942
        %3070 = vmatpush1.bf16.msra.mxu0 %v2941
        %3071 = vmatprep.subr.bf16.mxu0 %v2944
        %3072 = vmatpush1.bf16.msra.mxu0 %v2943
        %3073 = vmatprep.subr.bf16.mxu0 %v2946
        %3074 = vmatpush1.bf16.msra.mxu0 %v2945
        %3075 = vmatprep.subr.bf16.mxu0 %v2948
        %3076 = vmatpush1.bf16.msra.mxu0 %v2947
        %3077 = vmatprep.subr.bf16.mxu0 %v2950
        %3078 = vmatpush1.bf16.msra.mxu0 %v2949
        %3079 = vmatprep.subr.bf16.mxu0 %v2952
        %3080 = vmatpush1.bf16.msra.mxu0 %v2951
        %3081 = vmatprep.subr.bf16.mxu0 %v2954
        %3082 = vmatpush1.bf16.msra.mxu0 %v2953
        %3083 = vmatprep.subr.bf16.mxu0 %v2956
        %3084 = vmatpush1.bf16.msra.mxu0 %v2955
        %3085 = vmatprep.subr.bf16.mxu0 %v2958
        %3086 = vmatpush1.bf16.msra.mxu0 %v2957
        %3087 = vmatprep.subr.bf16.mxu0 %v2960
        %3088 = vmatpush1.bf16.msra.mxu0 %v2959
        %3089 = vmatprep.subr.bf16.mxu0 %v2962
        %3090 = vmatpush1.bf16.msra.mxu0 %v2961
        %3091 = vmatprep.subr.bf16.mxu0 %v2964
        %3092 = vmatpush1.bf16.msra.mxu0 %v2963
        %3093 = vmatprep.mubr.bf16.mxu0 %v2634
        %3094 = vmatmul.mubr.bf16.gmra.mrb[0].mxu0 %v2633
        %v3095 = vpop.f32.mrb[0].mxu0
        %v3096 = vadd.f32 %v2734, %v3095
        %v3097 = vpop.f32.mrb[0].mxu0
        %v3098 = vadd.f32 %v2738, %v3097
        %v3099 = vpop.f32.mrb[0].mxu0
        %v3100 = vadd.f32 %v2734, %v3099
        %v3101 = vpop.f32.mrb[0].mxu0
        %v3102 = vadd.f32 %v2738, %v3101
        %3103 = vmatprep.mubr.bf16.mxu0 %v2638
        %3104 = vmatmul.mubr.bf16.gmra.mrb[0].mxu0 %v2637
        %v3105 = vpop.f32.mrb[0].mxu0
        %v3106 = vadd.f32 %v2734, %v3105
        %v3107 = vpop.f32.mrb[0].mxu0
        %v3108 = vadd.f32 %v2738, %v3107
        %v3109 = vpop.f32.mrb[0].mxu0
        %v3110 = vadd.f32 %v2734, %v3109
        %v3111 = vpop.f32.mrb[0].mxu0
        %v3112 = vadd.f32 %v2738, %v3111
        %3113 = vmatprep.mubr.bf16.mxu0 %v2642
        %3114 = vmatmul.mubr.bf16.gmra.mrb[0].mxu0 %v2641
        %v3115 = vpop.f32.mrb[0].mxu0
        %v3116 = vadd.f32 %v2734, %v3115
        %v3117 = vpop.f32.mrb[0].mxu0
        %v3118 = vadd.f32 %v2738, %v3117
        %v3119 = vpop.f32.mrb[0].mxu0
        %v3120 = vadd.f32 %v2734, %v3119
        %v3121 = vpop.f32.mrb[0].mxu0
        %v3122 = vadd.f32 %v2738, %v3121
        %3123 = vmatprep.mubr.bf16.mxu0 %v2646
        %3124 = vmatmul.mubr.bf16.gmra.mrb[0].mxu0 %v2645
        %v3125 = vpop.f32.mrb[0].mxu0
        %v3126 = vadd.f32 %v2734, %v3125
        %v3127 = vpop.f32.mrb[0].mxu0
        %v3128 = vadd.f32 %v2738, %v3127
        %v3129 = vpop.f32.mrb[0].mxu0
        %v3130 = vadd.f32 %v2734, %v3129
        %v3131 = vpop.f32.mrb[0].mxu0
        %v3132 = vadd.f32 %v2738, %v3131
        %3133 = vmatprep.mubr.bf16.mxu0 %v2650
        %3134 = vmatmul.mubr.bf16.gmra.mrb[0].mxu0 %v2649
        %v3135 = vpop.f32.mrb[0].mxu0
        %v3136 = vadd.f32 %v2734, %v3135
        %v3137 = vpop.f32.mrb[0].mxu0
        %v3138 = vadd.f32 %v2738, %v3137
        %v3139 = vpop.f32.mrb[0].mxu0
        %v3140 = vadd.f32 %v2734, %v3139
        %v3141 = vpop.f32.mrb[0].mxu0
        %v3142 = vadd.f32 %v2738, %v3141
        %3143 = vmatprep.mubr.bf16.mxu0 %v2654
        %3144 = vmatmul.mubr.bf16.gmra.mrb[0].mxu0 %v2653
        %v3145 = vpop.f32.mrb[0].mxu0
        %v3146 = vadd.f32 %v2734, %v3145
        %v3147 = vpop.f32.mrb[0].mxu0
        %v3148 = vadd.f32 %v2738, %v3147
        %v3149 = vpop.f32.mrb[0].mxu0
        %v3150 = vadd.f32 %v2734, %v3149
        %v3151 = vpop.f32.mrb[0].mxu0
        %v3152 = vadd.f32 %v2738, %v3151
        %3153 = vmatprep.mubr.bf16.mxu0 %v2658
        %3154 = vmatmul.mubr.bf16.gmra.mrb[0].mxu0 %v2657
        %v3155 = vpop.f32.mrb[0].mxu0
        %v3156 = vadd.f32 %v2734, %v3155
        %v3157 = vpop.f32.mrb[0].mxu0
        %v3158 = vadd.f32 %v2738, %v3157
        %v3159 = vpop.f32.mrb[0].mxu0
        %v3160 = vadd.f32 %v2734, %v3159
        %v3161 = vpop.f32.mrb[0].mxu0
        %v3162 = vadd.f32 %v2738, %v3161
        %3163 = vmatprep.mubr.bf16.mxu0 %v2662
        %3164 = vmatmul.mubr.bf16.gmra.mrb[0].mxu0 %v2661
        %v3165 = vpop.f32.mrb[0].mxu0
        %v3166 = vadd.f32 %v2734, %v3165
        %v3167 = vpop.f32.mrb[0].mxu0
        %v3168 = vadd.f32 %v2738, %v3167
        %v3169 = vpop.f32.mrb[0].mxu0
        %v3170 = vadd.f32 %v2734, %v3169
        %v3171 = vpop.f32.mrb[0].mxu0
        %v3172 = vadd.f32 %v2738, %v3171
        %3173 = vdwg.mxu0
        %3174 = vmatprep.subr.bf16.mxu0 %v2966
        %3175 = vmatpush1.bf16.msra.mxu0 %v2965
        %3176 = vmatprep.subr.bf16.mxu0 %v2968
        %3177 = vmatpush1.bf16.msra.mxu0 %v2967
        %3178 = vmatprep.subr.bf16.mxu0 %v2970
        %3179 = vmatpush1.bf16.msra.mxu0 %v2969
        %3180 = vmatprep.subr.bf16.mxu0 %v2972
        %3181 = vmatpush1.bf16.msra.mxu0 %v2971
        %3182 = vmatprep.subr.bf16.mxu0 %v2974
        %3183 = vmatpush1.bf16.msra.mxu0 %v2973
        %3184 = vmatprep.subr.bf16.mxu0 %v2976
        %3185 = vmatpush1.bf16.msra.mxu0 %v2975
        %3186 = vmatprep.subr.bf16.mxu0 %v2978
        %3187 = vmatpush1.bf16.msra.mxu0 %v2977
        %3188 = vmatprep.subr.bf16.mxu0 %v2980
        %3189 = vmatpush1.bf16.msra.mxu0 %v2979
        %3190 = vmatprep.subr.bf16.mxu0 %v2982
        %3191 = vmatpush1.bf16.msra.mxu0 %v2981
        %3192 = vmatprep.subr.bf16.mxu0 %v2984
        %3193 = vmatpush1.bf16.msra.mxu0 %v2983
        %3194 = vmatprep.subr.bf16.mxu0 %v2986
        %3195 = vmatpush1.bf16.msra.mxu0 %v2985
        %3196 = vmatprep.subr.bf16.mxu0 %v2988
        %3197 = vmatpush1.bf16.msra.mxu0 %v2987
        %3198 = vmatprep.subr.bf16.mxu0 %v2990
        %3199 = vmatpush1.bf16.msra.mxu0 %v2989
        %3200 = vmatprep.subr.bf16.mxu0 %v2992
        %3201 = vmatpush1.bf16.msra.mxu0 %v2991
        %3202 = vmatprep.subr.bf16.mxu0 %v2994
        %3203 = vmatpush1.bf16.msra.mxu0 %v2993
        %3204 = vmatprep.subr.bf16.mxu0 %v2996
        %3205 = vmatpush1.bf16.msra.mxu0 %v2995
        %3206 = vmatprep.mubr.bf16.mxu0 %v2636
        %3207 = vmatmul.mubr.bf16.gmra.mrb[0].mxu0 %v2635
        %v3208 = vpop.f32.mrb[0].mxu0
        %v3209 = vadd.f32 %v3096, %v3208
        %v3210 = vpop.f32.mrb[0].mxu0
        %v3211 = vadd.f32 %v3098, %v3210
        %v3212 = vpop.f32.mrb[0].mxu0
        %v3213 = vadd.f32 %v3100, %v3212
        %v3214 = vpop.f32.mrb[0].mxu0
        %v3215 = vadd.f32 %v3102, %v3214
        %3216 = vmatprep.mubr.bf16.mxu0 %v2640
        %3217 = vmatmul.mubr.bf16.gmra.mrb[0].mxu0 %v2639
        %v3218 = vpop.f32.mrb[0].mxu0
        %v3219 = vadd.f32 %v3106, %v3218
        %v3220 = vpop.f32.mrb[0].mxu0
        %v3221 = vadd.f32 %v3108, %v3220
        %v3222 = vpop.f32.mrb[0].mxu0
        %v3223 = vadd.f32 %v3110, %v3222
        %v3224 = vpop.f32.mrb[0].mxu0
        %v3225 = vadd.f32 %v3112, %v3224
        %3226 = vmatprep.mubr.bf16.mxu0 %v2644
        %3227 = vmatmul.mubr.bf16.gmra.mrb[0].mxu0 %v2643
        %v3228 = vpop.f32.mrb[0].mxu0
        %v3229 = vadd.f32 %v3116, %v3228
        %v3230 = vpop.f32.mrb[0].mxu0
        %v3231 = vadd.f32 %v3118, %v3230
        %v3232 = vpop.f32.mrb[0].mxu0
        %v3233 = vadd.f32 %v3120, %v3232
        %v3234 = vpop.f32.mrb[0].mxu0
        %v3235 = vadd.f32 %v3122, %v3234
        %3236 = vmatprep.mubr.bf16.mxu0 %v2648
        %3237 = vmatmul.mubr.bf16.gmra.mrb[0].mxu0 %v2647
        %v3238 = vpop.f32.mrb[0].mxu0
        %v3239 = vadd.f32 %v3126, %v3238
        %v3240 = vpop.f32.mrb[0].mxu0
        %v3241 = vadd.f32 %v3128, %v3240
        %v3242 = vpop.f32.mrb[0].mxu0
        %v3243 = vadd.f32 %v3130, %v3242
        %v3244 = vpop.f32.mrb[0].mxu0
        %v3245 = vadd.f32 %v3132, %v3244
        %3246 = vmatprep.mubr.bf16.mxu0 %v2652
        %3247 = vmatmul.mubr.bf16.gmra.mrb[0].mxu0 %v2651
        %v3248 = vpop.f32.mrb[0].mxu0
        %v3249 = vadd.f32 %v3136, %v3248
        %v3250 = vpop.f32.mrb[0].mxu0
        %v3251 = vadd.f32 %v3138, %v3250
        %v3252 = vpop.f32.mrb[0].mxu0
        %v3253 = vadd.f32 %v3140, %v3252
        %v3254 = vpop.f32.mrb[0].mxu0
        %v3255 = vadd.f32 %v3142, %v3254
        %3256 = vmatprep.mubr.bf16.mxu0 %v2656
        %3257 = vmatmul.mubr.bf16.gmra.mrb[0].mxu0 %v2655
        %v3258 = vpop.f32.mrb[0].mxu0
        %v3259 = vadd.f32 %v3146, %v3258
        %v3260 = vpop.f32.mrb[0].mxu0
        %v3261 = vadd.f32 %v3148, %v3260
        %v3262 = vpop.f32.mrb[0].mxu0
        %v3263 = vadd.f32 %v3150, %v3262
        %v3264 = vpop.f32.mrb[0].mxu0
        %v3265 = vadd.f32 %v3152, %v3264
        %3266 = vmatprep.mubr.bf16.mxu0 %v2660
        %3267 = vmatmul.mubr.bf16.gmra.mrb[0].mxu0 %v2659
        %v3268 = vpop.f32.mrb[0].mxu0
        %v3269 = vadd.f32 %v3156, %v3268
        %v3270 = vpop.f32.mrb[0].mxu0
        %v3271 = vadd.f32 %v3158, %v3270
        %v3272 = vpop.f32.mrb[0].mxu0
        %v3273 = vadd.f32 %v3160, %v3272
        %v3274 = vpop.f32.mrb[0].mxu0
        %v3275 = vadd.f32 %v3162, %v3274
        %3276 = vmatprep.mubr.bf16.mxu0 %v2664
        %3277 = vmatmul.mubr.bf16.gmra.mrb[0].mxu0 %v2663
        %v3278 = vpop.f32.mrb[0].mxu0
        %v3279 = vadd.f32 %v3166, %v3278
        %v3280 = vpop.f32.mrb[0].mxu0
        %v3281 = vadd.f32 %v3168, %v3280
        %v3282 = vpop.f32.mrb[0].mxu0
        %v3283 = vadd.f32 %v3170, %v3282
        %v3284 = vpop.f32.mrb[0].mxu0
        %v3285 = vadd.f32 %v3172, %v3284
        %3286 = vdwg.mxu0
        %v3287 = vmax.f32 %v3209, 0.0
        %v3288 = vmax.f32 %v3211, 0.0
        %v3289 = vmax.f32 %v3213, 0.0
        %v3290 = vmax.f32 %v3215, 0.0
        %v3291 = vmax.f32 %v3219, 0.0
        %v3292 = vmax.f32 %v3221, 0.0
        %v3293 = vmax.f32 %v3223, 0.0
        %v3294 = vmax.f32 %v3225, 0.0
        %v3295 = vmax.f32 %v3229, 0.0
        %v3296 = vmax.f32 %v3231, 0.0
        %v3297 = vmax.f32 %v3233, 0.0
        %v3298 = vmax.f32 %v3235, 0.0
        %v3299 = vmax.f32 %v3239, 0.0
        %v3300 = vmax.f32 %v3241, 0.0
        %v3301 = vmax.f32 %v3243, 0.0
        %v3302 = vmax.f32 %v3245, 0.0
        %v3303 = vmax.f32 %v3249, 0.0
        %v3304 = vmax.f32 %v3251, 0.0
        %v3305 = vmax.f32 %v3253, 0.0
        %v3306 = vmax.f32 %v3255, 0.0
        %v3307 = vmax.f32 %v3259, 0.0
        %v3308 = vmax.f32 %v3261, 0.0
        %v3309 = vmax.f32 %v3263, 0.0
        %v3310 = vmax.f32 %v3265, 0.0
        %v3311 = vmax.f32 %v3269, 0.0
        %v3312 = vmax.f32 %v3271, 0.0
        %v3313 = vmax.f32 %v3273, 0.0
        %v3314 = vmax.f32 %v3275, 0.0
        %v3315 = vmax.f32 %v3279, 0.0
        %v3316 = vmax.f32 %v3281, 0.0
        %v3317 = vmax.f32 %v3283, 0.0
        %v3318 = vmax.f32 %v3285, 0.0
        %v3319 = vpack.c.bf16 %v3289, %v3287
        %v3320 = vpack.c.bf16 %v3290, %v3288
        %v3321 = vpack.c.bf16 %v3293, %v3291
        %v3322 = vpack.c.bf16 %v3294, %v3292
        %v3323 = vpack.c.bf16 %v3297, %v3295
        %v3324 = vpack.c.bf16 %v3298, %v3296
        %v3325 = vpack.c.bf16 %v3301, %v3299
        %v3326 = vpack.c.bf16 %v3302, %v3300
        %v3327 = vpack.c.bf16 %v3305, %v3303
        %v3328 = vpack.c.bf16 %v3306, %v3304
        %v3329 = vpack.c.bf16 %v3309, %v3307
        %v3330 = vpack.c.bf16 %v3310, %v3308
        %v3331 = vpack.c.bf16 %v3313, %v3311
        %v3332 = vpack.c.bf16 %v3314, %v3312
        %v3333 = vpack.c.bf16 %v3317, %v3315
        %v3334 = vpack.c.bf16 %v3318, %v3316
        %v3335 = vld [vmem:[#allocation8] sm:$0xf]
        %v3336 = vld [vmem:[#allocation8 + $0x4] sm:$0xf]
        %v3337 = vld [vmem:[#allocation8 + $0x8] sm:$0xf]
        %v3338 = vld [vmem:[#allocation8 + $0xc] sm:$0xf]
        %v3339 = vld [vmem:[#allocation8 + $0x10] sm:$0xf]
        %v3340 = vld [vmem:[#allocation8 + $0x14] sm:$0xf]
        %v3341 = vld [vmem:[#allocation8 + $0x18] sm:$0xf]
        %v3342 = vld [vmem:[#allocation8 + $0x1c] sm:$0xf]
        %v3343 = vld [vmem:[#allocation8 + $0x20] sm:$0xf]
        %v3344 = vld [vmem:[#allocation8 + $0x24] sm:$0xf]
        %v3345 = vld [vmem:[#allocation8 + $0x28] sm:$0xf]
        %v3346 = vld [vmem:[#allocation8 + $0x2c] sm:$0xf]
        %v3347 = vld [vmem:[#allocation8 + $0x30] sm:$0xf]
        %v3348 = vld [vmem:[#allocation8 + $0x34] sm:$0xf]
        %v3349 = vld [vmem:[#allocation8 + $0x38] sm:$0xf]
        %v3350 = vld [vmem:[#allocation8 + $0x3c] sm:$0xf]
        %v3351 = vld [vmem:[#allocation8 + $0x40] sm:$0xf]
        %v3352 = vld [vmem:[#allocation8 + $0x44] sm:$0xf]
        %v3353 = vld [vmem:[#allocation8 + $0x48] sm:$0xf]
        %v3354 = vld [vmem:[#allocation8 + $0x4c] sm:$0xf]
        %v3355 = vld [vmem:[#allocation8 + $0x50] sm:$0xf]
        %v3356 = vld [vmem:[#allocation8 + $0x54] sm:$0xf]
        %v3357 = vld [vmem:[#allocation8 + $0x58] sm:$0xf]
        %v3358 = vld [vmem:[#allocation8 + $0x5c] sm:$0xf]
        %v3359 = vld [vmem:[#allocation8 + $0x60] sm:$0xf]
        %v3360 = vld [vmem:[#allocation8 + $0x64] sm:$0xf]
        %v3361 = vld [vmem:[#allocation8 + $0x68] sm:$0xf]
        %v3362 = vld [vmem:[#allocation8 + $0x6c] sm:$0xf]
        %v3363 = vld [vmem:[#allocation8 + $0x70] sm:$0xf]
        %v3364 = vld [vmem:[#allocation8 + $0x74] sm:$0xf]
        %v3365 = vld [vmem:[#allocation8 + $0x78] sm:$0xf]
        %v3366 = vld [vmem:[#allocation8 + $0x7c] sm:$0xf]
        %v3367 = vld [vmem:[%s6] sm:$0x1]
        %v3369 = vlaneseq
        %v3370 = vshrl.u32 %v3369, 7
        %v3371 = vsub.s32 0, %v3370
        %v3372 = vrot.slane %v3367, %v3371
        %v3406 = vunpack.c.l.b16 %v3335
        %v3407 = vunpack.c.l.b16 %v3336
        %v3408 = vunpack.c.l.b16 %v3337
        %v3409 = vunpack.c.l.b16 %v3338
        %v3410 = vunpack.c.l.b16 %v3339
        %v3411 = vunpack.c.l.b16 %v3340
        %v3412 = vunpack.c.l.b16 %v3341
        %v3413 = vunpack.c.l.b16 %v3342
        %v3414 = vunpack.c.l.b16 %v3343
        %v3415 = vunpack.c.l.b16 %v3344
        %v3416 = vunpack.c.l.b16 %v3345
        %v3417 = vunpack.c.l.b16 %v3346
        %v3418 = vunpack.c.l.b16 %v3347
        %v3419 = vunpack.c.l.b16 %v3348
        %v3420 = vunpack.c.l.b16 %v3349
        %v3421 = vunpack.c.l.b16 %v3350
        %v3422 = vunpack.c.l.b16 %v3351
        %v3423 = vunpack.c.l.b16 %v3352
        %v3424 = vunpack.c.l.b16 %v3353
        %v3425 = vunpack.c.l.b16 %v3354
        %v3426 = vunpack.c.l.b16 %v3355
        %v3427 = vunpack.c.l.b16 %v3356
        %v3428 = vunpack.c.l.b16 %v3357
        %v3429 = vunpack.c.l.b16 %v3358
        %v3430 = vunpack.c.l.b16 %v3359
        %v3431 = vunpack.c.l.b16 %v3360
        %v3432 = vunpack.c.l.b16 %v3361
        %v3433 = vunpack.c.l.b16 %v3362
        %v3434 = vunpack.c.l.b16 %v3363
        %v3435 = vunpack.c.l.b16 %v3364
        %v3436 = vunpack.c.l.b16 %v3365
        %v3437 = vunpack.c.l.b16 %v3366
        %v3438 = vpack.c.b16 %v3407, %v3406
        %v3439 = vpack.c.b16 %v3409, %v3408
        %v3440 = vpack.c.b16 %v3411, %v3410
        %v3441 = vpack.c.b16 %v3413, %v3412
        %v3442 = vpack.c.b16 %v3415, %v3414
        %v3443 = vpack.c.b16 %v3417, %v3416
        %v3444 = vpack.c.b16 %v3419, %v3418
        %v3445 = vpack.c.b16 %v3421, %v3420
        %v3446 = vpack.c.b16 %v3423, %v3422
        %v3447 = vpack.c.b16 %v3425, %v3424
        %v3448 = vpack.c.b16 %v3427, %v3426
        %v3449 = vpack.c.b16 %v3429, %v3428
        %v3450 = vpack.c.b16 %v3431, %v3430
        %v3451 = vpack.c.b16 %v3433, %v3432
        %v3452 = vpack.c.b16 %v3435, %v3434
        %v3453 = vpack.c.b16 %v3437, %v3436
        %3470 = vmatprep.subr.bf16.mxu0 0
        %3471 = vmatpush1.bf16.msra.mxu0 %v3438
        %3472 = vmatprep.subr.bf16.mxu0 0
        %3473 = vmatpush1.bf16.msra.mxu0 %v3439
        %3474 = vmatprep.subr.bf16.mxu0 0
        %3475 = vmatpush1.bf16.msra.mxu0 %v3440
        %3476 = vmatprep.subr.bf16.mxu0 0
        %3477 = vmatpush1.bf16.msra.mxu0 %v3441
        %3478 = vmatprep.subr.bf16.mxu0 0
        %3479 = vmatpush1.bf16.msra.mxu0 %v3442
        %3480 = vmatprep.subr.bf16.mxu0 0
        %3481 = vmatpush1.bf16.msra.mxu0 %v3443
        %3482 = vmatprep.subr.bf16.mxu0 0
        %3483 = vmatpush1.bf16.msra.mxu0 %v3444
        %3484 = vmatprep.subr.bf16.mxu0 0
        %3485 = vmatpush1.bf16.msra.mxu0 %v3445
        %3486 = vmatprep.subr.bf16.mxu0 0
        %3487 = vmatpush1.bf16.msra.mxu0 %v3446
        %3488 = vmatprep.subr.bf16.mxu0 0
        %3489 = vmatpush1.bf16.msra.mxu0 %v3447
        %3490 = vmatprep.subr.bf16.mxu0 0
        %3491 = vmatpush1.bf16.msra.mxu0 %v3448
        %3492 = vmatprep.subr.bf16.mxu0 0
        %3493 = vmatpush1.bf16.msra.mxu0 %v3449
        %3494 = vmatprep.subr.bf16.mxu0 0
        %3495 = vmatpush1.bf16.msra.mxu0 %v3450
        %3496 = vmatprep.subr.bf16.mxu0 0
        %3497 = vmatpush1.bf16.msra.mxu0 %v3451
        %3498 = vmatprep.subr.bf16.mxu0 0
        %3499 = vmatpush1.bf16.msra.mxu0 %v3452
        %3500 = vmatprep.subr.bf16.mxu0 0
        %3501 = vmatpush1.bf16.msra.mxu0 %v3453
        %3502 = vmatprep.mubr.bf16.mxu0 %v3320
        %3503 = vmatmul.mubr.bf16.gmra.mrb[0].mxu0 %v3319
        %v3504 = vpop.f32.mrb[0].mxu0
        %v3505 = vadd.f32 %v3372, %v3504
        %v3506 = vpop.f32.mrb[0].mxu0
        %v3507 = vpop.f32.mrb[0].mxu0
        %v3508 = vadd.f32 %v3372, %v3507
        %v3509 = vpop.f32.mrb[0].mxu0
        %3510 = vmatprep.mubr.bf16.mxu0 %v3322
        %3511 = vmatmul.mubr.bf16.gmra.mrb[0].mxu0 %v3321
        %v3512 = vpop.f32.mrb[0].mxu0
        %v3513 = vadd.f32 %v3372, %v3512
        %v3514 = vpop.f32.mrb[0].mxu0
        %v3515 = vpop.f32.mrb[0].mxu0
        %v3516 = vadd.f32 %v3372, %v3515
        %v3517 = vpop.f32.mrb[0].mxu0
        %3518 = vmatprep.mubr.bf16.mxu0 %v3324
        %3519 = vmatmul.mubr.bf16.gmra.mrb[0].mxu0 %v3323
        %v3520 = vpop.f32.mrb[0].mxu0
        %v3521 = vadd.f32 %v3372, %v3520
        %v3522 = vpop.f32.mrb[0].mxu0
        %v3523 = vpop.f32.mrb[0].mxu0
        %v3524 = vadd.f32 %v3372, %v3523
        %v3525 = vpop.f32.mrb[0].mxu0
        %3526 = vmatprep.mubr.bf16.mxu0 %v3326
        %3527 = vmatmul.mubr.bf16.gmra.mrb[0].mxu0 %v3325
        %v3528 = vpop.f32.mrb[0].mxu0
        %v3529 = vadd.f32 %v3372, %v3528
        %v3530 = vpop.f32.mrb[0].mxu0
        %v3531 = vpop.f32.mrb[0].mxu0
        %v3532 = vadd.f32 %v3372, %v3531
        %v3533 = vpop.f32.mrb[0].mxu0
        %3534 = vmatprep.mubr.bf16.mxu0 %v3328
        %3535 = vmatmul.mubr.bf16.gmra.mrb[0].mxu0 %v3327
        %v3536 = vpop.f32.mrb[0].mxu0
        %v3537 = vadd.f32 %v3372, %v3536
        %v3538 = vpop.f32.mrb[0].mxu0
        %v3539 = vpop.f32.mrb[0].mxu0
        %v3540 = vadd.f32 %v3372, %v3539
        %v3541 = vpop.f32.mrb[0].mxu0
        %3542 = vmatprep.mubr.bf16.mxu0 %v3330
        %3543 = vmatmul.mubr.bf16.gmra.mrb[0].mxu0 %v3329
        %v3544 = vpop.f32.mrb[0].mxu0
        %v3545 = vadd.f32 %v3372, %v3544
        %v3546 = vpop.f32.mrb[0].mxu0
        %v3547 = vpop.f32.mrb[0].mxu0
        %v3548 = vadd.f32 %v3372, %v3547
        %v3549 = vpop.f32.mrb[0].mxu0
        %3550 = vmatprep.mubr.bf16.mxu0 %v3332
        %3551 = vmatmul.mubr.bf16.gmra.mrb[0].mxu0 %v3331
        %v3552 = vpop.f32.mrb[0].mxu0
        %v3553 = vadd.f32 %v3372, %v3552
        %v3554 = vpop.f32.mrb[0].mxu0
        %v3555 = vpop.f32.mrb[0].mxu0
        %v3556 = vadd.f32 %v3372, %v3555
        %v3557 = vpop.f32.mrb[0].mxu0
        %3558 = vmatprep.mubr.bf16.mxu0 %v3334
        %3559 = vmatmul.mubr.bf16.gmra.mrb[0].mxu0 %v3333
        %v3560 = vpop.f32.mrb[0].mxu0
        %v3561 = vadd.f32 %v3372, %v3560
        %v3562 = vpop.f32.mrb[0].mxu0
        %v3563 = vpop.f32.mrb[0].mxu0
        %v3564 = vadd.f32 %v3372, %v3563
        %v3565 = vpop.f32.mrb[0].mxu0
        %3566 = vdwg.mxu0
        %v3567 = vmax.f32 %v3505, 0.0
        %v3568 = vmax.f32 %v3508, 0.0
        %v3569 = vmax.f32 %v3513, 0.0
        %v3570 = vmax.f32 %v3516, 0.0
        %v3571 = vmax.f32 %v3521, 0.0
        %v3572 = vmax.f32 %v3524, 0.0
        %v3573 = vmax.f32 %v3529, 0.0
        %v3574 = vmax.f32 %v3532, 0.0
        %v3575 = vmax.f32 %v3537, 0.0
        %v3576 = vmax.f32 %v3540, 0.0
        %v3577 = vmax.f32 %v3545, 0.0
        %v3578 = vmax.f32 %v3548, 0.0
        %v3579 = vmax.f32 %v3553, 0.0
        %v3580 = vmax.f32 %v3556, 0.0
        %v3581 = vmax.f32 %v3561, 0.0
        %v3582 = vmax.f32 %v3564, 0.0
        %v3583 = vpack.c.bf16 %v3568, %v3567
        %v3584 = vpack.c.bf16 %v3570, %v3569
        %v3585 = vpack.c.bf16 %v3572, %v3571
        %v3586 = vpack.c.bf16 %v3574, %v3573
        %v3587 = vpack.c.bf16 %v3576, %v3575
        %v3588 = vpack.c.bf16 %v3578, %v3577
        %v3589 = vpack.c.bf16 %v3580, %v3579
        %v3590 = vpack.c.bf16 %v3582, %v3581
        %v3591 = vld [vmem:[#allocation10] sm:$0xf]
        %v3592 = vld [vmem:[#allocation10 + $0x4] sm:$0xf]
        %v3593 = vld [vmem:[#allocation10 + $0x8] sm:$0xf]
        %v3594 = vld [vmem:[#allocation10 + $0xc] sm:$0xf]
        %v3595 = vld [vmem:[#allocation10 + $0x10] sm:$0xf]
        %v3596 = vld [vmem:[#allocation10 + $0x14] sm:$0xf]
        %v3597 = vld [vmem:[#allocation10 + $0x18] sm:$0xf]
        %v3598 = vld [vmem:[#allocation10 + $0x1c] sm:$0xf]
        %v3599 = vld [vmem:[#allocation10 + $0x20] sm:$0xf]
        %v3600 = vld [vmem:[#allocation10 + $0x24] sm:$0xf]
        %v3601 = vld [vmem:[#allocation10 + $0x28] sm:$0xf]
        %v3602 = vld [vmem:[#allocation10 + $0x2c] sm:$0xf]
        %v3603 = vld [vmem:[#allocation10 + $0x30] sm:$0xf]
        %v3604 = vld [vmem:[#allocation10 + $0x34] sm:$0xf]
        %v3605 = vld [vmem:[#allocation10 + $0x38] sm:$0xf]
        %v3606 = vld [vmem:[#allocation10 + $0x3c] sm:$0xf]
        %v3607 = vld [vmem:[%s8] sm:$0x1]
        %v3609 = vlaneseq
        %v3610 = vshrl.u32 %v3609, 7
        %v3611 = vsub.s32 0, %v3610
        %v3612 = vrot.slane %v3607, %v3611
        %v3630 = vunpack.c.l.b16 %v3591
        %v3631 = vunpack.c.l.b16 %v3592
        %v3632 = vunpack.c.l.b16 %v3593
        %v3633 = vunpack.c.l.b16 %v3594
        %v3634 = vunpack.c.l.b16 %v3595
        %v3635 = vunpack.c.l.b16 %v3596
        %v3636 = vunpack.c.l.b16 %v3597
        %v3637 = vunpack.c.l.b16 %v3598
        %v3638 = vunpack.c.l.b16 %v3599
        %v3639 = vunpack.c.l.b16 %v3600
        %v3640 = vunpack.c.l.b16 %v3601
        %v3641 = vunpack.c.l.b16 %v3602
        %v3642 = vunpack.c.l.b16 %v3603
        %v3643 = vunpack.c.l.b16 %v3604
        %v3644 = vunpack.c.l.b16 %v3605
        %v3645 = vunpack.c.l.b16 %v3606
        %v3646 = vpack.c.b16 %v3631, %v3630
        %v3647 = vpack.c.b16 %v3633, %v3632
        %v3648 = vpack.c.b16 %v3635, %v3634
        %v3649 = vpack.c.b16 %v3637, %v3636
        %v3650 = vpack.c.b16 %v3639, %v3638
        %v3651 = vpack.c.b16 %v3641, %v3640
        %v3652 = vpack.c.b16 %v3643, %v3642
        %v3653 = vpack.c.b16 %v3645, %v3644
        %3662 = vmatprep.subr.bf16.mxu0 0
        %3663 = vmatpush1.bf16.msra.mxu0 %v3646
        %3664 = vmatprep.subr.bf16.mxu0 0
        %3665 = vmatpush1.bf16.msra.mxu0 %v3647
        %3666 = vmatprep.subr.bf16.mxu0 0
        %3667 = vmatpush1.bf16.msra.mxu0 %v3648
        %3668 = vmatprep.subr.bf16.mxu0 0
        %3669 = vmatpush1.bf16.msra.mxu0 %v3649
        %3670 = vmatprep.subr.bf16.mxu0 0
        %3671 = vmatpush1.bf16.msra.mxu0 %v3650
        %3672 = vmatprep.subr.bf16.mxu0 0
        %3673 = vmatpush1.bf16.msra.mxu0 %v3651
        %3674 = vmatprep.subr.bf16.mxu0 0
        %3675 = vmatpush1.bf16.msra.mxu0 %v3652
        %3676 = vmatprep.subr.bf16.mxu0 0
        %3677 = vmatpush1.bf16.msra.mxu0 %v3653
        %3678 = vmatprep.subr.bf16.mxu0 0
        %3679 = vmatpush1.bf16.msra.mxu0 0
        %3680 = vmatprep.subr.bf16.mxu0 0
        %3681 = vmatpush1.bf16.msra.mxu0 0
        %3682 = vmatprep.subr.bf16.mxu0 0
        %3683 = vmatpush1.bf16.msra.mxu0 0
        %3684 = vmatprep.subr.bf16.mxu0 0
        %3685 = vmatpush1.bf16.msra.mxu0 0
        %3686 = vmatprep.subr.bf16.mxu0 0
        %3687 = vmatpush1.bf16.msra.mxu0 0
        %3688 = vmatprep.subr.bf16.mxu0 0
        %3689 = vmatpush1.bf16.msra.mxu0 0
        %3690 = vmatprep.subr.bf16.mxu0 0
        %3691 = vmatpush1.bf16.msra.mxu0 0
        %3692 = vmatprep.subr.bf16.mxu0 0
        %3693 = vmatpush1.bf16.msra.mxu0 0
        %3694 = vmatprep.mubr.bf16.mxu0 0
        %3695 = vmatmul.mubr.bf16.gmra.mrb[0].mxu0 %v3583
        %v3696 = vpop.f32.mrb[0].mxu0
        %v3697 = vadd.f32 %v3612, %v3696
        %v3698 = vpop.f32.mrb[0].mxu0
        %v3699 = vpop.f32.mrb[0].mxu0
        %v3700 = vadd.f32 %v3612, %v3699
        %v3701 = vpop.f32.mrb[0].mxu0
        %3702 = vmatprep.mubr.bf16.mxu0 0
        %3703 = vmatmul.mubr.bf16.gmra.mrb[0].mxu0 %v3584
        %v3704 = vpop.f32.mrb[0].mxu0
        %v3705 = vadd.f32 %v3612, %v3704
        %v3706 = vpop.f32.mrb[0].mxu0
        %v3707 = vpop.f32.mrb[0].mxu0
        %v3708 = vadd.f32 %v3612, %v3707
        %v3709 = vpop.f32.mrb[0].mxu0
        %3710 = vmatprep.mubr.bf16.mxu0 0
        %3711 = vmatmul.mubr.bf16.gmra.mrb[0].mxu0 %v3585
        %v3712 = vpop.f32.mrb[0].mxu0
        %v3713 = vadd.f32 %v3612, %v3712
        %v3714 = vpop.f32.mrb[0].mxu0
        %v3715 = vpop.f32.mrb[0].mxu0
        %v3716 = vadd.f32 %v3612, %v3715
        %v3717 = vpop.f32.mrb[0].mxu0
        %3718 = vmatprep.mubr.bf16.mxu0 0
        %3719 = vmatmul.mubr.bf16.gmra.mrb[0].mxu0 %v3586
        %v3720 = vpop.f32.mrb[0].mxu0
        %v3721 = vadd.f32 %v3612, %v3720
        %v3722 = vpop.f32.mrb[0].mxu0
        %v3723 = vpop.f32.mrb[0].mxu0
        %v3724 = vadd.f32 %v3612, %v3723
        %v3725 = vpop.f32.mrb[0].mxu0
        %3726 = vmatprep.mubr.bf16.mxu0 0
        %3727 = vmatmul.mubr.bf16.gmra.mrb[0].mxu0 %v3587
        %v3728 = vpop.f32.mrb[0].mxu0
        %v3729 = vadd.f32 %v3612, %v3728
        %v3730 = vpop.f32.mrb[0].mxu0
        %v3731 = vpop.f32.mrb[0].mxu0
        %v3732 = vadd.f32 %v3612, %v3731
        %v3733 = vpop.f32.mrb[0].mxu0
        %3734 = vmatprep.mubr.bf16.mxu0 0
        %3735 = vmatmul.mubr.bf16.gmra.mrb[0].mxu0 %v3588
        %v3736 = vpop.f32.mrb[0].mxu0
        %v3737 = vadd.f32 %v3612, %v3736
        %v3738 = vpop.f32.mrb[0].mxu0
        %v3739 = vpop.f32.mrb[0].mxu0
        %v3740 = vadd.f32 %v3612, %v3739
        %v3741 = vpop.f32.mrb[0].mxu0
        %3742 = vmatprep.mubr.bf16.mxu0 0
        %3743 = vmatmul.mubr.bf16.gmra.mrb[0].mxu0 %v3589
        %v3744 = vpop.f32.mrb[0].mxu0
        %v3745 = vadd.f32 %v3612, %v3744
        %v3746 = vpop.f32.mrb[0].mxu0
        %v3747 = vpop.f32.mrb[0].mxu0
        %v3748 = vadd.f32 %v3612, %v3747
        %v3749 = vpop.f32.mrb[0].mxu0
        %3750 = vmatprep.mubr.bf16.mxu0 0
        %3751 = vmatmul.mubr.bf16.gmra.mrb[0].mxu0 %v3590
        %v3752 = vpop.f32.mrb[0].mxu0
        %v3753 = vadd.f32 %v3612, %v3752
        %v3754 = vpop.f32.mrb[0].mxu0
        %v3755 = vpop.f32.mrb[0].mxu0
        %v3756 = vadd.f32 %v3612, %v3755
        %v3757 = vpop.f32.mrb[0].mxu0
        %3758 = vdwg.mxu0
        %3759 = vst [vmem:[%s416] sm:$0xff] %v3697
        %3760 = vst [vmem:[%s416 + $0x8] sm:$0xff] %v3700
        %3761 = vst [vmem:[%s416 + $0x10] sm:$0xff] %v3705
        %3762 = vst [vmem:[%s416 + $0x18] sm:$0xff] %v3708
        %3763 = vst [vmem:[%s416 + $0x20] sm:$0xff] %v3713
        %3764 = vst [vmem:[%s416 + $0x28] sm:$0xff] %v3716
        %3765 = vst [vmem:[%s416 + $0x30] sm:$0xff] %v3721
        %3766 = vst [vmem:[%s416 + $0x38] sm:$0xff] %v3724
        %3767 = vst [vmem:[%s416 + $0x40] sm:$0xff] %v3729
        %3768 = vst [vmem:[%s416 + $0x48] sm:$0xff] %v3732
        %3769 = vst [vmem:[%s416 + $0x50] sm:$0xff] %v3737
        %3770 = vst [vmem:[%s416 + $0x58] sm:$0xff] %v3740
        %3771 = vst [vmem:[%s416 + $0x60] sm:$0xff] %v3745
        %3772 = vst [vmem:[%s416 + $0x68] sm:$0xff] %v3748
        %3773 = vst [vmem:[%s416 + $0x70] sm:$0xff] %v3753
        %3774 = vst [vmem:[%s416 + $0x78] sm:$0xff] %v3756
        %s3775 = sand.u32 %s230, 1
        %s3776 = scalar_lea.sflag [#allocation4], %s3775
        %s3777 = sand.u32 %s230, 1
        %s3778 = smul.addr %s3777, 128
        %s3779 = scalar_lea.vmem [#allocation11], %s3778
        // Predicated region
        $region77: #{tpu_custom_call.1} parent=55 // pred_check
          %p3780 = pneg %p240
        $region78: #{tpu_custom_call.1} parent=55 // pred_check_branch
          %3782 = sbr.rel (%p3780) target = $region80
        $region79: #{tpu_custom_call.1} parent=55 // pred_region
          %s3783 = smul.u32 16, %s28
          %s3784 = ssub.s32 25, %s3783
          %p3785 = scmp.lt.s32.totalorder %s3784, 16
          %s3786 = scalar_select %p3785, %s3784, 16
          %s3787 = smul.u32 128, %s3786
          %s3789 = ssub.s32 2048, %s3787
          %3790 = vsyncadd %s3776, %s3789
          %p3791 = scmp.ne.s32.totalorder 0, %s3787
          %s3792 = smul.addr %s3783, 128
          %s3793 = scalar_lea.hbm %s9, %s3792
          %s3794 = smul.u32 8, %s3786
          %s3795 = sshll.u32 %s3779, 4
          %s3796 = int_to_ptr.vmem [resolvable:$true] %s3795
          %s3797 = sshll.u32 %s3794, 4
          %3801 = dma.vmem_to_hbm [thread:$0]  (%p3791), %s3796, %s3797, %s3793, %s3776, 128, 128, 8
        $region80: #{tpu_custom_call.1} parent=55 // pred_fallthru
          _
      $region56: #{tpu_custom_call.1} parent=5 // pred_fallthru
        _
      %p3802 = scmp.le.s32.totalorder 2, %s23
      // Predicated region
      $region81: #{tpu_custom_call.1} parent=5 // pred_check
        %p3803 = pneg %p3802
      $region82: #{tpu_custom_call.1} parent=5 // pred_check_branch
        %3805 = sbr.rel (%p3803) target = $region84
      $region83: #{tpu_custom_call.1} parent=5 // pred_region
        %s3806 = ssub.s32 %s23, 2
        // Predicated region
        $region85: #{tpu_custom_call.1} parent=83 // pred_check
          %p3807 = pneg %p246
        $region86: #{tpu_custom_call.1} parent=83 // pred_check_branch
          %3809 = sbr.rel (%p3807) target = $region88
        $region87: #{tpu_custom_call.1} parent=83 // pred_region
          %s3810 = sand.u32 %s231, 1
          %s3811 = scalar_lea.sflag [#allocation4], %s3810
          %s3812 = sand.u32 %s231, 1
          %s3813 = smul.addr %s3812, 128
          %s3814 = scalar_lea.vmem [#allocation11], %s3813
          %3815 = dma.done %s3811, 2048
        $region88: #{tpu_custom_call.1} parent=83 // pred_fallthru
          _
      $region84: #{tpu_custom_call.1} parent=5 // pred_fallthru
        _
    $region6: #{tpu_custom_call.1} parent=1 // loop_footer
      %s27 = sadd.s32 1, %s23
    $region7: #{tpu_custom_call.1} parent=1 // loop_footer_branch
      %22 = sbr.rel target = $region3
    $region8: #{tpu_custom_call.1} parent=1 // loop_exit
      _
    %3816 = vsyncpa [#allocation3], 1
    %s3817 = scalar_lea.sflag [#allocation3], 1
    %3818 = vsyncpa %s3817, 1
    %3819 = vsyncpa [#allocation6], 1
    %3820 = vsyncpa [#allocation9], 1
    %3821 = vsyncpa [#allocation4], 1
    %s3822 = scalar_lea.sflag [#allocation4], 1
    %3823 = vsyncpa %s3822, 1

// kernel: tpu_custom_call.1
$region0: #{tpu_custom_call.1}
  #allocation0 [shape = 'u32[]', space=smem, size = 0x4, offset = 0x4, fixed_abs, tag = 'smem constant byte address 0x4 - core index']
  #allocation1 [shape = 'u32[144,128]{1,0:T(1,128)}', space=vmem, size = 0x12000, scoped, tag = 'internal scratch']
  %s0 = inlined_call_operand.hbm [shape: bf16[200,768], index: 0, kind: input, shape index: {}]
  %s1 = inlined_call_operand.hbm [shape: bf16[768,512], index: 1, kind: input, shape index: {}]
  %s2 = inlined_call_operand.vmem [shape: f32[1,512], index: 2, kind: input, shape index: {}]
  %s3 = inlined_call_operand.hbm [shape: bf16[512,256], index: 3, kind: input, shape index: {}]
  %s4 = inlined_call_operand.vmem [shape: f32[1,256], index: 4, kind: input, shape index: {}]
  %s5 = inlined_call_operand.hbm [shape: bf16[256,128], index: 5, kind: input, shape index: {}]
  %s6 = inlined_call_operand.vmem [shape: f32[1,128], index: 6, kind: input, shape index: {}]
  %s7 = inlined_call_operand.hbm [shape: bf16[128,128], index: 7, kind: input, shape index: {}]
  %s8 = inlined_call_operand.vmem [shape: f32[1,128], index: 8, kind: input, shape index: {}]
  %s9 = inlined_call_operand.hbm [shape: f32[200,128], index: 9, kind: output, shape index: {}]
  %s10 = sld [smem:[#allocation0]]
  $region89: #{tpu_custom_call.1} parent=0
    _
  %s12 = ssub.s32 1, %s10
  %s13 = scalar_select 0, %s12, %s10
  $region1: #{tpu_custom_call.1} parent=0
    #allocation2 [shape = 'u8[393216]{0}', space=vmem, size = 0x60000, scoped, tag = 'input window, operand 0']
    #allocation3 [shape = 's32[2]{0}', space=sflag, size = 0x8, scoped, tag = 'scoped memory for tpu_custom_call.1']
    #allocation4 [shape = 's32[2]{0}', space=sflag, size = 0x8, scoped, tag = 'scoped memory for tpu_custom_call.1']
    #allocation5 [shape = 'u8[786432]{0}', space=vmem, size = 0xc0000, scoped, tag = 'input window, operand 1, single buffered']
    #allocation6 [shape = 's32[1]{0}', space=sflag, size = 0x4, scoped, tag = 'scoped memory for tpu_custom_call.1']
    #allocation7 [shape = 'u8[262144]{0}', space=vmem, size = 0x40000, scoped, tag = 'input window, operand 3, single buffered']
    #allocation8 [shape = 'u8[65536]{0}', space=vmem, size = 0x10000, scoped, tag = 'input window, operand 5, single buffered']
    #allocation9 [shape = 's32[1]{0}', space=sflag, size = 0x4, scoped, tag = 'scoped memory for tpu_custom_call.1']
    #allocation10 [shape = 'u8[32768]{0}', space=vmem, size = 0x8000, scoped, tag = 'input window, operand 7, single buffered']
    #allocation11 [shape = 'u8[131072]{0}', space=vmem, size = 0x20000, scoped, tag = 'output window, operand 0']
    %14 = vsyncpa [#allocation3], 0
    %s15 = scalar_lea.sflag [#allocation3], 1
    %16 = vsyncpa %s15, 0
    %17 = vsyncpa [#allocation6], 0
    %18 = vsyncpa [#allocation9], 0
    %19 = vsyncpa [#allocation4], 0
    %s20 = scalar_lea.sflag [#allocation4], 1
    %21 = vsyncpa %s20, 0
    loop: start=0, step=1, limit=4
    $region2: #{tpu_custom_call.1} parent=1 // loop_pre_header
      _
    $region3: #{tpu_custom_call.1} parent=1 // loop_header
      %s23 = sphi 0, %s27
      %p24 = scmp.ge.s32.totalorder %s23, 4
      %s33 = sphi 0, %s35
      %s36 = sphi 0, %s33
      %s37 = sphi 0, %s36
      %s53 = sphi 0, %s37
      %s57 = sphi 0, %s57
      %s59 = sphi 0, %s57
      %s60 = sphi 0, %s59
      %s74 = sphi 0, %s60
      %s78 = sphi 0, %s78
      %s80 = sphi 0, %s78
      %s81 = sphi 0, %s80
      %s95 = sphi 0, %s81
      %s99 = sphi 0, %s99
      %s101 = sphi 0, %s99
      %s102 = sphi 0, %s101
      %s116 = sphi 0, %s102
      %s120 = sphi 0, %s120
      %s122 = sphi 0, %s120
      %s123 = sphi 0, %s122
      %s137 = sphi 0, %s123
      %s141 = sphi 0, %s141
      %s143 = sphi 0, %s141
      %s144 = sphi 0, %s143
      %s158 = sphi 0, %s144
      %s162 = sphi 0, %s162
      %s164 = sphi 0, %s162
      %s165 = sphi 0, %s164
      %s179 = sphi 0, %s165
      %s183 = sphi 0, %s183
      %s185 = sphi 0, %s183
      %s186 = sphi 0, %s185
      %s200 = sphi 0, %s186
      %s204 = sphi 0, %s204
      %s206 = sphi 0, %s204
      %s207 = sphi 0, %s206
      %s221 = sphi 0, %s207
      %s227 = sphi 0, %s229
      %s230 = sphi 0, %s227
      %s231 = sphi 0, %s230
      %s247 = sphi 0, %s231
    $region4: #{tpu_custom_call.1} parent=1 // loop_header_branch
      %26 = sbr.rel (%p24) target = $region8
    $region5: #{tpu_custom_call.1} parent=1 // loop_body
      %s28 = ssub.s32 %s23, 1
      %s29 = ssub.s32 %s23, 2
      %s30 = sadd.s32 %s23, 1
      %s31 = ssub.s32 %s23, %s30
      %p32 = scmp.eq.s32.totalorder %s31, 0
      %s34 = sadd.s32 %s33, 1
      %s35 = scalar_select %p32, %s33, %s34
      %p38 = pneg %p32
      %p39 = scmp.eq.s32.totalorder %s23, 1
      %p40 = por %p38, %p39
      %p41 = scmp.ne.s32.totalorder %s33, %s36
      %p42 = scmp.eq.s32.totalorder %s23, 0
      %p43 = por %p41, %p42
      %p44 = scmp.ne.s32.totalorder %s33, %s36
      %p45 = scmp.eq.s32.totalorder %s28, 1
      %p46 = por %p44, %p45
      %p47 = scmp.ne.s32.totalorder %s36, %s37
      %p48 = scmp.eq.s32.totalorder %s28, 0
      %p49 = por %p47, %p48
      %p50 = scmp.ne.s32.totalorder %s36, %s37
      %p51 = scmp.eq.s32.totalorder %s29, 1
      %p52 = por %p50, %p51
      %p54 = scmp.ne.s32.totalorder %s37, %s53
      %p55 = scmp.eq.s32.totalorder %s29, 0
      %p56 = por %p54, %p55
      %s58 = sadd.s32 %s57, 1
      %p61 = scmp.eq.s32.totalorder %s23, 1
      %p62 = scmp.ne.s32.totalorder %s57, %s59
      %p63 = scmp.eq.s32.totalorder %s23, 0
      %p64 = por %p62, %p63
      %p65 = scmp.ne.s32.totalorder %s57, %s59
      %p66 = scmp.eq.s32.totalorder %s28, 1
      %p67 = por %p65, %p66
      %p68 = scmp.ne.s32.totalorder %s59, %s60
      %p69 = scmp.eq.s32.totalorder %s28, 0
      %p70 = por %p68, %p69
      %p71 = scmp.ne.s32.totalorder %s59, %s60
      %p72 = scmp.eq.s32.totalorder %s29, 1
      %p73 = por %p71, %p72
      %p75 = scmp.ne.s32.totalorder %s60, %s74
      %p76 = scmp.eq.s32.totalorder %s29, 0
      %p77 = por %p75, %p76
      %s79 = sadd.s32 %s78, 1
      %p82 = scmp.eq.s32.totalorder %s23, 1
      %p83 = scmp.ne.s32.totalorder %s78, %s80
      %p84 = scmp.eq.s32.totalorder %s23, 0
      %p85 = por %p83, %p84
      %p86 = scmp.ne.s32.totalorder %s78, %s80
      %p87 = scmp.eq.s32.totalorder %s28, 1
      %p88 = por %p86, %p87
      %p89 = scmp.ne.s32.totalorder %s80, %s81
      %p90 = scmp.eq.s32.totalorder %s28, 0
      %p91 = por %p89, %p90
      %p92 = scmp.ne.s32.totalorder %s80, %s81
      %p93 = scmp.eq.s32.totalorder %s29, 1
      %p94 = por %p92, %p93
      %p96 = scmp.ne.s32.totalorder %s81, %s95
      %p97 = scmp.eq.s32.totalorder %s29, 0
      %p98 = por %p96, %p97
      %s100 = sadd.s32 %s99, 1
      %p103 = scmp.eq.s32.totalorder %s23, 1
      %p104 = scmp.ne.s32.totalorder %s99, %s101
      %p105 = scmp.eq.s32.totalorder %s23, 0
      %p106 = por %p104, %p105
      %p107 = scmp.ne.s32.totalorder %s99, %s101
      %p108 = scmp.eq.s32.totalorder %s28, 1
      %p109 = por %p107, %p108
      %p110 = scmp.ne.s32.totalorder %s101, %s102
      %p111 = scmp.eq.s32.totalorder %s28, 0
      %p112 = por %p110, %p111
      %p113 = scmp.ne.s32.totalorder %s101, %s102
      %p114 = scmp.eq.s32.totalorder %s29, 1
      %p115 = por %p113, %p114
      %p117 = scmp.ne.s32.totalorder %s102, %s116
      %p118 = scmp.eq.s32.totalorder %s29, 0
      %p119 = por %p117, %p118
      %s121 = sadd.s32 %s120, 1
      %p124 = scmp.eq.s32.totalorder %s23, 1
      %p125 = scmp.ne.s32.totalorder %s120, %s122
      %p126 = scmp.eq.s32.totalorder %s23, 0
      %p127 = por %p125, %p126
      %p128 = scmp.ne.s32.totalorder %s120, %s122
      %p129 = scmp.eq.s32.totalorder %s28, 1
      %p130 = por %p128, %p129
      %p131 = scmp.ne.s32.totalorder %s122, %s123
      %p132 = scmp.eq.s32.totalorder %s28, 0
      %p133 = por %p131, %p132
      %p134 = scmp.ne.s32.totalorder %s122, %s123
      %p135 = scmp.eq.s32.totalorder %s29, 1
      %p136 = por %p134, %p135
      %p138 = scmp.ne.s32.totalorder %s123, %s137
      %p139 = scmp.eq.s32.totalorder %s29, 0
      %p140 = por %p138, %p139
      %s142 = sadd.s32 %s141, 1
      %p145 = scmp.eq.s32.totalorder %s23, 1
      %p146 = scmp.ne.s32.totalorder %s141, %s143
      %p147 = scmp.eq.s32.totalorder %s23, 0
      %p148 = por %p146, %p147
      %p149 = scmp.ne.s32.totalorder %s141, %s143
      %p150 = scmp.eq.s32.totalorder %s28, 1
      %p151 = por %p149, %p150
      %p152 = scmp.ne.s32.totalorder %s143, %s144
      %p153 = scmp.eq.s32.totalorder %s28, 0
      %p154 = por %p152, %p153
      %p155 = scmp.ne.s32.totalorder %s143, %s144
      %p156 = scmp.eq.s32.totalorder %s29, 1
      %p157 = por %p155, %p156
      %p159 = scmp.ne.s32.totalorder %s144, %s158
      %p160 = scmp.eq.s32.totalorder %s29, 0
      %p161 = por %p159, %p160
      %s163 = sadd.s32 %s162, 1
      %p166 = scmp.eq.s32.totalorder %s23, 1
      %p167 = scmp.ne.s32.totalorder %s162, %s164
      %p168 = scmp.eq.s32.totalorder %s23, 0
      %p169 = por %p167, %p168
      %p170 = scmp.ne.s32.totalorder %s162, %s164
      %p171 = scmp.eq.s32.totalorder %s28, 1
      %p172 = por %p170, %p171
      %p173 = scmp.ne.s32.totalorder %s164, %s165
      %p174 = scmp.eq.s32.totalorder %s28, 0
      %p175 = por %p173, %p174
      %p176 = scmp.ne.s32.totalorder %s164, %s165
      %p177 = scmp.eq.s32.totalorder %s29, 1
      %p178 = por %p176, %p177
      %p180 = scmp.ne.s32.totalorder %s165, %s179
      %p181 = scmp.eq.s32.totalorder %s29, 0
      %p182 = por %p180, %p181
      %s184 = sadd.s32 %s183, 1
      %p187 = scmp.eq.s32.totalorder %s23, 1
      %p188 = scmp.ne.s32.totalorder %s183, %s185
      %p189 = scmp.eq.s32.totalorder %s23, 0
      %p190 = por %p188, %p189
      %p191 = scmp.ne.s32.totalorder %s183, %s185
      %p192 = scmp.eq.s32.totalorder %s28, 1
      %p193 = por %p191, %p192
      %p194 = scmp.ne.s32.totalorder %s185, %s186
      %p195 = scmp.eq.s32.totalorder %s28, 0
      %p196 = por %p194, %p195
      %p197 = scmp.ne.s32.totalorder %s185, %s186
      %p198 = scmp.eq.s32.totalorder %s29, 1
      %p199 = por %p197, %p198
      %p201 = scmp.ne.s32.totalorder %s186, %s200
      %p202 = scmp.eq.s32.totalorder %s29, 0
      %p203 = por %p201, %p202
      %s205 = sadd.s32 %s204, 1
      %p208 = scmp.eq.s32.totalorder %s23, 1
      %p209 = scmp.ne.s32.totalorder %s204, %s206
      %p210 = scmp.eq.s32.totalorder %s23, 0
      %p211 = por %p209, %p210
      %p212 = scmp.ne.s32.totalorder %s204, %s206
      %p213 = scmp.eq.s32.totalorder %s28, 1
      %p214 = por %p212, %p213
      %p215 = scmp.ne.s32.totalorder %s206, %s207
      %p216 = scmp.eq.s32.totalorder %s28, 0
      %p217 = por %p215, %p216
      %p218 = scmp.ne.s32.totalorder %s206, %s207
      %p219 = scmp.eq.s32.totalorder %s29, 1
      %p220 = por %p218, %p219
      %p222 = scmp.ne.s32.totalorder %s207, %s221
      %p223 = scmp.eq.s32.totalorder %s29, 0
      %p224 = por %p222, %p223
      %s225 = ssub.s32 %s23, %s30
      %p226 = scmp.eq.s32.totalorder %s225, 0
      %s228 = sadd.s32 %s227, 1
      %s229 = scalar_select %p226, %s227, %s228
      %p232 = pneg %p226
      %p233 = scmp.eq.s32.totalorder %s23, 1
      %p234 = por %p232, %p233
      %p235 = scmp.ne.s32.totalorder %s227, %s230
      %p236 = scmp.eq.s32.totalorder %s23, 0
      %p237 = por %p235, %p236
      %p238 = scmp.ne.s32.totalorder %s227, %s230
      %p239 = scmp.eq.s32.totalorder %s28, 1
      %p240 = por %p238, %p239
      %p241 = scmp.ne.s32.totalorder %s230, %s231
      %p242 = scmp.eq.s32.totalorder %s28, 0
      %p243 = por %p241, %p242
      %p244 = scmp.ne.s32.totalorder %s230, %s231
      %p245 = scmp.eq.s32.totalorder %s29, 1
      %p246 = por %p244, %p245
      %p248 = scmp.ne.s32.totalorder %s231, %s247
      %p249 = scmp.eq.s32.totalorder %s29, 0
      %p250 = por %p248, %p249
      %p251 = scmp.le.s32.totalorder 1, %s23
      %p252 = scmp.lt.s32.totalorder %s23, 3
      %p253 = pnand %p251, %p252
      %p254 = pneg %p253
      // Predicated region
      $region9: #{tpu_custom_call.1} parent=5 // pred_check
        _
      $region10: #{tpu_custom_call.1} parent=5 // pred_check_branch
        %256 = sbr.rel (%p253) target = $region12
      $region11: #{tpu_custom_call.1} parent=5 // pred_region
        %s257 = ssub.s32 %s23, 1
        // Predicated region
        $region13: #{tpu_custom_call.1} parent=11 // pred_check
          %p258 = pneg %p70
        $region14: #{tpu_custom_call.1} parent=11 // pred_check_branch
          %260 = sbr.rel (%p258) target = $region16
        $region15: #{tpu_custom_call.1} parent=11 // pred_region
          %s262 = ssub.s32 24576, 24576
          %263 = vsyncadd [#allocation6], %s262
          %s264 = sshll.u32 [#allocation5], 4
          %s265 = int_to_ptr.vmem [resolvable:$true] %s264
          %270 = dma.hbm_to_vmem [thread:$0]  %s1, 24576, %s265, [#allocation6], 256, 256, 16
        $region16: #{tpu_custom_call.1} parent=11 // pred_fallthru
          _
        // Predicated region
        $region17: #{tpu_custom_call.1} parent=11 // pred_check
          %p271 = pneg %p91
        $region18: #{tpu_custom_call.1} parent=11 // pred_check_branch
          %273 = sbr.rel (%p271) target = $region20
        $region19: #{tpu_custom_call.1} parent=11 // pred_region
          _
        $region20: #{tpu_custom_call.1} parent=11 // pred_fallthru
          _
        // Predicated region
        $region21: #{tpu_custom_call.1} parent=11 // pred_check
          %p274 = pneg %p112
        $region22: #{tpu_custom_call.1} parent=11 // pred_check_branch
          %276 = sbr.rel (%p274) target = $region24
        $region23: #{tpu_custom_call.1} parent=11 // pred_region
          %s278 = ssub.s32 8192, 8192
          %279 = vsyncadd [#allocation6], %s278
          %s280 = sshll.u32 [#allocation7], 4
          %s281 = int_to_ptr.vmem [resolvable:$true] %s280
          %286 = dma.hbm_to_vmem [thread:$0]  %s3, 8192, %s281, [#allocation6], 128, 128, 8
        $region24: #{tpu_custom_call.1} parent=11 // pred_fallthru
          _
        // Predicated region
        $region25: #{tpu_custom_call.1} parent=11 // pred_check
          %p287 = pneg %p133
        $region26: #{tpu_custom_call.1} parent=11 // pred_check_branch
          %289 = sbr.rel (%p287) target = $region28
        $region27: #{tpu_custom_call.1} parent=11 // pred_region
          _
        $region28: #{tpu_custom_call.1} parent=11 // pred_fallthru
          _
        // Predicated region
        $region29: #{tpu_custom_call.1} parent=11 // pred_check
          %p290 = pneg %p154
        $region30: #{tpu_custom_call.1} parent=11 // pred_check_branch
          %292 = sbr.rel (%p290) target = $region32
        $region31: #{tpu_custom_call.1} parent=11 // pred_region
          %s294 = ssub.s32 2048, 2048
          %295 = vsyncadd [#allocation9], %s294
          %s296 = sshll.u32 [#allocation8], 4
          %s297 = int_to_ptr.vmem [resolvable:$true] %s296
          %302 = dma.hbm_to_vmem [thread:$0]  %s5, 2048, %s297, [#allocation9], 64, 64, 4
        $region32: #{tpu_custom_call.1} parent=11 // pred_fallthru
          _
        // Predicated region
        $region33: #{tpu_custom_call.1} parent=11 // pred_check
          %p303 = pneg %p175
        $region34: #{tpu_custom_call.1} parent=11 // pred_check_branch
          %305 = sbr.rel (%p303) target = $region36
        $region35: #{tpu_custom_call.1} parent=11 // pred_region
          _
        $region36: #{tpu_custom_call.1} parent=11 // pred_fallthru
          _
        // Predicated region
        $region37: #{tpu_custom_call.1} parent=11 // pred_check
          %p306 = pneg %p196
        $region38: #{tpu_custom_call.1} parent=11 // pred_check_branch
          %308 = sbr.rel (%p306) target = $region40
        $region39: #{tpu_custom_call.1} parent=11 // pred_region
          %s310 = ssub.s32 1024, 1024
          %311 = vsyncadd [#allocation9], %s310
          %s312 = sshll.u32 [#allocation10], 4
          %s313 = int_to_ptr.vmem [resolvable:$true] %s312
          %318 = dma.hbm_to_vmem [thread:$0]  %s7, 1024, %s313, [#allocation9], 64, 64, 4
        $region40: #{tpu_custom_call.1} parent=11 // pred_fallthru
          _
        // Predicated region
        $region41: #{tpu_custom_call.1} parent=11 // pred_check
          %p319 = pneg %p217
        $region42: #{tpu_custom_call.1} parent=11 // pred_check_branch
          %321 = sbr.rel (%p319) target = $region44
        $region43: #{tpu_custom_call.1} parent=11 // pred_region
          _
        $region44: #{tpu_custom_call.1} parent=11 // pred_fallthru
          _
      $region12: #{tpu_custom_call.1} parent=5 // pred_fallthru
        _
      %p322 = scmp.lt.s32.totalorder %s23, 2
      // Predicated region
      $region45: #{tpu_custom_call.1} parent=5 // pred_check
        %p323 = pneg %p322
      $region46: #{tpu_custom_call.1} parent=5 // pred_check_branch
        %325 = sbr.rel (%p323) target = $region48
      $region47: #{tpu_custom_call.1} parent=5 // pred_region
        // Predicated region
        $region49: #{tpu_custom_call.1} parent=47 // pred_check
          %p326 = pneg %p43
        $region50: #{tpu_custom_call.1} parent=47 // pred_check_branch
          %328 = sbr.rel (%p326) target = $region52
        $region51: #{tpu_custom_call.1} parent=47 // pred_region
          %s329 = sand.u32 %s33, 1
          %s330 = scalar_lea.sflag [#allocation3], %s329
          %s331 = sand.u32 %s33, 1
          %s332 = smul.addr %s331, 384
          %s333 = scalar_lea.vmem [#allocation2], %s332
          %s334 = smul.u32 16, %s23
          %s335 = ssub.s32 25, %s334
          %p336 = scmp.lt.s32.totalorder %s335, 16
          %s337 = scalar_select %p336, %s335, 16
          %s338 = smul.u32 64, %s337
          %s339 = smul.u32 %s338, 6
          %s341 = ssub.s32 6144, %s339
          %342 = vsyncadd %s330, %s341
          %p343 = scmp.ne.s32.totalorder 0, %s339
          %s344 = smul.addr %s334, 6
          %s345 = smul.addr %s344, 64
          %s346 = scalar_lea.hbm %s0, %s345
          %s347 = smul.u32 24, %s337
          %s348 = sshll.u32 %s333, 4
          %s349 = int_to_ptr.vmem [resolvable:$true] %s348
          %s350 = sshll.u32 %s347, 4
          %354 = dma.hbm_to_vmem [thread:$0]  (%p343), %s346, %s350, %s349, %s330, 384, 384, 24
        $region52: #{tpu_custom_call.1} parent=47 // pred_fallthru
          _
      $region48: #{tpu_custom_call.1} parent=5 // pred_fallthru
        _
      %p355 = scmp.le.s32.totalorder 1, %s23
      %p356 = scmp.lt.s32.totalorder %s23, 3
      %p357 = pnand %p355, %p356
      %p358 = pneg %p357
      // Predicated region
      $region53: #{tpu_custom_call.1} parent=5 // pred_check
        _
      $region54: #{tpu_custom_call.1} parent=5 // pred_check_branch
        %360 = sbr.rel (%p357) target = $region56
      $region55: #{tpu_custom_call.1} parent=5 // pred_region
        %s361 = ssub.s32 %s23, 1
        %s362 = sand.u32 %s36, 1
        %s363 = scalar_lea.sflag [#allocation3], %s362
        %s364 = sand.u32 %s36, 1
        %s365 = smul.addr %s364, 384
        %s366 = scalar_lea.vmem [#allocation2], %s365
        // Predicated region
        $region57: #{tpu_custom_call.1} parent=55 // pred_check
          %p367 = pneg %p49
        $region58: #{tpu_custom_call.1} parent=55 // pred_check_branch
          %369 = sbr.rel (%p367) target = $region60
        $region59: #{tpu_custom_call.1} parent=55 // pred_region
          %370 = dma.done %s363, 6144
        $region60: #{tpu_custom_call.1} parent=55 // pred_fallthru
          _
        // Predicated region
        $region61: #{tpu_custom_call.1} parent=55 // pred_check
          %p371 = pneg %p70
        $region62: #{tpu_custom_call.1} parent=55 // pred_check_branch
          %373 = sbr.rel (%p371) target = $region64
        $region63: #{tpu_custom_call.1} parent=55 // pred_region
          %374 = dma.done [#allocation6], 24576
        $region64: #{tpu_custom_call.1} parent=55 // pred_fallthru
          _
        // Predicated region
        $region65: #{tpu_custom_call.1} parent=55 // pred_check
          %p375 = pneg %p112
        $region66: #{tpu_custom_call.1} parent=55 // pred_check_branch
          %377 = sbr.rel (%p375) target = $region68
        $region67: #{tpu_custom_call.1} parent=55 // pred_region
          %378 = dma.done [#allocation6], 8192
        $region68: #{tpu_custom_call.1} parent=55 // pred_fallthru
          _
        // Predicated region
        $region69: #{tpu_custom_call.1} parent=55 // pred_check
          %p379 = pneg %p154
        $region70: #{tpu_custom_call.1} parent=55 // pred_check_branch
          %381 = sbr.rel (%p379) target = $region72
        $region71: #{tpu_custom_call.1} parent=55 // pred_region
          %382 = dma.done [#allocation9], 2048
        $region72: #{tpu_custom_call.1} parent=55 // pred_fallthru
          _
        // Predicated region
        $region73: #{tpu_custom_call.1} parent=55 // pred_check
          %p383 = pneg %p196
        $region74: #{tpu_custom_call.1} parent=55 // pred_check_branch
          %385 = sbr.rel (%p383) target = $region76
        $region75: #{tpu_custom_call.1} parent=55 // pred_region
          %386 = dma.done [#allocation9], 1024
        $region76: #{tpu_custom_call.1} parent=55 // pred_fallthru
          _
        %s387 = sand.u32 %s36, 1
        %s388 = scalar_lea.sflag [#allocation3], %s387
        %s389 = sand.u32 %s36, 1
        %s390 = smul.addr %s389, 384
        %s391 = scalar_lea.vmem [#allocation2], %s390
        %p392 = pneg %p49
        %p393 = pneg %p46
        %p394 = pneg %p70
        %p395 = pneg %p67
        %p396 = pneg %p91
        %p397 = pneg %p88
        %p398 = pneg %p112
        %p399 = pneg %p109
        %p400 = pneg %p133
        %p401 = pneg %p130
        %p402 = pneg %p154
        %p403 = pneg %p151
        %p404 = pneg %p175
        %p405 = pneg %p172
        %p406 = pneg %p196
        %p407 = pneg %p193
        %p408 = pneg %p217
        %p409 = pneg %p214
        %p410 = pneg %p243
        %p411 = pneg %p240
        %s412 = sand.u32 %s230, 1
        %s413 = scalar_lea.sflag [#allocation4], %s412
        %s414 = sand.u32 %s230, 1
        %s415 = smul.addr %s414, 128
        %s416 = scalar_lea.vmem [#allocation11], %s415
        %s417 = smul.u32 16, %s28
        %s418 = ssub.s32 25, %s417
        %p419 = scmp.lt.s32.totalorder %s418, 16
        %s420 = scalar_select %p419, %s418, 16
        %s421 = smul.u32 64, %s420
        %s422 = smul.u32 %s421, 6
        %s423 = smul.u32 16, %s28
        %s424 = ssub.s32 25, %s423
        %p425 = scmp.lt.s32.totalorder %s424, 16
        %s426 = scalar_select %p425, %s424, 16
        %s427 = smul.u32 128, %s426
        %v429 = vld [vmem:[%s366] sm:$0xff]
        %v430 = vld [vmem:[%s366 + $0x8] sm:$0xff]
        %v431 = vld [vmem:[%s366 + $0x10] sm:$0xff]
        %v432 = vld [vmem:[%s366 + $0x18] sm:$0xff]
        %v433 = vld [vmem:[%s366 + $0x20] sm:$0xff]
        %v434 = vld [vmem:[%s366 + $0x28] sm:$0xff]
        %v435 = vld [vmem:[%s366 + $0x30] sm:$0xff]
        %v436 = vld [vmem:[%s366 + $0x38] sm:$0xff]
        %v437 = vld [vmem:[%s366 + $0x40] sm:$0xff]
        %v438 = vld [vmem:[%s366 + $0x48] sm:$0xff]
        %v439 = vld [vmem:[%s366 + $0x50] sm:$0xff]
        %v440 = vld [vmem:[%s366 + $0x58] sm:$0xff]
        %v441 = vld [vmem:[%s366 + $0x60] sm:$0xff]
        %v442 = vld [vmem:[%s366 + $0x68] sm:$0xff]
        %v443 = vld [vmem:[%s366 + $0x70] sm:$0xff]
        %v444 = vld [vmem:[%s366 + $0x78] sm:$0xff]
        %v445 = vld [vmem:[%s366 + $0x80] sm:$0xff]
        %v446 = vld [vmem:[%s366 + $0x88] sm:$0xff]
        %v447 = vld [vmem:[%s366 + $0x90] sm:$0xff]
        %v448 = vld [vmem:[%s366 + $0x98] sm:$0xff]
        %v449 = vld [vmem:[%s366 + $0xa0] sm:$0xff]
        %v450 = vld [vmem:[%s366 + $0xa8] sm:$0xff]
        %v451 = vld [vmem:[%s366 + $0xb0] sm:$0xff]
        %v452 = vld [vmem:[%s366 + $0xb8] sm:$0xff]
        %v453 = vld [vmem:[%s366 + $0xc0] sm:$0xff]
        %v454 = vld [vmem:[%s366 + $0xc8] sm:$0xff]
        %v455 = vld [vmem:[%s366 + $0xd0] sm:$0xff]
        %v456 = vld [vmem:[%s366 + $0xd8] sm:$0xff]
        %v457 = vld [vmem:[%s366 + $0xe0] sm:$0xff]
        %v458 = vld [vmem:[%s366 + $0xe8] sm:$0xff]
        %v459 = vld [vmem:[%s366 + $0xf0] sm:$0xff]
        %v460 = vld [vmem:[%s366 + $0xf8] sm:$0xff]
        %v461 = vld [vmem:[%s366 + $0x100] sm:$0xff]
        %v462 = vld [vmem:[%s366 + $0x108] sm:$0xff]
        %v463 = vld [vmem:[%s366 + $0x110] sm:$0xff]
        %v464 = vld [vmem:[%s366 + $0x118] sm:$0xff]
        %v465 = vld [vmem:[%s366 + $0x120] sm:$0xff]
        %v466 = vld [vmem:[%s366 + $0x128] sm:$0xff]
        %v467 = vld [vmem:[%s366 + $0x130] sm:$0xff]
        %v468 = vld [vmem:[%s366 + $0x138] sm:$0xff]
        %v469 = vld [vmem:[%s366 + $0x140] sm:$0xff]
        %v470 = vld [vmem:[%s366 + $0x148] sm:$0xff]
        %v471 = vld [vmem:[%s366 + $0x150] sm:$0xff]
        %v472 = vld [vmem:[%s366 + $0x158] sm:$0xff]
        %v473 = vld [vmem:[%s366 + $0x160] sm:$0xff]
        %v474 = vld [vmem:[%s366 + $0x168] sm:$0xff]
        %v475 = vld [vmem:[%s366 + $0x170] sm:$0xff]
        %v476 = vld [vmem:[%s366 + $0x178] sm:$0xff]
        %v477 = vld [vmem:[#allocation5] sm:$0xff]
        %v478 = vld [vmem:[#allocation5 + $0x8] sm:$0xff]
        %v479 = vld [vmem:[#allocation5 + $0x10] sm:$0xff]
        %v480 = vld [vmem:[#allocation5 + $0x18] sm:$0xff]
        %v481 = vld [vmem:[#allocation5 + $0x20] sm:$0xff]
        %v482 = vld [vmem:[#allocation5 + $0x28] sm:$0xff]
        %v483 = vld [vmem:[#allocation5 + $0x30] sm:$0xff]
        %v484 = vld [vmem:[#allocation5 + $0x38] sm:$0xff]
        %v485 = vld [vmem:[#allocation5 + $0x40] sm:$0xff]
        %v486 = vld [vmem:[#allocation5 + $0x48] sm:$0xff]
        %v487 = vld [vmem:[#allocation5 + $0x50] sm:$0xff]
        %v488 = vld [vmem:[#allocation5 + $0x58] sm:$0xff]
        %v489 = vld [vmem:[#allocation5 + $0x60] sm:$0xff]
        %v490 = vld [vmem:[#allocation5 + $0x68] sm:$0xff]
        %v491 = vld [vmem:[#allocation5 + $0x70] sm:$0xff]
        %v492 = vld [vmem:[#allocation5 + $0x78] sm:$0xff]
        %v493 = vld [vmem:[#allocation5 + $0x80] sm:$0xff]
        %v494 = vld [vmem:[#allocation5 + $0x88] sm:$0xff]
        %v495 = vld [vmem:[#allocation5 + $0x90] sm:$0xff]
        %v496 = vld [vmem:[#allocation5 + $0x98] sm:$0xff]
        %v497 = vld [vmem:[#allocation5 + $0xa0] sm:$0xff]
        %v498 = vld [vmem:[#allocation5 + $0xa8] sm:$0xff]
        %v499 = vld [vmem:[#allocation5 + $0xb0] sm:$0xff]
        %v500 = vld [vmem:[#allocation5 + $0xb8] sm:$0xff]
        %v501 = vld [vmem:[#allocation5 + $0xc0] sm:$0xff]
        %v502 = vld [vmem:[#allocation5 + $0xc8] sm:$0xff]
        %v503 = vld [vmem:[#allocation5 + $0xd0] sm:$0xff]
        %v504 = vld [vmem:[#allocation5 + $0xd8] sm:$0xff]
        %v505 = vld [vmem:[#allocation5 + $0xe0] sm:$0xff]
        %v506 = vld [vmem:[#allocation5 + $0xe8] sm:$0xff]
        %v507 = vld [vmem:[#allocation5 + $0xf0] sm:$0xff]
        %v508 = vld [vmem:[#allocation5 + $0xf8] sm:$0xff]
        %v509 = vld [vmem:[#allocation5 + $0x100] sm:$0xff]
        %v510 = vld [vmem:[#allocation5 + $0x108] sm:$0xff]
        %v511 = vld [vmem:[#allocation5 + $0x110] sm:$0xff]
        %v512 = vld [vmem:[#allocation5 + $0x118] sm:$0xff]
        %v513 = vld [vmem:[#allocation5 + $0x120] sm:$0xff]
        %v514 = vld [vmem:[#allocation5 + $0x128] sm:$0xff]
        %v515 = vld [vmem:[#allocation5 + $0x130] sm:$0xff]
        %v516 = vld [vmem:[#allocation5 + $0x138] sm:$0xff]
        %v517 = vld [vmem:[#allocation5 + $0x140] sm:$0xff]
        %v518 = vld [vmem:[#allocation5 + $0x148] sm:$0xff]
        %v519 = vld [vmem:[#allocation5 + $0x150] sm:$0xff]
        %v520 = vld [vmem:[#allocation5 + $0x158] sm:$0xff]
        %v521 = vld [vmem:[#allocation5 + $0x160] sm:$0xff]
        %v522 = vld [vmem:[#allocation5 + $0x168] sm:$0xff]
        %v523 = vld [vmem:[#allocation5 + $0x170] sm:$0xff]
        %v524 = vld [vmem:[#allocation5 + $0x178] sm:$0xff]
        %v525 = vld [vmem:[#allocation5 + $0x180] sm:$0xff]
        %v526 = vld [vmem:[#allocation5 + $0x188] sm:$0xff]
        %v527 = vld [vmem:[#allocation5 + $0x190] sm:$0xff]
        %v528 = vld [vmem:[#allocation5 + $0x198] sm:$0xff]
        %v529 = vld [vmem:[#allocation5 + $0x1a0] sm:$0xff]
        %v530 = vld [vmem:[#allocation5 + $0x1a8] sm:$0xff]
        %v531 = vld [vmem:[#allocation5 + $0x1b0] sm:$0xff]
        %v532 = vld [vmem:[#allocation5 + $0x1b8] sm:$0xff]
        %v533 = vld [vmem:[#allocation5 + $0x1c0] sm:$0xff]
        %v534 = vld [vmem:[#allocation5 + $0x1c8] sm:$0xff]
        %v535 = vld [vmem:[#allocation5 + $0x1d0] sm:$0xff]
        %v536 = vld [vmem:[#allocation5 + $0x1d8] sm:$0xff]
        %v537 = vld [vmem:[#allocation5 + $0x1e0] sm:$0xff]
        %v538 = vld [vmem:[#allocation5 + $0x1e8] sm:$0xff]
        %v539 = vld [vmem:[#allocation5 + $0x1f0] sm:$0xff]
        %v540 = vld [vmem:[#allocation5 + $0x1f8] sm:$0xff]
        %v541 = vld [vmem:[#allocation5 + $0x200] sm:$0xff]
        %v542 = vld [vmem:[#allocation5 + $0x208] sm:$0xff]
        %v543 = vld [vmem:[#allocation5 + $0x210] sm:$0xff]
        %v544 = vld [vmem:[#allocation5 + $0x218] sm:$0xff]
        %v545 = vld [vmem:[#allocation5 + $0x220] sm:$0xff]
        %v546 = vld [vmem:[#allocation5 + $0x228] sm:$0xff]
        %v547 = vld [vmem:[#allocation5 + $0x230] sm:$0xff]
        %v548 = vld [vmem:[#allocation5 + $0x238] sm:$0xff]
        %v549 = vld [vmem:[#allocation5 + $0x240] sm:$0xff]
        %v550 = vld [vmem:[#allocation5 + $0x248] sm:$0xff]
        %v551 = vld [vmem:[#allocation5 + $0x250] sm:$0xff]
        %v552 = vld [vmem:[#allocation5 + $0x258] sm:$0xff]
        %v553 = vld [vmem:[#allocation5 + $0x260] sm:$0xff]
        %v554 = vld [vmem:[#allocation5 + $0x268] sm:$0xff]
        %v555 = vld [vmem:[#allocation5 + $0x270] sm:$0xff]
        %v556 = vld [vmem:[#allocation5 + $0x278] sm:$0xff]
        %v557 = vld [vmem:[#allocation5 + $0x280] sm:$0xff]
        %v558 = vld [vmem:[#allocation5 + $0x288] sm:$0xff]
        %v559 = vld [vmem:[#allocation5 + $0x290] sm:$0xff]
        %v560 = vld [vmem:[#allocation5 + $0x298] sm:$0xff]
        %v561 = vld [vmem:[#allocation5 + $0x2a0] sm:$0xff]
        %v562 = vld [vmem:[#allocation5 + $0x2a8] sm:$0xff]
        %v563 = vld [vmem:[#allocation5 + $0x2b0] sm:$0xff]
        %v564 = vld [vmem:[#allocation5 + $0x2b8] sm:$0xff]
        %v565 = vld [vmem:[#allocation5 + $0x2c0] sm:$0xff]
        %v566 = vld [vmem:[#allocation5 + $0x2c8] sm:$0xff]
        %v567 = vld [vmem:[#allocation5 + $0x2d0] sm:$0xff]
        %v568 = vld [vmem:[#allocation5 + $0x2d8] sm:$0xff]
        %v569 = vld [vmem:[#allocation5 + $0x2e0] sm:$0xff]
        %v570 = vld [vmem:[#allocation5 + $0x2e8] sm:$0xff]
        %v571 = vld [vmem:[#allocation5 + $0x2f0] sm:$0xff]
        %v572 = vld [vmem:[#allocation5 + $0x2f8] sm:$0xff]
        %v573 = vld [vmem:[#allocation5 + $0x300] sm:$0xff]
        %v574 = vld [vmem:[#allocation5 + $0x308] sm:$0xff]
        %v575 = vld [vmem:[#allocation5 + $0x310] sm:$0xff]
        %v576 = vld [vmem:[#allocation5 + $0x318] sm:$0xff]
        %v577 = vld [vmem:[#allocation5 + $0x320] sm:$0xff]
        %v578 = vld [vmem:[#allocation5 + $0x328] sm:$0xff]
        %v579 = vld [vmem:[#allocation5 + $0x330] sm:$0xff]
        %v580 = vld [vmem:[#allocation5 + $0x338] sm:$0xff]
        %v581 = vld [vmem:[#allocation5 + $0x340] sm:$0xff]
        %v582 = vld [vmem:[#allocation5 + $0x348] sm:$0xff]
        %v583 = vld [vmem:[#allocation5 + $0x350] sm:$0xff]
        %v584 = vld [vmem:[#allocation5 + $0x358] sm:$0xff]
        %v585 = vld [vmem:[#allocation5 + $0x360] sm:$0xff]
        %v586 = vld [vmem:[#allocation5 + $0x368] sm:$0xff]
        %v587 = vld [vmem:[#allocation5 + $0x370] sm:$0xff]
        %v588 = vld [vmem:[#allocation5 + $0x378] sm:$0xff]
        %v589 = vld [vmem:[#allocation5 + $0x380] sm:$0xff]
        %v590 = vld [vmem:[#allocation5 + $0x388] sm:$0xff]
        %v591 = vld [vmem:[#allocation5 + $0x390] sm:$0xff]
        %v592 = vld [vmem:[#allocation5 + $0x398] sm:$0xff]
        %v593 = vld [vmem:[#allocation5 + $0x3a0] sm:$0xff]
        %v594 = vld [vmem:[#allocation5 + $0x3a8] sm:$0xff]
        %v595 = vld [vmem:[#allocation5 + $0x3b0] sm:$0xff]
        %v596 = vld [vmem:[#allocation5 + $0x3b8] sm:$0xff]
        %v597 = vld [vmem:[#allocation5 + $0x3c0] sm:$0xff]
        %v598 = vld [vmem:[#allocation5 + $0x3c8] sm:$0xff]
        %v599 = vld [vmem:[#allocation5 + $0x3d0] sm:$0xff]
        %v600 = vld [vmem:[#allocation5 + $0x3d8] sm:$0xff]
        %v601 = vld [vmem:[#allocation5 + $0x3e0] sm:$0xff]
        %v602 = vld [vmem:[#allocation5 + $0x3e8] sm:$0xff]
        %v603 = vld [vmem:[#allocation5 + $0x3f0] sm:$0xff]
        %v604 = vld [vmem:[#allocation5 + $0x3f8] sm:$0xff]
        %v605 = vld [vmem:[#allocation5 + $0x400] sm:$0xff]
        %v606 = vld [vmem:[#allocation5 + $0x408] sm:$0xff]
        %v607 = vld [vmem:[#allocation5 + $0x410] sm:$0xff]
        %v608 = vld [vmem:[#allocation5 + $0x418] sm:$0xff]
        %v609 = vld [vmem:[#allocation5 + $0x420] sm:$0xff]
        %v610 = vld [vmem:[#allocation5 + $0x428] sm:$0xff]
        %v611 = vld [vmem:[#allocation5 + $0x430] sm:$0xff]
        %v612 = vld [vmem:[#allocation5 + $0x438] sm:$0xff]
        %v613 = vld [vmem:[#allocation5 + $0x440] sm:$0xff]
        %v614 = vld [vmem:[#allocation5 + $0x448] sm:$0xff]
        %v615 = vld [vmem:[#allocation5 + $0x450] sm:$0xff]
        %v616 = vld [vmem:[#allocation5 + $0x458] sm:$0xff]
        %v617 = vld [vmem:[#allocation5 + $0x460] sm:$0xff]
        %v618 = vld [vmem:[#allocation5 + $0x468] sm:$0xff]
        %v619 = vld [vmem:[#allocation5 + $0x470] sm:$0xff]
        %v620 = vld [vmem:[#allocation5 + $0x478] sm:$0xff]
        %v621 = vld [vmem:[#allocation5 + $0x480] sm:$0xff]
        %v622 = vld [vmem:[#allocation5 + $0x488] sm:$0xff]
        %v623 = vld [vmem:[#allocation5 + $0x490] sm:$0xff]
        %v624 = vld [vmem:[#allocation5 + $0x498] sm:$0xff]
        %v625 = vld [vmem:[#allocation5 + $0x4a0] sm:$0xff]
        %v626 = vld [vmem:[#allocation5 + $0x4a8] sm:$0xff]
        %v627 = vld [vmem:[#allocation5 + $0x4b0] sm:$0xff]
        %v628 = vld [vmem:[#allocation5 + $0x4b8] sm:$0xff]
        %v629 = vld [vmem:[#allocation5 + $0x4c0] sm:$0xff]
        %v630 = vld [vmem:[#allocation5 + $0x4c8] sm:$0xff]
        %v631 = vld [vmem:[#allocation5 + $0x4d0] sm:$0xff]
        %v632 = vld [vmem:[#allocation5 + $0x4d8] sm:$0xff]
        %v633 = vld [vmem:[#allocation5 + $0x4e0] sm:$0xff]
        %v634 = vld [vmem:[#allocation5 + $0x4e8] sm:$0xff]
        %v635 = vld [vmem:[#allocation5 + $0x4f0] sm:$0xff]
        %v636 = vld [vmem:[#allocation5 + $0x4f8] sm:$0xff]
        %v637 = vld [vmem:[#allocation5 + $0x500] sm:$0xff]
        %v638 = vld [vmem:[#allocation5 + $0x508] sm:$0xff]
        %v639 = vld [vmem:[#allocation5 + $0x510] sm:$0xff]
        %v640 = vld [vmem:[#allocation5 + $0x518] sm:$0xff]
        %v641 = vld [vmem:[#allocation5 + $0x520] sm:$0xff]
        %v642 = vld [vmem:[#allocation5 + $0x528] sm:$0xff]
        %v643 = vld [vmem:[#allocation5 + $0x530] sm:$0xff]
        %v644 = vld [vmem:[#allocation5 + $0x538] sm:$0xff]
        %v645 = vld [vmem:[#allocation5 + $0x540] sm:$0xff]
        %v646 = vld [vmem:[#allocation5 + $0x548] sm:$0xff]
        %v647 = vld [vmem:[#allocation5 + $0x550] sm:$0xff]
        %v648 = vld [vmem:[#allocation5 + $0x558] sm:$0xff]
        %v649 = vld [vmem:[#allocation5 + $0x560] sm:$0xff]
        %v650 = vld [vmem:[#allocation5 + $0x568] sm:$0xff]
        %v651 = vld [vmem:[#allocation5 + $0x570] sm:$0xff]
        %v652 = vld [vmem:[#allocation5 + $0x578] sm:$0xff]
        %v653 = vld [vmem:[#allocation5 + $0x580] sm:$0xff]
        %v654 = vld [vmem:[#allocation5 + $0x588] sm:$0xff]
        %v655 = vld [vmem:[#allocation5 + $0x590] sm:$0xff]
        %v656 = vld [vmem:[#allocation5 + $0x598] sm:$0xff]
        %v657 = vld [vmem:[#allocation5 + $0x5a0] sm:$0xff]
        %v658 = vld [vmem:[#allocation5 + $0x5a8] sm:$0xff]
        %v659 = vld [vmem:[#allocation5 + $0x5b0] sm:$0xff]
        %v660 = vld [vmem:[#allocation5 + $0x5b8] sm:$0xff]
        %v661 = vld [vmem:[#allocation5 + $0x5c0] sm:$0xff]
        %v662 = vld [vmem:[#allocation5 + $0x5c8] sm:$0xff]
        %v663 = vld [vmem:[#allocation5 + $0x5d0] sm:$0xff]
        %v664 = vld [vmem:[#allocation5 + $0x5d8] sm:$0xff]
        %v665 = vld [vmem:[#allocation5 + $0x5e0] sm:$0xff]
        %v666 = vld [vmem:[#allocation5 + $0x5e8] sm:$0xff]
        %v667 = vld [vmem:[#allocation5 + $0x5f0] sm:$0xff]
        %v668 = vld [vmem:[#allocation5 + $0x5f8] sm:$0xff]
        %v669 = vld [vmem:[%s2] sm:$0xf]
        %v671 = vlaneseq
        %v672 = vshrl.u32 %v671, 7
        %v673 = vsub.s32 0, %v672
        %v674 = vrot.slane %v669, %v673
        %v675 = vlaneseq
        %v676 = vshrl.u32 %v675, 7
        %v677 = vsub.s32 1, %v676
        %v678 = vrot.slane %v669, %v677
        %v679 = vlaneseq
        %v680 = vshrl.u32 %v679, 7
        %v681 = vsub.s32 2, %v680
        %v682 = vrot.slane %v669, %v681
        %v683 = vlaneseq
        %v684 = vshrl.u32 %v683, 7
        %v685 = vsub.s32 3, %v684
        %v686 = vrot.slane %v669, %v685
        %v739 = vunpack.c.l.b16 %v429
        %v740 = vunpack.c.h.b16 %v429
        %v741 = vunpack.c.l.b16 %v430
        %v742 = vunpack.c.h.b16 %v430
        %v743 = vunpack.c.l.b16 %v431
        %v744 = vunpack.c.h.b16 %v431
        %v745 = vunpack.c.l.b16 %v432
        %v746 = vunpack.c.h.b16 %v432
        %v747 = vunpack.c.l.b16 %v433
        %v748 = vunpack.c.h.b16 %v433
        %v749 = vunpack.c.l.b16 %v434
        %v750 = vunpack.c.h.b16 %v434
        %v751 = vunpack.c.l.b16 %v435
        %v752 = vunpack.c.h.b16 %v435
        %v753 = vunpack.c.l.b16 %v436
        %v754 = vunpack.c.h.b16 %v436
        %v755 = vunpack.c.l.b16 %v437
        %v756 = vunpack.c.h.b16 %v437
        %v757 = vunpack.c.l.b16 %v438
        %v758 = vunpack.c.h.b16 %v438
        %v759 = vunpack.c.l.b16 %v439
        %v760 = vunpack.c.h.b16 %v439
        %v761 = vunpack.c.l.b16 %v440
        %v762 = vunpack.c.h.b16 %v440
        %v763 = vunpack.c.l.b16 %v441
        %v764 = vunpack.c.h.b16 %v441
        %v765 = vunpack.c.l.b16 %v442
        %v766 = vunpack.c.h.b16 %v442
        %v767 = vunpack.c.l.b16 %v443
        %v768 = vunpack.c.h.b16 %v443
        %v769 = vunpack.c.l.b16 %v444
        %v770 = vunpack.c.h.b16 %v444
        %v771 = vunpack.c.l.b16 %v445
        %v772 = vunpack.c.h.b16 %v445
        %v773 = vunpack.c.l.b16 %v446
        %v774 = vunpack.c.h.b16 %v446
        %v775 = vunpack.c.l.b16 %v447
        %v776 = vunpack.c.h.b16 %v447
        %v777 = vunpack.c.l.b16 %v448
        %v778 = vunpack.c.h.b16 %v448
        %v779 = vunpack.c.l.b16 %v449
        %v780 = vunpack.c.h.b16 %v449
        %v781 = vunpack.c.l.b16 %v450
        %v782 = vunpack.c.h.b16 %v450
        %v783 = vunpack.c.l.b16 %v451
        %v784 = vunpack.c.h.b16 %v451
        %v785 = vunpack.c.l.b16 %v452
        %v786 = vunpack.c.h.b16 %v452
        %v787 = vunpack.c.l.b16 %v453
        %v788 = vunpack.c.h.b16 %v453
        %v789 = vunpack.c.l.b16 %v454
        %v790 = vunpack.c.h.b16 %v454
        %v791 = vunpack.c.l.b16 %v455
        %v792 = vunpack.c.h.b16 %v455
        %v793 = vunpack.c.l.b16 %v456
        %v794 = vunpack.c.h.b16 %v456
        %v795 = vunpack.c.l.b16 %v457
        %v796 = vunpack.c.h.b16 %v457
        %v797 = vunpack.c.l.b16 %v458
        %v798 = vunpack.c.h.b16 %v458
        %v799 = vunpack.c.l.b16 %v459
        %v800 = vunpack.c.h.b16 %v459
        %v801 = vunpack.c.l.b16 %v460
        %v802 = vunpack.c.h.b16 %v460
        %v803 = vunpack.c.l.b16 %v461
        %v804 = vunpack.c.h.b16 %v461
        %v805 = vunpack.c.l.b16 %v462
        %v806 = vunpack.c.h.b16 %v462
        %v807 = vunpack.c.l.b16 %v463
        %v808 = vunpack.c.h.b16 %v463
        %v809 = vunpack.c.l.b16 %v464
        %v810 = vunpack.c.h.b16 %v464
        %v811 = vunpack.c.l.b16 %v465
        %v812 = vunpack.c.h.b16 %v465
        %v813 = vunpack.c.l.b16 %v466
        %v814 = vunpack.c.h.b16 %v466
        %v815 = vunpack.c.l.b16 %v467
        %v816 = vunpack.c.h.b16 %v467
        %v817 = vunpack.c.l.b16 %v468
        %v818 = vunpack.c.h.b16 %v468
        %v819 = vunpack.c.l.b16 %v469
        %v820 = vunpack.c.h.b16 %v469
        %v821 = vunpack.c.l.b16 %v470
        %v822 = vunpack.c.h.b16 %v470
        %v823 = vunpack.c.l.b16 %v471
        %v824 = vunpack.c.h.b16 %v471
        %v825 = vunpack.c.l.b16 %v472
        %v826 = vunpack.c.h.b16 %v472
        %v827 = vunpack.c.l.b16 %v473
        %v828 = vunpack.c.h.b16 %v473
        %v829 = vunpack.c.l.b16 %v474
        %v830 = vunpack.c.h.b16 %v474
        %v831 = vunpack.c.l.b16 %v475
        %v832 = vunpack.c.h.b16 %v475
        %v833 = vunpack.c.l.b16 %v476
        %v834 = vunpack.c.h.b16 %v476
        %v835 = vpack.c.b16 %v745, %v739
        %v836 = vpack.c.b16 %v746, %v740
        %v837 = vpack.c.b16 %v747, %v741
        %v838 = vpack.c.b16 %v748, %v742
        %v839 = vpack.c.b16 %v749, %v743
        %v840 = vpack.c.b16 %v750, %v744
        %v841 = vpack.c.b16 %v757, %v751
        %v842 = vpack.c.b16 %v758, %v752
        %v843 = vpack.c.b16 %v759, %v753
        %v844 = vpack.c.b16 %v760, %v754
        %v845 = vpack.c.b16 %v761, %v755
        %v846 = vpack.c.b16 %v762, %v756
        %v847 = vpack.c.b16 %v769, %v763
        %v848 = vpack.c.b16 %v770, %v764
        %v849 = vpack.c.b16 %v771, %v765
        %v850 = vpack.c.b16 %v772, %v766
        %v851 = vpack.c.b16 %v773, %v767
        %v852 = vpack.c.b16 %v774, %v768
        %v853 = vpack.c.b16 %v781, %v775
        %v854 = vpack.c.b16 %v782, %v776
        %v855 = vpack.c.b16 %v783, %v777
        %v856 = vpack.c.b16 %v784, %v778
        %v857 = vpack.c.b16 %v785, %v779
        %v858 = vpack.c.b16 %v786, %v780
        %v859 = vpack.c.b16 %v793, %v787
        %v860 = vpack.c.b16 %v794, %v788
        %v861 = vpack.c.b16 %v795, %v789
        %v862 = vpack.c.b16 %v796, %v790
        %v863 = vpack.c.b16 %v797, %v791
        %v864 = vpack.c.b16 %v798, %v792
        %v865 = vpack.c.b16 %v805, %v799
        %v866 = vpack.c.b16 %v806, %v800
        %v867 = vpack.c.b16 %v807, %v801
        %v868 = vpack.c.b16 %v808, %v802
        %v869 = vpack.c.b16 %v809, %v803
        %v870 = vpack.c.b16 %v810, %v804
        %v871 = vpack.c.b16 %v817, %v811
        %v872 = vpack.c.b16 %v818, %v812
        %v873 = vpack.c.b16 %v819, %v813
        %v874 = vpack.c.b16 %v820, %v814
        %v875 = vpack.c.b16 %v821, %v815
        %v876 = vpack.c.b16 %v822, %v816
        %v877 = vpack.c.b16 %v829, %v823
        %v878 = vpack.c.b16 %v830, %v824
        %v879 = vpack.c.b16 %v831, %v825
        %v880 = vpack.c.b16 %v832, %v826
        %v881 = vpack.c.b16 %v833, %v827
        %v882 = vpack.c.b16 %v834, %v828
        %v1123 = vunpack.c.l.b16 %v477
        %v1124 = vunpack.c.h.b16 %v477
        %v1125 = vunpack.c.l.b16 %v478
        %v1126 = vunpack.c.h.b16 %v478
        %v1127 = vunpack.c.l.b16 %v479
        %v1128 = vunpack.c.h.b16 %v479
        %v1129 = vunpack.c.l.b16 %v480
        %v1130 = vunpack.c.h.b16 %v480
        %v1131 = vunpack.c.l.b16 %v481
        %v1132 = vunpack.c.h.b16 %v481
        %v1133 = vunpack.c.l.b16 %v482
        %v1134 = vunpack.c.h.b16 %v482
        %v1135 = vunpack.c.l.b16 %v483
        %v1136 = vunpack.c.h.b16 %v483
        %v1137 = vunpack.c.l.b16 %v484
        %v1138 = vunpack.c.h.b16 %v484
        %v1139 = vunpack.c.l.b16 %v485
        %v1140 = vunpack.c.h.b16 %v485
        %v1141 = vunpack.c.l.b16 %v486
        %v1142 = vunpack.c.h.b16 %v486
        %v1143 = vunpack.c.l.b16 %v487
        %v1144 = vunpack.c.h.b16 %v487
        %v1145 = vunpack.c.l.b16 %v488
        %v1146 = vunpack.c.h.b16 %v488
        %v1147 = vunpack.c.l.b16 %v489
        %v1148 = vunpack.c.h.b16 %v489
        %v1149 = vunpack.c.l.b16 %v490
        %v1150 = vunpack.c.h.b16 %v490
        %v1151 = vunpack.c.l.b16 %v491
        %v1152 = vunpack.c.h.b16 %v491
        %v1153 = vunpack.c.l.b16 %v492
        %v1154 = vunpack.c.h.b16 %v492
        %v1155 = vunpack.c.l.b16 %v493
        %v1156 = vunpack.c.h.b16 %v493
        %v1157 = vunpack.c.l.b16 %v494
        %v1158 = vunpack.c.h.b16 %v494
        %v1159 = vunpack.c.l.b16 %v495
        %v1160 = vunpack.c.h.b16 %v495
        %v1161 = vunpack.c.l.b16 %v496
        %v1162 = vunpack.c.h.b16 %v496
        %v1163 = vunpack.c.l.b16 %v497
        %v1164 = vunpack.c.h.b16 %v497
        %v1165 = vunpack.c.l.b16 %v498
        %v1166 = vunpack.c.h.b16 %v498
        %v1167 = vunpack.c.l.b16 %v499
        %v1168 = vunpack.c.h.b16 %v499
        %v1169 = vunpack.c.l.b16 %v500
        %v1170 = vunpack.c.h.b16 %v500
        %v1171 = vunpack.c.l.b16 %v501
        %v1172 = vunpack.c.h.b16 %v501
        %v1173 = vunpack.c.l.b16 %v502
        %v1174 = vunpack.c.h.b16 %v502
        %v1175 = vunpack.c.l.b16 %v503
        %v1176 = vunpack.c.h.b16 %v503
        %v1177 = vunpack.c.l.b16 %v504
        %v1178 = vunpack.c.h.b16 %v504
        %v1179 = vunpack.c.l.b16 %v505
        %v1180 = vunpack.c.h.b16 %v505
        %v1181 = vunpack.c.l.b16 %v506
        %v1182 = vunpack.c.h.b16 %v506
        %v1183 = vunpack.c.l.b16 %v507
        %v1184 = vunpack.c.h.b16 %v507
        %v1185 = vunpack.c.l.b16 %v508
        %v1186 = vunpack.c.h.b16 %v508
        %v1187 = vunpack.c.l.b16 %v509
        %v1188 = vunpack.c.h.b16 %v509
        %v1189 = vunpack.c.l.b16 %v510
        %v1190 = vunpack.c.h.b16 %v510
        %v1191 = vunpack.c.l.b16 %v511
        %v1192 = vunpack.c.h.b16 %v511
        %v1193 = vunpack.c.l.b16 %v512
        %v1194 = vunpack.c.h.b16 %v512
        %v1195 = vunpack.c.l.b16 %v513
        %v1196 = vunpack.c.h.b16 %v513
        %v1197 = vunpack.c.l.b16 %v514
        %v1198 = vunpack.c.h.b16 %v514
        %v1199 = vunpack.c.l.b16 %v515
        %v1200 = vunpack.c.h.b16 %v515
        %v1201 = vunpack.c.l.b16 %v516
        %v1202 = vunpack.c.h.b16 %v516
        %v1203 = vunpack.c.l.b16 %v517
        %v1204 = vunpack.c.h.b16 %v517
        %v1205 = vunpack.c.l.b16 %v518
        %v1206 = vunpack.c.h.b16 %v518
        %v1207 = vunpack.c.l.b16 %v519
        %v1208 = vunpack.c.h.b16 %v519
        %v1209 = vunpack.c.l.b16 %v520
        %v1210 = vunpack.c.h.b16 %v520
        %v1211 = vunpack.c.l.b16 %v521
        %v1212 = vunpack.c.h.b16 %v521
        %v1213 = vunpack.c.l.b16 %v522
        %v1214 = vunpack.c.h.b16 %v522
        %v1215 = vunpack.c.l.b16 %v523
        %v1216 = vunpack.c.h.b16 %v523
        %v1217 = vunpack.c.l.b16 %v524
        %v1218 = vunpack.c.h.b16 %v524
        %v1219 = vunpack.c.l.b16 %v525
        %v1220 = vunpack.c.h.b16 %v525
        %v1221 = vunpack.c.l.b16 %v526
        %v1222 = vunpack.c.h.b16 %v526
        %v1223 = vunpack.c.l.b16 %v527
        %v1224 = vunpack.c.h.b16 %v527
        %v1225 = vunpack.c.l.b16 %v528
        %v1226 = vunpack.c.h.b16 %v528
        %v1227 = vunpack.c.l.b16 %v529
        %v1228 = vunpack.c.h.b16 %v529
        %v1229 = vunpack.c.l.b16 %v530
        %v1230 = vunpack.c.h.b16 %v530
        %v1231 = vunpack.c.l.b16 %v531
        %v1232 = vunpack.c.h.b16 %v531
        %v1233 = vunpack.c.l.b16 %v532
        %v1234 = vunpack.c.h.b16 %v532
        %v1235 = vunpack.c.l.b16 %v533
        %v1236 = vunpack.c.h.b16 %v533
        %v1237 = vunpack.c.l.b16 %v534
        %v1238 = vunpack.c.h.b16 %v534
        %v1239 = vunpack.c.l.b16 %v535
        %v1240 = vunpack.c.h.b16 %v535
        %v1241 = vunpack.c.l.b16 %v536
        %v1242 = vunpack.c.h.b16 %v536
        %v1243 = vunpack.c.l.b16 %v537
        %v1244 = vunpack.c.h.b16 %v537
        %v1245 = vunpack.c.l.b16 %v538
        %v1246 = vunpack.c.h.b16 %v538
        %v1247 = vunpack.c.l.b16 %v539
        %v1248 = vunpack.c.h.b16 %v539
        %v1249 = vunpack.c.l.b16 %v540
        %v1250 = vunpack.c.h.b16 %v540
        %v1251 = vunpack.c.l.b16 %v541
        %v1252 = vunpack.c.h.b16 %v541
        %v1253 = vunpack.c.l.b16 %v542
        %v1254 = vunpack.c.h.b16 %v542
        %v1255 = vunpack.c.l.b16 %v543
        %v1256 = vunpack.c.h.b16 %v543
        %v1257 = vunpack.c.l.b16 %v544
        %v1258 = vunpack.c.h.b16 %v544
        %v1259 = vunpack.c.l.b16 %v545
        %v1260 = vunpack.c.h.b16 %v545
        %v1261 = vunpack.c.l.b16 %v546
        %v1262 = vunpack.c.h.b16 %v546
        %v1263 = vunpack.c.l.b16 %v547
        %v1264 = vunpack.c.h.b16 %v547
        %v1265 = vunpack.c.l.b16 %v548
        %v1266 = vunpack.c.h.b16 %v548
        %v1267 = vunpack.c.l.b16 %v549
        %v1268 = vunpack.c.h.b16 %v549
        %v1269 = vunpack.c.l.b16 %v550
        %v1270 = vunpack.c.h.b16 %v550
        %v1271 = vunpack.c.l.b16 %v551
        %v1272 = vunpack.c.h.b16 %v551
        %v1273 = vunpack.c.l.b16 %v552
        %v1274 = vunpack.c.h.b16 %v552
        %v1275 = vunpack.c.l.b16 %v553
        %v1276 = vunpack.c.h.b16 %v553
        %v1277 = vunpack.c.l.b16 %v554
        %v1278 = vunpack.c.h.b16 %v554
        %v1279 = vunpack.c.l.b16 %v555
        %v1280 = vunpack.c.h.b16 %v555
        %v1281 = vunpack.c.l.b16 %v556
        %v1282 = vunpack.c.h.b16 %v556
        %v1283 = vunpack.c.l.b16 %v557
        %v1284 = vunpack.c.h.b16 %v557
        %v1285 = vunpack.c.l.b16 %v558
        %v1286 = vunpack.c.h.b16 %v558
        %v1287 = vunpack.c.l.b16 %v559
        %v1288 = vunpack.c.h.b16 %v559
        %v1289 = vunpack.c.l.b16 %v560
        %v1290 = vunpack.c.h.b16 %v560
        %v1291 = vunpack.c.l.b16 %v561
        %v1292 = vunpack.c.h.b16 %v561
        %v1293 = vunpack.c.l.b16 %v562
        %v1294 = vunpack.c.h.b16 %v562
        %v1295 = vunpack.c.l.b16 %v563
        %v1296 = vunpack.c.h.b16 %v563
        %v1297 = vunpack.c.l.b16 %v564
        %v1298 = vunpack.c.h.b16 %v564
        %v1299 = vunpack.c.l.b16 %v565
        %v1300 = vunpack.c.h.b16 %v565
        %v1301 = vunpack.c.l.b16 %v566
        %v1302 = vunpack.c.h.b16 %v566
        %v1303 = vunpack.c.l.b16 %v567
        %v1304 = vunpack.c.h.b16 %v567
        %v1305 = vunpack.c.l.b16 %v568
        %v1306 = vunpack.c.h.b16 %v568
        %v1307 = vunpack.c.l.b16 %v569
        %v1308 = vunpack.c.h.b16 %v569
        %v1309 = vunpack.c.l.b16 %v570
        %v1310 = vunpack.c.h.b16 %v570
        %v1311 = vunpack.c.l.b16 %v571
        %v1312 = vunpack.c.h.b16 %v571
        %v1313 = vunpack.c.l.b16 %v572
        %v1314 = vunpack.c.h.b16 %v572
        %v1315 = vunpack.c.l.b16 %v573
        %v1316 = vunpack.c.h.b16 %v573
        %v1317 = vunpack.c.l.b16 %v574
        %v1318 = vunpack.c.h.b16 %v574
        %v1319 = vunpack.c.l.b16 %v575
        %v1320 = vunpack.c.h.b16 %v575
        %v1321 = vunpack.c.l.b16 %v576
        %v1322 = vunpack.c.h.b16 %v576
        %v1323 = vunpack.c.l.b16 %v577
        %v1324 = vunpack.c.h.b16 %v577
        %v1325 = vunpack.c.l.b16 %v578
        %v1326 = vunpack.c.h.b16 %v578
        %v1327 = vunpack.c.l.b16 %v579
        %v1328 = vunpack.c.h.b16 %v579
        %v1329 = vunpack.c.l.b16 %v580
        %v1330 = vunpack.c.h.b16 %v580
        %v1331 = vunpack.c.l.b16 %v581
        %v1332 = vunpack.c.h.b16 %v581
        %v1333 = vunpack.c.l.b16 %v582
        %v1334 = vunpack.c.h.b16 %v582
        %v1335 = vunpack.c.l.b16 %v583
        %v1336 = vunpack.c.h.b16 %v583
        %v1337 = vunpack.c.l.b16 %v584
        %v1338 = vunpack.c.h.b16 %v584
        %v1339 = vunpack.c.l.b16 %v585
        %v1340 = vunpack.c.h.b16 %v585
        %v1341 = vunpack.c.l.b16 %v586
        %v1342 = vunpack.c.h.b16 %v586
        %v1343 = vunpack.c.l.b16 %v587
        %v1344 = vunpack.c.h.b16 %v587
        %v1345 = vunpack.c.l.b16 %v588
        %v1346 = vunpack.c.h.b16 %v588
        %v1347 = vunpack.c.l.b16 %v589
        %v1348 = vunpack.c.h.b16 %v589
        %v1349 = vunpack.c.l.b16 %v590
        %v1350 = vunpack.c.h.b16 %v590
        %v1351 = vunpack.c.l.b16 %v591
        %v1352 = vunpack.c.h.b16 %v591
        %v1353 = vunpack.c.l.b16 %v592
        %v1354 = vunpack.c.h.b16 %v592
        %v1355 = vunpack.c.l.b16 %v593
        %v1356 = vunpack.c.h.b16 %v593
        %v1357 = vunpack.c.l.b16 %v594
        %v1358 = vunpack.c.h.b16 %v594
        %v1359 = vunpack.c.l.b16 %v595
        %v1360 = vunpack.c.h.b16 %v595
        %v1361 = vunpack.c.l.b16 %v596
        %v1362 = vunpack.c.h.b16 %v596
        %v1363 = vunpack.c.l.b16 %v597
        %v1364 = vunpack.c.h.b16 %v597
        %v1365 = vunpack.c.l.b16 %v598
        %v1366 = vunpack.c.h.b16 %v598
        %v1367 = vunpack.c.l.b16 %v599
        %v1368 = vunpack.c.h.b16 %v599
        %v1369 = vunpack.c.l.b16 %v600
        %v1370 = vunpack.c.h.b16 %v600
        %v1371 = vunpack.c.l.b16 %v601
        %v1372 = vunpack.c.h.b16 %v601
        %v1373 = vunpack.c.l.b16 %v602
        %v1374 = vunpack.c.h.b16 %v602
        %v1375 = vunpack.c.l.b16 %v603
        %v1376 = vunpack.c.h.b16 %v603
        %v1377 = vunpack.c.l.b16 %v604
        %v1378 = vunpack.c.h.b16 %v604
        %v1379 = vunpack.c.l.b16 %v605
        %v1380 = vunpack.c.h.b16 %v605
        %v1381 = vunpack.c.l.b16 %v606
        %v1382 = vunpack.c.h.b16 %v606
        %v1383 = vunpack.c.l.b16 %v607
        %v1384 = vunpack.c.h.b16 %v607
        %v1385 = vunpack.c.l.b16 %v608
        %v1386 = vunpack.c.h.b16 %v608
        %v1387 = vunpack.c.l.b16 %v609
        %v1388 = vunpack.c.h.b16 %v609
        %v1389 = vunpack.c.l.b16 %v610
        %v1390 = vunpack.c.h.b16 %v610
        %v1391 = vunpack.c.l.b16 %v611
        %v1392 = vunpack.c.h.b16 %v611
        %v1393 = vunpack.c.l.b16 %v612
        %v1394 = vunpack.c.h.b16 %v612
        %v1395 = vunpack.c.l.b16 %v613
        %v1396 = vunpack.c.h.b16 %v613
        %v1397 = vunpack.c.l.b16 %v614
        %v1398 = vunpack.c.h.b16 %v614
        %v1399 = vunpack.c.l.b16 %v615
        %v1400 = vunpack.c.h.b16 %v615
        %v1401 = vunpack.c.l.b16 %v616
        %v1402 = vunpack.c.h.b16 %v616
        %v1403 = vunpack.c.l.b16 %v617
        %v1404 = vunpack.c.h.b16 %v617
        %v1405 = vunpack.c.l.b16 %v618
        %v1406 = vunpack.c.h.b16 %v618
        %v1407 = vunpack.c.l.b16 %v619
        %v1408 = vunpack.c.h.b16 %v619
        %v1409 = vunpack.c.l.b16 %v620
        %v1410 = vunpack.c.h.b16 %v620
        %v1411 = vunpack.c.l.b16 %v621
        %v1412 = vunpack.c.h.b16 %v621
        %v1413 = vunpack.c.l.b16 %v622
        %v1414 = vunpack.c.h.b16 %v622
        %v1415 = vunpack.c.l.b16 %v623
        %v1416 = vunpack.c.h.b16 %v623
        %v1417 = vunpack.c.l.b16 %v624
        %v1418 = vunpack.c.h.b16 %v624
        %v1419 = vunpack.c.l.b16 %v625
        %v1420 = vunpack.c.h.b16 %v625
        %v1421 = vunpack.c.l.b16 %v626
        %v1422 = vunpack.c.h.b16 %v626
        %v1423 = vunpack.c.l.b16 %v627
        %v1424 = vunpack.c.h.b16 %v627
        %v1425 = vunpack.c.l.b16 %v628
        %v1426 = vunpack.c.h.b16 %v628
        %v1427 = vunpack.c.l.b16 %v629
        %v1428 = vunpack.c.h.b16 %v629
        %v1429 = vunpack.c.l.b16 %v630
        %v1430 = vunpack.c.h.b16 %v630
        %v1431 = vunpack.c.l.b16 %v631
        %v1432 = vunpack.c.h.b16 %v631
        %v1433 = vunpack.c.l.b16 %v632
        %v1434 = vunpack.c.h.b16 %v632
        %v1435 = vunpack.c.l.b16 %v633
        %v1436 = vunpack.c.h.b16 %v633
        %v1437 = vunpack.c.l.b16 %v634
        %v1438 = vunpack.c.h.b16 %v634
        %v1439 = vunpack.c.l.b16 %v635
        %v1440 = vunpack.c.h.b16 %v635
        %v1441 = vunpack.c.l.b16 %v636
        %v1442 = vunpack.c.h.b16 %v636
        %v1443 = vunpack.c.l.b16 %v637
        %v1444 = vunpack.c.h.b16 %v637
        %v1445 = vunpack.c.l.b16 %v638
        %v1446 = vunpack.c.h.b16 %v638
        %v1447 = vunpack.c.l.b16 %v639
        %v1448 = vunpack.c.h.b16 %v639
        %v1449 = vunpack.c.l.b16 %v640
        %v1450 = vunpack.c.h.b16 %v640
        %v1451 = vunpack.c.l.b16 %v641
        %v1452 = vunpack.c.h.b16 %v641
        %v1453 = vunpack.c.l.b16 %v642
        %v1454 = vunpack.c.h.b16 %v642
        %v1455 = vunpack.c.l.b16 %v643
        %v1456 = vunpack.c.h.b16 %v643
        %v1457 = vunpack.c.l.b16 %v644
        %v1458 = vunpack.c.h.b16 %v644
        %v1459 = vunpack.c.l.b16 %v645
        %v1460 = vunpack.c.h.b16 %v645
        %v1461 = vunpack.c.l.b16 %v646
        %v1462 = vunpack.c.h.b16 %v646
        %v1463 = vunpack.c.l.b16 %v647
        %v1464 = vunpack.c.h.b16 %v647
        %v1465 = vunpack.c.l.b16 %v648
        %v1466 = vunpack.c.h.b16 %v648
        %v1467 = vunpack.c.l.b16 %v649
        %v1468 = vunpack.c.h.b16 %v649
        %v1469 = vunpack.c.l.b16 %v650
        %v1470 = vunpack.c.h.b16 %v650
        %v1471 = vunpack.c.l.b16 %v651
        %v1472 = vunpack.c.h.b16 %v651
        %v1473 = vunpack.c.l.b16 %v652
        %v1474 = vunpack.c.h.b16 %v652
        %v1475 = vunpack.c.l.b16 %v653
        %v1476 = vunpack.c.h.b16 %v653
        %v1477 = vunpack.c.l.b16 %v654
        %v1478 = vunpack.c.h.b16 %v654
        %v1479 = vunpack.c.l.b16 %v655
        %v1480 = vunpack.c.h.b16 %v655
        %v1481 = vunpack.c.l.b16 %v656
        %v1482 = vunpack.c.h.b16 %v656
        %v1483 = vunpack.c.l.b16 %v657
        %v1484 = vunpack.c.h.b16 %v657
        %v1485 = vunpack.c.l.b16 %v658
        %v1486 = vunpack.c.h.b16 %v658
        %v1487 = vunpack.c.l.b16 %v659
        %v1488 = vunpack.c.h.b16 %v659
        %v1489 = vunpack.c.l.b16 %v660
        %v1490 = vunpack.c.h.b16 %v660
        %v1491 = vunpack.c.l.b16 %v661
        %v1492 = vunpack.c.h.b16 %v661
        %v1493 = vunpack.c.l.b16 %v662
        %v1494 = vunpack.c.h.b16 %v662
        %v1495 = vunpack.c.l.b16 %v663
        %v1496 = vunpack.c.h.b16 %v663
        %v1497 = vunpack.c.l.b16 %v664
        %v1498 = vunpack.c.h.b16 %v664
        %v1499 = vunpack.c.l.b16 %v665
        %v1500 = vunpack.c.h.b16 %v665
        %v1501 = vunpack.c.l.b16 %v666
        %v1502 = vunpack.c.h.b16 %v666
        %v1503 = vunpack.c.l.b16 %v667
        %v1504 = vunpack.c.h.b16 %v667
        %v1505 = vunpack.c.l.b16 %v668
        %v1506 = vunpack.c.h.b16 %v668
        %v1507 = vpack.c.b16 %v1127, %v1123
        %v1508 = vpack.c.b16 %v1128, %v1124
        %v1509 = vpack.c.b16 %v1129, %v1125
        %v1510 = vpack.c.b16 %v1130, %v1126
        %v1511 = vpack.c.b16 %v1135, %v1131
        %v1512 = vpack.c.b16 %v1136, %v1132
        %v1513 = vpack.c.b16 %v1137, %v1133
        %v1514 = vpack.c.b16 %v1138, %v1134
        %v1515 = vpack.c.b16 %v1143, %v1139
        %v1516 = vpack.c.b16 %v1144, %v1140
        %v1517 = vpack.c.b16 %v1145, %v1141
        %v1518 = vpack.c.b16 %v1146, %v1142
        %v1519 = vpack.c.b16 %v1151, %v1147
        %v1520 = vpack.c.b16 %v1152, %v1148
        %v1521 = vpack.c.b16 %v1153, %v1149
        %v1522 = vpack.c.b16 %v1154, %v1150
        %v1523 = vpack.c.b16 %v1159, %v1155
        %v1524 = vpack.c.b16 %v1160, %v1156
        %v1525 = vpack.c.b16 %v1161, %v1157
        %v1526 = vpack.c.b16 %v1162, %v1158
        %v1527 = vpack.c.b16 %v1167, %v1163
        %v1528 = vpack.c.b16 %v1168, %v1164
        %v1529 = vpack.c.b16 %v1169, %v1165
        %v1530 = vpack.c.b16 %v1170, %v1166
        %v1531 = vpack.c.b16 %v1175, %v1171
        %v1532 = vpack.c.b16 %v1176, %v1172
        %v1533 = vpack.c.b16 %v1177, %v1173
        %v1534 = vpack.c.b16 %v1178, %v1174
        %v1535 = vpack.c.b16 %v1183, %v1179
        %v1536 = vpack.c.b16 %v1184, %v1180
        %v1537 = vpack.c.b16 %v1185, %v1181
        %v1538 = vpack.c.b16 %v1186, %v1182
        %v1539 = vpack.c.b16 %v1191, %v1187
        %v1540 = vpack.c.b16 %v1192, %v1188
        %v1541 = vpack.c.b16 %v1193, %v1189
        %v1542 = vpack.c.b16 %v1194, %v1190
        %v1543 = vpack.c.b16 %v1199, %v1195
        %v1544 = vpack.c.b16 %v1200, %v1196
        %v1545 = vpack.c.b16 %v1201, %v1197
        %v1546 = vpack.c.b16 %v1202, %v1198
        %v1547 = vpack.c.b16 %v1207, %v1203
        %v1548 = vpack.c.b16 %v1208, %v1204
        %v1549 = vpack.c.b16 %v1209, %v1205
        %v1550 = vpack.c.b16 %v1210, %v1206
        %v1551 = vpack.c.b16 %v1215, %v1211
        %v1552 = vpack.c.b16 %v1216, %v1212
        %v1553 = vpack.c.b16 %v1217, %v1213
        %v1554 = vpack.c.b16 %v1218, %v1214
        %v1555 = vpack.c.b16 %v1223, %v1219
        %v1556 = vpack.c.b16 %v1224, %v1220
        %v1557 = vpack.c.b16 %v1225, %v1221
        %v1558 = vpack.c.b16 %v1226, %v1222
        %v1559 = vpack.c.b16 %v1231, %v1227
        %v1560 = vpack.c.b16 %v1232, %v1228
        %v1561 = vpack.c.b16 %v1233, %v1229
        %v1562 = vpack.c.b16 %v1234, %v1230
        %v1563 = vpack.c.b16 %v1239, %v1235
        %v1564 = vpack.c.b16 %v1240, %v1236
        %v1565 = vpack.c.b16 %v1241, %v1237
        %v1566 = vpack.c.b16 %v1242, %v1238
        %v1567 = vpack.c.b16 %v1247, %v1243
        %v1568 = vpack.c.b16 %v1248, %v1244
        %v1569 = vpack.c.b16 %v1249, %v1245
        %v1570 = vpack.c.b16 %v1250, %v1246
        %v1571 = vpack.c.b16 %v1255, %v1251
        %v1572 = vpack.c.b16 %v1256, %v1252
        %v1573 = vpack.c.b16 %v1257, %v1253
        %v1574 = vpack.c.b16 %v1258, %v1254
        %v1575 = vpack.c.b16 %v1263, %v1259
        %v1576 = vpack.c.b16 %v1264, %v1260
        %v1577 = vpack.c.b16 %v1265, %v1261
        %v1578 = vpack.c.b16 %v1266, %v1262
        %v1579 = vpack.c.b16 %v1271, %v1267
        %v1580 = vpack.c.b16 %v1272, %v1268
        %v1581 = vpack.c.b16 %v1273, %v1269
        %v1582 = vpack.c.b16 %v1274, %v1270
        %v1583 = vpack.c.b16 %v1279, %v1275
        %v1584 = vpack.c.b16 %v1280, %v1276
        %v1585 = vpack.c.b16 %v1281, %v1277
        %v1586 = vpack.c.b16 %v1282, %v1278
        %v1587 = vpack.c.b16 %v1287, %v1283
        %v1588 = vpack.c.b16 %v1288, %v1284
        %v1589 = vpack.c.b16 %v1289, %v1285
        %v1590 = vpack.c.b16 %v1290, %v1286
        %v1591 = vpack.c.b16 %v1295, %v1291
        %v1592 = vpack.c.b16 %v1296, %v1292
        %v1593 = vpack.c.b16 %v1297, %v1293
        %v1594 = vpack.c.b16 %v1298, %v1294
        %v1595 = vpack.c.b16 %v1303, %v1299
        %v1596 = vpack.c.b16 %v1304, %v1300
        %v1597 = vpack.c.b16 %v1305, %v1301
        %v1598 = vpack.c.b16 %v1306, %v1302
        %v1599 = vpack.c.b16 %v1311, %v1307
        %v1600 = vpack.c.b16 %v1312, %v1308
        %v1601 = vpack.c.b16 %v1313, %v1309
        %v1602 = vpack.c.b16 %v1314, %v1310
        %v1603 = vpack.c.b16 %v1319, %v1315
        %v1604 = vpack.c.b16 %v1320, %v1316
        %v1605 = vpack.c.b16 %v1321, %v1317
        %v1606 = vpack.c.b16 %v1322, %v1318
        %v1607 = vpack.c.b16 %v1327, %v1323
        %v1608 = vpack.c.b16 %v1328, %v1324
        %v1609 = vpack.c.b16 %v1329, %v1325
        %v1610 = vpack.c.b16 %v1330, %v1326
        %v1611 = vpack.c.b16 %v1335, %v1331
        %v1612 = vpack.c.b16 %v1336, %v1332
        %v1613 = vpack.c.b16 %v1337, %v1333
        %v1614 = vpack.c.b16 %v1338, %v1334
        %v1615 = vpack.c.b16 %v1343, %v1339
        %v1616 = vpack.c.b16 %v1344, %v1340
        %v1617 = vpack.c.b16 %v1345, %v1341
        %v1618 = vpack.c.b16 %v1346, %v1342
        %v1619 = vpack.c.b16 %v1351, %v1347
        %v1620 = vpack.c.b16 %v1352, %v1348
        %v1621 = vpack.c.b16 %v1353, %v1349
        %v1622 = vpack.c.b16 %v1354, %v1350
        %v1623 = vpack.c.b16 %v1359, %v1355
        %v1624 = vpack.c.b16 %v1360, %v1356
        %v1625 = vpack.c.b16 %v1361, %v1357
        %v1626 = vpack.c.b16 %v1362, %v1358
        %v1627 = vpack.c.b16 %v1367, %v1363
        %v1628 = vpack.c.b16 %v1368, %v1364
        %v1629 = vpack.c.b16 %v1369, %v1365
        %v1630 = vpack.c.b16 %v1370, %v1366
        %v1631 = vpack.c.b16 %v1375, %v1371
        %v1632 = vpack.c.b16 %v1376, %v1372
        %v1633 = vpack.c.b16 %v1377, %v1373
        %v1634 = vpack.c.b16 %v1378, %v1374
        %v1635 = vpack.c.b16 %v1383, %v1379
        %v1636 = vpack.c.b16 %v1384, %v1380
        %v1637 = vpack.c.b16 %v1385, %v1381
        %v1638 = vpack.c.b16 %v1386, %v1382
        %v1639 = vpack.c.b16 %v1391, %v1387
        %v1640 = vpack.c.b16 %v1392, %v1388
        %v1641 = vpack.c.b16 %v1393, %v1389
        %v1642 = vpack.c.b16 %v1394, %v1390
        %v1643 = vpack.c.b16 %v1399, %v1395
        %v1644 = vpack.c.b16 %v1400, %v1396
        %v1645 = vpack.c.b16 %v1401, %v1397
        %v1646 = vpack.c.b16 %v1402, %v1398
        %v1647 = vpack.c.b16 %v1407, %v1403
        %v1648 = vpack.c.b16 %v1408, %v1404
        %v1649 = vpack.c.b16 %v1409, %v1405
        %v1650 = vpack.c.b16 %v1410, %v1406
        %v1651 = vpack.c.b16 %v1415, %v1411
        %v1652 = vpack.c.b16 %v1416, %v1412
        %v1653 = vpack.c.b16 %v1417, %v1413
        %v1654 = vpack.c.b16 %v1418, %v1414
        %v1655 = vpack.c.b16 %v1423, %v1419
        %v1656 = vpack.c.b16 %v1424, %v1420
        %v1657 = vpack.c.b16 %v1425, %v1421
        %v1658 = vpack.c.b16 %v1426, %v1422
        %v1659 = vpack.c.b16 %v1431, %v1427
        %v1660 = vpack.c.b16 %v1432, %v1428
        %v1661 = vpack.c.b16 %v1433, %v1429
        %v1662 = vpack.c.b16 %v1434, %v1430
        %v1663 = vpack.c.b16 %v1439, %v1435
        %v1664 = vpack.c.b16 %v1440, %v1436
        %v1665 = vpack.c.b16 %v1441, %v1437
        %v1666 = vpack.c.b16 %v1442, %v1438
        %v1667 = vpack.c.b16 %v1447, %v1443
        %v1668 = vpack.c.b16 %v1448, %v1444
        %v1669 = vpack.c.b16 %v1449, %v1445
        %v1670 = vpack.c.b16 %v1450, %v1446
        %v1671 = vpack.c.b16 %v1455, %v1451
        %v1672 = vpack.c.b16 %v1456, %v1452
        %v1673 = vpack.c.b16 %v1457, %v1453
        %v1674 = vpack.c.b16 %v1458, %v1454
        %v1675 = vpack.c.b16 %v1463, %v1459
        %v1676 = vpack.c.b16 %v1464, %v1460
        %v1677 = vpack.c.b16 %v1465, %v1461
        %v1678 = vpack.c.b16 %v1466, %v1462
        %v1679 = vpack.c.b16 %v1471, %v1467
        %v1680 = vpack.c.b16 %v1472, %v1468
        %v1681 = vpack.c.b16 %v1473, %v1469
        %v1682 = vpack.c.b16 %v1474, %v1470
        %v1683 = vpack.c.b16 %v1479, %v1475
        %v1684 = vpack.c.b16 %v1480, %v1476
        %v1685 = vpack.c.b16 %v1481, %v1477
        %v1686 = vpack.c.b16 %v1482, %v1478
        %v1687 = vpack.c.b16 %v1487, %v1483
        %v1688 = vpack.c.b16 %v1488, %v1484
        %v1689 = vpack.c.b16 %v1489, %v1485
        %v1690 = vpack.c.b16 %v1490, %v1486
        %v1691 = vpack.c.b16 %v1495, %v1491
        %v1692 = vpack.c.b16 %v1496, %v1492
        %v1693 = vpack.c.b16 %v1497, %v1493
        %v1694 = vpack.c.b16 %v1498, %v1494
        %v1695 = vpack.c.b16 %v1503, %v1499
        %v1696 = vpack.c.b16 %v1504, %v1500
        %v1697 = vpack.c.b16 %v1505, %v1501
        %v1698 = vpack.c.b16 %v1506, %v1502
        %1891 = vmatprep.subr.bf16.mxu0 %v1508
        %1892 = vmatpush1.bf16.msra.mxu0 %v1507
        %1893 = vmatprep.subr.bf16.mxu0 %v1512
        %1894 = vmatpush1.bf16.msra.mxu0 %v1511
        %1895 = vmatprep.subr.bf16.mxu0 %v1516
        %1896 = vmatpush1.bf16.msra.mxu0 %v1515
        %1897 = vmatprep.subr.bf16.mxu0 %v1520
        %1898 = vmatpush1.bf16.msra.mxu0 %v1519
        %1899 = vmatprep.subr.bf16.mxu0 %v1524
        %1900 = vmatpush1.bf16.msra.mxu0 %v1523
        %1901 = vmatprep.subr.bf16.mxu0 %v1528
        %1902 = vmatpush1.bf16.msra.mxu0 %v1527
        %1903 = vmatprep.subr.bf16.mxu0 %v1532
        %1904 = vmatpush1.bf16.msra.mxu0 %v1531
        %1905 = vmatprep.subr.bf16.mxu0 %v1536
        %1906 = vmatpush1.bf16.msra.mxu0 %v1535
        %1907 = vmatprep.subr.bf16.mxu0 %v1540
        %1908 = vmatpush1.bf16.msra.mxu0 %v1539
        %1909 = vmatprep.subr.bf16.mxu0 %v1544
        %1910 = vmatpush1.bf16.msra.mxu0 %v1543
        %1911 = vmatprep.subr.bf16.mxu0 %v1548
        %1912 = vmatpush1.bf16.msra.mxu0 %v1547
        %1913 = vmatprep.subr.bf16.mxu0 %v1552
        %1914 = vmatpush1.bf16.msra.mxu0 %v1551
        %1915 = vmatprep.subr.bf16.mxu0 %v1556
        %1916 = vmatpush1.bf16.msra.mxu0 %v1555
        %1917 = vmatprep.subr.bf16.mxu0 %v1560
        %1918 = vmatpush1.bf16.msra.mxu0 %v1559
        %1919 = vmatprep.subr.bf16.mxu0 %v1564
        %1920 = vmatpush1.bf16.msra.mxu0 %v1563
        %1921 = vmatprep.subr.bf16.mxu0 %v1568
        %1922 = vmatpush1.bf16.msra.mxu0 %v1567
        %1923 = vmatprep.mubr.bf16.mxu0 %v836
        %1924 = vmatmul.mubr.bf16.gmra.mrb[0].mxu0 %v835
        %v1925 = vpop.f32.mrb[0].mxu0
        %v1926 = vadd.f32 %v674, %v1925
        %v1927 = vpop.f32.mrb[0].mxu0
        %v1928 = vadd.f32 %v678, %v1927
        %v1929 = vpop.f32.mrb[0].mxu0
        %v1930 = vadd.f32 %v674, %v1929
        %v1931 = vpop.f32.mrb[0].mxu0
        %v1932 = vadd.f32 %v678, %v1931
        %1933 = vmatprep.mubr.bf16.mxu0 %v842
        %1934 = vmatmul.mubr.bf16.gmra.mrb[0].mxu0 %v841
        %v1935 = vpop.f32.mrb[0].mxu0
        %v1936 = vadd.f32 %v674, %v1935
        %v1937 = vpop.f32.mrb[0].mxu0
        %v1938 = vadd.f32 %v678, %v1937
        %v1939 = vpop.f32.mrb[0].mxu0
        %v1940 = vadd.f32 %v674, %v1939
        %v1941 = vpop.f32.mrb[0].mxu0
        %v1942 = vadd.f32 %v678, %v1941
        %1943 = vmatprep.mubr.bf16.mxu0 %v848
        %1944 = vmatmul.mubr.bf16.gmra.mrb[0].mxu0 %v847
        %v1945 = vpop.f32.mrb[0].mxu0
        %v1946 = vadd.f32 %v674, %v1945
        %v1947 = vpop.f32.mrb[0].mxu0
        %v1948 = vadd.f32 %v678, %v1947
        %v1949 = vpop.f32.mrb[0].mxu0
        %v1950 = vadd.f32 %v674, %v1949
        %v1951 = vpop.f32.mrb[0].mxu0
        %v1952 = vadd.f32 %v678, %v1951
        %1953 = vmatprep.mubr.bf16.mxu0 %v854
        %1954 = vmatmul.mubr.bf16.gmra.mrb[0].mxu0 %v853
        %v1955 = vpop.f32.mrb[0].mxu0
        %v1956 = vadd.f32 %v674, %v1955
        %v1957 = vpop.f32.mrb[0].mxu0
        %v1958 = vadd.f32 %v678, %v1957
        %v1959 = vpop.f32.mrb[0].mxu0
        %v1960 = vadd.f32 %v674, %v1959
        %v1961 = vpop.f32.mrb[0].mxu0
        %v1962 = vadd.f32 %v678, %v1961
        %1963 = vmatprep.mubr.bf16.mxu0 %v860
        %1964 = vmatmul.mubr.bf16.gmra.mrb[0].mxu0 %v859
        %v1965 = vpop.f32.mrb[0].mxu0
        %v1966 = vadd.f32 %v674, %v1965
        %v1967 = vpop.f32.mrb[0].mxu0
        %v1968 = vadd.f32 %v678, %v1967
        %v1969 = vpop.f32.mrb[0].mxu0
        %v1970 = vadd.f32 %v674, %v1969
        %v1971 = vpop.f32.mrb[0].mxu0
        %v1972 = vadd.f32 %v678, %v1971
        %1973 = vmatprep.mubr.bf16.mxu0 %v866
        %1974 = vmatmul.mubr.bf16.gmra.mrb[0].mxu0 %v865
        %v1975 = vpop.f32.mrb[0].mxu0
        %v1976 = vadd.f32 %v674, %v1975
        %v1977 = vpop.f32.mrb[0].mxu0
        %v1978 = vadd.f32 %v678, %v1977
        %v1979 = vpop.f32.mrb[0].mxu0
        %v1980 = vadd.f32 %v674, %v1979
        %v1981 = vpop.f32.mrb[0].mxu0
        %v1982 = vadd.f32 %v678, %v1981
        %1983 = vmatprep.mubr.bf16.mxu0 %v872
        %1984 = vmatmul.mubr.bf16.gmra.mrb[0].mxu0 %v871
        %v1985 = vpop.f32.mrb[0].mxu0
        %v1986 = vadd.f32 %v674, %v1985
        %v1987 = vpop.f32.mrb[0].mxu0
        %v1988 = vadd.f32 %v678, %v1987
        %v1989 = vpop.f32.mrb[0].mxu0
        %v1990 = vadd.f32 %v674, %v1989
        %v1991 = vpop.f32.mrb[0].mxu0
        %v1992 = vadd.f32 %v678, %v1991
        %1993 = vmatprep.mubr.bf16.mxu0 %v878
        %1994 = vmatmul.mubr.bf16.gmra.mrb[0].mxu0 %v877
        %v1995 = vpop.f32.mrb[0].mxu0
        %v1996 = vadd.f32 %v674, %v1995
        %v1997 = vpop.f32.mrb[0].mxu0
        %v1998 = vadd.f32 %v678, %v1997
        %v1999 = vpop.f32.mrb[0].mxu0
        %v2000 = vadd.f32 %v674, %v1999
        %v2001 = vpop.f32.mrb[0].mxu0
        %v2002 = vadd.f32 %v678, %v2001
        %2003 = vdwg.mxu0
        %2004 = vmatprep.subr.bf16.mxu0 %v1572
        %2005 = vmatpush1.bf16.msra.mxu0 %v1571
        %2006 = vmatprep.subr.bf16.mxu0 %v1576
        %2007 = vmatpush1.bf16.msra.mxu0 %v1575
        %2008 = vmatprep.subr.bf16.mxu0 %v1580
        %2009 = vmatpush1.bf16.msra.mxu0 %v1579
        %2010 = vmatprep.subr.bf16.mxu0 %v1584
        %2011 = vmatpush1.bf16.msra.mxu0 %v1583
        %2012 = vmatprep.subr.bf16.mxu0 %v1588
        %2013 = vmatpush1.bf16.msra.mxu0 %v1587
        %2014 = vmatprep.subr.bf16.mxu0 %v1592
        %2015 = vmatpush1.bf16.msra.mxu0 %v1591
        %2016 = vmatprep.subr.bf16.mxu0 %v1596
        %2017 = vmatpush1.bf16.msra.mxu0 %v1595
        %2018 = vmatprep.subr.bf16.mxu0 %v1600
        %2019 = vmatpush1.bf16.msra.mxu0 %v1599
        %2020 = vmatprep.subr.bf16.mxu0 %v1604
        %2021 = vmatpush1.bf16.msra.mxu0 %v1603
        %2022 = vmatprep.subr.bf16.mxu0 %v1608
        %2023 = vmatpush1.bf16.msra.mxu0 %v1607
        %2024 = vmatprep.subr.bf16.mxu0 %v1612
        %2025 = vmatpush1.bf16.msra.mxu0 %v1611
        %2026 = vmatprep.subr.bf16.mxu0 %v1616
        %2027 = vmatpush1.bf16.msra.mxu0 %v1615
        %2028 = vmatprep.subr.bf16.mxu0 %v1620
        %2029 = vmatpush1.bf16.msra.mxu0 %v1619
        %2030 = vmatprep.subr.bf16.mxu0 %v1624
        %2031 = vmatpush1.bf16.msra.mxu0 %v1623
        %2032 = vmatprep.subr.bf16.mxu0 %v1628
        %2033 = vmatpush1.bf16.msra.mxu0 %v1627
        %2034 = vmatprep.subr.bf16.mxu0 %v1632
        %2035 = vmatpush1.bf16.msra.mxu0 %v1631
        %2036 = vmatprep.mubr.bf16.mxu0 %v838
        %2037 = vmatmul.mubr.bf16.gmra.mrb[0].mxu0 %v837
        %v2038 = vpop.f32.mrb[0].mxu0
        %v2039 = vadd.f32 %v1926, %v2038
        %v2040 = vpop.f32.mrb[0].mxu0
        %v2041 = vadd.f32 %v1928, %v2040
        %v2042 = vpop.f32.mrb[0].mxu0
        %v2043 = vadd.f32 %v1930, %v2042
        %v2044 = vpop.f32.mrb[0].mxu0
        %v2045 = vadd.f32 %v1932, %v2044
        %2046 = vmatprep.mubr.bf16.mxu0 %v844
        %2047 = vmatmul.mubr.bf16.gmra.mrb[0].mxu0 %v843
        %v2048 = vpop.f32.mrb[0].mxu0
        %v2049 = vadd.f32 %v1936, %v2048
        %v2050 = vpop.f32.mrb[0].mxu0
        %v2051 = vadd.f32 %v1938, %v2050
        %v2052 = vpop.f32.mrb[0].mxu0
        %v2053 = vadd.f32 %v1940, %v2052
        %v2054 = vpop.f32.mrb[0].mxu0
        %v2055 = vadd.f32 %v1942, %v2054
        %2056 = vmatprep.mubr.bf16.mxu0 %v850
        %2057 = vmatmul.mubr.bf16.gmra.mrb[0].mxu0 %v849
        %v2058 = vpop.f32.mrb[0].mxu0
        %v2059 = vadd.f32 %v1946, %v2058
        %v2060 = vpop.f32.mrb[0].mxu0
        %v2061 = vadd.f32 %v1948, %v2060
        %v2062 = vpop.f32.mrb[0].mxu0
        %v2063 = vadd.f32 %v1950, %v2062
        %v2064 = vpop.f32.mrb[0].mxu0
        %v2065 = vadd.f32 %v1952, %v2064
        %2066 = vmatprep.mubr.bf16.mxu0 %v856
        %2067 = vmatmul.mubr.bf16.gmra.mrb[0].mxu0 %v855
        %v2068 = vpop.f32.mrb[0].mxu0
        %v2069 = vadd.f32 %v1956, %v2068
        %v2070 = vpop.f32.mrb[0].mxu0
        %v2071 = vadd.f32 %v1958, %v2070
        %v2072 = vpop.f32.mrb[0].mxu0
        %v2073 = vadd.f32 %v1960, %v2072
        %v2074 = vpop.f32.mrb[0].mxu0
        %v2075 = vadd.f32 %v1962, %v2074
        %2076 = vmatprep.mubr.bf16.mxu0 %v862
        %2077 = vmatmul.mubr.bf16.gmra.mrb[0].mxu0 %v861
        %v2078 = vpop.f32.mrb[0].mxu0
        %v2079 = vadd.f32 %v1966, %v2078
        %v2080 = vpop.f32.mrb[0].mxu0
        %v2081 = vadd.f32 %v1968, %v2080
        %v2082 = vpop.f32.mrb[0].mxu0
        %v2083 = vadd.f32 %v1970, %v2082
        %v2084 = vpop.f32.mrb[0].mxu0
        %v2085 = vadd.f32 %v1972, %v2084
        %2086 = vmatprep.mubr.bf16.mxu0 %v868
        %2087 = vmatmul.mubr.bf16.gmra.mrb[0].mxu0 %v867
        %v2088 = vpop.f32.mrb[0].mxu0
        %v2089 = vadd.f32 %v1976, %v2088
        %v2090 = vpop.f32.mrb[0].mxu0
        %v2091 = vadd.f32 %v1978, %v2090
        %v2092 = vpop.f32.mrb[0].mxu0
        %v2093 = vadd.f32 %v1980, %v2092
        %v2094 = vpop.f32.mrb[0].mxu0
        %v2095 = vadd.f32 %v1982, %v2094
        %2096 = vmatprep.mubr.bf16.mxu0 %v874
        %2097 = vmatmul.mubr.bf16.gmra.mrb[0].mxu0 %v873
        %v2098 = vpop.f32.mrb[0].mxu0
        %v2099 = vadd.f32 %v1986, %v2098
        %v2100 = vpop.f32.mrb[0].mxu0
        %v2101 = vadd.f32 %v1988, %v2100
        %v2102 = vpop.f32.mrb[0].mxu0
        %v2103 = vadd.f32 %v1990, %v2102
        %v2104 = vpop.f32.mrb[0].mxu0
        %v2105 = vadd.f32 %v1992, %v2104
        %2106 = vmatprep.mubr.bf16.mxu0 %v880
        %2107 = vmatmul.mubr.bf16.gmra.mrb[0].mxu0 %v879
        %v2108 = vpop.f32.mrb[0].mxu0
        %v2109 = vadd.f32 %v1996, %v2108
        %v2110 = vpop.f32.mrb[0].mxu0
        %v2111 = vadd.f32 %v1998, %v2110
        %v2112 = vpop.f32.mrb[0].mxu0
        %v2113 = vadd.f32 %v2000, %v2112
        %v2114 = vpop.f32.mrb[0].mxu0
        %v2115 = vadd.f32 %v2002, %v2114
        %2116 = vdwg.mxu0
        %2117 = vmatprep.subr.bf16.mxu0 %v1636
        %2118 = vmatpush1.bf16.msra.mxu0 %v1635
        %2119 = vmatprep.subr.bf16.mxu0 %v1640
        %2120 = vmatpush1.bf16.msra.mxu0 %v1639
        %2121 = vmatprep.subr.bf16.mxu0 %v1644
        %2122 = vmatpush1.bf16.msra.mxu0 %v1643
        %2123 = vmatprep.subr.bf16.mxu0 %v1648
        %2124 = vmatpush1.bf16.msra.mxu0 %v1647
        %2125 = vmatprep.subr.bf16.mxu0 %v1652
        %2126 = vmatpush1.bf16.msra.mxu0 %v1651
        %2127 = vmatprep.subr.bf16.mxu0 %v1656
        %2128 = vmatpush1.bf16.msra.mxu0 %v1655
        %2129 = vmatprep.subr.bf16.mxu0 %v1660
        %2130 = vmatpush1.bf16.msra.mxu0 %v1659
        %2131 = vmatprep.subr.bf16.mxu0 %v1664
        %2132 = vmatpush1.bf16.msra.mxu0 %v1663
        %2133 = vmatprep.subr.bf16.mxu0 %v1668
        %2134 = vmatpush1.bf16.msra.mxu0 %v1667
        %2135 = vmatprep.subr.bf16.mxu0 %v1672
        %2136 = vmatpush1.bf16.msra.mxu0 %v1671
        %2137 = vmatprep.subr.bf16.mxu0 %v1676
        %2138 = vmatpush1.bf16.msra.mxu0 %v1675
        %2139 = vmatprep.subr.bf16.mxu0 %v1680
        %2140 = vmatpush1.bf16.msra.mxu0 %v1679
        %2141 = vmatprep.subr.bf16.mxu0 %v1684
        %2142 = vmatpush1.bf16.msra.mxu0 %v1683
        %2143 = vmatprep.subr.bf16.mxu0 %v1688
        %2144 = vmatpush1.bf16.msra.mxu0 %v1687
        %2145 = vmatprep.subr.bf16.mxu0 %v1692
        %2146 = vmatpush1.bf16.msra.mxu0 %v1691
        %2147 = vmatprep.subr.bf16.mxu0 %v1696
        %2148 = vmatpush1.bf16.msra.mxu0 %v1695
        %2149 = vmatprep.mubr.bf16.mxu0 %v840
        %2150 = vmatmul.mubr.bf16.gmra.mrb[0].mxu0 %v839
        %v2151 = vpop.f32.mrb[0].mxu0
        %v2152 = vadd.f32 %v2039, %v2151
        %v2153 = vpop.f32.mrb[0].mxu0
        %v2154 = vadd.f32 %v2041, %v2153
        %v2155 = vpop.f32.mrb[0].mxu0
        %v2156 = vadd.f32 %v2043, %v2155
        %v2157 = vpop.f32.mrb[0].mxu0
        %v2158 = vadd.f32 %v2045, %v2157
        %2159 = vmatprep.mubr.bf16.mxu0 %v846
        %2160 = vmatmul.mubr.bf16.gmra.mrb[0].mxu0 %v845
        %v2161 = vpop.f32.mrb[0].mxu0
        %v2162 = vadd.f32 %v2049, %v2161
        %v2163 = vpop.f32.mrb[0].mxu0
        %v2164 = vadd.f32 %v2051, %v2163
        %v2165 = vpop.f32.mrb[0].mxu0
        %v2166 = vadd.f32 %v2053, %v2165
        %v2167 = vpop.f32.mrb[0].mxu0
        %v2168 = vadd.f32 %v2055, %v2167
        %2169 = vmatprep.mubr.bf16.mxu0 %v852
        %2170 = vmatmul.mubr.bf16.gmra.mrb[0].mxu0 %v851
        %v2171 = vpop.f32.mrb[0].mxu0
        %v2172 = vadd.f32 %v2059, %v2171
        %v2173 = vpop.f32.mrb[0].mxu0
        %v2174 = vadd.f32 %v2061, %v2173
        %v2175 = vpop.f32.mrb[0].mxu0
        %v2176 = vadd.f32 %v2063, %v2175
        %v2177 = vpop.f32.mrb[0].mxu0
        %v2178 = vadd.f32 %v2065, %v2177
        %2179 = vmatprep.mubr.bf16.mxu0 %v858
        %2180 = vmatmul.mubr.bf16.gmra.mrb[0].mxu0 %v857
        %v2181 = vpop.f32.mrb[0].mxu0
        %v2182 = vadd.f32 %v2069, %v2181
        %v2183 = vpop.f32.mrb[0].mxu0
        %v2184 = vadd.f32 %v2071, %v2183
        %v2185 = vpop.f32.mrb[0].mxu0
        %v2186 = vadd.f32 %v2073, %v2185
        %v2187 = vpop.f32.mrb[0].mxu0
        %v2188 = vadd.f32 %v2075, %v2187
        %2189 = vmatprep.mubr.bf16.mxu0 %v864
        %2190 = vmatmul.mubr.bf16.gmra.mrb[0].mxu0 %v863
        %v2191 = vpop.f32.mrb[0].mxu0
        %v2192 = vadd.f32 %v2079, %v2191
        %v2193 = vpop.f32.mrb[0].mxu0
        %v2194 = vadd.f32 %v2081, %v2193
        %v2195 = vpop.f32.mrb[0].mxu0
        %v2196 = vadd.f32 %v2083, %v2195
        %v2197 = vpop.f32.mrb[0].mxu0
        %v2198 = vadd.f32 %v2085, %v2197
        %2199 = vmatprep.mubr.bf16.mxu0 %v870
        %2200 = vmatmul.mubr.bf16.gmra.mrb[0].mxu0 %v869
        %v2201 = vpop.f32.mrb[0].mxu0
        %v2202 = vadd.f32 %v2089, %v2201
        %v2203 = vpop.f32.mrb[0].mxu0
        %v2204 = vadd.f32 %v2091, %v2203
        %v2205 = vpop.f32.mrb[0].mxu0
        %v2206 = vadd.f32 %v2093, %v2205
        %v2207 = vpop.f32.mrb[0].mxu0
        %v2208 = vadd.f32 %v2095, %v2207
        %2209 = vmatprep.mubr.bf16.mxu0 %v876
        %2210 = vmatmul.mubr.bf16.gmra.mrb[0].mxu0 %v875
        %v2211 = vpop.f32.mrb[0].mxu0
        %v2212 = vadd.f32 %v2099, %v2211
        %v2213 = vpop.f32.mrb[0].mxu0
        %v2214 = vadd.f32 %v2101, %v2213
        %v2215 = vpop.f32.mrb[0].mxu0
        %v2216 = vadd.f32 %v2103, %v2215
        %v2217 = vpop.f32.mrb[0].mxu0
        %v2218 = vadd.f32 %v2105, %v2217
        %2219 = vmatprep.mubr.bf16.mxu0 %v882
        %2220 = vmatmul.mubr.bf16.gmra.mrb[0].mxu0 %v881
        %v2221 = vpop.f32.mrb[0].mxu0
        %v2222 = vadd.f32 %v2109, %v2221
        %v2223 = vpop.f32.mrb[0].mxu0
        %v2224 = vadd.f32 %v2111, %v2223
        %v2225 = vpop.f32.mrb[0].mxu0
        %v2226 = vadd.f32 %v2113, %v2225
        %v2227 = vpop.f32.mrb[0].mxu0
        %v2228 = vadd.f32 %v2115, %v2227
        %2229 = vdwg.mxu0
        %2230 = vmatprep.subr.bf16.mxu0 %v1510
        %2231 = vmatpush1.bf16.msra.mxu0 %v1509
        %2232 = vmatprep.subr.bf16.mxu0 %v1514
        %2233 = vmatpush1.bf16.msra.mxu0 %v1513
        %2234 = vmatprep.subr.bf16.mxu0 %v1518
        %2235 = vmatpush1.bf16.msra.mxu0 %v1517
        %2236 = vmatprep.subr.bf16.mxu0 %v1522
        %2237 = vmatpush1.bf16.msra.mxu0 %v1521
        %2238 = vmatprep.subr.bf16.mxu0 %v1526
        %2239 = vmatpush1.bf16.msra.mxu0 %v1525
        %2240 = vmatprep.subr.bf16.mxu0 %v1530
        %2241 = vmatpush1.bf16.msra.mxu0 %v1529
        %2242 = vmatprep.subr.bf16.mxu0 %v1534
        %2243 = vmatpush1.bf16.msra.mxu0 %v1533
        %2244 = vmatprep.subr.bf16.mxu0 %v1538
        %2245 = vmatpush1.bf16.msra.mxu0 %v1537
        %2246 = vmatprep.subr.bf16.mxu0 %v1542
        %2247 = vmatpush1.bf16.msra.mxu0 %v1541
        %2248 = vmatprep.subr.bf16.mxu0 %v1546
        %2249 = vmatpush1.bf16.msra.mxu0 %v1545
        %2250 = vmatprep.subr.bf16.mxu0 %v1550
        %2251 = vmatpush1.bf16.msra.mxu0 %v1549
        %2252 = vmatprep.subr.bf16.mxu0 %v1554
        %2253 = vmatpush1.bf16.msra.mxu0 %v1553
        %2254 = vmatprep.subr.bf16.mxu0 %v1558
        %2255 = vmatpush1.bf16.msra.mxu0 %v1557
        %2256 = vmatprep.subr.bf16.mxu0 %v1562
        %2257 = vmatpush1.bf16.msra.mxu0 %v1561
        %2258 = vmatprep.subr.bf16.mxu0 %v1566
        %2259 = vmatpush1.bf16.msra.mxu0 %v1565
        %2260 = vmatprep.subr.bf16.mxu0 %v1570
        %2261 = vmatpush1.bf16.msra.mxu0 %v1569
        %2262 = vmatprep.mubr.bf16.mxu0 %v836
        %2263 = vmatmul.mubr.bf16.gmra.mrb[0].mxu0 %v835
        %v2264 = vpop.f32.mrb[0].mxu0
        %v2265 = vadd.f32 %v682, %v2264
        %v2266 = vpop.f32.mrb[0].mxu0
        %v2267 = vadd.f32 %v686, %v2266
        %v2268 = vpop.f32.mrb[0].mxu0
        %v2269 = vadd.f32 %v682, %v2268
        %v2270 = vpop.f32.mrb[0].mxu0
        %v2271 = vadd.f32 %v686, %v2270
        %2272 = vmatprep.mubr.bf16.mxu0 %v842
        %2273 = vmatmul.mubr.bf16.gmra.mrb[0].mxu0 %v841
        %v2274 = vpop.f32.mrb[0].mxu0
        %v2275 = vadd.f32 %v682, %v2274
        %v2276 = vpop.f32.mrb[0].mxu0
        %v2277 = vadd.f32 %v686, %v2276
        %v2278 = vpop.f32.mrb[0].mxu0
        %v2279 = vadd.f32 %v682, %v2278
        %v2280 = vpop.f32.mrb[0].mxu0
        %v2281 = vadd.f32 %v686, %v2280
        %2282 = vmatprep.mubr.bf16.mxu0 %v848
        %2283 = vmatmul.mubr.bf16.gmra.mrb[0].mxu0 %v847
        %v2284 = vpop.f32.mrb[0].mxu0
        %v2285 = vadd.f32 %v682, %v2284
        %v2286 = vpop.f32.mrb[0].mxu0
        %v2287 = vadd.f32 %v686, %v2286
        %v2288 = vpop.f32.mrb[0].mxu0
        %v2289 = vadd.f32 %v682, %v2288
        %v2290 = vpop.f32.mrb[0].mxu0
        %v2291 = vadd.f32 %v686, %v2290
        %2292 = vmatprep.mubr.bf16.mxu0 %v854
        %2293 = vmatmul.mubr.bf16.gmra.mrb[0].mxu0 %v853
        %v2294 = vpop.f32.mrb[0].mxu0
        %v2295 = vadd.f32 %v682, %v2294
        %v2296 = vpop.f32.mrb[0].mxu0
        %v2297 = vadd.f32 %v686, %v2296
        %v2298 = vpop.f32.mrb[0].mxu0
        %v2299 = vadd.f32 %v682, %v2298
        %v2300 = vpop.f32.mrb[0].mxu0
        %v2301 = vadd.f32 %v686, %v2300
        %2302 = vmatprep.mubr.bf16.mxu0 %v860
        %2303 = vmatmul.mubr.bf16.gmra.mrb[0].mxu0 %v859
        %v2304 = vpop.f32.mrb[0].mxu0
        %v2305 = vadd.f32 %v682, %v2304
        %v2306 = vpop.f32.mrb[0].mxu0
        %v2307 = vadd.f32 %v686, %v2306
        %v2308 = vpop.f32.mrb[0].mxu0
        %v2309 = vadd.f32 %v682, %v2308
        %v2310 = vpop.f32.mrb[0].mxu0
        %v2311 = vadd.f32 %v686, %v2310
        %2312 = vmatprep.mubr.bf16.mxu0 %v866
        %2313 = vmatmul.mubr.bf16.gmra.mrb[0].mxu0 %v865
        %v2314 = vpop.f32.mrb[0].mxu0
        %v2315 = vadd.f32 %v682, %v2314
        %v2316 = vpop.f32.mrb[0].mxu0
        %v2317 = vadd.f32 %v686, %v2316
        %v2318 = vpop.f32.mrb[0].mxu0
        %v2319 = vadd.f32 %v682, %v2318
        %v2320 = vpop.f32.mrb[0].mxu0
        %v2321 = vadd.f32 %v686, %v2320
        %2322 = vmatprep.mubr.bf16.mxu0 %v872
        %2323 = vmatmul.mubr.bf16.gmra.mrb[0].mxu0 %v871
        %v2324 = vpop.f32.mrb[0].mxu0
        %v2325 = vadd.f32 %v682, %v2324
        %v2326 = vpop.f32.mrb[0].mxu0
        %v2327 = vadd.f32 %v686, %v2326
        %v2328 = vpop.f32.mrb[0].mxu0
        %v2329 = vadd.f32 %v682, %v2328
        %v2330 = vpop.f32.mrb[0].mxu0
        %v2331 = vadd.f32 %v686, %v2330
        %2332 = vmatprep.mubr.bf16.mxu0 %v878
        %2333 = vmatmul.mubr.bf16.gmra.mrb[0].mxu0 %v877
        %v2334 = vpop.f32.mrb[0].mxu0
        %v2335 = vadd.f32 %v682, %v2334
        %v2336 = vpop.f32.mrb[0].mxu0
        %v2337 = vadd.f32 %v686, %v2336
        %v2338 = vpop.f32.mrb[0].mxu0
        %v2339 = vadd.f32 %v682, %v2338
        %v2340 = vpop.f32.mrb[0].mxu0
        %v2341 = vadd.f32 %v686, %v2340
        %2342 = vdwg.mxu0
        %2343 = vmatprep.subr.bf16.mxu0 %v1574
        %2344 = vmatpush1.bf16.msra.mxu0 %v1573
        %2345 = vmatprep.subr.bf16.mxu0 %v1578
        %2346 = vmatpush1.bf16.msra.mxu0 %v1577
        %2347 = vmatprep.subr.bf16.mxu0 %v1582
        %2348 = vmatpush1.bf16.msra.mxu0 %v1581
        %2349 = vmatprep.subr.bf16.mxu0 %v1586
        %2350 = vmatpush1.bf16.msra.mxu0 %v1585
        %2351 = vmatprep.subr.bf16.mxu0 %v1590
        %2352 = vmatpush1.bf16.msra.mxu0 %v1589
        %2353 = vmatprep.subr.bf16.mxu0 %v1594
        %2354 = vmatpush1.bf16.msra.mxu0 %v1593
        %2355 = vmatprep.subr.bf16.mxu0 %v1598
        %2356 = vmatpush1.bf16.msra.mxu0 %v1597
        %2357 = vmatprep.subr.bf16.mxu0 %v1602
        %2358 = vmatpush1.bf16.msra.mxu0 %v1601
        %2359 = vmatprep.subr.bf16.mxu0 %v1606
        %2360 = vmatpush1.bf16.msra.mxu0 %v1605
        %2361 = vmatprep.subr.bf16.mxu0 %v1610
        %2362 = vmatpush1.bf16.msra.mxu0 %v1609
        %2363 = vmatprep.subr.bf16.mxu0 %v1614
        %2364 = vmatpush1.bf16.msra.mxu0 %v1613
        %2365 = vmatprep.subr.bf16.mxu0 %v1618
        %2366 = vmatpush1.bf16.msra.mxu0 %v1617
        %2367 = vmatprep.subr.bf16.mxu0 %v1622
        %2368 = vmatpush1.bf16.msra.mxu0 %v1621
        %2369 = vmatprep.subr.bf16.mxu0 %v1626
        %2370 = vmatpush1.bf16.msra.mxu0 %v1625
        %2371 = vmatprep.subr.bf16.mxu0 %v1630
        %2372 = vmatpush1.bf16.msra.mxu0 %v1629
        %2373 = vmatprep.subr.bf16.mxu0 %v1634
        %2374 = vmatpush1.bf16.msra.mxu0 %v1633
        %2375 = vmatprep.mubr.bf16.mxu0 %v838
        %2376 = vmatmul.mubr.bf16.gmra.mrb[0].mxu0 %v837
        %v2377 = vpop.f32.mrb[0].mxu0
        %v2378 = vadd.f32 %v2265, %v2377
        %v2379 = vpop.f32.mrb[0].mxu0
        %v2380 = vadd.f32 %v2267, %v2379
        %v2381 = vpop.f32.mrb[0].mxu0
        %v2382 = vadd.f32 %v2269, %v2381
        %v2383 = vpop.f32.mrb[0].mxu0
        %v2384 = vadd.f32 %v2271, %v2383
        %2385 = vmatprep.mubr.bf16.mxu0 %v844
        %2386 = vmatmul.mubr.bf16.gmra.mrb[0].mxu0 %v843
        %v2387 = vpop.f32.mrb[0].mxu0
        %v2388 = vadd.f32 %v2275, %v2387
        %v2389 = vpop.f32.mrb[0].mxu0
        %v2390 = vadd.f32 %v2277, %v2389
        %v2391 = vpop.f32.mrb[0].mxu0
        %v2392 = vadd.f32 %v2279, %v2391
        %v2393 = vpop.f32.mrb[0].mxu0
        %v2394 = vadd.f32 %v2281, %v2393
        %2395 = vmatprep.mubr.bf16.mxu0 %v850
        %2396 = vmatmul.mubr.bf16.gmra.mrb[0].mxu0 %v849
        %v2397 = vpop.f32.mrb[0].mxu0
        %v2398 = vadd.f32 %v2285, %v2397
        %v2399 = vpop.f32.mrb[0].mxu0
        %v2400 = vadd.f32 %v2287, %v2399
        %v2401 = vpop.f32.mrb[0].mxu0
        %v2402 = vadd.f32 %v2289, %v2401
        %v2403 = vpop.f32.mrb[0].mxu0
        %v2404 = vadd.f32 %v2291, %v2403
        %2405 = vmatprep.mubr.bf16.mxu0 %v856
        %2406 = vmatmul.mubr.bf16.gmra.mrb[0].mxu0 %v855
        %v2407 = vpop.f32.mrb[0].mxu0
        %v2408 = vadd.f32 %v2295, %v2407
        %v2409 = vpop.f32.mrb[0].mxu0
        %v2410 = vadd.f32 %v2297, %v2409
        %v2411 = vpop.f32.mrb[0].mxu0
        %v2412 = vadd.f32 %v2299, %v2411
        %v2413 = vpop.f32.mrb[0].mxu0
        %v2414 = vadd.f32 %v2301, %v2413
        %2415 = vmatprep.mubr.bf16.mxu0 %v862
        %2416 = vmatmul.mubr.bf16.gmra.mrb[0].mxu0 %v861
        %v2417 = vpop.f32.mrb[0].mxu0
        %v2418 = vadd.f32 %v2305, %v2417
        %v2419 = vpop.f32.mrb[0].mxu0
        %v2420 = vadd.f32 %v2307, %v2419
        %v2421 = vpop.f32.mrb[0].mxu0
        %v2422 = vadd.f32 %v2309, %v2421
        %v2423 = vpop.f32.mrb[0].mxu0
        %v2424 = vadd.f32 %v2311, %v2423
        %2425 = vmatprep.mubr.bf16.mxu0 %v868
        %2426 = vmatmul.mubr.bf16.gmra.mrb[0].mxu0 %v867
        %v2427 = vpop.f32.mrb[0].mxu0
        %v2428 = vadd.f32 %v2315, %v2427
        %v2429 = vpop.f32.mrb[0].mxu0
        %v2430 = vadd.f32 %v2317, %v2429
        %v2431 = vpop.f32.mrb[0].mxu0
        %v2432 = vadd.f32 %v2319, %v2431
        %v2433 = vpop.f32.mrb[0].mxu0
        %v2434 = vadd.f32 %v2321, %v2433
        %2435 = vmatprep.mubr.bf16.mxu0 %v874
        %2436 = vmatmul.mubr.bf16.gmra.mrb[0].mxu0 %v873
        %v2437 = vpop.f32.mrb[0].mxu0
        %v2438 = vadd.f32 %v2325, %v2437
        %v2439 = vpop.f32.mrb[0].mxu0
        %v2440 = vadd.f32 %v2327, %v2439
        %v2441 = vpop.f32.mrb[0].mxu0
        %v2442 = vadd.f32 %v2329, %v2441
        %v2443 = vpop.f32.mrb[0].mxu0
        %v2444 = vadd.f32 %v2331, %v2443
        %2445 = vmatprep.mubr.bf16.mxu0 %v880
        %2446 = vmatmul.mubr.bf16.gmra.mrb[0].mxu0 %v879
        %v2447 = vpop.f32.mrb[0].mxu0
        %v2448 = vadd.f32 %v2335, %v2447
        %v2449 = vpop.f32.mrb[0].mxu0
        %v2450 = vadd.f32 %v2337, %v2449
        %v2451 = vpop.f32.mrb[0].mxu0
        %v2452 = vadd.f32 %v2339, %v2451
        %v2453 = vpop.f32.mrb[0].mxu0
        %v2454 = vadd.f32 %v2341, %v2453
        %2455 = vdwg.mxu0
        %2456 = vmatprep.subr.bf16.mxu0 %v1638
        %2457 = vmatpush1.bf16.msra.mxu0 %v1637
        %2458 = vmatprep.subr.bf16.mxu0 %v1642
        %2459 = vmatpush1.bf16.msra.mxu0 %v1641
        %2460 = vmatprep.subr.bf16.mxu0 %v1646
        %2461 = vmatpush1.bf16.msra.mxu0 %v1645
        %2462 = vmatprep.subr.bf16.mxu0 %v1650
        %2463 = vmatpush1.bf16.msra.mxu0 %v1649
        %2464 = vmatprep.subr.bf16.mxu0 %v1654
        %2465 = vmatpush1.bf16.msra.mxu0 %v1653
        %2466 = vmatprep.subr.bf16.mxu0 %v1658
        %2467 = vmatpush1.bf16.msra.mxu0 %v1657
        %2468 = vmatprep.subr.bf16.mxu0 %v1662
        %2469 = vmatpush1.bf16.msra.mxu0 %v1661
        %2470 = vmatprep.subr.bf16.mxu0 %v1666
        %2471 = vmatpush1.bf16.msra.mxu0 %v1665
        %2472 = vmatprep.subr.bf16.mxu0 %v1670
        %2473 = vmatpush1.bf16.msra.mxu0 %v1669
        %2474 = vmatprep.subr.bf16.mxu0 %v1674
        %2475 = vmatpush1.bf16.msra.mxu0 %v1673
        %2476 = vmatprep.subr.bf16.mxu0 %v1678
        %2477 = vmatpush1.bf16.msra.mxu0 %v1677
        %2478 = vmatprep.subr.bf16.mxu0 %v1682
        %2479 = vmatpush1.bf16.msra.mxu0 %v1681
        %2480 = vmatprep.subr.bf16.mxu0 %v1686
        %2481 = vmatpush1.bf16.msra.mxu0 %v1685
        %2482 = vmatprep.subr.bf16.mxu0 %v1690
        %2483 = vmatpush1.bf16.msra.mxu0 %v1689
        %2484 = vmatprep.subr.bf16.mxu0 %v1694
        %2485 = vmatpush1.bf16.msra.mxu0 %v1693
        %2486 = vmatprep.subr.bf16.mxu0 %v1698
        %2487 = vmatpush1.bf16.msra.mxu0 %v1697
        %2488 = vmatprep.mubr.bf16.mxu0 %v840
        %2489 = vmatmul.mubr.bf16.gmra.mrb[0].mxu0 %v839
        %v2490 = vpop.f32.mrb[0].mxu0
        %v2491 = vadd.f32 %v2378, %v2490
        %v2492 = vpop.f32.mrb[0].mxu0
        %v2493 = vadd.f32 %v2380, %v2492
        %v2494 = vpop.f32.mrb[0].mxu0
        %v2495 = vadd.f32 %v2382, %v2494
        %v2496 = vpop.f32.mrb[0].mxu0
        %v2497 = vadd.f32 %v2384, %v2496
        %2498 = vmatprep.mubr.bf16.mxu0 %v846
        %2499 = vmatmul.mubr.bf16.gmra.mrb[0].mxu0 %v845
        %v2500 = vpop.f32.mrb[0].mxu0
        %v2501 = vadd.f32 %v2388, %v2500
        %v2502 = vpop.f32.mrb[0].mxu0
        %v2503 = vadd.f32 %v2390, %v2502
        %v2504 = vpop.f32.mrb[0].mxu0
        %v2505 = vadd.f32 %v2392, %v2504
        %v2506 = vpop.f32.mrb[0].mxu0
        %v2507 = vadd.f32 %v2394, %v2506
        %2508 = vmatprep.mubr.bf16.mxu0 %v852
        %2509 = vmatmul.mubr.bf16.gmra.mrb[0].mxu0 %v851
        %v2510 = vpop.f32.mrb[0].mxu0
        %v2511 = vadd.f32 %v2398, %v2510
        %v2512 = vpop.f32.mrb[0].mxu0
        %v2513 = vadd.f32 %v2400, %v2512
        %v2514 = vpop.f32.mrb[0].mxu0
        %v2515 = vadd.f32 %v2402, %v2514
        %v2516 = vpop.f32.mrb[0].mxu0
        %v2517 = vadd.f32 %v2404, %v2516
        %2518 = vmatprep.mubr.bf16.mxu0 %v858
        %2519 = vmatmul.mubr.bf16.gmra.mrb[0].mxu0 %v857
        %v2520 = vpop.f32.mrb[0].mxu0
        %v2521 = vadd.f32 %v2408, %v2520
        %v2522 = vpop.f32.mrb[0].mxu0
        %v2523 = vadd.f32 %v2410, %v2522
        %v2524 = vpop.f32.mrb[0].mxu0
        %v2525 = vadd.f32 %v2412, %v2524
        %v2526 = vpop.f32.mrb[0].mxu0
        %v2527 = vadd.f32 %v2414, %v2526
        %2528 = vmatprep.mubr.bf16.mxu0 %v864
        %2529 = vmatmul.mubr.bf16.gmra.mrb[0].mxu0 %v863
        %v2530 = vpop.f32.mrb[0].mxu0
        %v2531 = vadd.f32 %v2418, %v2530
        %v2532 = vpop.f32.mrb[0].mxu0
        %v2533 = vadd.f32 %v2420, %v2532
        %v2534 = vpop.f32.mrb[0].mxu0
        %v2535 = vadd.f32 %v2422, %v2534
        %v2536 = vpop.f32.mrb[0].mxu0
        %v2537 = vadd.f32 %v2424, %v2536
        %2538 = vmatprep.mubr.bf16.mxu0 %v870
        %2539 = vmatmul.mubr.bf16.gmra.mrb[0].mxu0 %v869
        %v2540 = vpop.f32.mrb[0].mxu0
        %v2541 = vadd.f32 %v2428, %v2540
        %v2542 = vpop.f32.mrb[0].mxu0
        %v2543 = vadd.f32 %v2430, %v2542
        %v2544 = vpop.f32.mrb[0].mxu0
        %v2545 = vadd.f32 %v2432, %v2544
        %v2546 = vpop.f32.mrb[0].mxu0
        %v2547 = vadd.f32 %v2434, %v2546
        %2548 = vmatprep.mubr.bf16.mxu0 %v876
        %2549 = vmatmul.mubr.bf16.gmra.mrb[0].mxu0 %v875
        %v2550 = vpop.f32.mrb[0].mxu0
        %v2551 = vadd.f32 %v2438, %v2550
        %v2552 = vpop.f32.mrb[0].mxu0
        %v2553 = vadd.f32 %v2440, %v2552
        %v2554 = vpop.f32.mrb[0].mxu0
        %v2555 = vadd.f32 %v2442, %v2554
        %v2556 = vpop.f32.mrb[0].mxu0
        %v2557 = vadd.f32 %v2444, %v2556
        %2558 = vmatprep.mubr.bf16.mxu0 %v882
        %2559 = vmatmul.mubr.bf16.gmra.mrb[0].mxu0 %v881
        %v2560 = vpop.f32.mrb[0].mxu0
        %v2561 = vadd.f32 %v2448, %v2560
        %v2562 = vpop.f32.mrb[0].mxu0
        %v2563 = vadd.f32 %v2450, %v2562
        %v2564 = vpop.f32.mrb[0].mxu0
        %v2565 = vadd.f32 %v2452, %v2564
        %v2566 = vpop.f32.mrb[0].mxu0
        %v2567 = vadd.f32 %v2454, %v2566
        %2568 = vdwg.mxu0
        %v2569 = vmax.f32 %v2152, 0.0
        %v2570 = vmax.f32 %v2154, 0.0
        %v2571 = vmax.f32 %v2491, 0.0
        %v2572 = vmax.f32 %v2493, 0.0
        %v2573 = vmax.f32 %v2156, 0.0
        %v2574 = vmax.f32 %v2158, 0.0
        %v2575 = vmax.f32 %v2495, 0.0
        %v2576 = vmax.f32 %v2497, 0.0
        %v2577 = vmax.f32 %v2162, 0.0
        %v2578 = vmax.f32 %v2164, 0.0
        %v2579 = vmax.f32 %v2501, 0.0
        %v2580 = vmax.f32 %v2503, 0.0
        %v2581 = vmax.f32 %v2166, 0.0
        %v2582 = vmax.f32 %v2168, 0.0
        %v2583 = vmax.f32 %v2505, 0.0
        %v2584 = vmax.f32 %v2507, 0.0
        %v2585 = vmax.f32 %v2172, 0.0
        %v2586 = vmax.f32 %v2174, 0.0
        %v2587 = vmax.f32 %v2511, 0.0
        %v2588 = vmax.f32 %v2513, 0.0
        %v2589 = vmax.f32 %v2176, 0.0
        %v2590 = vmax.f32 %v2178, 0.0
        %v2591 = vmax.f32 %v2515, 0.0
        %v2592 = vmax.f32 %v2517, 0.0
        %v2593 = vmax.f32 %v2182, 0.0
        %v2594 = vmax.f32 %v2184, 0.0
        %v2595 = vmax.f32 %v2521, 0.0
        %v2596 = vmax.f32 %v2523, 0.0
        %v2597 = vmax.f32 %v2186, 0.0
        %v2598 = vmax.f32 %v2188, 0.0
        %v2599 = vmax.f32 %v2525, 0.0
        %v2600 = vmax.f32 %v2527, 0.0
        %v2601 = vmax.f32 %v2192, 0.0
        %v2602 = vmax.f32 %v2194, 0.0
        %v2603 = vmax.f32 %v2531, 0.0
        %v2604 = vmax.f32 %v2533, 0.0
        %v2605 = vmax.f32 %v2196, 0.0
        %v2606 = vmax.f32 %v2198, 0.0
        %v2607 = vmax.f32 %v2535, 0.0
        %v2608 = vmax.f32 %v2537, 0.0
        %v2609 = vmax.f32 %v2202, 0.0
        %v2610 = vmax.f32 %v2204, 0.0
        %v2611 = vmax.f32 %v2541, 0.0
        %v2612 = vmax.f32 %v2543, 0.0
        %v2613 = vmax.f32 %v2206, 0.0
        %v2614 = vmax.f32 %v2208, 0.0
        %v2615 = vmax.f32 %v2545, 0.0
        %v2616 = vmax.f32 %v2547, 0.0
        %v2617 = vmax.f32 %v2212, 0.0
        %v2618 = vmax.f32 %v2214, 0.0
        %v2619 = vmax.f32 %v2551, 0.0
        %v2620 = vmax.f32 %v2553, 0.0
        %v2621 = vmax.f32 %v2216, 0.0
        %v2622 = vmax.f32 %v2218, 0.0
        %v2623 = vmax.f32 %v2555, 0.0
        %v2624 = vmax.f32 %v2557, 0.0
        %v2625 = vmax.f32 %v2222, 0.0
        %v2626 = vmax.f32 %v2224, 0.0
        %v2627 = vmax.f32 %v2561, 0.0
        %v2628 = vmax.f32 %v2563, 0.0
        %v2629 = vmax.f32 %v2226, 0.0
        %v2630 = vmax.f32 %v2228, 0.0
        %v2631 = vmax.f32 %v2565, 0.0
        %v2632 = vmax.f32 %v2567, 0.0
        %v2633 = vpack.c.bf16 %v2573, %v2569
        %v2634 = vpack.c.bf16 %v2574, %v2570
        %v2635 = vpack.c.bf16 %v2575, %v2571
        %v2636 = vpack.c.bf16 %v2576, %v2572
        %v2637 = vpack.c.bf16 %v2581, %v2577
        %v2638 = vpack.c.bf16 %v2582, %v2578
        %v2639 = vpack.c.bf16 %v2583, %v2579
        %v2640 = vpack.c.bf16 %v2584, %v2580
        %v2641 = vpack.c.bf16 %v2589, %v2585
        %v2642 = vpack.c.bf16 %v2590, %v2586
        %v2643 = vpack.c.bf16 %v2591, %v2587
        %v2644 = vpack.c.bf16 %v2592, %v2588
        %v2645 = vpack.c.bf16 %v2597, %v2593
        %v2646 = vpack.c.bf16 %v2598, %v2594
        %v2647 = vpack.c.bf16 %v2599, %v2595
        %v2648 = vpack.c.bf16 %v2600, %v2596
        %v2649 = vpack.c.bf16 %v2605, %v2601
        %v2650 = vpack.c.bf16 %v2606, %v2602
        %v2651 = vpack.c.bf16 %v2607, %v2603
        %v2652 = vpack.c.bf16 %v2608, %v2604
        %v2653 = vpack.c.bf16 %v2613, %v2609
        %v2654 = vpack.c.bf16 %v2614, %v2610
        %v2655 = vpack.c.bf16 %v2615, %v2611
        %v2656 = vpack.c.bf16 %v2616, %v2612
        %v2657 = vpack.c.bf16 %v2621, %v2617
        %v2658 = vpack.c.bf16 %v2622, %v2618
        %v2659 = vpack.c.bf16 %v2623, %v2619
        %v2660 = vpack.c.bf16 %v2624, %v2620
        %v2661 = vpack.c.bf16 %v2629, %v2625
        %v2662 = vpack.c.bf16 %v2630, %v2626
        %v2663 = vpack.c.bf16 %v2631, %v2627
        %v2664 = vpack.c.bf16 %v2632, %v2628
        %v2665 = vld [vmem:[#allocation7] sm:$0xff]
        %v2666 = vld [vmem:[#allocation7 + $0x8] sm:$0xff]
        %v2667 = vld [vmem:[#allocation7 + $0x10] sm:$0xff]
        %v2668 = vld [vmem:[#allocation7 + $0x18] sm:$0xff]
        %v2669 = vld [vmem:[#allocation7 + $0x20] sm:$0xff]
        %v2670 = vld [vmem:[#allocation7 + $0x28] sm:$0xff]
        %v2671 = vld [vmem:[#allocation7 + $0x30] sm:$0xff]
        %v2672 = vld [vmem:[#allocation7 + $0x38] sm:$0xff]
        %v2673 = vld [vmem:[#allocation7 + $0x40] sm:$0xff]
        %v2674 = vld [vmem:[#allocation7 + $0x48] sm:$0xff]
        %v2675 = vld [vmem:[#allocation7 + $0x50] sm:$0xff]
        %v2676 = vld [vmem:[#allocation7 + $0x58] sm:$0xff]
        %v2677 = vld [vmem:[#allocation7 + $0x60] sm:$0xff]
        %v2678 = vld [vmem:[#allocation7 + $0x68] sm:$0xff]
        %v2679 = vld [vmem:[#allocation7 + $0x70] sm:$0xff]
        %v2680 = vld [vmem:[#allocation7 + $0x78] sm:$0xff]
        %v2681 = vld [vmem:[#allocation7 + $0x80] sm:$0xff]
        %v2682 = vld [vmem:[#allocation7 + $0x88] sm:$0xff]
        %v2683 = vld [vmem:[#allocation7 + $0x90] sm:$0xff]
        %v2684 = vld [vmem:[#allocation7 + $0x98] sm:$0xff]
        %v2685 = vld [vmem:[#allocation7 + $0xa0] sm:$0xff]
        %v2686 = vld [vmem:[#allocation7 + $0xa8] sm:$0xff]
        %v2687 = vld [vmem:[#allocation7 + $0xb0] sm:$0xff]
        %v2688 = vld [vmem:[#allocation7 + $0xb8] sm:$0xff]
        %v2689 = vld [vmem:[#allocation7 + $0xc0] sm:$0xff]
        %v2690 = vld [vmem:[#allocation7 + $0xc8] sm:$0xff]
        %v2691 = vld [vmem:[#allocation7 + $0xd0] sm:$0xff]
        %v2692 = vld [vmem:[#allocation7 + $0xd8] sm:$0xff]
        %v2693 = vld [vmem:[#allocation7 + $0xe0] sm:$0xff]
        %v2694 = vld [vmem:[#allocation7 + $0xe8] sm:$0xff]
        %v2695 = vld [vmem:[#allocation7 + $0xf0] sm:$0xff]
        %v2696 = vld [vmem:[#allocation7 + $0xf8] sm:$0xff]
        %v2697 = vld [vmem:[#allocation7 + $0x100] sm:$0xff]
        %v2698 = vld [vmem:[#allocation7 + $0x108] sm:$0xff]
        %v2699 = vld [vmem:[#allocation7 + $0x110] sm:$0xff]
        %v2700 = vld [vmem:[#allocation7 + $0x118] sm:$0xff]
        %v2701 = vld [vmem:[#allocation7 + $0x120] sm:$0xff]
        %v2702 = vld [vmem:[#allocation7 + $0x128] sm:$0xff]
        %v2703 = vld [vmem:[#allocation7 + $0x130] sm:$0xff]
        %v2704 = vld [vmem:[#allocation7 + $0x138] sm:$0xff]
        %v2705 = vld [vmem:[#allocation7 + $0x140] sm:$0xff]
        %v2706 = vld [vmem:[#allocation7 + $0x148] sm:$0xff]
        %v2707 = vld [vmem:[#allocation7 + $0x150] sm:$0xff]
        %v2708 = vld [vmem:[#allocation7 + $0x158] sm:$0xff]
        %v2709 = vld [vmem:[#allocation7 + $0x160] sm:$0xff]
        %v2710 = vld [vmem:[#allocation7 + $0x168] sm:$0xff]
        %v2711 = vld [vmem:[#allocation7 + $0x170] sm:$0xff]
        %v2712 = vld [vmem:[#allocation7 + $0x178] sm:$0xff]
        %v2713 = vld [vmem:[#allocation7 + $0x180] sm:$0xff]
        %v2714 = vld [vmem:[#allocation7 + $0x188] sm:$0xff]
        %v2715 = vld [vmem:[#allocation7 + $0x190] sm:$0xff]
        %v2716 = vld [vmem:[#allocation7 + $0x198] sm:$0xff]
        %v2717 = vld [vmem:[#allocation7 + $0x1a0] sm:$0xff]
        %v2718 = vld [vmem:[#allocation7 + $0x1a8] sm:$0xff]
        %v2719 = vld [vmem:[#allocation7 + $0x1b0] sm:$0xff]
        %v2720 = vld [vmem:[#allocation7 + $0x1b8] sm:$0xff]
        %v2721 = vld [vmem:[#allocation7 + $0x1c0] sm:$0xff]
        %v2722 = vld [vmem:[#allocation7 + $0x1c8] sm:$0xff]
        %v2723 = vld [vmem:[#allocation7 + $0x1d0] sm:$0xff]
        %v2724 = vld [vmem:[#allocation7 + $0x1d8] sm:$0xff]
        %v2725 = vld [vmem:[#allocation7 + $0x1e0] sm:$0xff]
        %v2726 = vld [vmem:[#allocation7 + $0x1e8] sm:$0xff]
        %v2727 = vld [vmem:[#allocation7 + $0x1f0] sm:$0xff]
        %v2728 = vld [vmem:[#allocation7 + $0x1f8] sm:$0xff]
        %v2729 = vld [vmem:[%s4] sm:$0x3]
        %v2731 = vlaneseq
        %v2732 = vshrl.u32 %v2731, 7
        %v2733 = vsub.s32 0, %v2732
        %v2734 = vrot.slane %v2729, %v2733
        %v2735 = vlaneseq
        %v2736 = vshrl.u32 %v2735, 7
        %v2737 = vsub.s32 1, %v2736
        %v2738 = vrot.slane %v2729, %v2737
        %v2805 = vunpack.c.l.b16 %v2665
        %v2806 = vunpack.c.h.b16 %v2665
        %v2807 = vunpack.c.l.b16 %v2666
        %v2808 = vunpack.c.h.b16 %v2666
        %v2809 = vunpack.c.l.b16 %v2667
        %v2810 = vunpack.c.h.b16 %v2667
        %v2811 = vunpack.c.l.b16 %v2668
        %v2812 = vunpack.c.h.b16 %v2668
        %v2813 = vunpack.c.l.b16 %v2669
        %v2814 = vunpack.c.h.b16 %v2669
        %v2815 = vunpack.c.l.b16 %v2670
        %v2816 = vunpack.c.h.b16 %v2670
        %v2817 = vunpack.c.l.b16 %v2671
        %v2818 = vunpack.c.h.b16 %v2671
        %v2819 = vunpack.c.l.b16 %v2672
        %v2820 = vunpack.c.h.b16 %v2672
        %v2821 = vunpack.c.l.b16 %v2673
        %v2822 = vunpack.c.h.b16 %v2673
        %v2823 = vunpack.c.l.b16 %v2674
        %v2824 = vunpack.c.h.b16 %v2674
        %v2825 = vunpack.c.l.b16 %v2675
        %v2826 = vunpack.c.h.b16 %v2675
        %v2827 = vunpack.c.l.b16 %v2676
        %v2828 = vunpack.c.h.b16 %v2676
        %v2829 = vunpack.c.l.b16 %v2677
        %v2830 = vunpack.c.h.b16 %v2677
        %v2831 = vunpack.c.l.b16 %v2678
        %v2832 = vunpack.c.h.b16 %v2678
        %v2833 = vunpack.c.l.b16 %v2679
        %v2834 = vunpack.c.h.b16 %v2679
        %v2835 = vunpack.c.l.b16 %v2680
        %v2836 = vunpack.c.h.b16 %v2680
        %v2837 = vunpack.c.l.b16 %v2681
        %v2838 = vunpack.c.h.b16 %v2681
        %v2839 = vunpack.c.l.b16 %v2682
        %v2840 = vunpack.c.h.b16 %v2682
        %v2841 = vunpack.c.l.b16 %v2683
        %v2842 = vunpack.c.h.b16 %v2683
        %v2843 = vunpack.c.l.b16 %v2684
        %v2844 = vunpack.c.h.b16 %v2684
        %v2845 = vunpack.c.l.b16 %v2685
        %v2846 = vunpack.c.h.b16 %v2685
        %v2847 = vunpack.c.l.b16 %v2686
        %v2848 = vunpack.c.h.b16 %v2686
        %v2849 = vunpack.c.l.b16 %v2687
        %v2850 = vunpack.c.h.b16 %v2687
        %v2851 = vunpack.c.l.b16 %v2688
        %v2852 = vunpack.c.h.b16 %v2688
        %v2853 = vunpack.c.l.b16 %v2689
        %v2854 = vunpack.c.h.b16 %v2689
        %v2855 = vunpack.c.l.b16 %v2690
        %v2856 = vunpack.c.h.b16 %v2690
        %v2857 = vunpack.c.l.b16 %v2691
        %v2858 = vunpack.c.h.b16 %v2691
        %v2859 = vunpack.c.l.b16 %v2692
        %v2860 = vunpack.c.h.b16 %v2692
        %v2861 = vunpack.c.l.b16 %v2693
        %v2862 = vunpack.c.h.b16 %v2693
        %v2863 = vunpack.c.l.b16 %v2694
        %v2864 = vunpack.c.h.b16 %v2694
        %v2865 = vunpack.c.l.b16 %v2695
        %v2866 = vunpack.c.h.b16 %v2695
        %v2867 = vunpack.c.l.b16 %v2696
        %v2868 = vunpack.c.h.b16 %v2696
        %v2869 = vunpack.c.l.b16 %v2697
        %v2870 = vunpack.c.h.b16 %v2697
        %v2871 = vunpack.c.l.b16 %v2698
        %v2872 = vunpack.c.h.b16 %v2698
        %v2873 = vunpack.c.l.b16 %v2699
        %v2874 = vunpack.c.h.b16 %v2699
        %v2875 = vunpack.c.l.b16 %v2700
        %v2876 = vunpack.c.h.b16 %v2700
        %v2877 = vunpack.c.l.b16 %v2701
        %v2878 = vunpack.c.h.b16 %v2701
        %v2879 = vunpack.c.l.b16 %v2702
        %v2880 = vunpack.c.h.b16 %v2702
        %v2881 = vunpack.c.l.b16 %v2703
        %v2882 = vunpack.c.h.b16 %v2703
        %v2883 = vunpack.c.l.b16 %v2704
        %v2884 = vunpack.c.h.b16 %v2704
        %v2885 = vunpack.c.l.b16 %v2705
        %v2886 = vunpack.c.h.b16 %v2705
        %v2887 = vunpack.c.l.b16 %v2706
        %v2888 = vunpack.c.h.b16 %v2706
        %v2889 = vunpack.c.l.b16 %v2707
        %v2890 = vunpack.c.h.b16 %v2707
        %v2891 = vunpack.c.l.b16 %v2708
        %v2892 = vunpack.c.h.b16 %v2708
        %v2893 = vunpack.c.l.b16 %v2709
        %v2894 = vunpack.c.h.b16 %v2709
        %v2895 = vunpack.c.l.b16 %v2710
        %v2896 = vunpack.c.h.b16 %v2710
        %v2897 = vunpack.c.l.b16 %v2711
        %v2898 = vunpack.c.h.b16 %v2711
        %v2899 = vunpack.c.l.b16 %v2712
        %v2900 = vunpack.c.h.b16 %v2712
        %v2901 = vunpack.c.l.b16 %v2713
        %v2902 = vunpack.c.h.b16 %v2713
        %v2903 = vunpack.c.l.b16 %v2714
        %v2904 = vunpack.c.h.b16 %v2714
        %v2905 = vunpack.c.l.b16 %v2715
        %v2906 = vunpack.c.h.b16 %v2715
        %v2907 = vunpack.c.l.b16 %v2716
        %v2908 = vunpack.c.h.b16 %v2716
        %v2909 = vunpack.c.l.b16 %v2717
        %v2910 = vunpack.c.h.b16 %v2717
        %v2911 = vunpack.c.l.b16 %v2718
        %v2912 = vunpack.c.h.b16 %v2718
        %v2913 = vunpack.c.l.b16 %v2719
        %v2914 = vunpack.c.h.b16 %v2719
        %v2915 = vunpack.c.l.b16 %v2720
        %v2916 = vunpack.c.h.b16 %v2720
        %v2917 = vunpack.c.l.b16 %v2721
        %v2918 = vunpack.c.h.b16 %v2721
        %v2919 = vunpack.c.l.b16 %v2722
        %v2920 = vunpack.c.h.b16 %v2722
        %v2921 = vunpack.c.l.b16 %v2723
        %v2922 = vunpack.c.h.b16 %v2723
        %v2923 = vunpack.c.l.b16 %v2724
        %v2924 = vunpack.c.h.b16 %v2724
        %v2925 = vunpack.c.l.b16 %v2725
        %v2926 = vunpack.c.h.b16 %v2725
        %v2927 = vunpack.c.l.b16 %v2726
        %v2928 = vunpack.c.h.b16 %v2726
        %v2929 = vunpack.c.l.b16 %v2727
        %v2930 = vunpack.c.h.b16 %v2727
        %v2931 = vunpack.c.l.b16 %v2728
        %v2932 = vunpack.c.h.b16 %v2728
        %v2933 = vpack.c.b16 %v2807, %v2805
        %v2934 = vpack.c.b16 %v2808, %v2806
        %v2935 = vpack.c.b16 %v2811, %v2809
        %v2936 = vpack.c.b16 %v2812, %v2810
        %v2937 = vpack.c.b16 %v2815, %v2813
        %v2938 = vpack.c.b16 %v2816, %v2814
        %v2939 = vpack.c.b16 %v2819, %v2817
        %v2940 = vpack.c.b16 %v2820, %v2818
        %v2941 = vpack.c.b16 %v2823, %v2821
        %v2942 = vpack.c.b16 %v2824, %v2822
        %v2943 = vpack.c.b16 %v2827, %v2825
        %v2944 = vpack.c.b16 %v2828, %v2826
        %v2945 = vpack.c.b16 %v2831, %v2829
        %v2946 = vpack.c.b16 %v2832, %v2830
        %v2947 = vpack.c.b16 %v2835, %v2833
        %v2948 = vpack.c.b16 %v2836, %v2834
        %v2949 = vpack.c.b16 %v2839, %v2837
        %v2950 = vpack.c.b16 %v2840, %v2838
        %v2951 = vpack.c.b16 %v2843, %v2841
        %v2952 = vpack.c.b16 %v2844, %v2842
        %v2953 = vpack.c.b16 %v2847, %v2845
        %v2954 = vpack.c.b16 %v2848, %v2846
        %v2955 = vpack.c.b16 %v2851, %v2849
        %v2956 = vpack.c.b16 %v2852, %v2850
        %v2957 = vpack.c.b16 %v2855, %v2853
        %v2958 = vpack.c.b16 %v2856, %v2854
        %v2959 = vpack.c.b16 %v2859, %v2857
        %v2960 = vpack.c.b16 %v2860, %v2858
        %v2961 = vpack.c.b16 %v2863, %v2861
        %v2962 = vpack.c.b16 %v2864, %v2862
        %v2963 = vpack.c.b16 %v2867, %v2865
        %v2964 = vpack.c.b16 %v2868, %v2866
        %v2965 = vpack.c.b16 %v2871, %v2869
        %v2966 = vpack.c.b16 %v2872, %v2870
        %v2967 = vpack.c.b16 %v2875, %v2873
        %v2968 = vpack.c.b16 %v2876, %v2874
        %v2969 = vpack.c.b16 %v2879, %v2877
        %v2970 = vpack.c.b16 %v2880, %v2878
        %v2971 = vpack.c.b16 %v2883, %v2881
        %v2972 = vpack.c.b16 %v2884, %v2882
        %v2973 = vpack.c.b16 %v2887, %v2885
        %v2974 = vpack.c.b16 %v2888, %v2886
        %v2975 = vpack.c.b16 %v2891, %v2889
        %v2976 = vpack.c.b16 %v2892, %v2890
        %v2977 = vpack.c.b16 %v2895, %v2893
        %v2978 = vpack.c.b16 %v2896, %v2894
        %v2979 = vpack.c.b16 %v2899, %v2897
        %v2980 = vpack.c.b16 %v2900, %v2898
        %v2981 = vpack.c.b16 %v2903, %v2901
        %v2982 = vpack.c.b16 %v2904, %v2902
        %v2983 = vpack.c.b16 %v2907, %v2905
        %v2984 = vpack.c.b16 %v2908, %v2906
        %v2985 = vpack.c.b16 %v2911, %v2909
        %v2986 = vpack.c.b16 %v2912, %v2910
        %v2987 = vpack.c.b16 %v2915, %v2913
        %v2988 = vpack.c.b16 %v2916, %v2914
        %v2989 = vpack.c.b16 %v2919, %v2917
        %v2990 = vpack.c.b16 %v2920, %v2918
        %v2991 = vpack.c.b16 %v2923, %v2921
        %v2992 = vpack.c.b16 %v2924, %v2922
        %v2993 = vpack.c.b16 %v2927, %v2925
        %v2994 = vpack.c.b16 %v2928, %v2926
        %v2995 = vpack.c.b16 %v2931, %v2929
        %v2996 = vpack.c.b16 %v2932, %v2930
        %3061 = vmatprep.subr.bf16.mxu0 %v2934
        %3062 = vmatpush1.bf16.msra.mxu0 %v2933
        %3063 = vmatprep.subr.bf16.mxu0 %v2936
        %3064 = vmatpush1.bf16.msra.mxu0 %v2935
        %3065 = vmatprep.subr.bf16.mxu0 %v2938
        %3066 = vmatpush1.bf16.msra.mxu0 %v2937
        %3067 = vmatprep.subr.bf16.mxu0 %v2940
        %3068 = vmatpush1.bf16.msra.mxu0 %v2939
        %3069 = vmatprep.subr.bf16.mxu0 %v2942
        %3070 = vmatpush1.bf16.msra.mxu0 %v2941
        %3071 = vmatprep.subr.bf16.mxu0 %v2944
        %3072 = vmatpush1.bf16.msra.mxu0 %v2943
        %3073 = vmatprep.subr.bf16.mxu0 %v2946
        %3074 = vmatpush1.bf16.msra.mxu0 %v2945
        %3075 = vmatprep.subr.bf16.mxu0 %v2948
        %3076 = vmatpush1.bf16.msra.mxu0 %v2947
        %3077 = vmatprep.subr.bf16.mxu0 %v2950
        %3078 = vmatpush1.bf16.msra.mxu0 %v2949
        %3079 = vmatprep.subr.bf16.mxu0 %v2952
        %3080 = vmatpush1.bf16.msra.mxu0 %v2951
        %3081 = vmatprep.subr.bf16.mxu0 %v2954
        %3082 = vmatpush1.bf16.msra.mxu0 %v2953
        %3083 = vmatprep.subr.bf16.mxu0 %v2956
        %3084 = vmatpush1.bf16.msra.mxu0 %v2955
        %3085 = vmatprep.subr.bf16.mxu0 %v2958
        %3086 = vmatpush1.bf16.msra.mxu0 %v2957
        %3087 = vmatprep.subr.bf16.mxu0 %v2960
        %3088 = vmatpush1.bf16.msra.mxu0 %v2959
        %3089 = vmatprep.subr.bf16.mxu0 %v2962
        %3090 = vmatpush1.bf16.msra.mxu0 %v2961
        %3091 = vmatprep.subr.bf16.mxu0 %v2964
        %3092 = vmatpush1.bf16.msra.mxu0 %v2963
        %3093 = vmatprep.mubr.bf16.mxu0 %v2634
        %3094 = vmatmul.mubr.bf16.gmra.mrb[0].mxu0 %v2633
        %v3095 = vpop.f32.mrb[0].mxu0
        %v3096 = vadd.f32 %v2734, %v3095
        %v3097 = vpop.f32.mrb[0].mxu0
        %v3098 = vadd.f32 %v2738, %v3097
        %v3099 = vpop.f32.mrb[0].mxu0
        %v3100 = vadd.f32 %v2734, %v3099
        %v3101 = vpop.f32.mrb[0].mxu0
        %v3102 = vadd.f32 %v2738, %v3101
        %3103 = vmatprep.mubr.bf16.mxu0 %v2638
        %3104 = vmatmul.mubr.bf16.gmra.mrb[0].mxu0 %v2637
        %v3105 = vpop.f32.mrb[0].mxu0
        %v3106 = vadd.f32 %v2734, %v3105
        %v3107 = vpop.f32.mrb[0].mxu0
        %v3108 = vadd.f32 %v2738, %v3107
        %v3109 = vpop.f32.mrb[0].mxu0
        %v3110 = vadd.f32 %v2734, %v3109
        %v3111 = vpop.f32.mrb[0].mxu0
        %v3112 = vadd.f32 %v2738, %v3111
        %3113 = vmatprep.mubr.bf16.mxu0 %v2642
        %3114 = vmatmul.mubr.bf16.gmra.mrb[0].mxu0 %v2641
        %v3115 = vpop.f32.mrb[0].mxu0
        %v3116 = vadd.f32 %v2734, %v3115
        %v3117 = vpop.f32.mrb[0].mxu0
        %v3118 = vadd.f32 %v2738, %v3117
        %v3119 = vpop.f32.mrb[0].mxu0
        %v3120 = vadd.f32 %v2734, %v3119
        %v3121 = vpop.f32.mrb[0].mxu0
        %v3122 = vadd.f32 %v2738, %v3121
        %3123 = vmatprep.mubr.bf16.mxu0 %v2646
        %3124 = vmatmul.mubr.bf16.gmra.mrb[0].mxu0 %v2645
        %v3125 = vpop.f32.mrb[0].mxu0
        %v3126 = vadd.f32 %v2734, %v3125
        %v3127 = vpop.f32.mrb[0].mxu0
        %v3128 = vadd.f32 %v2738, %v3127
        %v3129 = vpop.f32.mrb[0].mxu0
        %v3130 = vadd.f32 %v2734, %v3129
        %v3131 = vpop.f32.mrb[0].mxu0
        %v3132 = vadd.f32 %v2738, %v3131
        %3133 = vmatprep.mubr.bf16.mxu0 %v2650
        %3134 = vmatmul.mubr.bf16.gmra.mrb[0].mxu0 %v2649
        %v3135 = vpop.f32.mrb[0].mxu0
        %v3136 = vadd.f32 %v2734, %v3135
        %v3137 = vpop.f32.mrb[0].mxu0
        %v3138 = vadd.f32 %v2738, %v3137
        %v3139 = vpop.f32.mrb[0].mxu0
        %v3140 = vadd.f32 %v2734, %v3139
        %v3141 = vpop.f32.mrb[0].mxu0
        %v3142 = vadd.f32 %v2738, %v3141
        %3143 = vmatprep.mubr.bf16.mxu0 %v2654
        %3144 = vmatmul.mubr.bf16.gmra.mrb[0].mxu0 %v2653
        %v3145 = vpop.f32.mrb[0].mxu0
        %v3146 = vadd.f32 %v2734, %v3145
        %v3147 = vpop.f32.mrb[0].mxu0
        %v3148 = vadd.f32 %v2738, %v3147
        %v3149 = vpop.f32.mrb[0].mxu0
        %v3150 = vadd.f32 %v2734, %v3149
        %v3151 = vpop.f32.mrb[0].mxu0
        %v3152 = vadd.f32 %v2738, %v3151
        %3153 = vmatprep.mubr.bf16.mxu0 %v2658
        %3154 = vmatmul.mubr.bf16.gmra.mrb[0].mxu0 %v2657
        %v3155 = vpop.f32.mrb[0].mxu0
        %v3156 = vadd.f32 %v2734, %v3155
        %v3157 = vpop.f32.mrb[0].mxu0
        %v3158 = vadd.f32 %v2738, %v3157
        %v3159 = vpop.f32.mrb[0].mxu0
        %v3160 = vadd.f32 %v2734, %v3159
        %v3161 = vpop.f32.mrb[0].mxu0
        %v3162 = vadd.f32 %v2738, %v3161
        %3163 = vmatprep.mubr.bf16.mxu0 %v2662
        %3164 = vmatmul.mubr.bf16.gmra.mrb[0].mxu0 %v2661
        %v3165 = vpop.f32.mrb[0].mxu0
        %v3166 = vadd.f32 %v2734, %v3165
        %v3167 = vpop.f32.mrb[0].mxu0
        %v3168 = vadd.f32 %v2738, %v3167
        %v3169 = vpop.f32.mrb[0].mxu0
        %v3170 = vadd.f32 %v2734, %v3169
        %v3171 = vpop.f32.mrb[0].mxu0
        %v3172 = vadd.f32 %v2738, %v3171
        %3173 = vdwg.mxu0
        %3174 = vmatprep.subr.bf16.mxu0 %v2966
        %3175 = vmatpush1.bf16.msra.mxu0 %v2965
        %3176 = vmatprep.subr.bf16.mxu0 %v2968
        %3177 = vmatpush1.bf16.msra.mxu0 %v2967
        %3178 = vmatprep.subr.bf16.mxu0 %v2970
        %3179 = vmatpush1.bf16.msra.mxu0 %v2969
        %3180 = vmatprep.subr.bf16.mxu0 %v2972
        %3181 = vmatpush1.bf16.msra.mxu0 %v2971
        %3182 = vmatprep.subr.bf16.mxu0 %v2974
        %3183 = vmatpush1.bf16.msra.mxu0 %v2973
        %3184 = vmatprep.subr.bf16.mxu0 %v2976
        %3185 = vmatpush1.bf16.msra.mxu0 %v2975
        %3186 = vmatprep.subr.bf16.mxu0 %v2978
        %3187 = vmatpush1.bf16.msra.mxu0 %v2977
        %3188 = vmatprep.subr.bf16.mxu0 %v2980
        %3189 = vmatpush1.bf16.msra.mxu0 %v2979
        %3190 = vmatprep.subr.bf16.mxu0 %v2982
        %3191 = vmatpush1.bf16.msra.mxu0 %v2981
        %3192 = vmatprep.subr.bf16.mxu0 %v2984
        %3193 = vmatpush1.bf16.msra.mxu0 %v2983
        %3194 = vmatprep.subr.bf16.mxu0 %v2986
        %3195 = vmatpush1.bf16.msra.mxu0 %v2985
        %3196 = vmatprep.subr.bf16.mxu0 %v2988
        %3197 = vmatpush1.bf16.msra.mxu0 %v2987
        %3198 = vmatprep.subr.bf16.mxu0 %v2990
        %3199 = vmatpush1.bf16.msra.mxu0 %v2989
        %3200 = vmatprep.subr.bf16.mxu0 %v2992
        %3201 = vmatpush1.bf16.msra.mxu0 %v2991
        %3202 = vmatprep.subr.bf16.mxu0 %v2994
        %3203 = vmatpush1.bf16.msra.mxu0 %v2993
        %3204 = vmatprep.subr.bf16.mxu0 %v2996
        %3205 = vmatpush1.bf16.msra.mxu0 %v2995
        %3206 = vmatprep.mubr.bf16.mxu0 %v2636
        %3207 = vmatmul.mubr.bf16.gmra.mrb[0].mxu0 %v2635
        %v3208 = vpop.f32.mrb[0].mxu0
        %v3209 = vadd.f32 %v3096, %v3208
        %v3210 = vpop.f32.mrb[0].mxu0
        %v3211 = vadd.f32 %v3098, %v3210
        %v3212 = vpop.f32.mrb[0].mxu0
        %v3213 = vadd.f32 %v3100, %v3212
        %v3214 = vpop.f32.mrb[0].mxu0
        %v3215 = vadd.f32 %v3102, %v3214
        %3216 = vmatprep.mubr.bf16.mxu0 %v2640
        %3217 = vmatmul.mubr.bf16.gmra.mrb[0].mxu0 %v2639
        %v3218 = vpop.f32.mrb[0].mxu0
        %v3219 = vadd.f32 %v3106, %v3218
        %v3220 = vpop.f32.mrb[0].mxu0
        %v3221 = vadd.f32 %v3108, %v3220
        %v3222 = vpop.f32.mrb[0].mxu0
        %v3223 = vadd.f32 %v3110, %v3222
        %v3224 = vpop.f32.mrb[0].mxu0
        %v3225 = vadd.f32 %v3112, %v3224
        %3226 = vmatprep.mubr.bf16.mxu0 %v2644
        %3227 = vmatmul.mubr.bf16.gmra.mrb[0].mxu0 %v2643
        %v3228 = vpop.f32.mrb[0].mxu0
        %v3229 = vadd.f32 %v3116, %v3228
        %v3230 = vpop.f32.mrb[0].mxu0
        %v3231 = vadd.f32 %v3118, %v3230
        %v3232 = vpop.f32.mrb[0].mxu0
        %v3233 = vadd.f32 %v3120, %v3232
        %v3234 = vpop.f32.mrb[0].mxu0
        %v3235 = vadd.f32 %v3122, %v3234
        %3236 = vmatprep.mubr.bf16.mxu0 %v2648
        %3237 = vmatmul.mubr.bf16.gmra.mrb[0].mxu0 %v2647
        %v3238 = vpop.f32.mrb[0].mxu0
        %v3239 = vadd.f32 %v3126, %v3238
        %v3240 = vpop.f32.mrb[0].mxu0
        %v3241 = vadd.f32 %v3128, %v3240
        %v3242 = vpop.f32.mrb[0].mxu0
        %v3243 = vadd.f32 %v3130, %v3242
        %v3244 = vpop.f32.mrb[0].mxu0
        %v3245 = vadd.f32 %v3132, %v3244
        %3246 = vmatprep.mubr.bf16.mxu0 %v2652
        %3247 = vmatmul.mubr.bf16.gmra.mrb[0].mxu0 %v2651
        %v3248 = vpop.f32.mrb[0].mxu0
        %v3249 = vadd.f32 %v3136, %v3248
        %v3250 = vpop.f32.mrb[0].mxu0
        %v3251 = vadd.f32 %v3138, %v3250
        %v3252 = vpop.f32.mrb[0].mxu0
        %v3253 = vadd.f32 %v3140, %v3252
        %v3254 = vpop.f32.mrb[0].mxu0
        %v3255 = vadd.f32 %v3142, %v3254
        %3256 = vmatprep.mubr.bf16.mxu0 %v2656
        %3257 = vmatmul.mubr.bf16.gmra.mrb[0].mxu0 %v2655
        %v3258 = vpop.f32.mrb[0].mxu0
        %v3259 = vadd.f32 %v3146, %v3258
        %v3260 = vpop.f32.mrb[0].mxu0
        %v3261 = vadd.f32 %v3148, %v3260
        %v3262 = vpop.f32.mrb[0].mxu0
        %v3263 = vadd.f32 %v3150, %v3262
        %v3264 = vpop.f32.mrb[0].mxu0
        %v3265 = vadd.f32 %v3152, %v3264
        %3266 = vmatprep.mubr.bf16.mxu0 %v2660
        %3267 = vmatmul.mubr.bf16.gmra.mrb[0].mxu0 %v2659
        %v3268 = vpop.f32.mrb[0].mxu0
        %v3269 = vadd.f32 %v3156, %v3268
        %v3270 = vpop.f32.mrb[0].mxu0
        %v3271 = vadd.f32 %v3158, %v3270
        %v3272 = vpop.f32.mrb[0].mxu0
        %v3273 = vadd.f32 %v3160, %v3272
        %v3274 = vpop.f32.mrb[0].mxu0
        %v3275 = vadd.f32 %v3162, %v3274
        %3276 = vmatprep.mubr.bf16.mxu0 %v2664
        %3277 = vmatmul.mubr.bf16.gmra.mrb[0].mxu0 %v2663
        %v3278 = vpop.f32.mrb[0].mxu0
        %v3279 = vadd.f32 %v3166, %v3278
        %v3280 = vpop.f32.mrb[0].mxu0
        %v3281 = vadd.f32 %v3168, %v3280
        %v3282 = vpop.f32.mrb[0].mxu0
        %v3283 = vadd.f32 %v3170, %v3282
        %v3284 = vpop.f32.mrb[0].mxu0
        %v3285 = vadd.f32 %v3172, %v3284
        %3286 = vdwg.mxu0
        %v3287 = vmax.f32 %v3209, 0.0
        %v3288 = vmax.f32 %v3211, 0.0
        %v3289 = vmax.f32 %v3213, 0.0
        %v3290 = vmax.f32 %v3215, 0.0
        %v3291 = vmax.f32 %v3219, 0.0
        %v3292 = vmax.f32 %v3221, 0.0
        %v3293 = vmax.f32 %v3223, 0.0
        %v3294 = vmax.f32 %v3225, 0.0
        %v3295 = vmax.f32 %v3229, 0.0
        %v3296 = vmax.f32 %v3231, 0.0
        %v3297 = vmax.f32 %v3233, 0.0
        %v3298 = vmax.f32 %v3235, 0.0
        %v3299 = vmax.f32 %v3239, 0.0
        %v3300 = vmax.f32 %v3241, 0.0
        %v3301 = vmax.f32 %v3243, 0.0
        %v3302 = vmax.f32 %v3245, 0.0
        %v3303 = vmax.f32 %v3249, 0.0
        %v3304 = vmax.f32 %v3251, 0.0
        %v3305 = vmax.f32 %v3253, 0.0
        %v3306 = vmax.f32 %v3255, 0.0
        %v3307 = vmax.f32 %v3259, 0.0
        %v3308 = vmax.f32 %v3261, 0.0
        %v3309 = vmax.f32 %v3263, 0.0
        %v3310 = vmax.f32 %v3265, 0.0
        %v3311 = vmax.f32 %v3269, 0.0
        %v3312 = vmax.f32 %v3271, 0.0
        %v3313 = vmax.f32 %v3273, 0.0
        %v3314 = vmax.f32 %v3275, 0.0
        %v3315 = vmax.f32 %v3279, 0.0
        %v3316 = vmax.f32 %v3281, 0.0
        %v3317 = vmax.f32 %v3283, 0.0
        %v3318 = vmax.f32 %v3285, 0.0
        %v3319 = vpack.c.bf16 %v3289, %v3287
        %v3320 = vpack.c.bf16 %v3290, %v3288
        %v3321 = vpack.c.bf16 %v3293, %v3291
        %v3322 = vpack.c.bf16 %v3294, %v3292
        %v3323 = vpack.c.bf16 %v3297, %v3295
        %v3324 = vpack.c.bf16 %v3298, %v3296
        %v3325 = vpack.c.bf16 %v3301, %v3299
        %v3326 = vpack.c.bf16 %v3302, %v3300
        %v3327 = vpack.c.bf16 %v3305, %v3303
        %v3328 = vpack.c.bf16 %v3306, %v3304
        %v3329 = vpack.c.bf16 %v3309, %v3307
        %v3330 = vpack.c.bf16 %v3310, %v3308
        %v3331 = vpack.c.bf16 %v3313, %v3311
        %v3332 = vpack.c.bf16 %v3314, %v3312
        %v3333 = vpack.c.bf16 %v3317, %v3315
        %v3334 = vpack.c.bf16 %v3318, %v3316
        %v3335 = vld [vmem:[#allocation8] sm:$0xf]
        %v3336 = vld [vmem:[#allocation8 + $0x4] sm:$0xf]
        %v3337 = vld [vmem:[#allocation8 + $0x8] sm:$0xf]
        %v3338 = vld [vmem:[#allocation8 + $0xc] sm:$0xf]
        %v3339 = vld [vmem:[#allocation8 + $0x10] sm:$0xf]
        %v3340 = vld [vmem:[#allocation8 + $0x14] sm:$0xf]
        %v3341 = vld [vmem:[#allocation8 + $0x18] sm:$0xf]
        %v3342 = vld [vmem:[#allocation8 + $0x1c] sm:$0xf]
        %v3343 = vld [vmem:[#allocation8 + $0x20] sm:$0xf]
        %v3344 = vld [vmem:[#allocation8 + $0x24] sm:$0xf]
        %v3345 = vld [vmem:[#allocation8 + $0x28] sm:$0xf]
        %v3346 = vld [vmem:[#allocation8 + $0x2c] sm:$0xf]
        %v3347 = vld [vmem:[#allocation8 + $0x30] sm:$0xf]
        %v3348 = vld [vmem:[#allocation8 + $0x34] sm:$0xf]
        %v3349 = vld [vmem:[#allocation8 + $0x38] sm:$0xf]
        %v3350 = vld [vmem:[#allocation8 + $0x3c] sm:$0xf]
        %v3351 = vld [vmem:[#allocation8 + $0x40] sm:$0xf]
        %v3352 = vld [vmem:[#allocation8 + $0x44] sm:$0xf]
        %v3353 = vld [vmem:[#allocation8 + $0x48] sm:$0xf]
        %v3354 = vld [vmem:[#allocation8 + $0x4c] sm:$0xf]
        %v3355 = vld [vmem:[#allocation8 + $0x50] sm:$0xf]
        %v3356 = vld [vmem:[#allocation8 + $0x54] sm:$0xf]
        %v3357 = vld [vmem:[#allocation8 + $0x58] sm:$0xf]
        %v3358 = vld [vmem:[#allocation8 + $0x5c] sm:$0xf]
        %v3359 = vld [vmem:[#allocation8 + $0x60] sm:$0xf]
        %v3360 = vld [vmem:[#allocation8 + $0x64] sm:$0xf]
        %v3361 = vld [vmem:[#allocation8 + $0x68] sm:$0xf]
        %v3362 = vld [vmem:[#allocation8 + $0x6c] sm:$0xf]
        %v3363 = vld [vmem:[#allocation8 + $0x70] sm:$0xf]
        %v3364 = vld [vmem:[#allocation8 + $0x74] sm:$0xf]
        %v3365 = vld [vmem:[#allocation8 + $0x78] sm:$0xf]
        %v3366 = vld [vmem:[#allocation8 + $0x7c] sm:$0xf]
        %v3367 = vld [vmem:[%s6] sm:$0x1]
        %v3369 = vlaneseq
        %v3370 = vshrl.u32 %v3369, 7
        %v3371 = vsub.s32 0, %v3370
        %v3372 = vrot.slane %v3367, %v3371
        %v3406 = vunpack.c.l.b16 %v3335
        %v3407 = vunpack.c.l.b16 %v3336
        %v3408 = vunpack.c.l.b16 %v3337
        %v3409 = vunpack.c.l.b16 %v3338
        %v3410 = vunpack.c.l.b16 %v3339
        %v3411 = vunpack.c.l.b16 %v3340
        %v3412 = vunpack.c.l.b16 %v3341
        %v3413 = vunpack.c.l.b16 %v3342
        %v3414 = vunpack.c.l.b16 %v3343
        %v3415 = vunpack.c.l.b16 %v3344
        %v3416 = vunpack.c.l.b16 %v3345
        %v3417 = vunpack.c.l.b16 %v3346
        %v3418 = vunpack.c.l.b16 %v3347
        %v3419 = vunpack.c.l.b16 %v3348
        %v3420 = vunpack.c.l.b16 %v3349
        %v3421 = vunpack.c.l.b16 %v3350
        %v3422 = vunpack.c.l.b16 %v3351
        %v3423 = vunpack.c.l.b16 %v3352
        %v3424 = vunpack.c.l.b16 %v3353
        %v3425 = vunpack.c.l.b16 %v3354
        %v3426 = vunpack.c.l.b16 %v3355
        %v3427 = vunpack.c.l.b16 %v3356
        %v3428 = vunpack.c.l.b16 %v3357
        %v3429 = vunpack.c.l.b16 %v3358
        %v3430 = vunpack.c.l.b16 %v3359
        %v3431 = vunpack.c.l.b16 %v3360
        %v3432 = vunpack.c.l.b16 %v3361
        %v3433 = vunpack.c.l.b16 %v3362
        %v3434 = vunpack.c.l.b16 %v3363
        %v3435 = vunpack.c.l.b16 %v3364
        %v3436 = vunpack.c.l.b16 %v3365
        %v3437 = vunpack.c.l.b16 %v3366
        %v3438 = vpack.c.b16 %v3407, %v3406
        %v3439 = vpack.c.b16 %v3409, %v3408
        %v3440 = vpack.c.b16 %v3411, %v3410
        %v3441 = vpack.c.b16 %v3413, %v3412
        %v3442 = vpack.c.b16 %v3415, %v3414
        %v3443 = vpack.c.b16 %v3417, %v3416
        %v3444 = vpack.c.b16 %v3419, %v3418
        %v3445 = vpack.c.b16 %v3421, %v3420
        %v3446 = vpack.c.b16 %v3423, %v3422
        %v3447 = vpack.c.b16 %v3425, %v3424
        %v3448 = vpack.c.b16 %v3427, %v3426
        %v3449 = vpack.c.b16 %v3429, %v3428
        %v3450 = vpack.c.b16 %v3431, %v3430
        %v3451 = vpack.c.b16 %v3433, %v3432
        %v3452 = vpack.c.b16 %v3435, %v3434
        %v3453 = vpack.c.b16 %v3437, %v3436
        %3470 = vmatprep.subr.bf16.mxu0 0
        %3471 = vmatpush1.bf16.msra.mxu0 %v3438
        %3472 = vmatprep.subr.bf16.mxu0 0
        %3473 = vmatpush1.bf16.msra.mxu0 %v3439
        %3474 = vmatprep.subr.bf16.mxu0 0
        %3475 = vmatpush1.bf16.msra.mxu0 %v3440
        %3476 = vmatprep.subr.bf16.mxu0 0
        %3477 = vmatpush1.bf16.msra.mxu0 %v3441
        %3478 = vmatprep.subr.bf16.mxu0 0
        %3479 = vmatpush1.bf16.msra.mxu0 %v3442
        %3480 = vmatprep.subr.bf16.mxu0 0
        %3481 = vmatpush1.bf16.msra.mxu0 %v3443
        %3482 = vmatprep.subr.bf16.mxu0 0
        %3483 = vmatpush1.bf16.msra.mxu0 %v3444
        %3484 = vmatprep.subr.bf16.mxu0 0
        %3485 = vmatpush1.bf16.msra.mxu0 %v3445
        %3486 = vmatprep.subr.bf16.mxu0 0
        %3487 = vmatpush1.bf16.msra.mxu0 %v3446
        %3488 = vmatprep.subr.bf16.mxu0 0
        %3489 = vmatpush1.bf16.msra.mxu0 %v3447
        %3490 = vmatprep.subr.bf16.mxu0 0
        %3491 = vmatpush1.bf16.msra.mxu0 %v3448
        %3492 = vmatprep.subr.bf16.mxu0 0
        %3493 = vmatpush1.bf16.msra.mxu0 %v3449
        %3494 = vmatprep.subr.bf16.mxu0 0
        %3495 = vmatpush1.bf16.msra.mxu0 %v3450
        %3496 = vmatprep.subr.bf16.mxu0 0
        %3497 = vmatpush1.bf16.msra.mxu0 %v3451
        %3498 = vmatprep.subr.bf16.mxu0 0
        %3499 = vmatpush1.bf16.msra.mxu0 %v3452
        %3500 = vmatprep.subr.bf16.mxu0 0
        %3501 = vmatpush1.bf16.msra.mxu0 %v3453
        %3502 = vmatprep.mubr.bf16.mxu0 %v3320
        %3503 = vmatmul.mubr.bf16.gmra.mrb[0].mxu0 %v3319
        %v3504 = vpop.f32.mrb[0].mxu0
        %v3505 = vadd.f32 %v3372, %v3504
        %v3506 = vpop.f32.mrb[0].mxu0
        %v3507 = vpop.f32.mrb[0].mxu0
        %v3508 = vadd.f32 %v3372, %v3507
        %v3509 = vpop.f32.mrb[0].mxu0
        %3510 = vmatprep.mubr.bf16.mxu0 %v3322
        %3511 = vmatmul.mubr.bf16.gmra.mrb[0].mxu0 %v3321
        %v3512 = vpop.f32.mrb[0].mxu0
        %v3513 = vadd.f32 %v3372, %v3512
        %v3514 = vpop.f32.mrb[0].mxu0
        %v3515 = vpop.f32.mrb[0].mxu0
        %v3516 = vadd.f32 %v3372, %v3515
        %v3517 = vpop.f32.mrb[0].mxu0
        %3518 = vmatprep.mubr.bf16.mxu0 %v3324
        %3519 = vmatmul.mubr.bf16.gmra.mrb[0].mxu0 %v3323
        %v3520 = vpop.f32.mrb[0].mxu0
        %v3521 = vadd.f32 %v3372, %v3520
        %v3522 = vpop.f32.mrb[0].mxu0
        %v3523 = vpop.f32.mrb[0].mxu0
        %v3524 = vadd.f32 %v3372, %v3523
        %v3525 = vpop.f32.mrb[0].mxu0
        %3526 = vmatprep.mubr.bf16.mxu0 %v3326
        %3527 = vmatmul.mubr.bf16.gmra.mrb[0].mxu0 %v3325
        %v3528 = vpop.f32.mrb[0].mxu0
        %v3529 = vadd.f32 %v3372, %v3528
        %v3530 = vpop.f32.mrb[0].mxu0
        %v3531 = vpop.f32.mrb[0].mxu0
        %v3532 = vadd.f32 %v3372, %v3531
        %v3533 = vpop.f32.mrb[0].mxu0
        %3534 = vmatprep.mubr.bf16.mxu0 %v3328
        %3535 = vmatmul.mubr.bf16.gmra.mrb[0].mxu0 %v3327
        %v3536 = vpop.f32.mrb[0].mxu0
        %v3537 = vadd.f32 %v3372, %v3536
        %v3538 = vpop.f32.mrb[0].mxu0
        %v3539 = vpop.f32.mrb[0].mxu0
        %v3540 = vadd.f32 %v3372, %v3539
        %v3541 = vpop.f32.mrb[0].mxu0
        %3542 = vmatprep.mubr.bf16.mxu0 %v3330
        %3543 = vmatmul.mubr.bf16.gmra.mrb[0].mxu0 %v3329
        %v3544 = vpop.f32.mrb[0].mxu0
        %v3545 = vadd.f32 %v3372, %v3544
        %v3546 = vpop.f32.mrb[0].mxu0
        %v3547 = vpop.f32.mrb[0].mxu0
        %v3548 = vadd.f32 %v3372, %v3547
        %v3549 = vpop.f32.mrb[0].mxu0
        %3550 = vmatprep.mubr.bf16.mxu0 %v3332
        %3551 = vmatmul.mubr.bf16.gmra.mrb[0].mxu0 %v3331
        %v3552 = vpop.f32.mrb[0].mxu0
        %v3553 = vadd.f32 %v3372, %v3552
        %v3554 = vpop.f32.mrb[0].mxu0
        %v3555 = vpop.f32.mrb[0].mxu0
        %v3556 = vadd.f32 %v3372, %v3555
        %v3557 = vpop.f32.mrb[0].mxu0
        %3558 = vmatprep.mubr.bf16.mxu0 %v3334
        %3559 = vmatmul.mubr.bf16.gmra.mrb[0].mxu0 %v3333
        %v3560 = vpop.f32.mrb[0].mxu0
        %v3561 = vadd.f32 %v3372, %v3560
        %v3562 = vpop.f32.mrb[0].mxu0
        %v3563 = vpop.f32.mrb[0].mxu0
        %v3564 = vadd.f32 %v3372, %v3563
        %v3565 = vpop.f32.mrb[0].mxu0
        %3566 = vdwg.mxu0
        %v3567 = vmax.f32 %v3505, 0.0
        %v3568 = vmax.f32 %v3508, 0.0
        %v3569 = vmax.f32 %v3513, 0.0
        %v3570 = vmax.f32 %v3516, 0.0
        %v3571 = vmax.f32 %v3521, 0.0
        %v3572 = vmax.f32 %v3524, 0.0
        %v3573 = vmax.f32 %v3529, 0.0
        %v3574 = vmax.f32 %v3532, 0.0
        %v3575 = vmax.f32 %v3537, 0.0
        %v3576 = vmax.f32 %v3540, 0.0
        %v3577 = vmax.f32 %v3545, 0.0
        %v3578 = vmax.f32 %v3548, 0.0
        %v3579 = vmax.f32 %v3553, 0.0
        %v3580 = vmax.f32 %v3556, 0.0
        %v3581 = vmax.f32 %v3561, 0.0
        %v3582 = vmax.f32 %v3564, 0.0
        %v3583 = vpack.c.bf16 %v3568, %v3567
        %v3584 = vpack.c.bf16 %v3570, %v3569
        %v3585 = vpack.c.bf16 %v3572, %v3571
        %v3586 = vpack.c.bf16 %v3574, %v3573
        %v3587 = vpack.c.bf16 %v3576, %v3575
        %v3588 = vpack.c.bf16 %v3578, %v3577
        %v3589 = vpack.c.bf16 %v3580, %v3579
        %v3590 = vpack.c.bf16 %v3582, %v3581
        %v3591 = vld [vmem:[#allocation10] sm:$0xf]
        %v3592 = vld [vmem:[#allocation10 + $0x4] sm:$0xf]
        %v3593 = vld [vmem:[#allocation10 + $0x8] sm:$0xf]
        %v3594 = vld [vmem:[#allocation10 + $0xc] sm:$0xf]
        %v3595 = vld [vmem:[#allocation10 + $0x10] sm:$0xf]
        %v3596 = vld [vmem:[#allocation10 + $0x14] sm:$0xf]
        %v3597 = vld [vmem:[#allocation10 + $0x18] sm:$0xf]
        %v3598 = vld [vmem:[#allocation10 + $0x1c] sm:$0xf]
        %v3599 = vld [vmem:[#allocation10 + $0x20] sm:$0xf]
        %v3600 = vld [vmem:[#allocation10 + $0x24] sm:$0xf]
        %v3601 = vld [vmem:[#allocation10 + $0x28] sm:$0xf]
        %v3602 = vld [vmem:[#allocation10 + $0x2c] sm:$0xf]
        %v3603 = vld [vmem:[#allocation10 + $0x30] sm:$0xf]
        %v3604 = vld [vmem:[#allocation10 + $0x34] sm:$0xf]
        %v3605 = vld [vmem:[#allocation10 + $0x38] sm:$0xf]
        %v3606 = vld [vmem:[#allocation10 + $0x3c] sm:$0xf]
        %v3607 = vld [vmem:[%s8] sm:$0x1]
        %v3609 = vlaneseq
        %v3610 = vshrl.u32 %v3609, 7
        %v3611 = vsub.s32 0, %v3610
        %v3612 = vrot.slane %v3607, %v3611
        %v3630 = vunpack.c.l.b16 %v3591
        %v3631 = vunpack.c.l.b16 %v3592
        %v3632 = vunpack.c.l.b16 %v3593
        %v3633 = vunpack.c.l.b16 %v3594
        %v3634 = vunpack.c.l.b16 %v3595
        %v3635 = vunpack.c.l.b16 %v3596
        %v3636 = vunpack.c.l.b16 %v3597
        %v3637 = vunpack.c.l.b16 %v3598
        %v3638 = vunpack.c.l.b16 %v3599
        %v3639 = vunpack.c.l.b16 %v3600
        %v3640 = vunpack.c.l.b16 %v3601
        %v3641 = vunpack.c.l.b16 %v3602
        %v3642 = vunpack.c.l.b16 %v3603
        %v3643 = vunpack.c.l.b16 %v3604
        %v3644 = vunpack.c.l.b16 %v3605
        %v3645 = vunpack.c.l.b16 %v3606
        %v3646 = vpack.c.b16 %v3631, %v3630
        %v3647 = vpack.c.b16 %v3633, %v3632
        %v3648 = vpack.c.b16 %v3635, %v3634
        %v3649 = vpack.c.b16 %v3637, %v3636
        %v3650 = vpack.c.b16 %v3639, %v3638
        %v3651 = vpack.c.b16 %v3641, %v3640
        %v3652 = vpack.c.b16 %v3643, %v3642
        %v3653 = vpack.c.b16 %v3645, %v3644
        %3662 = vmatprep.subr.bf16.mxu0 0
        %3663 = vmatpush1.bf16.msra.mxu0 %v3646
        %3664 = vmatprep.subr.bf16.mxu0 0
        %3665 = vmatpush1.bf16.msra.mxu0 %v3647
        %3666 = vmatprep.subr.bf16.mxu0 0
        %3667 = vmatpush1.bf16.msra.mxu0 %v3648
        %3668 = vmatprep.subr.bf16.mxu0 0
        %3669 = vmatpush1.bf16.msra.mxu0 %v3649
        %3670 = vmatprep.subr.bf16.mxu0 0
        %3671 = vmatpush1.bf16.msra.mxu0 %v3650
        %3672 = vmatprep.subr.bf16.mxu0 0
        %3673 = vmatpush1.bf16.msra.mxu0 %v3651
        %3674 = vmatprep.subr.bf16.mxu0 0
        %3675 = vmatpush1.bf16.msra.mxu0 %v3652
        %3676 = vmatprep.subr.bf16.mxu0 0
        %3677 = vmatpush1.bf16.msra.mxu0 %v3653
        %3678 = vmatprep.subr.bf16.mxu0 0
        %3679 = vmatpush1.bf16.msra.mxu0 0
        %3680 = vmatprep.subr.bf16.mxu0 0
        %3681 = vmatpush1.bf16.msra.mxu0 0
        %3682 = vmatprep.subr.bf16.mxu0 0
        %3683 = vmatpush1.bf16.msra.mxu0 0
        %3684 = vmatprep.subr.bf16.mxu0 0
        %3685 = vmatpush1.bf16.msra.mxu0 0
        %3686 = vmatprep.subr.bf16.mxu0 0
        %3687 = vmatpush1.bf16.msra.mxu0 0
        %3688 = vmatprep.subr.bf16.mxu0 0
        %3689 = vmatpush1.bf16.msra.mxu0 0
        %3690 = vmatprep.subr.bf16.mxu0 0
        %3691 = vmatpush1.bf16.msra.mxu0 0
        %3692 = vmatprep.subr.bf16.mxu0 0
        %3693 = vmatpush1.bf16.msra.mxu0 0
        %3694 = vmatprep.mubr.bf16.mxu0 0
        %3695 = vmatmul.mubr.bf16.gmra.mrb[0].mxu0 %v3583
        %v3696 = vpop.f32.mrb[0].mxu0
        %v3697 = vadd.f32 %v3612, %v3696
        %v3698 = vpop.f32.mrb[0].mxu0
        %v3699 = vpop.f32.mrb[0].mxu0
        %v3700 = vadd.f32 %v3612, %v3699
        %v3701 = vpop.f32.mrb[0].mxu0
        %3702 = vmatprep.mubr.bf16.mxu0 0
        %3703 = vmatmul.mubr.bf16.gmra.mrb[0].mxu0 %v3584
        %v3704 = vpop.f32.mrb[0].mxu0
        %v3705 = vadd.f32 %v3612, %v3704
        %v3706 = vpop.f32.mrb[0].mxu0
        %v3707 = vpop.f32.mrb[0].mxu0
        %v3708 = vadd.f32 %v3612, %v3707
        %v3709 = vpop.f32.mrb[0].mxu0
        %3710 = vmatprep.mubr.bf16.mxu0 0
        %3711 = vmatmul.mubr.bf16.gmra.mrb[0].mxu0 %v3585
        %v3712 = vpop.f32.mrb[0].mxu0
        %v3713 = vadd.f32 %v3612, %v3712
        %v3714 = vpop.f32.mrb[0].mxu0
        %v3715 = vpop.f32.mrb[0].mxu0
        %v3716 = vadd.f32 %v3612, %v3715
        %v3717 = vpop.f32.mrb[0].mxu0
        %3718 = vmatprep.mubr.bf16.mxu0 0
        %3719 = vmatmul.mubr.bf16.gmra.mrb[0].mxu0 %v3586
        %v3720 = vpop.f32.mrb[0].mxu0
        %v3721 = vadd.f32 %v3612, %v3720
        %v3722 = vpop.f32.mrb[0].mxu0
        %v3723 = vpop.f32.mrb[0].mxu0
        %v3724 = vadd.f32 %v3612, %v3723
        %v3725 = vpop.f32.mrb[0].mxu0
        %3726 = vmatprep.mubr.bf16.mxu0 0
        %3727 = vmatmul.mubr.bf16.gmra.mrb[0].mxu0 %v3587
        %v3728 = vpop.f32.mrb[0].mxu0
        %v3729 = vadd.f32 %v3612, %v3728
        %v3730 = vpop.f32.mrb[0].mxu0
        %v3731 = vpop.f32.mrb[0].mxu0
        %v3732 = vadd.f32 %v3612, %v3731
        %v3733 = vpop.f32.mrb[0].mxu0
        %3734 = vmatprep.mubr.bf16.mxu0 0
        %3735 = vmatmul.mubr.bf16.gmra.mrb[0].mxu0 %v3588
        %v3736 = vpop.f32.mrb[0].mxu0
        %v3737 = vadd.f32 %v3612, %v3736
        %v3738 = vpop.f32.mrb[0].mxu0
        %v3739 = vpop.f32.mrb[0].mxu0
        %v3740 = vadd.f32 %v3612, %v3739
        %v3741 = vpop.f32.mrb[0].mxu0
        %3742 = vmatprep.mubr.bf16.mxu0 0
        %3743 = vmatmul.mubr.bf16.gmra.mrb[0].mxu0 %v3589
        %v3744 = vpop.f32.mrb[0].mxu0
        %v3745 = vadd.f32 %v3612, %v3744
        %v3746 = vpop.f32.mrb[0].mxu0
        %v3747 = vpop.f32.mrb[0].mxu0
        %v3748 = vadd.f32 %v3612, %v3747
        %v3749 = vpop.f32.mrb[0].mxu0
        %3750 = vmatprep.mubr.bf16.mxu0 0
        %3751 = vmatmul.mubr.bf16.gmra.mrb[0].mxu0 %v3590
        %v3752 = vpop.f32.mrb[0].mxu0
        %v3753 = vadd.f32 %v3612, %v3752
        %v3754 = vpop.f32.mrb[0].mxu0
        %v3755 = vpop.f32.mrb[0].mxu0
        %v3756 = vadd.f32 %v3612, %v3755
        %v3757 = vpop.f32.mrb[0].mxu0
        %3758 = vdwg.mxu0
        %3759 = vst [vmem:[%s416] sm:$0xff] %v3697
        %3760 = vst [vmem:[%s416 + $0x8] sm:$0xff] %v3700
        %3761 = vst [vmem:[%s416 + $0x10] sm:$0xff] %v3705
        %3762 = vst [vmem:[%s416 + $0x18] sm:$0xff] %v3708
        %3763 = vst [vmem:[%s416 + $0x20] sm:$0xff] %v3713
        %3764 = vst [vmem:[%s416 + $0x28] sm:$0xff] %v3716
        %3765 = vst [vmem:[%s416 + $0x30] sm:$0xff] %v3721
        %3766 = vst [vmem:[%s416 + $0x38] sm:$0xff] %v3724
        %3767 = vst [vmem:[%s416 + $0x40] sm:$0xff] %v3729
        %3768 = vst [vmem:[%s416 + $0x48] sm:$0xff] %v3732
        %3769 = vst [vmem:[%s416 + $0x50] sm:$0xff] %v3737
        %3770 = vst [vmem:[%s416 + $0x58] sm:$0xff] %v3740
        %3771 = vst [vmem:[%s416 + $0x60] sm:$0xff] %v3745
        %3772 = vst [vmem:[%s416 + $0x68] sm:$0xff] %v3748
        %3773 = vst [vmem:[%s416 + $0x70] sm:$0xff] %v3753
        %3774 = vst [vmem:[%s416 + $0x78] sm:$0xff] %v3756
        %s3775 = sand.u32 %s230, 1
        %s3776 = scalar_lea.sflag [#allocation4], %s3775
        %s3777 = sand.u32 %s230, 1
        %s3778 = smul.addr %s3777, 128
        %s3779 = scalar_lea.vmem [#allocation11], %s3778
        // Predicated region
        $region77: #{tpu_custom_call.1} parent=55 // pred_check
          %p3780 = pneg %p240
        $region78: #{tpu_custom_call.1} parent=55 // pred_check_branch
          %3782 = sbr.rel (%p3780) target = $region80
        $region79: #{tpu_custom_call.1} parent=55 // pred_region
          %s3783 = smul.u32 16, %s28
          %s3784 = ssub.s32 25, %s3783
          %p3785 = scmp.lt.s32.totalorder %s3784, 16
          %s3786 = scalar_select %p3785, %s3784, 16
          %s3787 = smul.u32 128, %s3786
          %s3789 = ssub.s32 2048, %s3787
          %3790 = vsyncadd %s3776, %s3789
          %p3791 = scmp.ne.s32.totalorder 0, %s3787
          %s3792 = smul.addr %s3783, 128
          %s3793 = scalar_lea.hbm %s9, %s3792
          %s3794 = smul.u32 8, %s3786
          %s3795 = sshll.u32 %s3779, 4
          %s3796 = int_to_ptr.vmem [resolvable:$true] %s3795
          %s3797 = sshll.u32 %s3794, 4
          %3801 = dma.vmem_to_hbm [thread:$0]  (%p3791), %s3796, %s3797, %s3793, %s3776, 128, 128, 8
        $region80: #{tpu_custom_call.1} parent=55 // pred_fallthru
          _
      $region56: #{tpu_custom_call.1} parent=5 // pred_fallthru
        _
      %p3802 = scmp.le.s32.totalorder 2, %s23
      // Predicated region
      $region81: #{tpu_custom_call.1} parent=5 // pred_check
        %p3803 = pneg %p3802
      $region82: #{tpu_custom_call.1} parent=5 // pred_check_branch
        %3805 = sbr.rel (%p3803) target = $region84
      $region83: #{tpu_custom_call.1} parent=5 // pred_region
        %s3806 = ssub.s32 %s23, 2
        // Predicated region
        $region85: #{tpu_custom_call.1} parent=83 // pred_check
          %p3807 = pneg %p246
        $region86: #{tpu_custom_call.1} parent=83 // pred_check_branch
          %3809 = sbr.rel (%p3807) target = $region88
        $region87: #{tpu_custom_call.1} parent=83 // pred_region
          %s3810 = sand.u32 %s231, 1
          %s3811 = scalar_lea.sflag [#allocation4], %s3810
          %s3812 = sand.u32 %s231, 1
          %s3813 = smul.addr %s3812, 128
          %s3814 = scalar_lea.vmem [#allocation11], %s3813
          %3815 = dma.done %s3811, 2048
        $region88: #{tpu_custom_call.1} parent=83 // pred_fallthru
          _
      $region84: #{tpu_custom_call.1} parent=5 // pred_fallthru
        _
    $region6: #{tpu_custom_call.1} parent=1 // loop_footer
      %s27 = sadd.s32 1, %s23
    $region7: #{tpu_custom_call.1} parent=1 // loop_footer_branch
      %22 = sbr.rel target = $region3
    $region8: #{tpu_custom_call.1} parent=1 // loop_exit
      _
    %3816 = vsyncpa [#allocation3], 1
    %s3817 = scalar_lea.sflag [#allocation3], 1
    %3818 = vsyncpa %s3817, 1
    %3819 = vsyncpa [#allocation6], 1
    %3820 = vsyncpa [#allocation9], 1
    %3821 = vsyncpa [#allocation4], 1
    %s3822 = scalar_lea.sflag [#allocation4], 1
    %3823 = vsyncpa %s3822, 1

</llo_original>
